<compile_context>
chip_gen: v7x
topology: tpu7x:2x2x1
jax: 0.10.0
libtpu: 0.0.40
codegen_flags: <defaults>
</compile_context>

<pallas_src>
import functools

import jax
import jax.numpy as jnp
from jax.experimental import pallas as pl
from jax.experimental.pallas import tpu as pltpu

_VMEM_LIMIT = 64 * 1024 * 1024          # scoped VMEM request
_BLOCK_BUDGET = 28 * 1024 * 1024        # target working-set per grid step


def _pick_block(total, target, quantum):
    """Largest divisor of `total` that is a multiple of `quantum` and <= target.

    Falls back to `total` (full axis == always a legal Pallas block)."""
    if total <= target:
        return total
    for cand in range(min(target, total), 0, -1):
        if total % cand == 0 and cand % quantum == 0:
            return cand
    return total


# ----------------------------------------------------------------------------
# Hoisted LSTM input projection: gx_dir = x @ W_ih_dir + b_dir  (both directions)
# ----------------------------------------------------------------------------
def _proj_kernel(x_ref, wf_ref, bf_ref, wb_ref, bb_ref, of_ref, ob_ref):
    x = x_ref[...]
    of_ref[...] = (jnp.dot(x, wf_ref[...], preferred_element_type=jnp.float32)
                   + bf_ref[...])
    ob_ref[...] = (jnp.dot(x, wb_ref[...], preferred_element_type=jnp.float32)
                   + bb_ref[...])


def lstm_input_proj(x2d, w_f, b_f, w_b, b_b):
    M, D = x2d.shape
    G = w_f.shape[1]
    # VMEM budget: resident weights (2 dirs) + double-buffered row tiles (in + 2 outs)
    weight_bytes = 2 * 2 * (D * G + G) * 4
    bytes_per_row = 2 * (D + 2 * G) * 4
    rb_target = max(8, min(1024,
                           max(_BLOCK_BUDGET - weight_bytes, 0)
                           // max(bytes_per_row, 1)))
    rb = _pick_block(M, rb_target, 8)
    return pl.pallas_call(
        _proj_kernel,
        out_shape=(jax.ShapeDtypeStruct((M, G), jnp.float32),
                   jax.ShapeDtypeStruct((M, G), jnp.float32)),
        grid_spec=pltpu.PrefetchScalarGridSpec(
            num_scalar_prefetch=0,
            grid=(M // rb,),
            in_specs=[
                pl.BlockSpec((rb, D), lambda r: (r, 0)),
                pl.BlockSpec((D, G), lambda r: (0, 0)),
                pl.BlockSpec((1, G), lambda r: (0, 0)),
                pl.BlockSpec((D, G), lambda r: (0, 0)),
                pl.BlockSpec((1, G), lambda r: (0, 0)),
            ],
            out_specs=(pl.BlockSpec((rb, G), lambda r: (r, 0)),
                       pl.BlockSpec((rb, G), lambda r: (r, 0))),
        ),
        compiler_params=pltpu.CompilerParams(
            dimension_semantics=("parallel",),
            vmem_limit_bytes=_VMEM_LIMIT),
    )(x2d, w_f, b_f.reshape(1, G), w_b, b_b.reshape(1, G))


# ----------------------------------------------------------------------------
# Fused bidirectional LSTM recurrence (input projection already applied).
# Grid = (N_blocks [parallel], T_blocks [arbitrary, sequential]).
# ----------------------------------------------------------------------------
def _bilstm_kernel(len_ref, gxf_ref, gxb_ref, whhf_ref, whhb_ref,
                   outf_ref, outb_ref, hf_scr, cf_scr, hb_scr, cb_scr,
                   *, time_block, seq_len, hidden):
    t_blk = pl.program_id(1)

    @pl.when(t_blk == 0)
    def _():
        hf_scr[...] = jnp.zeros_like(hf_scr)
        cf_scr[...] = jnp.zeros_like(cf_scr)
        hb_scr[...] = jnp.zeros_like(hb_scr)
        cb_scr[...] = jnp.zeros_like(cb_scr)

    lens = len_ref[...]              # (Nb, 1) int32
    whhf = whhf_ref[...]             # (H, 4H)
    whhb = whhb_ref[...]
    base = t_blk * time_block        # first absolute forward time in this block
    H = hidden

    def cell(gates, c):
        i_g = jax.nn.sigmoid(gates[:, 0 * H:1 * H])
        f_g = jax.nn.sigmoid(gates[:, 1 * H:2 * H])
        g_g = jnp.tanh(gates[:, 2 * H:3 * H])
        o_g = jax.nn.sigmoid(gates[:, 3 * H:4 * H])
        c_new = f_g * c + i_g * g_g
        h_new = o_g * jnp.tanh(c_new)
        return h_new, c_new

    def step(j, carry):
        hf, cf, hb, cb = carry
        # ---- forward direction, absolute time base + j ----
        t_f = base + j
        gf = gxf_ref[j] + jnp.dot(hf, whhf, preferred_element_type=jnp.float32)
        hf_new, cf_new = cell(gf, cf)
        mf = lens > t_f                                   # (Nb, 1)
        hf = jnp.where(mf, hf_new, hf)                    # freeze state past length
        cf = jnp.where(mf, cf_new, cf)
        outf_ref[j] = jnp.where(mf, hf_new, 0.0)          # zero padding
        # ---- backward direction, absolute time T - 1 - (base + j) ----
        jb = time_block - 1 - j
        t_b = seq_len - 1 - (base + j)
        gb = gxb_ref[jb] + jnp.dot(hb, whhb, preferred_element_type=jnp.float32)
        hb_new, cb_new = cell(gb, cb)
        mb = lens > t_b
        hb = jnp.where(mb, hb_new, hb)
        cb = jnp.where(mb, cb_new, cb)
        outb_ref[jb] = jnp.where(mb, hb_new, 0.0)
        return hf, cf, hb, cb

    carry = (hf_scr[...], cf_scr[...], hb_scr[...], cb_scr[...])
    hf, cf, hb, cb = jax.lax.fori_loop(0, time_block, step, carry, unroll=True)
    hf_scr[...] = hf
    cf_scr[...] = cf
    hb_scr[...] = hb
    cb_scr[...] = cb


def bilstm_recurrence(gx_f, gx_b, lengths, w_hh_f, w_hh_b):
    T, N, G = gx_f.shape
    H = w_hh_f.shape[0]
    tb = _pick_block(T, 16, 1)
    # double-buffered (tb, nb, 4H) gate streams x2 dirs + (tb, nb, H) outputs x2
    bytes_per_sent = 2 * 2 * tb * (G + H) * 4
    nb_target = max(8, min(256, _BLOCK_BUDGET // max(bytes_per_sent, 1)))
    nb = _pick_block(N, nb_target, 8)
    n_t = T // tb
    kernel = functools.partial(_bilstm_kernel, time_block=tb, seq_len=T, hidden=H)
    return pl.pallas_call(
        kernel,
        out_shape=(jax.ShapeDtypeStruct((T, N, H), jnp.float32),
                   jax.ShapeDtypeStruct((T, N, H), jnp.float32)),
        grid_spec=pltpu.PrefetchScalarGridSpec(
            num_scalar_prefetch=0,
            grid=(N // nb, n_t),
            in_specs=[
                pl.BlockSpec((nb, 1), lambda n, t: (n, 0)),              # lengths
                pl.BlockSpec((tb, nb, G), lambda n, t: (t, n, 0)),       # fwd gates
                pl.BlockSpec((tb, nb, G), lambda n, t: (n_t - 1 - t, n, 0)),  # bwd
                pl.BlockSpec((H, G), lambda n, t: (0, 0)),               # W_hh fwd
                pl.BlockSpec((H, G), lambda n, t: (0, 0)),               # W_hh bwd
            ],
            out_specs=(pl.BlockSpec((tb, nb, H), lambda n, t: (t, n, 0)),
                       pl.BlockSpec((tb, nb, H), lambda n, t: (n_t - 1 - t, n, 0))),
            scratch_shapes=[pltpu.VMEM((nb, H), jnp.float32)] * 4,
        ),
        compiler_params=pltpu.CompilerParams(
            dimension_semantics=("parallel", "arbitrary"),
            vmem_limit_bytes=_VMEM_LIMIT),
    )(lengths.reshape(N, 1).astype(jnp.int32), gx_f, gx_b, w_hh_f, w_hh_b)


def bilstm_time_major(x_tnd, lengths, p):
    """x_tnd: (T, N, D) time-major -> (h_fwd, h_bwd), each (T, N, H)."""
    T, N, D = x_tnd.shape
    H = p['w_hh_f'].shape[0]
    gx_f, gx_b = lstm_input_proj(x_tnd.reshape(T * N, D),
                                 p['w_ih_f'], p['b_f'], p['w_ih_b'], p['b_b'])
    gx_f = gx_f.reshape(T, N, 4 * H)
    gx_b = gx_b.reshape(T, N, 4 * H)
    return bilstm_recurrence(gx_f, gx_b, lengths, p['w_hh_f'], p['w_hh_b'])


# ----------------------------------------------------------------------------
# Multi-hop attention, batched over sentences; optional fused FC head.
#   scores = tanh(seq @ W1) @ W2 ; masked softmax over T per hop ;
#   output = mean_hops(attn @ seq)  ==  (mean_hops attn) @ seq
# ----------------------------------------------------------------------------
def _multi_att_kernel(len_ref, hf_ref, hb_ref, w1f_ref, w1b_ref, w2_ref, *rest,
                      with_fc):
    if with_fc:
        fcwf_ref, fcwb_ref, fcb_ref, fow_ref, fob_ref, out_ref, s_scr = rest
    else:
        out_ref, s_scr = rest

    T = hf_ref.shape[0]
    w1f = w1f_ref[...]
    w1b = w1b_ref[...]
    w2 = w2_ref[...]

    def score_step(t, carry):
        x = jnp.tanh(jnp.dot(hf_ref[t], w1f, preferred_element_type=jnp.float32)
                     + jnp.dot(hb_ref[t], w1b, preferred_element_type=jnp.float32))
        s_scr[t] = jnp.dot(x, w2, preferred_element_type=jnp.float32)
        return carry

    jax.lax.fori_loop(0, T, score_step, 0, unroll=True)

    lens = len_ref[...]                                   # (Nb, 1) int32
    scores = s_scr[...]                                   # (T, Nb, hops)
    t_ids = jax.lax.broadcasted_iota(jnp.int32, scores.shape, 0)
    # finite mask value: zero-length rows give uniform weights over zeroed h,
    # i.e. a zero output instead of NaN.
    masked = jnp.where(t_ids < lens[None, :, :], scores, -1e30)
    m = jnp.max(masked, axis=0, keepdims=True)
    p = jnp.exp(masked - m)
    denom = jnp.sum(p, axis=0, keepdims=True)
    w = p * pl.reciprocal(denom, approx=True)
    wbar = jnp.mean(w, axis=-1, keepdims=True)            # mean over hops, (T,Nb,1)

    pooled_f = jnp.sum(wbar * hf_ref[...], axis=0)        # (Nb, H)
    pooled_b = jnp.sum(wbar * hb_ref[...], axis=0)        # (Nb, H)

    if with_fc:
        h1 = (jnp.dot(pooled_f, fcwf_ref[...], preferred_element_type=jnp.float32)
              + jnp.dot(pooled_b, fcwb_ref[...], preferred_element_type=jnp.float32)
              + fcb_ref[...])
        out_ref[...] = (jnp.dot(h1, fow_ref[...], preferred_element_type=jnp.float32)
                        + fob_ref[...])
    else:
        out_ref[...] = jnp.concatenate([pooled_f, pooled_b], axis=-1)


def multi_attention(hf, hb, lengths, w1, w2, fc=None):
    """hf/hb: (T, N, H) time-major LSTM halves -> (N, 2H) or fused FC (N, out)."""
    T, N, H = hf.shape
    A = w1.shape[1]
    K = w2.shape[1]
    # double-buffered (T, nb, H) hf/hb inputs + (T, nb, K) score scratch
    bytes_per_sent = (2 * 2 * T * H + T * K) * 4
    nb_target = max(8, min(256, _BLOCK_BUDGET // max(bytes_per_sent, 1)))
    nb = _pick_block(N, nb_target, 8)

    in_specs = [
        pl.BlockSpec((nb, 1), lambda n: (n, 0)),
        pl.BlockSpec((T, nb, H), lambda n: (0, n, 0)),
        pl.BlockSpec((T, nb, H), lambda n: (0, n, 0)),
        pl.BlockSpec((H, A), lambda n: (0, 0)),
        pl.BlockSpec((H, A), lambda n: (0, 0)),
        pl.BlockSpec((A, K), lambda n: (0, 0)),
    ]
    args = [lengths.reshape(N, 1).astype(jnp.int32), hf, hb, w1[:H], w1[H:], w2]

    if fc is None:
        out_dim = 2 * H
    else:
        fc_w, fc_b, fo_w, fo_b = fc
        F = fc_w.shape[1]
        out_dim = fo_w.shape[1]
        in_specs += [
            pl.BlockSpec((H, F), lambda n: (0, 0)),
            pl.BlockSpec((H, F), lambda n: (0, 0)),
            pl.BlockSpec((1, F), lambda n: (0, 0)),
            pl.BlockSpec((F, out_dim), lambda n: (0, 0)),
            pl.BlockSpec((1, out_dim), lambda n: (0, 0)),
        ]
        args += [fc_w[:H], fc_w[H:], fc_b.reshape(1, F), fo_w,
                 fo_b.reshape(1, out_dim)]

    kernel = functools.partial(_multi_att_kernel, with_fc=fc is not None)
    return pl.pallas_call(
        kernel,
        out_shape=jax.ShapeDtypeStruct((N, out_dim), jnp.float32),
        grid_spec=pltpu.PrefetchScalarGridSpec(
            num_scalar_prefetch=0,
            grid=(N // nb,),
            in_specs=in_specs,
            out_specs=pl.BlockSpec((nb, out_dim), lambda n: (n, 0)),
            scratch_shapes=[pltpu.VMEM((T, nb, K), jnp.float32)],
        ),
        compiler_params=pltpu.CompilerParams(
            dimension_semantics=("parallel",),
            vmem_limit_bytes=_VMEM_LIMIT),
    )(*args)


# ----------------------------------------------------------------------------
# Full forward
# ----------------------------------------------------------------------------
def hierarchical_multi_attention_forward(params, document, document_lengths,
                                         sequence_lengths):
    B, S, W = document.shape
    # time-major word ids: (W, S*B) with sentence-major flattening so the
    # word-level attention output reshapes for free into (S, B, 2H).
    ids = jnp.transpose(document, (2, 1, 0)).reshape(W, S * B)
    word_lens = jnp.transpose(sequence_lengths, (1, 0)).reshape(S * B)
    doc_lens = document_lengths.astype(jnp.int32)

    # word embeddings, gathered directly in time-major layout (no transposes)
    emb = jnp.take(params['embedding'], ids, axis=0)            # (W, N, D)

    # word level: hoisted projection + fused BiLSTM + batched multi-hop attention
    hf0, hb0 = bilstm_time_major(emb, word_lens, params['lstm0'])
    tokens_att = multi_attention(hf0, hb0, word_lens,
                                 params['att0_w1'], params['att0_w2'])  # (N, 2H)

    # make_tokens_att_full: zero sentence vectors beyond each document length
    tokens_att = tokens_att.reshape(S, B, -1)
    sent_pos = jnp.arange(S, dtype=jnp.int32)[:, None, None]
    tokens_att = jnp.where(sent_pos < doc_lens[None, :, None], tokens_att, 0.0)

    # sentence level (already time-major over sentences) + fused FC head
    hf1, hb1 = bilstm_time_major(tokens_att, doc_lens, params['lstm1'])
    out = multi_attention(hf1, hb1, doc_lens,
                          params['att1_w1'], params['att1_w2'],
                          fc=(params['fc_w'], params['fc_b'],
                              params['final_w'], params['final_b']))
    # TODO(synk): drop_out > 0 (nn.Dropout) and custom_loss penalty not implemented.
    return out


# ----------------------------------------------------------------------------
# Deterministic parameter init (synthetic, no checkpoints)
# ----------------------------------------------------------------------------
def init_params(key, vocab_size, emb_size, hidden, att_size, hops, fc_size,
                out_size):
    keys = jax.random.split(key, 11)

    def rnd(k, shape, scale=0.1):
        return jax.random.normal(k, shape, dtype=jnp.float32) * scale

    def lstm_params(k, in_size, H):
        ks = jax.random.split(k, 6)
        return {
            'w_ih_f': rnd(ks[0], (in_size, 4 * H)),
            'w_hh_f': rnd(ks[1], (H, 4 * H)),
            'b_f':    rnd(ks[2], (4 * H,)),
            'w_ih_b': rnd(ks[3], (in_size, 4 * H)),
            'w_hh_b': rnd(ks[4], (H, 4 * H)),
            'b_b':    rnd(ks[5], (4 * H,)),
        }

    return {
        'embedding': rnd(keys[0], (vocab_size, emb_size), 1.0),
        'lstm0': lstm_params(keys[1], emb_size, hidden),
        'lstm1': lstm_params(keys[2], 2 * hidden, hidden),
        'att0_w1': rnd(keys[3], (2 * hidden, att_size)),
        'att0_w2': rnd(keys[4], (att_size, hops[0])),
        'att1_w1': rnd(keys[5], (2 * hidden, att_size)),
        'att1_w2': rnd(keys[6], (att_size, hops[1])),
        'fc_w': rnd(keys[7], (2 * hidden, fc_size)),
        'fc_b': rnd(keys[8], (fc_size,)),
        'final_w': rnd(keys[9], (fc_size, out_size)),
        'final_b': rnd(keys[10], (out_size,)),
    }


if __name__ == "__main__":
    key = jax.random.PRNGKey(0)
    B, max_sent, max_word = 2, 3, 8
    vocab, emb_size = 50, 32
    hidden, att_size = 16, 16
    hops = (2, 3)
    fc_size, out_size = 32, 4

    kp, kd = jax.random.split(key)
    params = init_params(kp, vocab, emb_size, hidden, att_size, hops, fc_size,
                         out_size)

    document = jax.random.randint(kd, (B, max_sent, max_word), 0, vocab,
                                  dtype=jnp.int32)
    document_lengths = jnp.array([3, 2], dtype=jnp.int32)          # sentences / doc
    sequence_lengths = jnp.array([[8, 5, 3],
                                  [6, 4, 0]], dtype=jnp.int32)     # words / sentence

    fwd = jax.jit(hierarchical_multi_attention_forward)
    out = fwd(params, document, document_lengths, sequence_lengths)
    out = jax.block_until_ready(out)
    assert out.shape == (B, out_size), out.shape
    assert bool(jnp.all(jnp.isfinite(out)))
    print("KERNEL_OK")
</pallas_src>

<mosaic_0001>
module attributes {stable_mosaic.version = 11 : i64} {
  func.func @_proj_kernel(%arg0: i32, %arg1: memref<48x32xf32, #tpu.memory_space<vmem>>, %arg2: memref<32x64xf32, #tpu.memory_space<vmem>>, %arg3: memref<1x64xf32, #tpu.memory_space<vmem>>, %arg4: memref<32x64xf32, #tpu.memory_space<vmem>>, %arg5: memref<1x64xf32, #tpu.memory_space<vmem>>, %arg6: memref<48x64xf32, #tpu.memory_space<vmem>>, %arg7: memref<48x64xf32, #tpu.memory_space<vmem>>) attributes {dimension_semantics = [#tpu.dimension_semantics<parallel>], iteration_bounds = array<i64: 1>, scalar_prefetch = 0 : i64, scratch_operands = 0 : i64, tpu.core_type = #tpu.core_type<tc>, window_params = [{transform_indices = @transform_0, window_bounds = array<i64: 48, 32>}, {pipeline_mode = #tpu.pipeline_mode<synchronous>, transform_indices = @transform_1, window_bounds = array<i64: 32, 64>}, {pipeline_mode = #tpu.pipeline_mode<synchronous>, transform_indices = @transform_2, window_bounds = array<i64: 1, 64>}, {pipeline_mode = #tpu.pipeline_mode<synchronous>, transform_indices = @transform_3, window_bounds = array<i64: 32, 64>}, {pipeline_mode = #tpu.pipeline_mode<synchronous>, transform_indices = @transform_4, window_bounds = array<i64: 1, 64>}, {transform_indices = @transform_5, window_bounds = array<i64: 48, 64>}, {transform_indices = @transform_6, window_bounds = array<i64: 48, 64>}]} {
    %c0 = arith.constant 0 : index
    %c0_0 = arith.constant 0 : index
    %0 = vector.load %arg1[%c0, %c0_0] : memref<48x32xf32, #tpu.memory_space<vmem>>, vector<48x32xf32>
    %c0_1 = arith.constant 0 : index
    %c0_2 = arith.constant 0 : index
    %1 = vector.load %arg2[%c0_1, %c0_2] : memref<32x64xf32, #tpu.memory_space<vmem>>, vector<32x64xf32>
    %cst = arith.constant dense<0.000000e+00> : vector<48x64xf32>
    %2 = tpu.matmul %0, %1, %cst {dimension_numbers = #tpu.dot_dimension_numbers<[1], [0], [0], [1], [0, 0, 1, 1], [], []>} : vector<48x32xf32>, vector<32x64xf32>, vector<48x64xf32> -> vector<48x64xf32>
    %c0_3 = arith.constant 0 : index
    %c0_4 = arith.constant 0 : index
    %3 = vector.load %arg3[%c0_3, %c0_4] : memref<1x64xf32, #tpu.memory_space<vmem>>, vector<1x64xf32>
    %4 = vector.broadcast %3 : vector<1x64xf32> to vector<48x64xf32>
    %5 = arith.addf %2, %4 : vector<48x64xf32>
    %c0_5 = arith.constant 0 : index
    %c0_6 = arith.constant 0 : index
    %6 = vector.load %arg6[%c0_5, %c0_6] : memref<48x64xf32, #tpu.memory_space<vmem>>, vector<48x64xf32>
    tpu.vector_store %arg6[%c0_5, %c0_6], %5 {strides = array<i32>} : memref<48x64xf32, #tpu.memory_space<vmem>>, vector<48x64xf32>,
    %c0_7 = arith.constant 0 : index
    %c0_8 = arith.constant 0 : index
    %7 = vector.load %arg4[%c0_7, %c0_8] : memref<32x64xf32, #tpu.memory_space<vmem>>, vector<32x64xf32>
    %cst_9 = arith.constant dense<0.000000e+00> : vector<48x64xf32>
    %8 = tpu.matmul %0, %7, %cst_9 {dimension_numbers = #tpu.dot_dimension_numbers<[1], [0], [0], [1], [0, 0, 1, 1], [], []>} : vector<48x32xf32>, vector<32x64xf32>, vector<48x64xf32> -> vector<48x64xf32>
    %c0_10 = arith.constant 0 : index
    %c0_11 = arith.constant 0 : index
    %9 = vector.load %arg5[%c0_10, %c0_11] : memref<1x64xf32, #tpu.memory_space<vmem>>, vector<1x64xf32>
    %10 = vector.broadcast %9 : vector<1x64xf32> to vector<48x64xf32>
    %11 = arith.addf %8, %10 : vector<48x64xf32>
    %c0_12 = arith.constant 0 : index
    %c0_13 = arith.constant 0 : index
    %12 = vector.load %arg7[%c0_12, %c0_13] : memref<48x64xf32, #tpu.memory_space<vmem>>, vector<48x64xf32>
    tpu.vector_store %arg7[%c0_12, %c0_13], %11 {strides = array<i32>} : memref<48x64xf32, #tpu.memory_space<vmem>>, vector<48x64xf32>,
    return
  }
  func.func @transform_0(%arg0: i32) -> (i32, i32) {
    %c0_i32 = arith.constant 0 : i32
    %c0_i32_0 = arith.constant 0 : i32
    return %arg0, %c0_i32 : i32, i32
  }
  func.func @transform_1(%arg0: i32) -> (i32, i32) {
    %c0_i32 = arith.constant 0 : i32
    %c0_i32_0 = arith.constant 0 : i32
    %c0_i32_1 = arith.constant 0 : i32
    return %c0_i32, %c0_i32_0 : i32, i32
  }
  func.func @transform_2(%arg0: i32) -> (i32, i32) {
    %c0_i32 = arith.constant 0 : i32
    %c0_i32_0 = arith.constant 0 : i32
    %c0_i32_1 = arith.constant 0 : i32
    return %c0_i32, %c0_i32_0 : i32, i32
  }
  func.func @transform_3(%arg0: i32) -> (i32, i32) {
    %c0_i32 = arith.constant 0 : i32
    %c0_i32_0 = arith.constant 0 : i32
    %c0_i32_1 = arith.constant 0 : i32
    return %c0_i32, %c0_i32_0 : i32, i32
  }
  func.func @transform_4(%arg0: i32) -> (i32, i32) {
    %c0_i32 = arith.constant 0 : i32
    %c0_i32_0 = arith.constant 0 : i32
    %c0_i32_1 = arith.constant 0 : i32
    return %c0_i32, %c0_i32_0 : i32, i32
  }
  func.func @transform_5(%arg0: i32) -> (i32, i32) {
    %c0_i32 = arith.constant 0 : i32
    %c0_i32_0 = arith.constant 0 : i32
    return %arg0, %c0_i32 : i32, i32
  }
  func.func @transform_6(%arg0: i32) -> (i32, i32) {
    %c0_i32 = arith.constant 0 : i32
    %c0_i32_0 = arith.constant 0 : i32
    return %arg0, %c0_i32 : i32, i32
  }
}

module attributes {stable_mosaic.version = 11 : i64} {
  func.func @_bilstm_kernel(%arg0: i32, %arg1: i32, %arg2: memref<6x1xi32, #tpu.memory_space<vmem>>, %arg3: memref<8x6x64xf32, #tpu.memory_space<vmem>>, %arg4: memref<8x6x64xf32, #tpu.memory_space<vmem>>, %arg5: memref<16x64xf32, #tpu.memory_space<vmem>>, %arg6: memref<16x64xf32, #tpu.memory_space<vmem>>, %arg7: memref<8x6x16xf32, #tpu.memory_space<vmem>>, %arg8: memref<8x6x16xf32, #tpu.memory_space<vmem>>, %arg9: memref<6x16xf32, #tpu.memory_space<vmem>>, %arg10: memref<6x16xf32, #tpu.memory_space<vmem>>, %arg11: memref<6x16xf32, #tpu.memory_space<vmem>>, %arg12: memref<6x16xf32, #tpu.memory_space<vmem>>) attributes {dimension_semantics = [#tpu.dimension_semantics<parallel>, #tpu.dimension_semantics<arbitrary>], iteration_bounds = array<i64: 1, 1>, scalar_prefetch = 0 : i64, scratch_operands = 4 : i64, tpu.core_type = #tpu.core_type<tc>, window_params = [{transform_indices = @transform_0, window_bounds = array<i64: 6, 1>}, {transform_indices = @transform_1, window_bounds = array<i64: 8, 6, 64>}, {transform_indices = @transform_2, window_bounds = array<i64: 8, 6, 64>}, {pipeline_mode = #tpu.pipeline_mode<synchronous>, transform_indices = @transform_3, window_bounds = array<i64: 16, 64>}, {pipeline_mode = #tpu.pipeline_mode<synchronous>, transform_indices = @transform_4, window_bounds = array<i64: 16, 64>}, {transform_indices = @transform_5, window_bounds = array<i64: 8, 6, 16>}, {transform_indices = @transform_6, window_bounds = array<i64: 8, 6, 16>}]} {
    %c0_i32 = arith.constant 0 : i32
    %0 = arith.cmpi eq, %arg1, %c0_i32 : i32
    %1 = arith.extui %0 : i1 to i32
    %c0_i32_0 = arith.constant 0 : i32
    %2 = arith.cmpi ne, %1, %c0_i32_0 : i32
    scf.if %2 {
      %cst_183 = arith.constant 0.000000e+00 : f32
      %783 = vector.broadcast %cst_183 : f32 to vector<6x16xf32>
      %c0_184 = arith.constant 0 : index
      %c0_185 = arith.constant 0 : index
      %784 = vector.load %arg9[%c0_184, %c0_185] : memref<6x16xf32, #tpu.memory_space<vmem>>, vector<6x16xf32>
      tpu.vector_store %arg9[%c0_184, %c0_185], %783 {strides = array<i32>} : memref<6x16xf32, #tpu.memory_space<vmem>>, vector<6x16xf32>,
      %cst_186 = arith.constant 0.000000e+00 : f32
      %785 = vector.broadcast %cst_186 : f32 to vector<6x16xf32>
      %c0_187 = arith.constant 0 : index
      %c0_188 = arith.constant 0 : index
      %786 = vector.load %arg10[%c0_187, %c0_188] : memref<6x16xf32, #tpu.memory_space<vmem>>, vector<6x16xf32>
      tpu.vector_store %arg10[%c0_187, %c0_188], %785 {strides = array<i32>} : memref<6x16xf32, #tpu.memory_space<vmem>>, vector<6x16xf32>,
      %cst_189 = arith.constant 0.000000e+00 : f32
      %787 = vector.broadcast %cst_189 : f32 to vector<6x16xf32>
      %c0_190 = arith.constant 0 : index
      %c0_191 = arith.constant 0 : index
      %788 = vector.load %arg11[%c0_190, %c0_191] : memref<6x16xf32, #tpu.memory_space<vmem>>, vector<6x16xf32>
      tpu.vector_store %arg11[%c0_190, %c0_191], %787 {strides = array<i32>} : memref<6x16xf32, #tpu.memory_space<vmem>>, vector<6x16xf32>,
      %cst_192 = arith.constant 0.000000e+00 : f32
      %789 = vector.broadcast %cst_192 : f32 to vector<6x16xf32>
      %c0_193 = arith.constant 0 : index
      %c0_194 = arith.constant 0 : index
      %790 = vector.load %arg12[%c0_193, %c0_194] : memref<6x16xf32, #tpu.memory_space<vmem>>, vector<6x16xf32>
      tpu.vector_store %arg12[%c0_193, %c0_194], %789 {strides = array<i32>} : memref<6x16xf32, #tpu.memory_space<vmem>>, vector<6x16xf32>,
    } else {
    }
    %c0 = arith.constant 0 : index
    %c0_1 = arith.constant 0 : index
    %3 = vector.load %arg2[%c0, %c0_1] : memref<6x1xi32, #tpu.memory_space<vmem>>, vector<6x1xi32>
    %c0_2 = arith.constant 0 : index
    %c0_3 = arith.constant 0 : index
    %4 = vector.load %arg5[%c0_2, %c0_3] : memref<16x64xf32, #tpu.memory_space<vmem>>, vector<16x64xf32>
    %c0_4 = arith.constant 0 : index
    %c0_5 = arith.constant 0 : index
    %5 = vector.load %arg6[%c0_4, %c0_5] : memref<16x64xf32, #tpu.memory_space<vmem>>, vector<16x64xf32>
    %c8_i32 = arith.constant 8 : i32
    %6 = arith.muli %arg1, %c8_i32 : i32
    %c0_6 = arith.constant 0 : index
    %c0_7 = arith.constant 0 : index
    %7 = vector.load %arg9[%c0_6, %c0_7] : memref<6x16xf32, #tpu.memory_space<vmem>>, vector<6x16xf32>
    %c0_8 = arith.constant 0 : index
    %c0_9 = arith.constant 0 : index
    %8 = vector.load %arg10[%c0_8, %c0_9] : memref<6x16xf32, #tpu.memory_space<vmem>>, vector<6x16xf32>
    %c0_10 = arith.constant 0 : index
    %c0_11 = arith.constant 0 : index
    %9 = vector.load %arg11[%c0_10, %c0_11] : memref<6x16xf32, #tpu.memory_space<vmem>>, vector<6x16xf32>
    %c0_12 = arith.constant 0 : index
    %c0_13 = arith.constant 0 : index
    %10 = vector.load %arg12[%c0_12, %c0_13] : memref<6x16xf32, #tpu.memory_space<vmem>>, vector<6x16xf32>
    %c0_i32_14 = arith.constant 0 : i32
    %11 = arith.addi %6, %c0_i32_14 : i32
    %12 = arith.index_cast %c0_i32_14 : i32 to index
    %c0_15 = arith.constant 0 : index
    %c0_16 = arith.constant 0 : index
    %13 = vector.load %arg3[%12, %c0_15, %c0_16] : memref<8x6x64xf32, #tpu.memory_space<vmem>>, vector<1x6x64xf32>
    %14 = vector.shape_cast %13 : vector<1x6x64xf32> to vector<6x64xf32>
    %cst = arith.constant dense<0.000000e+00> : vector<6x64xf32>
    %15 = tpu.matmul %7, %4, %cst {dimension_numbers = #tpu.dot_dimension_numbers<[1], [0], [0], [1], [0, 0, 1, 1], [], []>} : vector<6x16xf32>, vector<16x64xf32>, vector<6x64xf32> -> vector<6x64xf32>
    %16 = arith.addf %14, %15 : vector<6x64xf32>
    %17 = vector.extract_strided_slice %16 {offsets = [0, 0], sizes = [6, 16], strides = [1, 1]} : vector<6x64xf32> to vector<6x16xf32>
    %18 = arith.negf %17 : vector<6x16xf32>
    %19 = math.exp %18 : vector<6x16xf32>
    %cst_17 = arith.constant 1.000000e+00 : f32
    %20 = vector.broadcast %cst_17 : f32 to vector<6x16xf32>
    %21 = arith.addf %20, %19 : vector<6x16xf32>
    %22 = arith.divf %20, %21 : vector<6x16xf32>
    %23 = vector.extract_strided_slice %16 {offsets = [0, 16], sizes = [6, 16], strides = [1, 1]} : vector<6x64xf32> to vector<6x16xf32>
    %24 = arith.negf %23 : vector<6x16xf32>
    %25 = math.exp %24 : vector<6x16xf32>
    %cst_18 = arith.constant 1.000000e+00 : f32
    %26 = vector.broadcast %cst_18 : f32 to vector<6x16xf32>
    %27 = arith.addf %26, %25 : vector<6x16xf32>
    %28 = arith.divf %26, %27 : vector<6x16xf32>
    %29 = vector.extract_strided_slice %16 {offsets = [0, 32], sizes = [6, 16], strides = [1, 1]} : vector<6x64xf32> to vector<6x16xf32>
    %30 = math.tanh %29 : vector<6x16xf32>
    %31 = vector.extract_strided_slice %16 {offsets = [0, 48], sizes = [6, 16], strides = [1, 1]} : vector<6x64xf32> to vector<6x16xf32>
    %32 = arith.negf %31 : vector<6x16xf32>
    %33 = math.exp %32 : vector<6x16xf32>
    %cst_19 = arith.constant 1.000000e+00 : f32
    %34 = vector.broadcast %cst_19 : f32 to vector<6x16xf32>
    %35 = arith.addf %34, %33 : vector<6x16xf32>
    %36 = arith.divf %34, %35 : vector<6x16xf32>
    %37 = arith.mulf %28, %8 : vector<6x16xf32>
    %38 = arith.mulf %22, %30 : vector<6x16xf32>
    %39 = arith.addf %37, %38 : vector<6x16xf32>
    %40 = math.tanh %39 : vector<6x16xf32>
    %41 = arith.mulf %36, %40 : vector<6x16xf32>
    %42 = vector.broadcast %11 : i32 to vector<6x1xi32>
    %43 = arith.cmpi sgt, %3, %42 : vector<6x1xi32>
    %44 = vector.shape_cast %43 : vector<6x1xi1> to vector<6x1xi1>
    %45 = vector.broadcast %44 : vector<6x1xi1> to vector<6x16xi1>
    %46 = arith.select %45, %41, %7 : vector<6x16xi1>, vector<6x16xf32>
    %47 = vector.shape_cast %43 : vector<6x1xi1> to vector<6x1xi1>
    %48 = vector.broadcast %47 : vector<6x1xi1> to vector<6x16xi1>
    %49 = arith.select %48, %39, %8 : vector<6x16xi1>, vector<6x16xf32>
    %cst_20 = arith.constant 0.000000e+00 : f32
    %50 = vector.shape_cast %43 : vector<6x1xi1> to vector<6x1xi1>
    %51 = vector.broadcast %50 : vector<6x1xi1> to vector<6x16xi1>
    %52 = vector.broadcast %cst_20 : f32 to vector<6x16xf32>
    %53 = arith.select %51, %41, %52 : vector<6x16xi1>, vector<6x16xf32>
    %54 = arith.index_cast %c0_i32_14 : i32 to index
    %c0_21 = arith.constant 0 : index
    %c0_22 = arith.constant 0 : index
    %55 = vector.load %arg7[%54, %c0_21, %c0_22] : memref<8x6x16xf32, #tpu.memory_space<vmem>>, vector<1x6x16xf32>
    %56 = vector.shape_cast %55 : vector<1x6x16xf32> to vector<6x16xf32>
    %57 = vector.shape_cast %53 : vector<6x16xf32> to vector<1x6x16xf32>
    tpu.vector_store %arg7[%54, %c0_21, %c0_22], %57 {strides = array<i32>} : memref<8x6x16xf32, #tpu.memory_space<vmem>>, vector<1x6x16xf32>,
    %c7_i32 = arith.constant 7 : i32
    %58 = arith.subi %c7_i32, %c0_i32_14 : i32
    %59 = arith.addi %6, %c0_i32_14 : i32
    %c7_i32_23 = arith.constant 7 : i32
    %60 = arith.subi %c7_i32_23, %59 : i32
    %61 = arith.index_cast %58 : i32 to index
    %c0_24 = arith.constant 0 : index
    %c0_25 = arith.constant 0 : index
    %62 = vector.load %arg4[%61, %c0_24, %c0_25] : memref<8x6x64xf32, #tpu.memory_space<vmem>>, vector<1x6x64xf32>
    %63 = vector.shape_cast %62 : vector<1x6x64xf32> to vector<6x64xf32>
    %cst_26 = arith.constant dense<0.000000e+00> : vector<6x64xf32>
    %64 = tpu.matmul %9, %5, %cst_26 {dimension_numbers = #tpu.dot_dimension_numbers<[1], [0], [0], [1], [0, 0, 1, 1], [], []>} : vector<6x16xf32>, vector<16x64xf32>, vector<6x64xf32> -> vector<6x64xf32>
    %65 = arith.addf %63, %64 : vector<6x64xf32>
    %66 = vector.extract_strided_slice %65 {offsets = [0, 0], sizes = [6, 16], strides = [1, 1]} : vector<6x64xf32> to vector<6x16xf32>
    %67 = arith.negf %66 : vector<6x16xf32>
    %68 = math.exp %67 : vector<6x16xf32>
    %cst_27 = arith.constant 1.000000e+00 : f32
    %69 = vector.broadcast %cst_27 : f32 to vector<6x16xf32>
    %70 = arith.addf %69, %68 : vector<6x16xf32>
    %71 = arith.divf %69, %70 : vector<6x16xf32>
    %72 = vector.extract_strided_slice %65 {offsets = [0, 16], sizes = [6, 16], strides = [1, 1]} : vector<6x64xf32> to vector<6x16xf32>
    %73 = arith.negf %72 : vector<6x16xf32>
    %74 = math.exp %73 : vector<6x16xf32>
    %cst_28 = arith.constant 1.000000e+00 : f32
    %75 = vector.broadcast %cst_28 : f32 to vector<6x16xf32>
    %76 = arith.addf %75, %74 : vector<6x16xf32>
    %77 = arith.divf %75, %76 : vector<6x16xf32>
    %78 = vector.extract_strided_slice %65 {offsets = [0, 32], sizes = [6, 16], strides = [1, 1]} : vector<6x64xf32> to vector<6x16xf32>
    %79 = math.tanh %78 : vector<6x16xf32>
    %80 = vector.extract_strided_slice %65 {offsets = [0, 48], sizes = [6, 16], strides = [1, 1]} : vector<6x64xf32> to vector<6x16xf32>
    %81 = arith.negf %80 : vector<6x16xf32>
    %82 = math.exp %81 : vector<6x16xf32>
    %cst_29 = arith.constant 1.000000e+00 : f32
    %83 = vector.broadcast %cst_29 : f32 to vector<6x16xf32>
    %84 = arith.addf %83, %82 : vector<6x16xf32>
    %85 = arith.divf %83, %84 : vector<6x16xf32>
    %86 = arith.mulf %77, %10 : vector<6x16xf32>
    %87 = arith.mulf %71, %79 : vector<6x16xf32>
    %88 = arith.addf %86, %87 : vector<6x16xf32>
    %89 = math.tanh %88 : vector<6x16xf32>
    %90 = arith.mulf %85, %89 : vector<6x16xf32>
    %91 = vector.broadcast %60 : i32 to vector<6x1xi32>
    %92 = arith.cmpi sgt, %3, %91 : vector<6x1xi32>
    %93 = vector.shape_cast %92 : vector<6x1xi1> to vector<6x1xi1>
    %94 = vector.broadcast %93 : vector<6x1xi1> to vector<6x16xi1>
    %95 = arith.select %94, %90, %9 : vector<6x16xi1>, vector<6x16xf32>
    %96 = vector.shape_cast %92 : vector<6x1xi1> to vector<6x1xi1>
    %97 = vector.broadcast %96 : vector<6x1xi1> to vector<6x16xi1>
    %98 = arith.select %97, %88, %10 : vector<6x16xi1>, vector<6x16xf32>
    %cst_30 = arith.constant 0.000000e+00 : f32
    %99 = vector.shape_cast %92 : vector<6x1xi1> to vector<6x1xi1>
    %100 = vector.broadcast %99 : vector<6x1xi1> to vector<6x16xi1>
    %101 = vector.broadcast %cst_30 : f32 to vector<6x16xf32>
    %102 = arith.select %100, %90, %101 : vector<6x16xi1>, vector<6x16xf32>
    %103 = arith.index_cast %58 : i32 to index
    %c0_31 = arith.constant 0 : index
    %c0_32 = arith.constant 0 : index
    %104 = vector.load %arg8[%103, %c0_31, %c0_32] : memref<8x6x16xf32, #tpu.memory_space<vmem>>, vector<1x6x16xf32>
    %105 = vector.shape_cast %104 : vector<1x6x16xf32> to vector<6x16xf32>
    %106 = vector.shape_cast %102 : vector<6x16xf32> to vector<1x6x16xf32>
    tpu.vector_store %arg8[%103, %c0_31, %c0_32], %106 {strides = array<i32>} : memref<8x6x16xf32, #tpu.memory_space<vmem>>, vector<1x6x16xf32>,
    %c1_i32 = arith.constant 1 : i32
    %107 = arith.addi %6, %c1_i32 : i32
    %108 = arith.index_cast %c1_i32 : i32 to index
    %c0_33 = arith.constant 0 : index
    %c0_34 = arith.constant 0 : index
    %109 = vector.load %arg3[%108, %c0_33, %c0_34] : memref<8x6x64xf32, #tpu.memory_space<vmem>>, vector<1x6x64xf32>
    %110 = vector.shape_cast %109 : vector<1x6x64xf32> to vector<6x64xf32>
    %cst_35 = arith.constant dense<0.000000e+00> : vector<6x64xf32>
    %111 = tpu.matmul %46, %4, %cst_35 {dimension_numbers = #tpu.dot_dimension_numbers<[1], [0], [0], [1], [0, 0, 1, 1], [], []>} : vector<6x16xf32>, vector<16x64xf32>, vector<6x64xf32> -> vector<6x64xf32>
    %112 = arith.addf %110, %111 : vector<6x64xf32>
    %113 = vector.extract_strided_slice %112 {offsets = [0, 0], sizes = [6, 16], strides = [1, 1]} : vector<6x64xf32> to vector<6x16xf32>
    %114 = arith.negf %113 : vector<6x16xf32>
    %115 = math.exp %114 : vector<6x16xf32>
    %cst_36 = arith.constant 1.000000e+00 : f32
    %116 = vector.broadcast %cst_36 : f32 to vector<6x16xf32>
    %117 = arith.addf %116, %115 : vector<6x16xf32>
    %118 = arith.divf %116, %117 : vector<6x16xf32>
    %119 = vector.extract_strided_slice %112 {offsets = [0, 16], sizes = [6, 16], strides = [1, 1]} : vector<6x64xf32> to vector<6x16xf32>
    %120 = arith.negf %119 : vector<6x16xf32>
    %121 = math.exp %120 : vector<6x16xf32>
    %cst_37 = arith.constant 1.000000e+00 : f32
    %122 = vector.broadcast %cst_37 : f32 to vector<6x16xf32>
    %123 = arith.addf %122, %121 : vector<6x16xf32>
    %124 = arith.divf %122, %123 : vector<6x16xf32>
    %125 = vector.extract_strided_slice %112 {offsets = [0, 32], sizes = [6, 16], strides = [1, 1]} : vector<6x64xf32> to vector<6x16xf32>
    %126 = math.tanh %125 : vector<6x16xf32>
    %127 = vector.extract_strided_slice %112 {offsets = [0, 48], sizes = [6, 16], strides = [1, 1]} : vector<6x64xf32> to vector<6x16xf32>
    %128 = arith.negf %127 : vector<6x16xf32>
    %129 = math.exp %128 : vector<6x16xf32>
    %cst_38 = arith.constant 1.000000e+00 : f32
    %130 = vector.broadcast %cst_38 : f32 to vector<6x16xf32>
    %131 = arith.addf %130, %129 : vector<6x16xf32>
    %132 = arith.divf %130, %131 : vector<6x16xf32>
    %133 = arith.mulf %124, %49 : vector<6x16xf32>
    %134 = arith.mulf %118, %126 : vector<6x16xf32>
    %135 = arith.addf %133, %134 : vector<6x16xf32>
    %136 = math.tanh %135 : vector<6x16xf32>
    %137 = arith.mulf %132, %136 : vector<6x16xf32>
    %138 = vector.broadcast %107 : i32 to vector<6x1xi32>
    %139 = arith.cmpi sgt, %3, %138 : vector<6x1xi32>
    %140 = vector.shape_cast %139 : vector<6x1xi1> to vector<6x1xi1>
    %141 = vector.broadcast %140 : vector<6x1xi1> to vector<6x16xi1>
    %142 = arith.select %141, %137, %46 : vector<6x16xi1>, vector<6x16xf32>
    %143 = vector.shape_cast %139 : vector<6x1xi1> to vector<6x1xi1>
    %144 = vector.broadcast %143 : vector<6x1xi1> to vector<6x16xi1>
    %145 = arith.select %144, %135, %49 : vector<6x16xi1>, vector<6x16xf32>
    %cst_39 = arith.constant 0.000000e+00 : f32
    %146 = vector.shape_cast %139 : vector<6x1xi1> to vector<6x1xi1>
    %147 = vector.broadcast %146 : vector<6x1xi1> to vector<6x16xi1>
    %148 = vector.broadcast %cst_39 : f32 to vector<6x16xf32>
    %149 = arith.select %147, %137, %148 : vector<6x16xi1>, vector<6x16xf32>
    %150 = arith.index_cast %c1_i32 : i32 to index
    %c0_40 = arith.constant 0 : index
    %c0_41 = arith.constant 0 : index
    %151 = vector.load %arg7[%150, %c0_40, %c0_41] : memref<8x6x16xf32, #tpu.memory_space<vmem>>, vector<1x6x16xf32>
    %152 = vector.shape_cast %151 : vector<1x6x16xf32> to vector<6x16xf32>
    %153 = vector.shape_cast %149 : vector<6x16xf32> to vector<1x6x16xf32>
    tpu.vector_store %arg7[%150, %c0_40, %c0_41], %153 {strides = array<i32>} : memref<8x6x16xf32, #tpu.memory_space<vmem>>, vector<1x6x16xf32>,
    %c7_i32_42 = arith.constant 7 : i32
    %154 = arith.subi %c7_i32_42, %c1_i32 : i32
    %155 = arith.addi %6, %c1_i32 : i32
    %c7_i32_43 = arith.constant 7 : i32
    %156 = arith.subi %c7_i32_43, %155 : i32
    %157 = arith.index_cast %154 : i32 to index
    %c0_44 = arith.constant 0 : index
    %c0_45 = arith.constant 0 : index
    %158 = vector.load %arg4[%157, %c0_44, %c0_45] : memref<8x6x64xf32, #tpu.memory_space<vmem>>, vector<1x6x64xf32>
    %159 = vector.shape_cast %158 : vector<1x6x64xf32> to vector<6x64xf32>
    %cst_46 = arith.constant dense<0.000000e+00> : vector<6x64xf32>
    %160 = tpu.matmul %95, %5, %cst_46 {dimension_numbers = #tpu.dot_dimension_numbers<[1], [0], [0], [1], [0, 0, 1, 1], [], []>} : vector<6x16xf32>, vector<16x64xf32>, vector<6x64xf32> -> vector<6x64xf32>
    %161 = arith.addf %159, %160 : vector<6x64xf32>
    %162 = vector.extract_strided_slice %161 {offsets = [0, 0], sizes = [6, 16], strides = [1, 1]} : vector<6x64xf32> to vector<6x16xf32>
    %163 = arith.negf %162 : vector<6x16xf32>
    %164 = math.exp %163 : vector<6x16xf32>
    %cst_47 = arith.constant 1.000000e+00 : f32
    %165 = vector.broadcast %cst_47 : f32 to vector<6x16xf32>
    %166 = arith.addf %165, %164 : vector<6x16xf32>
    %167 = arith.divf %165, %166 : vector<6x16xf32>
    %168 = vector.extract_strided_slice %161 {offsets = [0, 16], sizes = [6, 16], strides = [1, 1]} : vector<6x64xf32> to vector<6x16xf32>
    %169 = arith.negf %168 : vector<6x16xf32>
    %170 = math.exp %169 : vector<6x16xf32>
    %cst_48 = arith.constant 1.000000e+00 : f32
    %171 = vector.broadcast %cst_48 : f32 to vector<6x16xf32>
    %172 = arith.addf %171, %170 : vector<6x16xf32>
    %173 = arith.divf %171, %172 : vector<6x16xf32>
    %174 = vector.extract_strided_slice %161 {offsets = [0, 32], sizes = [6, 16], strides = [1, 1]} : vector<6x64xf32> to vector<6x16xf32>
    %175 = math.tanh %174 : vector<6x16xf32>
    %176 = vector.extract_strided_slice %161 {offsets = [0, 48], sizes = [6, 16], strides = [1, 1]} : vector<6x64xf32> to vector<6x16xf32>
    %177 = arith.negf %176 : vector<6x16xf32>
    %178 = math.exp %177 : vector<6x16xf32>
    %cst_49 = arith.constant 1.000000e+00 : f32
    %179 = vector.broadcast %cst_49 : f32 to vector<6x16xf32>
    %180 = arith.addf %179, %178 : vector<6x16xf32>
    %181 = arith.divf %179, %180 : vector<6x16xf32>
    %182 = arith.mulf %173, %98 : vector<6x16xf32>
    %183 = arith.mulf %167, %175 : vector<6x16xf32>
    %184 = arith.addf %182, %183 : vector<6x16xf32>
    %185 = math.tanh %184 : vector<6x16xf32>
    %186 = arith.mulf %181, %185 : vector<6x16xf32>
    %187 = vector.broadcast %156 : i32 to vector<6x1xi32>
    %188 = arith.cmpi sgt, %3, %187 : vector<6x1xi32>
    %189 = vector.shape_cast %188 : vector<6x1xi1> to vector<6x1xi1>
    %190 = vector.broadcast %189 : vector<6x1xi1> to vector<6x16xi1>
    %191 = arith.select %190, %186, %95 : vector<6x16xi1>, vector<6x16xf32>
    %192 = vector.shape_cast %188 : vector<6x1xi1> to vector<6x1xi1>
    %193 = vector.broadcast %192 : vector<6x1xi1> to vector<6x16xi1>
    %194 = arith.select %193, %184, %98 : vector<6x16xi1>, vector<6x16xf32>
    %cst_50 = arith.constant 0.000000e+00 : f32
    %195 = vector.shape_cast %188 : vector<6x1xi1> to vector<6x1xi1>
    %196 = vector.broadcast %195 : vector<6x1xi1> to vector<6x16xi1>
    %197 = vector.broadcast %cst_50 : f32 to vector<6x16xf32>
    %198 = arith.select %196, %186, %197 : vector<6x16xi1>, vector<6x16xf32>
    %199 = arith.index_cast %154 : i32 to index
    %c0_51 = arith.constant 0 : index
    %c0_52 = arith.constant 0 : index
    %200 = vector.load %arg8[%199, %c0_51, %c0_52] : memref<8x6x16xf32, #tpu.memory_space<vmem>>, vector<1x6x16xf32>
    %201 = vector.shape_cast %200 : vector<1x6x16xf32> to vector<6x16xf32>
    %202 = vector.shape_cast %198 : vector<6x16xf32> to vector<1x6x16xf32>
    tpu.vector_store %arg8[%199, %c0_51, %c0_52], %202 {strides = array<i32>} : memref<8x6x16xf32, #tpu.memory_space<vmem>>, vector<1x6x16xf32>,
    %c2_i32 = arith.constant 2 : i32
    %203 = arith.addi %6, %c2_i32 : i32
    %204 = arith.index_cast %c2_i32 : i32 to index
    %c0_53 = arith.constant 0 : index
    %c0_54 = arith.constant 0 : index
    %205 = vector.load %arg3[%204, %c0_53, %c0_54] : memref<8x6x64xf32, #tpu.memory_space<vmem>>, vector<1x6x64xf32>
    %206 = vector.shape_cast %205 : vector<1x6x64xf32> to vector<6x64xf32>
    %cst_55 = arith.constant dense<0.000000e+00> : vector<6x64xf32>
    %207 = tpu.matmul %142, %4, %cst_55 {dimension_numbers = #tpu.dot_dimension_numbers<[1], [0], [0], [1], [0, 0, 1, 1], [], []>} : vector<6x16xf32>, vector<16x64xf32>, vector<6x64xf32> -> vector<6x64xf32>
    %208 = arith.addf %206, %207 : vector<6x64xf32>
    %209 = vector.extract_strided_slice %208 {offsets = [0, 0], sizes = [6, 16], strides = [1, 1]} : vector<6x64xf32> to vector<6x16xf32>
    %210 = arith.negf %209 : vector<6x16xf32>
    %211 = math.exp %210 : vector<6x16xf32>
    %cst_56 = arith.constant 1.000000e+00 : f32
    %212 = vector.broadcast %cst_56 : f32 to vector<6x16xf32>
    %213 = arith.addf %212, %211 : vector<6x16xf32>
    %214 = arith.divf %212, %213 : vector<6x16xf32>
    %215 = vector.extract_strided_slice %208 {offsets = [0, 16], sizes = [6, 16], strides = [1, 1]} : vector<6x64xf32> to vector<6x16xf32>
    %216 = arith.negf %215 : vector<6x16xf32>
    %217 = math.exp %216 : vector<6x16xf32>
    %cst_57 = arith.constant 1.000000e+00 : f32
    %218 = vector.broadcast %cst_57 : f32 to vector<6x16xf32>
    %219 = arith.addf %218, %217 : vector<6x16xf32>
    %220 = arith.divf %218, %219 : vector<6x16xf32>
    %221 = vector.extract_strided_slice %208 {offsets = [0, 32], sizes = [6, 16], strides = [1, 1]} : vector<6x64xf32> to vector<6x16xf32>
    %222 = math.tanh %221 : vector<6x16xf32>
    %223 = vector.extract_strided_slice %208 {offsets = [0, 48], sizes = [6, 16], strides = [1, 1]} : vector<6x64xf32> to vector<6x16xf32>
    %224 = arith.negf %223 : vector<6x16xf32>
    %225 = math.exp %224 : vector<6x16xf32>
    %cst_58 = arith.constant 1.000000e+00 : f32
    %226 = vector.broadcast %cst_58 : f32 to vector<6x16xf32>
    %227 = arith.addf %226, %225 : vector<6x16xf32>
    %228 = arith.divf %226, %227 : vector<6x16xf32>
    %229 = arith.mulf %220, %145 : vector<6x16xf32>
    %230 = arith.mulf %214, %222 : vector<6x16xf32>
    %231 = arith.addf %229, %230 : vector<6x16xf32>
    %232 = math.tanh %231 : vector<6x16xf32>
    %233 = arith.mulf %228, %232 : vector<6x16xf32>
    %234 = vector.broadcast %203 : i32 to vector<6x1xi32>
    %235 = arith.cmpi sgt, %3, %234 : vector<6x1xi32>
    %236 = vector.shape_cast %235 : vector<6x1xi1> to vector<6x1xi1>
    %237 = vector.broadcast %236 : vector<6x1xi1> to vector<6x16xi1>
    %238 = arith.select %237, %233, %142 : vector<6x16xi1>, vector<6x16xf32>
    %239 = vector.shape_cast %235 : vector<6x1xi1> to vector<6x1xi1>
    %240 = vector.broadcast %239 : vector<6x1xi1> to vector<6x16xi1>
    %241 = arith.select %240, %231, %145 : vector<6x16xi1>, vector<6x16xf32>
    %cst_59 = arith.constant 0.000000e+00 : f32
    %242 = vector.shape_cast %235 : vector<6x1xi1> to vector<6x1xi1>
    %243 = vector.broadcast %242 : vector<6x1xi1> to vector<6x16xi1>
    %244 = vector.broadcast %cst_59 : f32 to vector<6x16xf32>
    %245 = arith.select %243, %233, %244 : vector<6x16xi1>, vector<6x16xf32>
    %246 = arith.index_cast %c2_i32 : i32 to index
    %c0_60 = arith.constant 0 : index
    %c0_61 = arith.constant 0 : index
    %247 = vector.load %arg7[%246, %c0_60, %c0_61] : memref<8x6x16xf32, #tpu.memory_space<vmem>>, vector<1x6x16xf32>
    %248 = vector.shape_cast %247 : vector<1x6x16xf32> to vector<6x16xf32>
    %249 = vector.shape_cast %245 : vector<6x16xf32> to vector<1x6x16xf32>
    tpu.vector_store %arg7[%246, %c0_60, %c0_61], %249 {strides = array<i32>} : memref<8x6x16xf32, #tpu.memory_space<vmem>>, vector<1x6x16xf32>,
    %c7_i32_62 = arith.constant 7 : i32
    %250 = arith.subi %c7_i32_62, %c2_i32 : i32
    %251 = arith.addi %6, %c2_i32 : i32
    %c7_i32_63 = arith.constant 7 : i32
    %252 = arith.subi %c7_i32_63, %251 : i32
    %253 = arith.index_cast %250 : i32 to index
    %c0_64 = arith.constant 0 : index
    %c0_65 = arith.constant 0 : index
    %254 = vector.load %arg4[%253, %c0_64, %c0_65] : memref<8x6x64xf32, #tpu.memory_space<vmem>>, vector<1x6x64xf32>
    %255 = vector.shape_cast %254 : vector<1x6x64xf32> to vector<6x64xf32>
    %cst_66 = arith.constant dense<0.000000e+00> : vector<6x64xf32>
    %256 = tpu.matmul %191, %5, %cst_66 {dimension_numbers = #tpu.dot_dimension_numbers<[1], [0], [0], [1], [0, 0, 1, 1], [], []>} : vector<6x16xf32>, vector<16x64xf32>, vector<6x64xf32> -> vector<6x64xf32>
    %257 = arith.addf %255, %256 : vector<6x64xf32>
    %258 = vector.extract_strided_slice %257 {offsets = [0, 0], sizes = [6, 16], strides = [1, 1]} : vector<6x64xf32> to vector<6x16xf32>
    %259 = arith.negf %258 : vector<6x16xf32>
    %260 = math.exp %259 : vector<6x16xf32>
    %cst_67 = arith.constant 1.000000e+00 : f32
    %261 = vector.broadcast %cst_67 : f32 to vector<6x16xf32>
    %262 = arith.addf %261, %260 : vector<6x16xf32>
    %263 = arith.divf %261, %262 : vector<6x16xf32>
    %264 = vector.extract_strided_slice %257 {offsets = [0, 16], sizes = [6, 16], strides = [1, 1]} : vector<6x64xf32> to vector<6x16xf32>
    %265 = arith.negf %264 : vector<6x16xf32>
    %266 = math.exp %265 : vector<6x16xf32>
    %cst_68 = arith.constant 1.000000e+00 : f32
    %267 = vector.broadcast %cst_68 : f32 to vector<6x16xf32>
    %268 = arith.addf %267, %266 : vector<6x16xf32>
    %269 = arith.divf %267, %268 : vector<6x16xf32>
    %270 = vector.extract_strided_slice %257 {offsets = [0, 32], sizes = [6, 16], strides = [1, 1]} : vector<6x64xf32> to vector<6x16xf32>
    %271 = math.tanh %270 : vector<6x16xf32>
    %272 = vector.extract_strided_slice %257 {offsets = [0, 48], sizes = [6, 16], strides = [1, 1]} : vector<6x64xf32> to vector<6x16xf32>
    %273 = arith.negf %272 : vector<6x16xf32>
    %274 = math.exp %273 : vector<6x16xf32>
    %cst_69 = arith.constant 1.000000e+00 : f32
    %275 = vector.broadcast %cst_69 : f32 to vector<6x16xf32>
    %276 = arith.addf %275, %274 : vector<6x16xf32>
    %277 = arith.divf %275, %276 : vector<6x16xf32>
    %278 = arith.mulf %269, %194 : vector<6x16xf32>
    %279 = arith.mulf %263, %271 : vector<6x16xf32>
    %280 = arith.addf %278, %279 : vector<6x16xf32>
    %281 = math.tanh %280 : vector<6x16xf32>
    %282 = arith.mulf %277, %281 : vector<6x16xf32>
    %283 = vector.broadcast %252 : i32 to vector<6x1xi32>
    %284 = arith.cmpi sgt, %3, %283 : vector<6x1xi32>
    %285 = vector.shape_cast %284 : vector<6x1xi1> to vector<6x1xi1>
    %286 = vector.broadcast %285 : vector<6x1xi1> to vector<6x16xi1>
    %287 = arith.select %286, %282, %191 : vector<6x16xi1>, vector<6x16xf32>
    %288 = vector.shape_cast %284 : vector<6x1xi1> to vector<6x1xi1>
    %289 = vector.broadcast %288 : vector<6x1xi1> to vector<6x16xi1>
    %290 = arith.select %289, %280, %194 : vector<6x16xi1>, vector<6x16xf32>
    %cst_70 = arith.constant 0.000000e+00 : f32
    %291 = vector.shape_cast %284 : vector<6x1xi1> to vector<6x1xi1>
    %292 = vector.broadcast %291 : vector<6x1xi1> to vector<6x16xi1>
    %293 = vector.broadcast %cst_70 : f32 to vector<6x16xf32>
    %294 = arith.select %292, %282, %293 : vector<6x16xi1>, vector<6x16xf32>
    %295 = arith.index_cast %250 : i32 to index
    %c0_71 = arith.constant 0 : index
    %c0_72 = arith.constant 0 : index
    %296 = vector.load %arg8[%295, %c0_71, %c0_72] : memref<8x6x16xf32, #tpu.memory_space<vmem>>, vector<1x6x16xf32>
    %297 = vector.shape_cast %296 : vector<1x6x16xf32> to vector<6x16xf32>
    %298 = vector.shape_cast %294 : vector<6x16xf32> to vector<1x6x16xf32>
    tpu.vector_store %arg8[%295, %c0_71, %c0_72], %298 {strides = array<i32>} : memref<8x6x16xf32, #tpu.memory_space<vmem>>, vector<1x6x16xf32>,
    %c3_i32 = arith.constant 3 : i32
    %299 = arith.addi %6, %c3_i32 : i32
    %300 = arith.index_cast %c3_i32 : i32 to index
    %c0_73 = arith.constant 0 : index
    %c0_74 = arith.constant 0 : index
    %301 = vector.load %arg3[%300, %c0_73, %c0_74] : memref<8x6x64xf32, #tpu.memory_space<vmem>>, vector<1x6x64xf32>
    %302 = vector.shape_cast %301 : vector<1x6x64xf32> to vector<6x64xf32>
    %cst_75 = arith.constant dense<0.000000e+00> : vector<6x64xf32>
    %303 = tpu.matmul %238, %4, %cst_75 {dimension_numbers = #tpu.dot_dimension_numbers<[1], [0], [0], [1], [0, 0, 1, 1], [], []>} : vector<6x16xf32>, vector<16x64xf32>, vector<6x64xf32> -> vector<6x64xf32>
    %304 = arith.addf %302, %303 : vector<6x64xf32>
    %305 = vector.extract_strided_slice %304 {offsets = [0, 0], sizes = [6, 16], strides = [1, 1]} : vector<6x64xf32> to vector<6x16xf32>
    %306 = arith.negf %305 : vector<6x16xf32>
    %307 = math.exp %306 : vector<6x16xf32>
    %cst_76 = arith.constant 1.000000e+00 : f32
    %308 = vector.broadcast %cst_76 : f32 to vector<6x16xf32>
    %309 = arith.addf %308, %307 : vector<6x16xf32>
    %310 = arith.divf %308, %309 : vector<6x16xf32>
    %311 = vector.extract_strided_slice %304 {offsets = [0, 16], sizes = [6, 16], strides = [1, 1]} : vector<6x64xf32> to vector<6x16xf32>
    %312 = arith.negf %311 : vector<6x16xf32>
    %313 = math.exp %312 : vector<6x16xf32>
    %cst_77 = arith.constant 1.000000e+00 : f32
    %314 = vector.broadcast %cst_77 : f32 to vector<6x16xf32>
    %315 = arith.addf %314, %313 : vector<6x16xf32>
    %316 = arith.divf %314, %315 : vector<6x16xf32>
    %317 = vector.extract_strided_slice %304 {offsets = [0, 32], sizes = [6, 16], strides = [1, 1]} : vector<6x64xf32> to vector<6x16xf32>
    %318 = math.tanh %317 : vector<6x16xf32>
    %319 = vector.extract_strided_slice %304 {offsets = [0, 48], sizes = [6, 16], strides = [1, 1]} : vector<6x64xf32> to vector<6x16xf32>
    %320 = arith.negf %319 : vector<6x16xf32>
    %321 = math.exp %320 : vector<6x16xf32>
    %cst_78 = arith.constant 1.000000e+00 : f32
    %322 = vector.broadcast %cst_78 : f32 to vector<6x16xf32>
    %323 = arith.addf %322, %321 : vector<6x16xf32>
    %324 = arith.divf %322, %323 : vector<6x16xf32>
    %325 = arith.mulf %316, %241 : vector<6x16xf32>
    %326 = arith.mulf %310, %318 : vector<6x16xf32>
    %327 = arith.addf %325, %326 : vector<6x16xf32>
    %328 = math.tanh %327 : vector<6x16xf32>
    %329 = arith.mulf %324, %328 : vector<6x16xf32>
    %330 = vector.broadcast %299 : i32 to vector<6x1xi32>
    %331 = arith.cmpi sgt, %3, %330 : vector<6x1xi32>
    %332 = vector.shape_cast %331 : vector<6x1xi1> to vector<6x1xi1>
    %333 = vector.broadcast %332 : vector<6x1xi1> to vector<6x16xi1>
    %334 = arith.select %333, %329, %238 : vector<6x16xi1>, vector<6x16xf32>
    %335 = vector.shape_cast %331 : vector<6x1xi1> to vector<6x1xi1>
    %336 = vector.broadcast %335 : vector<6x1xi1> to vector<6x16xi1>
    %337 = arith.select %336, %327, %241 : vector<6x16xi1>, vector<6x16xf32>
    %cst_79 = arith.constant 0.000000e+00 : f32
    %338 = vector.shape_cast %331 : vector<6x1xi1> to vector<6x1xi1>
    %339 = vector.broadcast %338 : vector<6x1xi1> to vector<6x16xi1>
    %340 = vector.broadcast %cst_79 : f32 to vector<6x16xf32>
    %341 = arith.select %339, %329, %340 : vector<6x16xi1>, vector<6x16xf32>
    %342 = arith.index_cast %c3_i32 : i32 to index
    %c0_80 = arith.constant 0 : index
    %c0_81 = arith.constant 0 : index
    %343 = vector.load %arg7[%342, %c0_80, %c0_81] : memref<8x6x16xf32, #tpu.memory_space<vmem>>, vector<1x6x16xf32>
    %344 = vector.shape_cast %343 : vector<1x6x16xf32> to vector<6x16xf32>
    %345 = vector.shape_cast %341 : vector<6x16xf32> to vector<1x6x16xf32>
    tpu.vector_store %arg7[%342, %c0_80, %c0_81], %345 {strides = array<i32>} : memref<8x6x16xf32, #tpu.memory_space<vmem>>, vector<1x6x16xf32>,
    %c7_i32_82 = arith.constant 7 : i32
    %346 = arith.subi %c7_i32_82, %c3_i32 : i32
    %347 = arith.addi %6, %c3_i32 : i32
    %c7_i32_83 = arith.constant 7 : i32
    %348 = arith.subi %c7_i32_83, %347 : i32
    %349 = arith.index_cast %346 : i32 to index
    %c0_84 = arith.constant 0 : index
    %c0_85 = arith.constant 0 : index
    %350 = vector.load %arg4[%349, %c0_84, %c0_85] : memref<8x6x64xf32, #tpu.memory_space<vmem>>, vector<1x6x64xf32>
    %351 = vector.shape_cast %350 : vector<1x6x64xf32> to vector<6x64xf32>
    %cst_86 = arith.constant dense<0.000000e+00> : vector<6x64xf32>
    %352 = tpu.matmul %287, %5, %cst_86 {dimension_numbers = #tpu.dot_dimension_numbers<[1], [0], [0], [1], [0, 0, 1, 1], [], []>} : vector<6x16xf32>, vector<16x64xf32>, vector<6x64xf32> -> vector<6x64xf32>
    %353 = arith.addf %351, %352 : vector<6x64xf32>
    %354 = vector.extract_strided_slice %353 {offsets = [0, 0], sizes = [6, 16], strides = [1, 1]} : vector<6x64xf32> to vector<6x16xf32>
    %355 = arith.negf %354 : vector<6x16xf32>
    %356 = math.exp %355 : vector<6x16xf32>
    %cst_87 = arith.constant 1.000000e+00 : f32
    %357 = vector.broadcast %cst_87 : f32 to vector<6x16xf32>
    %358 = arith.addf %357, %356 : vector<6x16xf32>
    %359 = arith.divf %357, %358 : vector<6x16xf32>
    %360 = vector.extract_strided_slice %353 {offsets = [0, 16], sizes = [6, 16], strides = [1, 1]} : vector<6x64xf32> to vector<6x16xf32>
    %361 = arith.negf %360 : vector<6x16xf32>
    %362 = math.exp %361 : vector<6x16xf32>
    %cst_88 = arith.constant 1.000000e+00 : f32
    %363 = vector.broadcast %cst_88 : f32 to vector<6x16xf32>
    %364 = arith.addf %363, %362 : vector<6x16xf32>
    %365 = arith.divf %363, %364 : vector<6x16xf32>
    %366 = vector.extract_strided_slice %353 {offsets = [0, 32], sizes = [6, 16], strides = [1, 1]} : vector<6x64xf32> to vector<6x16xf32>
    %367 = math.tanh %366 : vector<6x16xf32>
    %368 = vector.extract_strided_slice %353 {offsets = [0, 48], sizes = [6, 16], strides = [1, 1]} : vector<6x64xf32> to vector<6x16xf32>
    %369 = arith.negf %368 : vector<6x16xf32>
    %370 = math.exp %369 : vector<6x16xf32>
    %cst_89 = arith.constant 1.000000e+00 : f32
    %371 = vector.broadcast %cst_89 : f32 to vector<6x16xf32>
    %372 = arith.addf %371, %370 : vector<6x16xf32>
    %373 = arith.divf %371, %372 : vector<6x16xf32>
    %374 = arith.mulf %365, %290 : vector<6x16xf32>
    %375 = arith.mulf %359, %367 : vector<6x16xf32>
    %376 = arith.addf %374, %375 : vector<6x16xf32>
    %377 = math.tanh %376 : vector<6x16xf32>
    %378 = arith.mulf %373, %377 : vector<6x16xf32>
    %379 = vector.broadcast %348 : i32 to vector<6x1xi32>
    %380 = arith.cmpi sgt, %3, %379 : vector<6x1xi32>
    %381 = vector.shape_cast %380 : vector<6x1xi1> to vector<6x1xi1>
    %382 = vector.broadcast %381 : vector<6x1xi1> to vector<6x16xi1>
    %383 = arith.select %382, %378, %287 : vector<6x16xi1>, vector<6x16xf32>
    %384 = vector.shape_cast %380 : vector<6x1xi1> to vector<6x1xi1>
    %385 = vector.broadcast %384 : vector<6x1xi1> to vector<6x16xi1>
    %386 = arith.select %385, %376, %290 : vector<6x16xi1>, vector<6x16xf32>
    %cst_90 = arith.constant 0.000000e+00 : f32
    %387 = vector.shape_cast %380 : vector<6x1xi1> to vector<6x1xi1>
    %388 = vector.broadcast %387 : vector<6x1xi1> to vector<6x16xi1>
    %389 = vector.broadcast %cst_90 : f32 to vector<6x16xf32>
    %390 = arith.select %388, %378, %389 : vector<6x16xi1>, vector<6x16xf32>
    %391 = arith.index_cast %346 : i32 to index
    %c0_91 = arith.constant 0 : index
    %c0_92 = arith.constant 0 : index
    %392 = vector.load %arg8[%391, %c0_91, %c0_92] : memref<8x6x16xf32, #tpu.memory_space<vmem>>, vector<1x6x16xf32>
    %393 = vector.shape_cast %392 : vector<1x6x16xf32> to vector<6x16xf32>
    %394 = vector.shape_cast %390 : vector<6x16xf32> to vector<1x6x16xf32>
    tpu.vector_store %arg8[%391, %c0_91, %c0_92], %394 {strides = array<i32>} : memref<8x6x16xf32, #tpu.memory_space<vmem>>, vector<1x6x16xf32>,
    %c4_i32 = arith.constant 4 : i32
    %395 = arith.addi %6, %c4_i32 : i32
    %396 = arith.index_cast %c4_i32 : i32 to index
    %c0_93 = arith.constant 0 : index
    %c0_94 = arith.constant 0 : index
    %397 = vector.load %arg3[%396, %c0_93, %c0_94] : memref<8x6x64xf32, #tpu.memory_space<vmem>>, vector<1x6x64xf32>
    %398 = vector.shape_cast %397 : vector<1x6x64xf32> to vector<6x64xf32>
    %cst_95 = arith.constant dense<0.000000e+00> : vector<6x64xf32>
    %399 = tpu.matmul %334, %4, %cst_95 {dimension_numbers = #tpu.dot_dimension_numbers<[1], [0], [0], [1], [0, 0, 1, 1], [], []>} : vector<6x16xf32>, vector<16x64xf32>, vector<6x64xf32> -> vector<6x64xf32>
    %400 = arith.addf %398, %399 : vector<6x64xf32>
    %401 = vector.extract_strided_slice %400 {offsets = [0, 0], sizes = [6, 16], strides = [1, 1]} : vector<6x64xf32> to vector<6x16xf32>
    %402 = arith.negf %401 : vector<6x16xf32>
    %403 = math.exp %402 : vector<6x16xf32>
    %cst_96 = arith.constant 1.000000e+00 : f32
    %404 = vector.broadcast %cst_96 : f32 to vector<6x16xf32>
    %405 = arith.addf %404, %403 : vector<6x16xf32>
    %406 = arith.divf %404, %405 : vector<6x16xf32>
    %407 = vector.extract_strided_slice %400 {offsets = [0, 16], sizes = [6, 16], strides = [1, 1]} : vector<6x64xf32> to vector<6x16xf32>
    %408 = arith.negf %407 : vector<6x16xf32>
    %409 = math.exp %408 : vector<6x16xf32>
    %cst_97 = arith.constant 1.000000e+00 : f32
    %410 = vector.broadcast %cst_97 : f32 to vector<6x16xf32>
    %411 = arith.addf %410, %409 : vector<6x16xf32>
    %412 = arith.divf %410, %411 : vector<6x16xf32>
    %413 = vector.extract_strided_slice %400 {offsets = [0, 32], sizes = [6, 16], strides = [1, 1]} : vector<6x64xf32> to vector<6x16xf32>
    %414 = math.tanh %413 : vector<6x16xf32>
    %415 = vector.extract_strided_slice %400 {offsets = [0, 48], sizes = [6, 16], strides = [1, 1]} : vector<6x64xf32> to vector<6x16xf32>
    %416 = arith.negf %415 : vector<6x16xf32>
    %417 = math.exp %416 : vector<6x16xf32>
    %cst_98 = arith.constant 1.000000e+00 : f32
    %418 = vector.broadcast %cst_98 : f32 to vector<6x16xf32>
    %419 = arith.addf %418, %417 : vector<6x16xf32>
    %420 = arith.divf %418, %419 : vector<6x16xf32>
    %421 = arith.mulf %412, %337 : vector<6x16xf32>
    %422 = arith.mulf %406, %414 : vector<6x16xf32>
    %423 = arith.addf %421, %422 : vector<6x16xf32>
    %424 = math.tanh %423 : vector<6x16xf32>
    %425 = arith.mulf %420, %424 : vector<6x16xf32>
    %426 = vector.broadcast %395 : i32 to vector<6x1xi32>
    %427 = arith.cmpi sgt, %3, %426 : vector<6x1xi32>
    %428 = vector.shape_cast %427 : vector<6x1xi1> to vector<6x1xi1>
    %429 = vector.broadcast %428 : vector<6x1xi1> to vector<6x16xi1>
    %430 = arith.select %429, %425, %334 : vector<6x16xi1>, vector<6x16xf32>
    %431 = vector.shape_cast %427 : vector<6x1xi1> to vector<6x1xi1>
    %432 = vector.broadcast %431 : vector<6x1xi1> to vector<6x16xi1>
    %433 = arith.select %432, %423, %337 : vector<6x16xi1>, vector<6x16xf32>
    %cst_99 = arith.constant 0.000000e+00 : f32
    %434 = vector.shape_cast %427 : vector<6x1xi1> to vector<6x1xi1>
    %435 = vector.broadcast %434 : vector<6x1xi1> to vector<6x16xi1>
    %436 = vector.broadcast %cst_99 : f32 to vector<6x16xf32>
    %437 = arith.select %435, %425, %436 : vector<6x16xi1>, vector<6x16xf32>
    %438 = arith.index_cast %c4_i32 : i32 to index
    %c0_100 = arith.constant 0 : index
    %c0_101 = arith.constant 0 : index
    %439 = vector.load %arg7[%438, %c0_100, %c0_101] : memref<8x6x16xf32, #tpu.memory_space<vmem>>, vector<1x6x16xf32>
    %440 = vector.shape_cast %439 : vector<1x6x16xf32> to vector<6x16xf32>
    %441 = vector.shape_cast %437 : vector<6x16xf32> to vector<1x6x16xf32>
    tpu.vector_store %arg7[%438, %c0_100, %c0_101], %441 {strides = array<i32>} : memref<8x6x16xf32, #tpu.memory_space<vmem>>, vector<1x6x16xf32>,
    %c7_i32_102 = arith.constant 7 : i32
    %442 = arith.subi %c7_i32_102, %c4_i32 : i32
    %443 = arith.addi %6, %c4_i32 : i32
    %c7_i32_103 = arith.constant 7 : i32
    %444 = arith.subi %c7_i32_103, %443 : i32
    %445 = arith.index_cast %442 : i32 to index
    %c0_104 = arith.constant 0 : index
    %c0_105 = arith.constant 0 : index
    %446 = vector.load %arg4[%445, %c0_104, %c0_105] : memref<8x6x64xf32, #tpu.memory_space<vmem>>, vector<1x6x64xf32>
    %447 = vector.shape_cast %446 : vector<1x6x64xf32> to vector<6x64xf32>
    %cst_106 = arith.constant dense<0.000000e+00> : vector<6x64xf32>
    %448 = tpu.matmul %383, %5, %cst_106 {dimension_numbers = #tpu.dot_dimension_numbers<[1], [0], [0], [1], [0, 0, 1, 1], [], []>} : vector<6x16xf32>, vector<16x64xf32>, vector<6x64xf32> -> vector<6x64xf32>
    %449 = arith.addf %447, %448 : vector<6x64xf32>
    %450 = vector.extract_strided_slice %449 {offsets = [0, 0], sizes = [6, 16], strides = [1, 1]} : vector<6x64xf32> to vector<6x16xf32>
    %451 = arith.negf %450 : vector<6x16xf32>
    %452 = math.exp %451 : vector<6x16xf32>
    %cst_107 = arith.constant 1.000000e+00 : f32
    %453 = vector.broadcast %cst_107 : f32 to vector<6x16xf32>
    %454 = arith.addf %453, %452 : vector<6x16xf32>
    %455 = arith.divf %453, %454 : vector<6x16xf32>
    %456 = vector.extract_strided_slice %449 {offsets = [0, 16], sizes = [6, 16], strides = [1, 1]} : vector<6x64xf32> to vector<6x16xf32>
    %457 = arith.negf %456 : vector<6x16xf32>
    %458 = math.exp %457 : vector<6x16xf32>
    %cst_108 = arith.constant 1.000000e+00 : f32
    %459 = vector.broadcast %cst_108 : f32 to vector<6x16xf32>
    %460 = arith.addf %459, %458 : vector<6x16xf32>
    %461 = arith.divf %459, %460 : vector<6x16xf32>
    %462 = vector.extract_strided_slice %449 {offsets = [0, 32], sizes = [6, 16], strides = [1, 1]} : vector<6x64xf32> to vector<6x16xf32>
    %463 = math.tanh %462 : vector<6x16xf32>
    %464 = vector.extract_strided_slice %449 {offsets = [0, 48], sizes = [6, 16], strides = [1, 1]} : vector<6x64xf32> to vector<6x16xf32>
    %465 = arith.negf %464 : vector<6x16xf32>
    %466 = math.exp %465 : vector<6x16xf32>
    %cst_109 = arith.constant 1.000000e+00 : f32
    %467 = vector.broadcast %cst_109 : f32 to vector<6x16xf32>
    %468 = arith.addf %467, %466 : vector<6x16xf32>
    %469 = arith.divf %467, %468 : vector<6x16xf32>
    %470 = arith.mulf %461, %386 : vector<6x16xf32>
    %471 = arith.mulf %455, %463 : vector<6x16xf32>
    %472 = arith.addf %470, %471 : vector<6x16xf32>
    %473 = math.tanh %472 : vector<6x16xf32>
    %474 = arith.mulf %469, %473 : vector<6x16xf32>
    %475 = vector.broadcast %444 : i32 to vector<6x1xi32>
    %476 = arith.cmpi sgt, %3, %475 : vector<6x1xi32>
    %477 = vector.shape_cast %476 : vector<6x1xi1> to vector<6x1xi1>
    %478 = vector.broadcast %477 : vector<6x1xi1> to vector<6x16xi1>
    %479 = arith.select %478, %474, %383 : vector<6x16xi1>, vector<6x16xf32>
    %480 = vector.shape_cast %476 : vector<6x1xi1> to vector<6x1xi1>
    %481 = vector.broadcast %480 : vector<6x1xi1> to vector<6x16xi1>
    %482 = arith.select %481, %472, %386 : vector<6x16xi1>, vector<6x16xf32>
    %cst_110 = arith.constant 0.000000e+00 : f32
    %483 = vector.shape_cast %476 : vector<6x1xi1> to vector<6x1xi1>
    %484 = vector.broadcast %483 : vector<6x1xi1> to vector<6x16xi1>
    %485 = vector.broadcast %cst_110 : f32 to vector<6x16xf32>
    %486 = arith.select %484, %474, %485 : vector<6x16xi1>, vector<6x16xf32>
    %487 = arith.index_cast %442 : i32 to index
    %c0_111 = arith.constant 0 : index
    %c0_112 = arith.constant 0 : index
    %488 = vector.load %arg8[%487, %c0_111, %c0_112] : memref<8x6x16xf32, #tpu.memory_space<vmem>>, vector<1x6x16xf32>
    %489 = vector.shape_cast %488 : vector<1x6x16xf32> to vector<6x16xf32>
    %490 = vector.shape_cast %486 : vector<6x16xf32> to vector<1x6x16xf32>
    tpu.vector_store %arg8[%487, %c0_111, %c0_112], %490 {strides = array<i32>} : memref<8x6x16xf32, #tpu.memory_space<vmem>>, vector<1x6x16xf32>,
    %c5_i32 = arith.constant 5 : i32
    %491 = arith.addi %6, %c5_i32 : i32
    %492 = arith.index_cast %c5_i32 : i32 to index
    %c0_113 = arith.constant 0 : index
    %c0_114 = arith.constant 0 : index
    %493 = vector.load %arg3[%492, %c0_113, %c0_114] : memref<8x6x64xf32, #tpu.memory_space<vmem>>, vector<1x6x64xf32>
    %494 = vector.shape_cast %493 : vector<1x6x64xf32> to vector<6x64xf32>
    %cst_115 = arith.constant dense<0.000000e+00> : vector<6x64xf32>
    %495 = tpu.matmul %430, %4, %cst_115 {dimension_numbers = #tpu.dot_dimension_numbers<[1], [0], [0], [1], [0, 0, 1, 1], [], []>} : vector<6x16xf32>, vector<16x64xf32>, vector<6x64xf32> -> vector<6x64xf32>
    %496 = arith.addf %494, %495 : vector<6x64xf32>
    %497 = vector.extract_strided_slice %496 {offsets = [0, 0], sizes = [6, 16], strides = [1, 1]} : vector<6x64xf32> to vector<6x16xf32>
    %498 = arith.negf %497 : vector<6x16xf32>
    %499 = math.exp %498 : vector<6x16xf32>
    %cst_116 = arith.constant 1.000000e+00 : f32
    %500 = vector.broadcast %cst_116 : f32 to vector<6x16xf32>
    %501 = arith.addf %500, %499 : vector<6x16xf32>
    %502 = arith.divf %500, %501 : vector<6x16xf32>
    %503 = vector.extract_strided_slice %496 {offsets = [0, 16], sizes = [6, 16], strides = [1, 1]} : vector<6x64xf32> to vector<6x16xf32>
    %504 = arith.negf %503 : vector<6x16xf32>
    %505 = math.exp %504 : vector<6x16xf32>
    %cst_117 = arith.constant 1.000000e+00 : f32
    %506 = vector.broadcast %cst_117 : f32 to vector<6x16xf32>
    %507 = arith.addf %506, %505 : vector<6x16xf32>
    %508 = arith.divf %506, %507 : vector<6x16xf32>
    %509 = vector.extract_strided_slice %496 {offsets = [0, 32], sizes = [6, 16], strides = [1, 1]} : vector<6x64xf32> to vector<6x16xf32>
    %510 = math.tanh %509 : vector<6x16xf32>
    %511 = vector.extract_strided_slice %496 {offsets = [0, 48], sizes = [6, 16], strides = [1, 1]} : vector<6x64xf32> to vector<6x16xf32>
    %512 = arith.negf %511 : vector<6x16xf32>
    %513 = math.exp %512 : vector<6x16xf32>
    %cst_118 = arith.constant 1.000000e+00 : f32
    %514 = vector.broadcast %cst_118 : f32 to vector<6x16xf32>
    %515 = arith.addf %514, %513 : vector<6x16xf32>
    %516 = arith.divf %514, %515 : vector<6x16xf32>
    %517 = arith.mulf %508, %433 : vector<6x16xf32>
    %518 = arith.mulf %502, %510 : vector<6x16xf32>
    %519 = arith.addf %517, %518 : vector<6x16xf32>
    %520 = math.tanh %519 : vector<6x16xf32>
    %521 = arith.mulf %516, %520 : vector<6x16xf32>
    %522 = vector.broadcast %491 : i32 to vector<6x1xi32>
    %523 = arith.cmpi sgt, %3, %522 : vector<6x1xi32>
    %524 = vector.shape_cast %523 : vector<6x1xi1> to vector<6x1xi1>
    %525 = vector.broadcast %524 : vector<6x1xi1> to vector<6x16xi1>
    %526 = arith.select %525, %521, %430 : vector<6x16xi1>, vector<6x16xf32>
    %527 = vector.shape_cast %523 : vector<6x1xi1> to vector<6x1xi1>
    %528 = vector.broadcast %527 : vector<6x1xi1> to vector<6x16xi1>
    %529 = arith.select %528, %519, %433 : vector<6x16xi1>, vector<6x16xf32>
    %cst_119 = arith.constant 0.000000e+00 : f32
    %530 = vector.shape_cast %523 : vector<6x1xi1> to vector<6x1xi1>
    %531 = vector.broadcast %530 : vector<6x1xi1> to vector<6x16xi1>
    %532 = vector.broadcast %cst_119 : f32 to vector<6x16xf32>
    %533 = arith.select %531, %521, %532 : vector<6x16xi1>, vector<6x16xf32>
    %534 = arith.index_cast %c5_i32 : i32 to index
    %c0_120 = arith.constant 0 : index
    %c0_121 = arith.constant 0 : index
    %535 = vector.load %arg7[%534, %c0_120, %c0_121] : memref<8x6x16xf32, #tpu.memory_space<vmem>>, vector<1x6x16xf32>
    %536 = vector.shape_cast %535 : vector<1x6x16xf32> to vector<6x16xf32>
    %537 = vector.shape_cast %533 : vector<6x16xf32> to vector<1x6x16xf32>
    tpu.vector_store %arg7[%534, %c0_120, %c0_121], %537 {strides = array<i32>} : memref<8x6x16xf32, #tpu.memory_space<vmem>>, vector<1x6x16xf32>,
    %c7_i32_122 = arith.constant 7 : i32
    %538 = arith.subi %c7_i32_122, %c5_i32 : i32
    %539 = arith.addi %6, %c5_i32 : i32
    %c7_i32_123 = arith.constant 7 : i32
    %540 = arith.subi %c7_i32_123, %539 : i32
    %541 = arith.index_cast %538 : i32 to index
    %c0_124 = arith.constant 0 : index
    %c0_125 = arith.constant 0 : index
    %542 = vector.load %arg4[%541, %c0_124, %c0_125] : memref<8x6x64xf32, #tpu.memory_space<vmem>>, vector<1x6x64xf32>
    %543 = vector.shape_cast %542 : vector<1x6x64xf32> to vector<6x64xf32>
    %cst_126 = arith.constant dense<0.000000e+00> : vector<6x64xf32>
    %544 = tpu.matmul %479, %5, %cst_126 {dimension_numbers = #tpu.dot_dimension_numbers<[1], [0], [0], [1], [0, 0, 1, 1], [], []>} : vector<6x16xf32>, vector<16x64xf32>, vector<6x64xf32> -> vector<6x64xf32>
    %545 = arith.addf %543, %544 : vector<6x64xf32>
    %546 = vector.extract_strided_slice %545 {offsets = [0, 0], sizes = [6, 16], strides = [1, 1]} : vector<6x64xf32> to vector<6x16xf32>
    %547 = arith.negf %546 : vector<6x16xf32>
    %548 = math.exp %547 : vector<6x16xf32>
    %cst_127 = arith.constant 1.000000e+00 : f32
    %549 = vector.broadcast %cst_127 : f32 to vector<6x16xf32>
    %550 = arith.addf %549, %548 : vector<6x16xf32>
    %551 = arith.divf %549, %550 : vector<6x16xf32>
    %552 = vector.extract_strided_slice %545 {offsets = [0, 16], sizes = [6, 16], strides = [1, 1]} : vector<6x64xf32> to vector<6x16xf32>
    %553 = arith.negf %552 : vector<6x16xf32>
    %554 = math.exp %553 : vector<6x16xf32>
    %cst_128 = arith.constant 1.000000e+00 : f32
    %555 = vector.broadcast %cst_128 : f32 to vector<6x16xf32>
    %556 = arith.addf %555, %554 : vector<6x16xf32>
    %557 = arith.divf %555, %556 : vector<6x16xf32>
    %558 = vector.extract_strided_slice %545 {offsets = [0, 32], sizes = [6, 16], strides = [1, 1]} : vector<6x64xf32> to vector<6x16xf32>
    %559 = math.tanh %558 : vector<6x16xf32>
    %560 = vector.extract_strided_slice %545 {offsets = [0, 48], sizes = [6, 16], strides = [1, 1]} : vector<6x64xf32> to vector<6x16xf32>
    %561 = arith.negf %560 : vector<6x16xf32>
    %562 = math.exp %561 : vector<6x16xf32>
    %cst_129 = arith.constant 1.000000e+00 : f32
    %563 = vector.broadcast %cst_129 : f32 to vector<6x16xf32>
    %564 = arith.addf %563, %562 : vector<6x16xf32>
    %565 = arith.divf %563, %564 : vector<6x16xf32>
    %566 = arith.mulf %557, %482 : vector<6x16xf32>
    %567 = arith.mulf %551, %559 : vector<6x16xf32>
    %568 = arith.addf %566, %567 : vector<6x16xf32>
    %569 = math.tanh %568 : vector<6x16xf32>
    %570 = arith.mulf %565, %569 : vector<6x16xf32>
    %571 = vector.broadcast %540 : i32 to vector<6x1xi32>
    %572 = arith.cmpi sgt, %3, %571 : vector<6x1xi32>
    %573 = vector.shape_cast %572 : vector<6x1xi1> to vector<6x1xi1>
    %574 = vector.broadcast %573 : vector<6x1xi1> to vector<6x16xi1>
    %575 = arith.select %574, %570, %479 : vector<6x16xi1>, vector<6x16xf32>
    %576 = vector.shape_cast %572 : vector<6x1xi1> to vector<6x1xi1>
    %577 = vector.broadcast %576 : vector<6x1xi1> to vector<6x16xi1>
    %578 = arith.select %577, %568, %482 : vector<6x16xi1>, vector<6x16xf32>
    %cst_130 = arith.constant 0.000000e+00 : f32
    %579 = vector.shape_cast %572 : vector<6x1xi1> to vector<6x1xi1>
    %580 = vector.broadcast %579 : vector<6x1xi1> to vector<6x16xi1>
    %581 = vector.broadcast %cst_130 : f32 to vector<6x16xf32>
    %582 = arith.select %580, %570, %581 : vector<6x16xi1>, vector<6x16xf32>
    %583 = arith.index_cast %538 : i32 to index
    %c0_131 = arith.constant 0 : index
    %c0_132 = arith.constant 0 : index
    %584 = vector.load %arg8[%583, %c0_131, %c0_132] : memref<8x6x16xf32, #tpu.memory_space<vmem>>, vector<1x6x16xf32>
    %585 = vector.shape_cast %584 : vector<1x6x16xf32> to vector<6x16xf32>
    %586 = vector.shape_cast %582 : vector<6x16xf32> to vector<1x6x16xf32>
    tpu.vector_store %arg8[%583, %c0_131, %c0_132], %586 {strides = array<i32>} : memref<8x6x16xf32, #tpu.memory_space<vmem>>, vector<1x6x16xf32>,
    %c6_i32 = arith.constant 6 : i32
    %587 = arith.addi %6, %c6_i32 : i32
    %588 = arith.index_cast %c6_i32 : i32 to index
    %c0_133 = arith.constant 0 : index
    %c0_134 = arith.constant 0 : index
    %589 = vector.load %arg3[%588, %c0_133, %c0_134] : memref<8x6x64xf32, #tpu.memory_space<vmem>>, vector<1x6x64xf32>
    %590 = vector.shape_cast %589 : vector<1x6x64xf32> to vector<6x64xf32>
    %cst_135 = arith.constant dense<0.000000e+00> : vector<6x64xf32>
    %591 = tpu.matmul %526, %4, %cst_135 {dimension_numbers = #tpu.dot_dimension_numbers<[1], [0], [0], [1], [0, 0, 1, 1], [], []>} : vector<6x16xf32>, vector<16x64xf32>, vector<6x64xf32> -> vector<6x64xf32>
    %592 = arith.addf %590, %591 : vector<6x64xf32>
    %593 = vector.extract_strided_slice %592 {offsets = [0, 0], sizes = [6, 16], strides = [1, 1]} : vector<6x64xf32> to vector<6x16xf32>
    %594 = arith.negf %593 : vector<6x16xf32>
    %595 = math.exp %594 : vector<6x16xf32>
    %cst_136 = arith.constant 1.000000e+00 : f32
    %596 = vector.broadcast %cst_136 : f32 to vector<6x16xf32>
    %597 = arith.addf %596, %595 : vector<6x16xf32>
    %598 = arith.divf %596, %597 : vector<6x16xf32>
    %599 = vector.extract_strided_slice %592 {offsets = [0, 16], sizes = [6, 16], strides = [1, 1]} : vector<6x64xf32> to vector<6x16xf32>
    %600 = arith.negf %599 : vector<6x16xf32>
    %601 = math.exp %600 : vector<6x16xf32>
    %cst_137 = arith.constant 1.000000e+00 : f32
    %602 = vector.broadcast %cst_137 : f32 to vector<6x16xf32>
    %603 = arith.addf %602, %601 : vector<6x16xf32>
    %604 = arith.divf %602, %603 : vector<6x16xf32>
    %605 = vector.extract_strided_slice %592 {offsets = [0, 32], sizes = [6, 16], strides = [1, 1]} : vector<6x64xf32> to vector<6x16xf32>
    %606 = math.tanh %605 : vector<6x16xf32>
    %607 = vector.extract_strided_slice %592 {offsets = [0, 48], sizes = [6, 16], strides = [1, 1]} : vector<6x64xf32> to vector<6x16xf32>
    %608 = arith.negf %607 : vector<6x16xf32>
    %609 = math.exp %608 : vector<6x16xf32>
    %cst_138 = arith.constant 1.000000e+00 : f32
    %610 = vector.broadcast %cst_138 : f32 to vector<6x16xf32>
    %611 = arith.addf %610, %609 : vector<6x16xf32>
    %612 = arith.divf %610, %611 : vector<6x16xf32>
    %613 = arith.mulf %604, %529 : vector<6x16xf32>
    %614 = arith.mulf %598, %606 : vector<6x16xf32>
    %615 = arith.addf %613, %614 : vector<6x16xf32>
    %616 = math.tanh %615 : vector<6x16xf32>
    %617 = arith.mulf %612, %616 : vector<6x16xf32>
    %618 = vector.broadcast %587 : i32 to vector<6x1xi32>
    %619 = arith.cmpi sgt, %3, %618 : vector<6x1xi32>
    %620 = vector.shape_cast %619 : vector<6x1xi1> to vector<6x1xi1>
    %621 = vector.broadcast %620 : vector<6x1xi1> to vector<6x16xi1>
    %622 = arith.select %621, %617, %526 : vector<6x16xi1>, vector<6x16xf32>
    %623 = vector.shape_cast %619 : vector<6x1xi1> to vector<6x1xi1>
    %624 = vector.broadcast %623 : vector<6x1xi1> to vector<6x16xi1>
    %625 = arith.select %624, %615, %529 : vector<6x16xi1>, vector<6x16xf32>
    %cst_139 = arith.constant 0.000000e+00 : f32
    %626 = vector.shape_cast %619 : vector<6x1xi1> to vector<6x1xi1>
    %627 = vector.broadcast %626 : vector<6x1xi1> to vector<6x16xi1>
    %628 = vector.broadcast %cst_139 : f32 to vector<6x16xf32>
    %629 = arith.select %627, %617, %628 : vector<6x16xi1>, vector<6x16xf32>
    %630 = arith.index_cast %c6_i32 : i32 to index
    %c0_140 = arith.constant 0 : index
    %c0_141 = arith.constant 0 : index
    %631 = vector.load %arg7[%630, %c0_140, %c0_141] : memref<8x6x16xf32, #tpu.memory_space<vmem>>, vector<1x6x16xf32>
    %632 = vector.shape_cast %631 : vector<1x6x16xf32> to vector<6x16xf32>
    %633 = vector.shape_cast %629 : vector<6x16xf32> to vector<1x6x16xf32>
    tpu.vector_store %arg7[%630, %c0_140, %c0_141], %633 {strides = array<i32>} : memref<8x6x16xf32, #tpu.memory_space<vmem>>, vector<1x6x16xf32>,
    %c7_i32_142 = arith.constant 7 : i32
    %634 = arith.subi %c7_i32_142, %c6_i32 : i32
    %635 = arith.addi %6, %c6_i32 : i32
    %c7_i32_143 = arith.constant 7 : i32
    %636 = arith.subi %c7_i32_143, %635 : i32
    %637 = arith.index_cast %634 : i32 to index
    %c0_144 = arith.constant 0 : index
    %c0_145 = arith.constant 0 : index
    %638 = vector.load %arg4[%637, %c0_144, %c0_145] : memref<8x6x64xf32, #tpu.memory_space<vmem>>, vector<1x6x64xf32>
    %639 = vector.shape_cast %638 : vector<1x6x64xf32> to vector<6x64xf32>
    %cst_146 = arith.constant dense<0.000000e+00> : vector<6x64xf32>
    %640 = tpu.matmul %575, %5, %cst_146 {dimension_numbers = #tpu.dot_dimension_numbers<[1], [0], [0], [1], [0, 0, 1, 1], [], []>} : vector<6x16xf32>, vector<16x64xf32>, vector<6x64xf32> -> vector<6x64xf32>
    %641 = arith.addf %639, %640 : vector<6x64xf32>
    %642 = vector.extract_strided_slice %641 {offsets = [0, 0], sizes = [6, 16], strides = [1, 1]} : vector<6x64xf32> to vector<6x16xf32>
    %643 = arith.negf %642 : vector<6x16xf32>
    %644 = math.exp %643 : vector<6x16xf32>
    %cst_147 = arith.constant 1.000000e+00 : f32
    %645 = vector.broadcast %cst_147 : f32 to vector<6x16xf32>
    %646 = arith.addf %645, %644 : vector<6x16xf32>
    %647 = arith.divf %645, %646 : vector<6x16xf32>
    %648 = vector.extract_strided_slice %641 {offsets = [0, 16], sizes = [6, 16], strides = [1, 1]} : vector<6x64xf32> to vector<6x16xf32>
    %649 = arith.negf %648 : vector<6x16xf32>
    %650 = math.exp %649 : vector<6x16xf32>
    %cst_148 = arith.constant 1.000000e+00 : f32
    %651 = vector.broadcast %cst_148 : f32 to vector<6x16xf32>
    %652 = arith.addf %651, %650 : vector<6x16xf32>
    %653 = arith.divf %651, %652 : vector<6x16xf32>
    %654 = vector.extract_strided_slice %641 {offsets = [0, 32], sizes = [6, 16], strides = [1, 1]} : vector<6x64xf32> to vector<6x16xf32>
    %655 = math.tanh %654 : vector<6x16xf32>
    %656 = vector.extract_strided_slice %641 {offsets = [0, 48], sizes = [6, 16], strides = [1, 1]} : vector<6x64xf32> to vector<6x16xf32>
    %657 = arith.negf %656 : vector<6x16xf32>
    %658 = math.exp %657 : vector<6x16xf32>
    %cst_149 = arith.constant 1.000000e+00 : f32
    %659 = vector.broadcast %cst_149 : f32 to vector<6x16xf32>
    %660 = arith.addf %659, %658 : vector<6x16xf32>
    %661 = arith.divf %659, %660 : vector<6x16xf32>
    %662 = arith.mulf %653, %578 : vector<6x16xf32>
    %663 = arith.mulf %647, %655 : vector<6x16xf32>
    %664 = arith.addf %662, %663 : vector<6x16xf32>
    %665 = math.tanh %664 : vector<6x16xf32>
    %666 = arith.mulf %661, %665 : vector<6x16xf32>
    %667 = vector.broadcast %636 : i32 to vector<6x1xi32>
    %668 = arith.cmpi sgt, %3, %667 : vector<6x1xi32>
    %669 = vector.shape_cast %668 : vector<6x1xi1> to vector<6x1xi1>
    %670 = vector.broadcast %669 : vector<6x1xi1> to vector<6x16xi1>
    %671 = arith.select %670, %666, %575 : vector<6x16xi1>, vector<6x16xf32>
    %672 = vector.shape_cast %668 : vector<6x1xi1> to vector<6x1xi1>
    %673 = vector.broadcast %672 : vector<6x1xi1> to vector<6x16xi1>
    %674 = arith.select %673, %664, %578 : vector<6x16xi1>, vector<6x16xf32>
    %cst_150 = arith.constant 0.000000e+00 : f32
    %675 = vector.shape_cast %668 : vector<6x1xi1> to vector<6x1xi1>
    %676 = vector.broadcast %675 : vector<6x1xi1> to vector<6x16xi1>
    %677 = vector.broadcast %cst_150 : f32 to vector<6x16xf32>
    %678 = arith.select %676, %666, %677 : vector<6x16xi1>, vector<6x16xf32>
    %679 = arith.index_cast %634 : i32 to index
    %c0_151 = arith.constant 0 : index
    %c0_152 = arith.constant 0 : index
    %680 = vector.load %arg8[%679, %c0_151, %c0_152] : memref<8x6x16xf32, #tpu.memory_space<vmem>>, vector<1x6x16xf32>
    %681 = vector.shape_cast %680 : vector<1x6x16xf32> to vector<6x16xf32>
    %682 = vector.shape_cast %678 : vector<6x16xf32> to vector<1x6x16xf32>
    tpu.vector_store %arg8[%679, %c0_151, %c0_152], %682 {strides = array<i32>} : memref<8x6x16xf32, #tpu.memory_space<vmem>>, vector<1x6x16xf32>,
    %c7_i32_153 = arith.constant 7 : i32
    %683 = arith.addi %6, %c7_i32_153 : i32
    %684 = arith.index_cast %c7_i32_153 : i32 to index
    %c0_154 = arith.constant 0 : index
    %c0_155 = arith.constant 0 : index
    %685 = vector.load %arg3[%684, %c0_154, %c0_155] : memref<8x6x64xf32, #tpu.memory_space<vmem>>, vector<1x6x64xf32>
    %686 = vector.shape_cast %685 : vector<1x6x64xf32> to vector<6x64xf32>
    %cst_156 = arith.constant dense<0.000000e+00> : vector<6x64xf32>
    %687 = tpu.matmul %622, %4, %cst_156 {dimension_numbers = #tpu.dot_dimension_numbers<[1], [0], [0], [1], [0, 0, 1, 1], [], []>} : vector<6x16xf32>, vector<16x64xf32>, vector<6x64xf32> -> vector<6x64xf32>
    %688 = arith.addf %686, %687 : vector<6x64xf32>
    %689 = vector.extract_strided_slice %688 {offsets = [0, 0], sizes = [6, 16], strides = [1, 1]} : vector<6x64xf32> to vector<6x16xf32>
    %690 = arith.negf %689 : vector<6x16xf32>
    %691 = math.exp %690 : vector<6x16xf32>
    %cst_157 = arith.constant 1.000000e+00 : f32
    %692 = vector.broadcast %cst_157 : f32 to vector<6x16xf32>
    %693 = arith.addf %692, %691 : vector<6x16xf32>
    %694 = arith.divf %692, %693 : vector<6x16xf32>
    %695 = vector.extract_strided_slice %688 {offsets = [0, 16], sizes = [6, 16], strides = [1, 1]} : vector<6x64xf32> to vector<6x16xf32>
    %696 = arith.negf %695 : vector<6x16xf32>
    %697 = math.exp %696 : vector<6x16xf32>
    %cst_158 = arith.constant 1.000000e+00 : f32
    %698 = vector.broadcast %cst_158 : f32 to vector<6x16xf32>
    %699 = arith.addf %698, %697 : vector<6x16xf32>
    %700 = arith.divf %698, %699 : vector<6x16xf32>
    %701 = vector.extract_strided_slice %688 {offsets = [0, 32], sizes = [6, 16], strides = [1, 1]} : vector<6x64xf32> to vector<6x16xf32>
    %702 = math.tanh %701 : vector<6x16xf32>
    %703 = vector.extract_strided_slice %688 {offsets = [0, 48], sizes = [6, 16], strides = [1, 1]} : vector<6x64xf32> to vector<6x16xf32>
    %704 = arith.negf %703 : vector<6x16xf32>
    %705 = math.exp %704 : vector<6x16xf32>
    %cst_159 = arith.constant 1.000000e+00 : f32
    %706 = vector.broadcast %cst_159 : f32 to vector<6x16xf32>
    %707 = arith.addf %706, %705 : vector<6x16xf32>
    %708 = arith.divf %706, %707 : vector<6x16xf32>
    %709 = arith.mulf %700, %625 : vector<6x16xf32>
    %710 = arith.mulf %694, %702 : vector<6x16xf32>
    %711 = arith.addf %709, %710 : vector<6x16xf32>
    %712 = math.tanh %711 : vector<6x16xf32>
    %713 = arith.mulf %708, %712 : vector<6x16xf32>
    %714 = vector.broadcast %683 : i32 to vector<6x1xi32>
    %715 = arith.cmpi sgt, %3, %714 : vector<6x1xi32>
    %716 = vector.shape_cast %715 : vector<6x1xi1> to vector<6x1xi1>
    %717 = vector.broadcast %716 : vector<6x1xi1> to vector<6x16xi1>
    %718 = arith.select %717, %713, %622 : vector<6x16xi1>, vector<6x16xf32>
    %719 = vector.shape_cast %715 : vector<6x1xi1> to vector<6x1xi1>
    %720 = vector.broadcast %719 : vector<6x1xi1> to vector<6x16xi1>
    %721 = arith.select %720, %711, %625 : vector<6x16xi1>, vector<6x16xf32>
    %cst_160 = arith.constant 0.000000e+00 : f32
    %722 = vector.shape_cast %715 : vector<6x1xi1> to vector<6x1xi1>
    %723 = vector.broadcast %722 : vector<6x1xi1> to vector<6x16xi1>
    %724 = vector.broadcast %cst_160 : f32 to vector<6x16xf32>
    %725 = arith.select %723, %713, %724 : vector<6x16xi1>, vector<6x16xf32>
    %726 = arith.index_cast %c7_i32_153 : i32 to index
    %c0_161 = arith.constant 0 : index
    %c0_162 = arith.constant 0 : index
    %727 = vector.load %arg7[%726, %c0_161, %c0_162] : memref<8x6x16xf32, #tpu.memory_space<vmem>>, vector<1x6x16xf32>
    %728 = vector.shape_cast %727 : vector<1x6x16xf32> to vector<6x16xf32>
    %729 = vector.shape_cast %725 : vector<6x16xf32> to vector<1x6x16xf32>
    tpu.vector_store %arg7[%726, %c0_161, %c0_162], %729 {strides = array<i32>} : memref<8x6x16xf32, #tpu.memory_space<vmem>>, vector<1x6x16xf32>,
    %c7_i32_163 = arith.constant 7 : i32
    %730 = arith.subi %c7_i32_163, %c7_i32_153 : i32
    %731 = arith.addi %6, %c7_i32_153 : i32
    %c7_i32_164 = arith.constant 7 : i32
    %732 = arith.subi %c7_i32_164, %731 : i32
    %733 = arith.index_cast %730 : i32 to index
    %c0_165 = arith.constant 0 : index
    %c0_166 = arith.constant 0 : index
    %734 = vector.load %arg4[%733, %c0_165, %c0_166] : memref<8x6x64xf32, #tpu.memory_space<vmem>>, vector<1x6x64xf32>
    %735 = vector.shape_cast %734 : vector<1x6x64xf32> to vector<6x64xf32>
    %cst_167 = arith.constant dense<0.000000e+00> : vector<6x64xf32>
    %736 = tpu.matmul %671, %5, %cst_167 {dimension_numbers = #tpu.dot_dimension_numbers<[1], [0], [0], [1], [0, 0, 1, 1], [], []>} : vector<6x16xf32>, vector<16x64xf32>, vector<6x64xf32> -> vector<6x64xf32>
    %737 = arith.addf %735, %736 : vector<6x64xf32>
    %738 = vector.extract_strided_slice %737 {offsets = [0, 0], sizes = [6, 16], strides = [1, 1]} : vector<6x64xf32> to vector<6x16xf32>
    %739 = arith.negf %738 : vector<6x16xf32>
    %740 = math.exp %739 : vector<6x16xf32>
    %cst_168 = arith.constant 1.000000e+00 : f32
    %741 = vector.broadcast %cst_168 : f32 to vector<6x16xf32>
    %742 = arith.addf %741, %740 : vector<6x16xf32>
    %743 = arith.divf %741, %742 : vector<6x16xf32>
    %744 = vector.extract_strided_slice %737 {offsets = [0, 16], sizes = [6, 16], strides = [1, 1]} : vector<6x64xf32> to vector<6x16xf32>
    %745 = arith.negf %744 : vector<6x16xf32>
    %746 = math.exp %745 : vector<6x16xf32>
    %cst_169 = arith.constant 1.000000e+00 : f32
    %747 = vector.broadcast %cst_169 : f32 to vector<6x16xf32>
    %748 = arith.addf %747, %746 : vector<6x16xf32>
    %749 = arith.divf %747, %748 : vector<6x16xf32>
    %750 = vector.extract_strided_slice %737 {offsets = [0, 32], sizes = [6, 16], strides = [1, 1]} : vector<6x64xf32> to vector<6x16xf32>
    %751 = math.tanh %750 : vector<6x16xf32>
    %752 = vector.extract_strided_slice %737 {offsets = [0, 48], sizes = [6, 16], strides = [1, 1]} : vector<6x64xf32> to vector<6x16xf32>
    %753 = arith.negf %752 : vector<6x16xf32>
    %754 = math.exp %753 : vector<6x16xf32>
    %cst_170 = arith.constant 1.000000e+00 : f32
    %755 = vector.broadcast %cst_170 : f32 to vector<6x16xf32>
    %756 = arith.addf %755, %754 : vector<6x16xf32>
    %757 = arith.divf %755, %756 : vector<6x16xf32>
    %758 = arith.mulf %749, %674 : vector<6x16xf32>
    %759 = arith.mulf %743, %751 : vector<6x16xf32>
    %760 = arith.addf %758, %759 : vector<6x16xf32>
    %761 = math.tanh %760 : vector<6x16xf32>
    %762 = arith.mulf %757, %761 : vector<6x16xf32>
    %763 = vector.broadcast %732 : i32 to vector<6x1xi32>
    %764 = arith.cmpi sgt, %3, %763 : vector<6x1xi32>
    %765 = vector.shape_cast %764 : vector<6x1xi1> to vector<6x1xi1>
    %766 = vector.broadcast %765 : vector<6x1xi1> to vector<6x16xi1>
    %767 = arith.select %766, %762, %671 : vector<6x16xi1>, vector<6x16xf32>
    %768 = vector.shape_cast %764 : vector<6x1xi1> to vector<6x1xi1>
    %769 = vector.broadcast %768 : vector<6x1xi1> to vector<6x16xi1>
    %770 = arith.select %769, %760, %674 : vector<6x16xi1>, vector<6x16xf32>
    %cst_171 = arith.constant 0.000000e+00 : f32
    %771 = vector.shape_cast %764 : vector<6x1xi1> to vector<6x1xi1>
    %772 = vector.broadcast %771 : vector<6x1xi1> to vector<6x16xi1>
    %773 = vector.broadcast %cst_171 : f32 to vector<6x16xf32>
    %774 = arith.select %772, %762, %773 : vector<6x16xi1>, vector<6x16xf32>
    %775 = arith.index_cast %730 : i32 to index
    %c0_172 = arith.constant 0 : index
    %c0_173 = arith.constant 0 : index
    %776 = vector.load %arg8[%775, %c0_172, %c0_173] : memref<8x6x16xf32, #tpu.memory_space<vmem>>, vector<1x6x16xf32>
    %777 = vector.shape_cast %776 : vector<1x6x16xf32> to vector<6x16xf32>
    %778 = vector.shape_cast %774 : vector<6x16xf32> to vector<1x6x16xf32>
    tpu.vector_store %arg8[%775, %c0_172, %c0_173], %778 {strides = array<i32>} : memref<8x6x16xf32, #tpu.memory_space<vmem>>, vector<1x6x16xf32>,
    %c8_i32_174 = arith.constant 8 : i32
    %c0_175 = arith.constant 0 : index
    %c0_176 = arith.constant 0 : index
    %779 = vector.load %arg9[%c0_175, %c0_176] : memref<6x16xf32, #tpu.memory_space<vmem>>, vector<6x16xf32>
    tpu.vector_store %arg9[%c0_175, %c0_176], %718 {strides = array<i32>} : memref<6x16xf32, #tpu.memory_space<vmem>>, vector<6x16xf32>,
    %c0_177 = arith.constant 0 : index
    %c0_178 = arith.constant 0 : index
    %780 = vector.load %arg10[%c0_177, %c0_178] : memref<6x16xf32, #tpu.memory_space<vmem>>, vector<6x16xf32>
    tpu.vector_store %arg10[%c0_177, %c0_178], %721 {strides = array<i32>} : memref<6x16xf32, #tpu.memory_space<vmem>>, vector<6x16xf32>,
    %c0_179 = arith.constant 0 : index
    %c0_180 = arith.constant 0 : index
    %781 = vector.load %arg11[%c0_179, %c0_180] : memref<6x16xf32, #tpu.memory_space<vmem>>, vector<6x16xf32>
    tpu.vector_store %arg11[%c0_179, %c0_180], %767 {strides = array<i32>} : memref<6x16xf32, #tpu.memory_space<vmem>>, vector<6x16xf32>,
    %c0_181 = arith.constant 0 : index
    %c0_182 = arith.constant 0 : index
    %782 = vector.load %arg12[%c0_181, %c0_182] : memref<6x16xf32, #tpu.memory_space<vmem>>, vector<6x16xf32>
    tpu.vector_store %arg12[%c0_181, %c0_182], %770 {strides = array<i32>} : memref<6x16xf32, #tpu.memory_space<vmem>>, vector<6x16xf32>,
    return
  }
  func.func @transform_0(%arg0: i32, %arg1: i32) -> (i32, i32) {
    %c0_i32 = arith.constant 0 : i32
    %c0_i32_0 = arith.constant 0 : i32
    return %arg0, %c0_i32 : i32, i32
  }
  func.func @transform_1(%arg0: i32, %arg1: i32) -> (i32, i32, i32) {
    %c0_i32 = arith.constant 0 : i32
    %c0_i32_0 = arith.constant 0 : i32
    return %arg1, %arg0, %c0_i32 : i32, i32, i32
  }
  func.func @transform_2(%arg0: i32, %arg1: i32) -> (i32, i32, i32) {
    %c0_i32 = arith.constant 0 : i32
    %0 = arith.subi %c0_i32, %arg1 : i32
    %c0_i32_0 = arith.constant 0 : i32
    %c0_i32_1 = arith.constant 0 : i32
    return %0, %arg0, %c0_i32_0 : i32, i32, i32
  }
  func.func @transform_3(%arg0: i32, %arg1: i32) -> (i32, i32) {
    %c0_i32 = arith.constant 0 : i32
    %c0_i32_0 = arith.constant 0 : i32
    %c0_i32_1 = arith.constant 0 : i32
    return %c0_i32, %c0_i32_0 : i32, i32
  }
  func.func @transform_4(%arg0: i32, %arg1: i32) -> (i32, i32) {
    %c0_i32 = arith.constant 0 : i32
    %c0_i32_0 = arith.constant 0 : i32
    %c0_i32_1 = arith.constant 0 : i32
    return %c0_i32, %c0_i32_0 : i32, i32
  }
  func.func @transform_5(%arg0: i32, %arg1: i32) -> (i32, i32, i32) {
    %c0_i32 = arith.constant 0 : i32
    %c0_i32_0 = arith.constant 0 : i32
    return %arg1, %arg0, %c0_i32 : i32, i32, i32
  }
  func.func @transform_6(%arg0: i32, %arg1: i32) -> (i32, i32, i32) {
    %c0_i32 = arith.constant 0 : i32
    %0 = arith.subi %c0_i32, %arg1 : i32
    %c0_i32_0 = arith.constant 0 : i32
    %c0_i32_1 = arith.constant 0 : i32
    return %0, %arg0, %c0_i32_0 : i32, i32, i32
  }
}

module attributes {stable_mosaic.version = 11 : i64} {
  func.func @_multi_att_kernel(%arg0: i32, %arg1: memref<6x1xi32, #tpu.memory_space<vmem>>, %arg2: memref<8x6x16xf32, #tpu.memory_space<vmem>>, %arg3: memref<8x6x16xf32, #tpu.memory_space<vmem>>, %arg4: memref<16x16xf32, #tpu.memory_space<vmem>>, %arg5: memref<16x16xf32, #tpu.memory_space<vmem>>, %arg6: memref<16x2xf32, #tpu.memory_space<vmem>>, %arg7: memref<6x32xf32, #tpu.memory_space<vmem>>, %arg8: memref<8x6x2xf32, #tpu.memory_space<vmem>>) attributes {dimension_semantics = [#tpu.dimension_semantics<parallel>], iteration_bounds = array<i64: 1>, scalar_prefetch = 0 : i64, scratch_operands = 1 : i64, tpu.core_type = #tpu.core_type<tc>, window_params = [{transform_indices = @transform_0, window_bounds = array<i64: 6, 1>}, {transform_indices = @transform_1, window_bounds = array<i64: 8, 6, 16>}, {transform_indices = @transform_2, window_bounds = array<i64: 8, 6, 16>}, {pipeline_mode = #tpu.pipeline_mode<synchronous>, transform_indices = @transform_3, window_bounds = array<i64: 16, 16>}, {pipeline_mode = #tpu.pipeline_mode<synchronous>, transform_indices = @transform_4, window_bounds = array<i64: 16, 16>}, {pipeline_mode = #tpu.pipeline_mode<synchronous>, transform_indices = @transform_5, window_bounds = array<i64: 16, 2>}, {transform_indices = @transform_6, window_bounds = array<i64: 6, 32>}]} {
    %c0 = arith.constant 0 : index
    %c0_0 = arith.constant 0 : index
    %0 = vector.load %arg4[%c0, %c0_0] : memref<16x16xf32, #tpu.memory_space<vmem>>, vector<16x16xf32>
    %c0_1 = arith.constant 0 : index
    %c0_2 = arith.constant 0 : index
    %1 = vector.load %arg5[%c0_1, %c0_2] : memref<16x16xf32, #tpu.memory_space<vmem>>, vector<16x16xf32>
    %c0_3 = arith.constant 0 : index
    %c0_4 = arith.constant 0 : index
    %2 = vector.load %arg6[%c0_3, %c0_4] : memref<16x2xf32, #tpu.memory_space<vmem>>, vector<16x2xf32>
    %c0_i32 = arith.constant 0 : i32
    %3 = arith.index_cast %c0_i32 : i32 to index
    %c0_5 = arith.constant 0 : index
    %c0_6 = arith.constant 0 : index
    %4 = vector.load %arg2[%3, %c0_5, %c0_6] : memref<8x6x16xf32, #tpu.memory_space<vmem>>, vector<1x6x16xf32>
    %5 = vector.shape_cast %4 : vector<1x6x16xf32> to vector<6x16xf32>
    %cst = arith.constant dense<0.000000e+00> : vector<6x16xf32>
    %6 = tpu.matmul %5, %0, %cst {dimension_numbers = #tpu.dot_dimension_numbers<[1], [0], [0], [1], [0, 0, 1, 1], [], []>} : vector<6x16xf32>, vector<16x16xf32>, vector<6x16xf32> -> vector<6x16xf32>
    %7 = arith.index_cast %c0_i32 : i32 to index
    %c0_7 = arith.constant 0 : index
    %c0_8 = arith.constant 0 : index
    %8 = vector.load %arg3[%7, %c0_7, %c0_8] : memref<8x6x16xf32, #tpu.memory_space<vmem>>, vector<1x6x16xf32>
    %9 = vector.shape_cast %8 : vector<1x6x16xf32> to vector<6x16xf32>
    %cst_9 = arith.constant dense<0.000000e+00> : vector<6x16xf32>
    %10 = tpu.matmul %9, %1, %cst_9 {dimension_numbers = #tpu.dot_dimension_numbers<[1], [0], [0], [1], [0, 0, 1, 1], [], []>} : vector<6x16xf32>, vector<16x16xf32>, vector<6x16xf32> -> vector<6x16xf32>
    %11 = arith.addf %6, %10 : vector<6x16xf32>
    %12 = math.tanh %11 : vector<6x16xf32>
    %cst_10 = arith.constant dense<0.000000e+00> : vector<6x2xf32>
    %13 = tpu.matmul %12, %2, %cst_10 {dimension_numbers = #tpu.dot_dimension_numbers<[1], [0], [0], [1], [0, 0, 1, 1], [], []>} : vector<6x16xf32>, vector<16x2xf32>, vector<6x2xf32> -> vector<6x2xf32>
    %14 = arith.index_cast %c0_i32 : i32 to index
    %c0_11 = arith.constant 0 : index
    %c0_12 = arith.constant 0 : index
    %15 = vector.load %arg8[%14, %c0_11, %c0_12] : memref<8x6x2xf32, #tpu.memory_space<vmem>>, vector<1x6x2xf32>
    %16 = vector.shape_cast %15 : vector<1x6x2xf32> to vector<6x2xf32>
    %17 = vector.shape_cast %13 : vector<6x2xf32> to vector<1x6x2xf32>
    tpu.vector_store %arg8[%14, %c0_11, %c0_12], %17 {strides = array<i32>} : memref<8x6x2xf32, #tpu.memory_space<vmem>>, vector<1x6x2xf32>,
    %c1_i32 = arith.constant 1 : i32
    %18 = arith.index_cast %c1_i32 : i32 to index
    %c0_13 = arith.constant 0 : index
    %c0_14 = arith.constant 0 : index
    %19 = vector.load %arg2[%18, %c0_13, %c0_14] : memref<8x6x16xf32, #tpu.memory_space<vmem>>, vector<1x6x16xf32>
    %20 = vector.shape_cast %19 : vector<1x6x16xf32> to vector<6x16xf32>
    %cst_15 = arith.constant dense<0.000000e+00> : vector<6x16xf32>
    %21 = tpu.matmul %20, %0, %cst_15 {dimension_numbers = #tpu.dot_dimension_numbers<[1], [0], [0], [1], [0, 0, 1, 1], [], []>} : vector<6x16xf32>, vector<16x16xf32>, vector<6x16xf32> -> vector<6x16xf32>
    %22 = arith.index_cast %c1_i32 : i32 to index
    %c0_16 = arith.constant 0 : index
    %c0_17 = arith.constant 0 : index
    %23 = vector.load %arg3[%22, %c0_16, %c0_17] : memref<8x6x16xf32, #tpu.memory_space<vmem>>, vector<1x6x16xf32>
    %24 = vector.shape_cast %23 : vector<1x6x16xf32> to vector<6x16xf32>
    %cst_18 = arith.constant dense<0.000000e+00> : vector<6x16xf32>
    %25 = tpu.matmul %24, %1, %cst_18 {dimension_numbers = #tpu.dot_dimension_numbers<[1], [0], [0], [1], [0, 0, 1, 1], [], []>} : vector<6x16xf32>, vector<16x16xf32>, vector<6x16xf32> -> vector<6x16xf32>
    %26 = arith.addf %21, %25 : vector<6x16xf32>
    %27 = math.tanh %26 : vector<6x16xf32>
    %cst_19 = arith.constant dense<0.000000e+00> : vector<6x2xf32>
    %28 = tpu.matmul %27, %2, %cst_19 {dimension_numbers = #tpu.dot_dimension_numbers<[1], [0], [0], [1], [0, 0, 1, 1], [], []>} : vector<6x16xf32>, vector<16x2xf32>, vector<6x2xf32> -> vector<6x2xf32>
    %29 = arith.index_cast %c1_i32 : i32 to index
    %c0_20 = arith.constant 0 : index
    %c0_21 = arith.constant 0 : index
    %30 = vector.load %arg8[%29, %c0_20, %c0_21] : memref<8x6x2xf32, #tpu.memory_space<vmem>>, vector<1x6x2xf32>
    %31 = vector.shape_cast %30 : vector<1x6x2xf32> to vector<6x2xf32>
    %32 = vector.shape_cast %28 : vector<6x2xf32> to vector<1x6x2xf32>
    tpu.vector_store %arg8[%29, %c0_20, %c0_21], %32 {strides = array<i32>} : memref<8x6x2xf32, #tpu.memory_space<vmem>>, vector<1x6x2xf32>,
    %c2_i32 = arith.constant 2 : i32
    %33 = arith.index_cast %c2_i32 : i32 to index
    %c0_22 = arith.constant 0 : index
    %c0_23 = arith.constant 0 : index
    %34 = vector.load %arg2[%33, %c0_22, %c0_23] : memref<8x6x16xf32, #tpu.memory_space<vmem>>, vector<1x6x16xf32>
    %35 = vector.shape_cast %34 : vector<1x6x16xf32> to vector<6x16xf32>
    %cst_24 = arith.constant dense<0.000000e+00> : vector<6x16xf32>
    %36 = tpu.matmul %35, %0, %cst_24 {dimension_numbers = #tpu.dot_dimension_numbers<[1], [0], [0], [1], [0, 0, 1, 1], [], []>} : vector<6x16xf32>, vector<16x16xf32>, vector<6x16xf32> -> vector<6x16xf32>
    %37 = arith.index_cast %c2_i32 : i32 to index
    %c0_25 = arith.constant 0 : index
    %c0_26 = arith.constant 0 : index
    %38 = vector.load %arg3[%37, %c0_25, %c0_26] : memref<8x6x16xf32, #tpu.memory_space<vmem>>, vector<1x6x16xf32>
    %39 = vector.shape_cast %38 : vector<1x6x16xf32> to vector<6x16xf32>
    %cst_27 = arith.constant dense<0.000000e+00> : vector<6x16xf32>
    %40 = tpu.matmul %39, %1, %cst_27 {dimension_numbers = #tpu.dot_dimension_numbers<[1], [0], [0], [1], [0, 0, 1, 1], [], []>} : vector<6x16xf32>, vector<16x16xf32>, vector<6x16xf32> -> vector<6x16xf32>
    %41 = arith.addf %36, %40 : vector<6x16xf32>
    %42 = math.tanh %41 : vector<6x16xf32>
    %cst_28 = arith.constant dense<0.000000e+00> : vector<6x2xf32>
    %43 = tpu.matmul %42, %2, %cst_28 {dimension_numbers = #tpu.dot_dimension_numbers<[1], [0], [0], [1], [0, 0, 1, 1], [], []>} : vector<6x16xf32>, vector<16x2xf32>, vector<6x2xf32> -> vector<6x2xf32>
    %44 = arith.index_cast %c2_i32 : i32 to index
    %c0_29 = arith.constant 0 : index
    %c0_30 = arith.constant 0 : index
    %45 = vector.load %arg8[%44, %c0_29, %c0_30] : memref<8x6x2xf32, #tpu.memory_space<vmem>>, vector<1x6x2xf32>
    %46 = vector.shape_cast %45 : vector<1x6x2xf32> to vector<6x2xf32>
    %47 = vector.shape_cast %43 : vector<6x2xf32> to vector<1x6x2xf32>
    tpu.vector_store %arg8[%44, %c0_29, %c0_30], %47 {strides = array<i32>} : memref<8x6x2xf32, #tpu.memory_space<vmem>>, vector<1x6x2xf32>,
    %c3_i32 = arith.constant 3 : i32
    %48 = arith.index_cast %c3_i32 : i32 to index
    %c0_31 = arith.constant 0 : index
    %c0_32 = arith.constant 0 : index
    %49 = vector.load %arg2[%48, %c0_31, %c0_32] : memref<8x6x16xf32, #tpu.memory_space<vmem>>, vector<1x6x16xf32>
    %50 = vector.shape_cast %49 : vector<1x6x16xf32> to vector<6x16xf32>
    %cst_33 = arith.constant dense<0.000000e+00> : vector<6x16xf32>
    %51 = tpu.matmul %50, %0, %cst_33 {dimension_numbers = #tpu.dot_dimension_numbers<[1], [0], [0], [1], [0, 0, 1, 1], [], []>} : vector<6x16xf32>, vector<16x16xf32>, vector<6x16xf32> -> vector<6x16xf32>
    %52 = arith.index_cast %c3_i32 : i32 to index
    %c0_34 = arith.constant 0 : index
    %c0_35 = arith.constant 0 : index
    %53 = vector.load %arg3[%52, %c0_34, %c0_35] : memref<8x6x16xf32, #tpu.memory_space<vmem>>, vector<1x6x16xf32>
    %54 = vector.shape_cast %53 : vector<1x6x16xf32> to vector<6x16xf32>
    %cst_36 = arith.constant dense<0.000000e+00> : vector<6x16xf32>
    %55 = tpu.matmul %54, %1, %cst_36 {dimension_numbers = #tpu.dot_dimension_numbers<[1], [0], [0], [1], [0, 0, 1, 1], [], []>} : vector<6x16xf32>, vector<16x16xf32>, vector<6x16xf32> -> vector<6x16xf32>
    %56 = arith.addf %51, %55 : vector<6x16xf32>
    %57 = math.tanh %56 : vector<6x16xf32>
    %cst_37 = arith.constant dense<0.000000e+00> : vector<6x2xf32>
    %58 = tpu.matmul %57, %2, %cst_37 {dimension_numbers = #tpu.dot_dimension_numbers<[1], [0], [0], [1], [0, 0, 1, 1], [], []>} : vector<6x16xf32>, vector<16x2xf32>, vector<6x2xf32> -> vector<6x2xf32>
    %59 = arith.index_cast %c3_i32 : i32 to index
    %c0_38 = arith.constant 0 : index
    %c0_39 = arith.constant 0 : index
    %60 = vector.load %arg8[%59, %c0_38, %c0_39] : memref<8x6x2xf32, #tpu.memory_space<vmem>>, vector<1x6x2xf32>
    %61 = vector.shape_cast %60 : vector<1x6x2xf32> to vector<6x2xf32>
    %62 = vector.shape_cast %58 : vector<6x2xf32> to vector<1x6x2xf32>
    tpu.vector_store %arg8[%59, %c0_38, %c0_39], %62 {strides = array<i32>} : memref<8x6x2xf32, #tpu.memory_space<vmem>>, vector<1x6x2xf32>,
    %c4_i32 = arith.constant 4 : i32
    %63 = arith.index_cast %c4_i32 : i32 to index
    %c0_40 = arith.constant 0 : index
    %c0_41 = arith.constant 0 : index
    %64 = vector.load %arg2[%63, %c0_40, %c0_41] : memref<8x6x16xf32, #tpu.memory_space<vmem>>, vector<1x6x16xf32>
    %65 = vector.shape_cast %64 : vector<1x6x16xf32> to vector<6x16xf32>
    %cst_42 = arith.constant dense<0.000000e+00> : vector<6x16xf32>
    %66 = tpu.matmul %65, %0, %cst_42 {dimension_numbers = #tpu.dot_dimension_numbers<[1], [0], [0], [1], [0, 0, 1, 1], [], []>} : vector<6x16xf32>, vector<16x16xf32>, vector<6x16xf32> -> vector<6x16xf32>
    %67 = arith.index_cast %c4_i32 : i32 to index
    %c0_43 = arith.constant 0 : index
    %c0_44 = arith.constant 0 : index
    %68 = vector.load %arg3[%67, %c0_43, %c0_44] : memref<8x6x16xf32, #tpu.memory_space<vmem>>, vector<1x6x16xf32>
    %69 = vector.shape_cast %68 : vector<1x6x16xf32> to vector<6x16xf32>
    %cst_45 = arith.constant dense<0.000000e+00> : vector<6x16xf32>
    %70 = tpu.matmul %69, %1, %cst_45 {dimension_numbers = #tpu.dot_dimension_numbers<[1], [0], [0], [1], [0, 0, 1, 1], [], []>} : vector<6x16xf32>, vector<16x16xf32>, vector<6x16xf32> -> vector<6x16xf32>
    %71 = arith.addf %66, %70 : vector<6x16xf32>
    %72 = math.tanh %71 : vector<6x16xf32>
    %cst_46 = arith.constant dense<0.000000e+00> : vector<6x2xf32>
    %73 = tpu.matmul %72, %2, %cst_46 {dimension_numbers = #tpu.dot_dimension_numbers<[1], [0], [0], [1], [0, 0, 1, 1], [], []>} : vector<6x16xf32>, vector<16x2xf32>, vector<6x2xf32> -> vector<6x2xf32>
    %74 = arith.index_cast %c4_i32 : i32 to index
    %c0_47 = arith.constant 0 : index
    %c0_48 = arith.constant 0 : index
    %75 = vector.load %arg8[%74, %c0_47, %c0_48] : memref<8x6x2xf32, #tpu.memory_space<vmem>>, vector<1x6x2xf32>
    %76 = vector.shape_cast %75 : vector<1x6x2xf32> to vector<6x2xf32>
    %77 = vector.shape_cast %73 : vector<6x2xf32> to vector<1x6x2xf32>
    tpu.vector_store %arg8[%74, %c0_47, %c0_48], %77 {strides = array<i32>} : memref<8x6x2xf32, #tpu.memory_space<vmem>>, vector<1x6x2xf32>,
    %c5_i32 = arith.constant 5 : i32
    %78 = arith.index_cast %c5_i32 : i32 to index
    %c0_49 = arith.constant 0 : index
    %c0_50 = arith.constant 0 : index
    %79 = vector.load %arg2[%78, %c0_49, %c0_50] : memref<8x6x16xf32, #tpu.memory_space<vmem>>, vector<1x6x16xf32>
    %80 = vector.shape_cast %79 : vector<1x6x16xf32> to vector<6x16xf32>
    %cst_51 = arith.constant dense<0.000000e+00> : vector<6x16xf32>
    %81 = tpu.matmul %80, %0, %cst_51 {dimension_numbers = #tpu.dot_dimension_numbers<[1], [0], [0], [1], [0, 0, 1, 1], [], []>} : vector<6x16xf32>, vector<16x16xf32>, vector<6x16xf32> -> vector<6x16xf32>
    %82 = arith.index_cast %c5_i32 : i32 to index
    %c0_52 = arith.constant 0 : index
    %c0_53 = arith.constant 0 : index
    %83 = vector.load %arg3[%82, %c0_52, %c0_53] : memref<8x6x16xf32, #tpu.memory_space<vmem>>, vector<1x6x16xf32>
    %84 = vector.shape_cast %83 : vector<1x6x16xf32> to vector<6x16xf32>
    %cst_54 = arith.constant dense<0.000000e+00> : vector<6x16xf32>
    %85 = tpu.matmul %84, %1, %cst_54 {dimension_numbers = #tpu.dot_dimension_numbers<[1], [0], [0], [1], [0, 0, 1, 1], [], []>} : vector<6x16xf32>, vector<16x16xf32>, vector<6x16xf32> -> vector<6x16xf32>
    %86 = arith.addf %81, %85 : vector<6x16xf32>
    %87 = math.tanh %86 : vector<6x16xf32>
    %cst_55 = arith.constant dense<0.000000e+00> : vector<6x2xf32>
    %88 = tpu.matmul %87, %2, %cst_55 {dimension_numbers = #tpu.dot_dimension_numbers<[1], [0], [0], [1], [0, 0, 1, 1], [], []>} : vector<6x16xf32>, vector<16x2xf32>, vector<6x2xf32> -> vector<6x2xf32>
    %89 = arith.index_cast %c5_i32 : i32 to index
    %c0_56 = arith.constant 0 : index
    %c0_57 = arith.constant 0 : index
    %90 = vector.load %arg8[%89, %c0_56, %c0_57] : memref<8x6x2xf32, #tpu.memory_space<vmem>>, vector<1x6x2xf32>
    %91 = vector.shape_cast %90 : vector<1x6x2xf32> to vector<6x2xf32>
    %92 = vector.shape_cast %88 : vector<6x2xf32> to vector<1x6x2xf32>
    tpu.vector_store %arg8[%89, %c0_56, %c0_57], %92 {strides = array<i32>} : memref<8x6x2xf32, #tpu.memory_space<vmem>>, vector<1x6x2xf32>,
    %c6_i32 = arith.constant 6 : i32
    %93 = arith.index_cast %c6_i32 : i32 to index
    %c0_58 = arith.constant 0 : index
    %c0_59 = arith.constant 0 : index
    %94 = vector.load %arg2[%93, %c0_58, %c0_59] : memref<8x6x16xf32, #tpu.memory_space<vmem>>, vector<1x6x16xf32>
    %95 = vector.shape_cast %94 : vector<1x6x16xf32> to vector<6x16xf32>
    %cst_60 = arith.constant dense<0.000000e+00> : vector<6x16xf32>
    %96 = tpu.matmul %95, %0, %cst_60 {dimension_numbers = #tpu.dot_dimension_numbers<[1], [0], [0], [1], [0, 0, 1, 1], [], []>} : vector<6x16xf32>, vector<16x16xf32>, vector<6x16xf32> -> vector<6x16xf32>
    %97 = arith.index_cast %c6_i32 : i32 to index
    %c0_61 = arith.constant 0 : index
    %c0_62 = arith.constant 0 : index
    %98 = vector.load %arg3[%97, %c0_61, %c0_62] : memref<8x6x16xf32, #tpu.memory_space<vmem>>, vector<1x6x16xf32>
    %99 = vector.shape_cast %98 : vector<1x6x16xf32> to vector<6x16xf32>
    %cst_63 = arith.constant dense<0.000000e+00> : vector<6x16xf32>
    %100 = tpu.matmul %99, %1, %cst_63 {dimension_numbers = #tpu.dot_dimension_numbers<[1], [0], [0], [1], [0, 0, 1, 1], [], []>} : vector<6x16xf32>, vector<16x16xf32>, vector<6x16xf32> -> vector<6x16xf32>
    %101 = arith.addf %96, %100 : vector<6x16xf32>
    %102 = math.tanh %101 : vector<6x16xf32>
    %cst_64 = arith.constant dense<0.000000e+00> : vector<6x2xf32>
    %103 = tpu.matmul %102, %2, %cst_64 {dimension_numbers = #tpu.dot_dimension_numbers<[1], [0], [0], [1], [0, 0, 1, 1], [], []>} : vector<6x16xf32>, vector<16x2xf32>, vector<6x2xf32> -> vector<6x2xf32>
    %104 = arith.index_cast %c6_i32 : i32 to index
    %c0_65 = arith.constant 0 : index
    %c0_66 = arith.constant 0 : index
    %105 = vector.load %arg8[%104, %c0_65, %c0_66] : memref<8x6x2xf32, #tpu.memory_space<vmem>>, vector<1x6x2xf32>
    %106 = vector.shape_cast %105 : vector<1x6x2xf32> to vector<6x2xf32>
    %107 = vector.shape_cast %103 : vector<6x2xf32> to vector<1x6x2xf32>
    tpu.vector_store %arg8[%104, %c0_65, %c0_66], %107 {strides = array<i32>} : memref<8x6x2xf32, #tpu.memory_space<vmem>>, vector<1x6x2xf32>,
    %c7_i32 = arith.constant 7 : i32
    %108 = arith.index_cast %c7_i32 : i32 to index
    %c0_67 = arith.constant 0 : index
    %c0_68 = arith.constant 0 : index
    %109 = vector.load %arg2[%108, %c0_67, %c0_68] : memref<8x6x16xf32, #tpu.memory_space<vmem>>, vector<1x6x16xf32>
    %110 = vector.shape_cast %109 : vector<1x6x16xf32> to vector<6x16xf32>
    %cst_69 = arith.constant dense<0.000000e+00> : vector<6x16xf32>
    %111 = tpu.matmul %110, %0, %cst_69 {dimension_numbers = #tpu.dot_dimension_numbers<[1], [0], [0], [1], [0, 0, 1, 1], [], []>} : vector<6x16xf32>, vector<16x16xf32>, vector<6x16xf32> -> vector<6x16xf32>
    %112 = arith.index_cast %c7_i32 : i32 to index
    %c0_70 = arith.constant 0 : index
    %c0_71 = arith.constant 0 : index
    %113 = vector.load %arg3[%112, %c0_70, %c0_71] : memref<8x6x16xf32, #tpu.memory_space<vmem>>, vector<1x6x16xf32>
    %114 = vector.shape_cast %113 : vector<1x6x16xf32> to vector<6x16xf32>
    %cst_72 = arith.constant dense<0.000000e+00> : vector<6x16xf32>
    %115 = tpu.matmul %114, %1, %cst_72 {dimension_numbers = #tpu.dot_dimension_numbers<[1], [0], [0], [1], [0, 0, 1, 1], [], []>} : vector<6x16xf32>, vector<16x16xf32>, vector<6x16xf32> -> vector<6x16xf32>
    %116 = arith.addf %111, %115 : vector<6x16xf32>
    %117 = math.tanh %116 : vector<6x16xf32>
    %cst_73 = arith.constant dense<0.000000e+00> : vector<6x2xf32>
    %118 = tpu.matmul %117, %2, %cst_73 {dimension_numbers = #tpu.dot_dimension_numbers<[1], [0], [0], [1], [0, 0, 1, 1], [], []>} : vector<6x16xf32>, vector<16x2xf32>, vector<6x2xf32> -> vector<6x2xf32>
    %119 = arith.index_cast %c7_i32 : i32 to index
    %c0_74 = arith.constant 0 : index
    %c0_75 = arith.constant 0 : index
    %120 = vector.load %arg8[%119, %c0_74, %c0_75] : memref<8x6x2xf32, #tpu.memory_space<vmem>>, vector<1x6x2xf32>
    %121 = vector.shape_cast %120 : vector<1x6x2xf32> to vector<6x2xf32>
    %122 = vector.shape_cast %118 : vector<6x2xf32> to vector<1x6x2xf32>
    tpu.vector_store %arg8[%119, %c0_74, %c0_75], %122 {strides = array<i32>} : memref<8x6x2xf32, #tpu.memory_space<vmem>>, vector<1x6x2xf32>,
    %c8_i32 = arith.constant 8 : i32
    %c0_76 = arith.constant 0 : index
    %c0_77 = arith.constant 0 : index
    %123 = vector.load %arg1[%c0_76, %c0_77] : memref<6x1xi32, #tpu.memory_space<vmem>>, vector<6x1xi32>
    %c0_78 = arith.constant 0 : index
    %c0_79 = arith.constant 0 : index
    %c0_80 = arith.constant 0 : index
    %124 = vector.load %arg8[%c0_78, %c0_79, %c0_80] : memref<8x6x2xf32, #tpu.memory_space<vmem>>, vector<8x6x2xf32>
    %125 = tpu.iota {dimensions = array<i32: 0>} : vector<8x6x2xi32>
    %126 = vector.shape_cast %123 : vector<6x1xi32> to vector<1x6x1xi32>
    %127 = vector.broadcast %126 : vector<1x6x1xi32> to vector<8x6x2xi32>
    %128 = arith.cmpi slt, %125, %127 : vector<8x6x2xi32>
    %cst_81 = arith.constant -1.000000e+30 : f32
    %129 = vector.broadcast %cst_81 : f32 to vector<8x6x2xf32>
    %130 = arith.select %128, %124, %129 : vector<8x6x2xi1>, vector<8x6x2xf32>
    %cst_82 = arith.constant dense<0xFF800000> : vector<6x2xf32>
    %131 = vector.multi_reduction <maximumf>, %130, %cst_82 [0] : vector<8x6x2xf32> to vector<6x2xf32>
    %132 = vector.shape_cast %131 : vector<6x2xf32> to vector<1x6x2xf32>
    %133 = vector.broadcast %132 : vector<1x6x2xf32> to vector<8x6x2xf32>
    %134 = arith.subf %130, %133 : vector<8x6x2xf32>
    %135 = math.exp %134 : vector<8x6x2xf32>
    %cst_83 = arith.constant dense<0.000000e+00> : vector<6x2xf32>
    %136 = vector.multi_reduction <add>, %135, %cst_83 [0] : vector<8x6x2xf32> to vector<6x2xf32>
    %137 = vector.shape_cast %136 : vector<6x2xf32> to vector<1x6x2xf32>
    %138 = tpu.reciprocal %137 {approx = true} : vector<1x6x2xf32> -> vector<1x6x2xf32>
    %139 = vector.broadcast %138 : vector<1x6x2xf32> to vector<8x6x2xf32>
    %140 = arith.mulf %135, %139 : vector<8x6x2xf32>
    %cst_84 = arith.constant dense<0.000000e+00> : vector<8x6xf32>
    %141 = vector.multi_reduction <add>, %140, %cst_84 [2] : vector<8x6x2xf32> to vector<8x6xf32>
    %142 = vector.shape_cast %141 : vector<8x6xf32> to vector<8x6x1xf32>
    %cst_85 = arith.constant 2.000000e+00 : f32
    %143 = vector.broadcast %cst_85 : f32 to vector<8x6x1xf32>
    %144 = arith.divf %142, %143 : vector<8x6x1xf32>
    %c0_86 = arith.constant 0 : index
    %c0_87 = arith.constant 0 : index
    %c0_88 = arith.constant 0 : index
    %145 = vector.load %arg2[%c0_86, %c0_87, %c0_88] : memref<8x6x16xf32, #tpu.memory_space<vmem>>, vector<8x6x16xf32>
    %146 = vector.broadcast %144 : vector<8x6x1xf32> to vector<8x6x16xf32>
    %147 = arith.mulf %146, %145 : vector<8x6x16xf32>
    %cst_89 = arith.constant dense<0.000000e+00> : vector<6x16xf32>
    %148 = vector.multi_reduction <add>, %147, %cst_89 [0] : vector<8x6x16xf32> to vector<6x16xf32>
    %c0_90 = arith.constant 0 : index
    %c0_91 = arith.constant 0 : index
    %c0_92 = arith.constant 0 : index
    %149 = vector.load %arg3[%c0_90, %c0_91, %c0_92] : memref<8x6x16xf32, #tpu.memory_space<vmem>>, vector<8x6x16xf32>
    %150 = vector.broadcast %144 : vector<8x6x1xf32> to vector<8x6x16xf32>
    %151 = arith.mulf %150, %149 : vector<8x6x16xf32>
    %cst_93 = arith.constant dense<0.000000e+00> : vector<6x16xf32>
    %152 = vector.multi_reduction <add>, %151, %cst_93 [0] : vector<8x6x16xf32> to vector<6x16xf32>
    %153 = tpu.concatenate %148, %152 in 1 : vector<6x16xf32>, vector<6x16xf32> -> vector<6x32xf32>
    %c0_94 = arith.constant 0 : index
    %c0_95 = arith.constant 0 : index
    %154 = vector.load %arg7[%c0_94, %c0_95] : memref<6x32xf32, #tpu.memory_space<vmem>>, vector<6x32xf32>
    tpu.vector_store %arg7[%c0_94, %c0_95], %153 {strides = array<i32>} : memref<6x32xf32, #tpu.memory_space<vmem>>, vector<6x32xf32>,
    return
  }
  func.func @transform_0(%arg0: i32) -> (i32, i32) {
    %c0_i32 = arith.constant 0 : i32
    %c0_i32_0 = arith.constant 0 : i32
    return %arg0, %c0_i32 : i32, i32
  }
  func.func @transform_1(%arg0: i32) -> (i32, i32, i32) {
    %c0_i32 = arith.constant 0 : i32
    %c0_i32_0 = arith.constant 0 : i32
    %c0_i32_1 = arith.constant 0 : i32
    return %c0_i32, %arg0, %c0_i32_0 : i32, i32, i32
  }
  func.func @transform_2(%arg0: i32) -> (i32, i32, i32) {
    %c0_i32 = arith.constant 0 : i32
    %c0_i32_0 = arith.constant 0 : i32
    %c0_i32_1 = arith.constant 0 : i32
    return %c0_i32, %arg0, %c0_i32_0 : i32, i32, i32
  }
  func.func @transform_3(%arg0: i32) -> (i32, i32) {
    %c0_i32 = arith.constant 0 : i32
    %c0_i32_0 = arith.constant 0 : i32
    %c0_i32_1 = arith.constant 0 : i32
    return %c0_i32, %c0_i32_0 : i32, i32
  }
  func.func @transform_4(%arg0: i32) -> (i32, i32) {
    %c0_i32 = arith.constant 0 : i32
    %c0_i32_0 = arith.constant 0 : i32
    %c0_i32_1 = arith.constant 0 : i32
    return %c0_i32, %c0_i32_0 : i32, i32
  }
  func.func @transform_5(%arg0: i32) -> (i32, i32) {
    %c0_i32 = arith.constant 0 : i32
    %c0_i32_0 = arith.constant 0 : i32
    %c0_i32_1 = arith.constant 0 : i32
    return %c0_i32, %c0_i32_0 : i32, i32
  }
  func.func @transform_6(%arg0: i32) -> (i32, i32) {
    %c0_i32 = arith.constant 0 : i32
    %c0_i32_0 = arith.constant 0 : i32
    return %arg0, %c0_i32 : i32, i32
  }
}

module attributes {stable_mosaic.version = 11 : i64} {
  func.func @_proj_kernel(%arg0: i32, %arg1: memref<6x32xf32, #tpu.memory_space<vmem>>, %arg2: memref<32x64xf32, #tpu.memory_space<vmem>>, %arg3: memref<1x64xf32, #tpu.memory_space<vmem>>, %arg4: memref<32x64xf32, #tpu.memory_space<vmem>>, %arg5: memref<1x64xf32, #tpu.memory_space<vmem>>, %arg6: memref<6x64xf32, #tpu.memory_space<vmem>>, %arg7: memref<6x64xf32, #tpu.memory_space<vmem>>) attributes {dimension_semantics = [#tpu.dimension_semantics<parallel>], iteration_bounds = array<i64: 1>, scalar_prefetch = 0 : i64, scratch_operands = 0 : i64, tpu.core_type = #tpu.core_type<tc>, window_params = [{transform_indices = @transform_0, window_bounds = array<i64: 6, 32>}, {pipeline_mode = #tpu.pipeline_mode<synchronous>, transform_indices = @transform_1, window_bounds = array<i64: 32, 64>}, {pipeline_mode = #tpu.pipeline_mode<synchronous>, transform_indices = @transform_2, window_bounds = array<i64: 1, 64>}, {pipeline_mode = #tpu.pipeline_mode<synchronous>, transform_indices = @transform_3, window_bounds = array<i64: 32, 64>}, {pipeline_mode = #tpu.pipeline_mode<synchronous>, transform_indices = @transform_4, window_bounds = array<i64: 1, 64>}, {transform_indices = @transform_5, window_bounds = array<i64: 6, 64>}, {transform_indices = @transform_6, window_bounds = array<i64: 6, 64>}]} {
    %c0 = arith.constant 0 : index
    %c0_0 = arith.constant 0 : index
    %0 = vector.load %arg1[%c0, %c0_0] : memref<6x32xf32, #tpu.memory_space<vmem>>, vector<6x32xf32>
    %c0_1 = arith.constant 0 : index
    %c0_2 = arith.constant 0 : index
    %1 = vector.load %arg2[%c0_1, %c0_2] : memref<32x64xf32, #tpu.memory_space<vmem>>, vector<32x64xf32>
    %cst = arith.constant dense<0.000000e+00> : vector<6x64xf32>
    %2 = tpu.matmul %0, %1, %cst {dimension_numbers = #tpu.dot_dimension_numbers<[1], [0], [0], [1], [0, 0, 1, 1], [], []>} : vector<6x32xf32>, vector<32x64xf32>, vector<6x64xf32> -> vector<6x64xf32>
    %c0_3 = arith.constant 0 : index
    %c0_4 = arith.constant 0 : index
    %3 = vector.load %arg3[%c0_3, %c0_4] : memref<1x64xf32, #tpu.memory_space<vmem>>, vector<1x64xf32>
    %4 = vector.broadcast %3 : vector<1x64xf32> to vector<6x64xf32>
    %5 = arith.addf %2, %4 : vector<6x64xf32>
    %c0_5 = arith.constant 0 : index
    %c0_6 = arith.constant 0 : index
    %6 = vector.load %arg6[%c0_5, %c0_6] : memref<6x64xf32, #tpu.memory_space<vmem>>, vector<6x64xf32>
    tpu.vector_store %arg6[%c0_5, %c0_6], %5 {strides = array<i32>} : memref<6x64xf32, #tpu.memory_space<vmem>>, vector<6x64xf32>,
    %c0_7 = arith.constant 0 : index
    %c0_8 = arith.constant 0 : index
    %7 = vector.load %arg4[%c0_7, %c0_8] : memref<32x64xf32, #tpu.memory_space<vmem>>, vector<32x64xf32>
    %cst_9 = arith.constant dense<0.000000e+00> : vector<6x64xf32>
    %8 = tpu.matmul %0, %7, %cst_9 {dimension_numbers = #tpu.dot_dimension_numbers<[1], [0], [0], [1], [0, 0, 1, 1], [], []>} : vector<6x32xf32>, vector<32x64xf32>, vector<6x64xf32> -> vector<6x64xf32>
    %c0_10 = arith.constant 0 : index
    %c0_11 = arith.constant 0 : index
    %9 = vector.load %arg5[%c0_10, %c0_11] : memref<1x64xf32, #tpu.memory_space<vmem>>, vector<1x64xf32>
    %10 = vector.broadcast %9 : vector<1x64xf32> to vector<6x64xf32>
    %11 = arith.addf %8, %10 : vector<6x64xf32>
    %c0_12 = arith.constant 0 : index
    %c0_13 = arith.constant 0 : index
    %12 = vector.load %arg7[%c0_12, %c0_13] : memref<6x64xf32, #tpu.memory_space<vmem>>, vector<6x64xf32>
    tpu.vector_store %arg7[%c0_12, %c0_13], %11 {strides = array<i32>} : memref<6x64xf32, #tpu.memory_space<vmem>>, vector<6x64xf32>,
    return
  }
  func.func @transform_0(%arg0: i32) -> (i32, i32) {
    %c0_i32 = arith.constant 0 : i32
    %c0_i32_0 = arith.constant 0 : i32
    return %arg0, %c0_i32 : i32, i32
  }
  func.func @transform_1(%arg0: i32) -> (i32, i32) {
    %c0_i32 = arith.constant 0 : i32
    %c0_i32_0 = arith.constant 0 : i32
    %c0_i32_1 = arith.constant 0 : i32
    return %c0_i32, %c0_i32_0 : i32, i32
  }
  func.func @transform_2(%arg0: i32) -> (i32, i32) {
    %c0_i32 = arith.constant 0 : i32
    %c0_i32_0 = arith.constant 0 : i32
    %c0_i32_1 = arith.constant 0 : i32
    return %c0_i32, %c0_i32_0 : i32, i32
  }
  func.func @transform_3(%arg0: i32) -> (i32, i32) {
    %c0_i32 = arith.constant 0 : i32
    %c0_i32_0 = arith.constant 0 : i32
    %c0_i32_1 = arith.constant 0 : i32
    return %c0_i32, %c0_i32_0 : i32, i32
  }
  func.func @transform_4(%arg0: i32) -> (i32, i32) {
    %c0_i32 = arith.constant 0 : i32
    %c0_i32_0 = arith.constant 0 : i32
    %c0_i32_1 = arith.constant 0 : i32
    return %c0_i32, %c0_i32_0 : i32, i32
  }
  func.func @transform_5(%arg0: i32) -> (i32, i32) {
    %c0_i32 = arith.constant 0 : i32
    %c0_i32_0 = arith.constant 0 : i32
    return %arg0, %c0_i32 : i32, i32
  }
  func.func @transform_6(%arg0: i32) -> (i32, i32) {
    %c0_i32 = arith.constant 0 : i32
    %c0_i32_0 = arith.constant 0 : i32
    return %arg0, %c0_i32 : i32, i32
  }
}

module attributes {stable_mosaic.version = 11 : i64} {
  func.func @_bilstm_kernel(%arg0: i32, %arg1: i32, %arg2: memref<2x1xi32, #tpu.memory_space<vmem>>, %arg3: memref<3x2x64xf32, #tpu.memory_space<vmem>>, %arg4: memref<3x2x64xf32, #tpu.memory_space<vmem>>, %arg5: memref<16x64xf32, #tpu.memory_space<vmem>>, %arg6: memref<16x64xf32, #tpu.memory_space<vmem>>, %arg7: memref<3x2x16xf32, #tpu.memory_space<vmem>>, %arg8: memref<3x2x16xf32, #tpu.memory_space<vmem>>, %arg9: memref<2x16xf32, #tpu.memory_space<vmem>>, %arg10: memref<2x16xf32, #tpu.memory_space<vmem>>, %arg11: memref<2x16xf32, #tpu.memory_space<vmem>>, %arg12: memref<2x16xf32, #tpu.memory_space<vmem>>) attributes {dimension_semantics = [#tpu.dimension_semantics<parallel>, #tpu.dimension_semantics<arbitrary>], iteration_bounds = array<i64: 1, 1>, scalar_prefetch = 0 : i64, scratch_operands = 4 : i64, tpu.core_type = #tpu.core_type<tc>, window_params = [{transform_indices = @transform_0, window_bounds = array<i64: 2, 1>}, {transform_indices = @transform_1, window_bounds = array<i64: 3, 2, 64>}, {transform_indices = @transform_2, window_bounds = array<i64: 3, 2, 64>}, {pipeline_mode = #tpu.pipeline_mode<synchronous>, transform_indices = @transform_3, window_bounds = array<i64: 16, 64>}, {pipeline_mode = #tpu.pipeline_mode<synchronous>, transform_indices = @transform_4, window_bounds = array<i64: 16, 64>}, {transform_indices = @transform_5, window_bounds = array<i64: 3, 2, 16>}, {transform_indices = @transform_6, window_bounds = array<i64: 3, 2, 16>}]} {
    %c0_i32 = arith.constant 0 : i32
    %0 = arith.cmpi eq, %arg1, %c0_i32 : i32
    %1 = arith.extui %0 : i1 to i32
    %c0_i32_0 = arith.constant 0 : i32
    %2 = arith.cmpi ne, %1, %c0_i32_0 : i32
    scf.if %2 {
      %cst_83 = arith.constant 0.000000e+00 : f32
      %303 = vector.broadcast %cst_83 : f32 to vector<2x16xf32>
      %c0_84 = arith.constant 0 : index
      %c0_85 = arith.constant 0 : index
      %304 = vector.load %arg9[%c0_84, %c0_85] : memref<2x16xf32, #tpu.memory_space<vmem>>, vector<2x16xf32>
      tpu.vector_store %arg9[%c0_84, %c0_85], %303 {strides = array<i32>} : memref<2x16xf32, #tpu.memory_space<vmem>>, vector<2x16xf32>,
      %cst_86 = arith.constant 0.000000e+00 : f32
      %305 = vector.broadcast %cst_86 : f32 to vector<2x16xf32>
      %c0_87 = arith.constant 0 : index
      %c0_88 = arith.constant 0 : index
      %306 = vector.load %arg10[%c0_87, %c0_88] : memref<2x16xf32, #tpu.memory_space<vmem>>, vector<2x16xf32>
      tpu.vector_store %arg10[%c0_87, %c0_88], %305 {strides = array<i32>} : memref<2x16xf32, #tpu.memory_space<vmem>>, vector<2x16xf32>,
      %cst_89 = arith.constant 0.000000e+00 : f32
      %307 = vector.broadcast %cst_89 : f32 to vector<2x16xf32>
      %c0_90 = arith.constant 0 : index
      %c0_91 = arith.constant 0 : index
      %308 = vector.load %arg11[%c0_90, %c0_91] : memref<2x16xf32, #tpu.memory_space<vmem>>, vector<2x16xf32>
      tpu.vector_store %arg11[%c0_90, %c0_91], %307 {strides = array<i32>} : memref<2x16xf32, #tpu.memory_space<vmem>>, vector<2x16xf32>,
      %cst_92 = arith.constant 0.000000e+00 : f32
      %309 = vector.broadcast %cst_92 : f32 to vector<2x16xf32>
      %c0_93 = arith.constant 0 : index
      %c0_94 = arith.constant 0 : index
      %310 = vector.load %arg12[%c0_93, %c0_94] : memref<2x16xf32, #tpu.memory_space<vmem>>, vector<2x16xf32>
      tpu.vector_store %arg12[%c0_93, %c0_94], %309 {strides = array<i32>} : memref<2x16xf32, #tpu.memory_space<vmem>>, vector<2x16xf32>,
    } else {
    }
    %c0 = arith.constant 0 : index
    %c0_1 = arith.constant 0 : index
    %3 = vector.load %arg2[%c0, %c0_1] : memref<2x1xi32, #tpu.memory_space<vmem>>, vector<2x1xi32>
    %c0_2 = arith.constant 0 : index
    %c0_3 = arith.constant 0 : index
    %4 = vector.load %arg5[%c0_2, %c0_3] : memref<16x64xf32, #tpu.memory_space<vmem>>, vector<16x64xf32>
    %c0_4 = arith.constant 0 : index
    %c0_5 = arith.constant 0 : index
    %5 = vector.load %arg6[%c0_4, %c0_5] : memref<16x64xf32, #tpu.memory_space<vmem>>, vector<16x64xf32>
    %c3_i32 = arith.constant 3 : i32
    %6 = arith.muli %arg1, %c3_i32 : i32
    %c0_6 = arith.constant 0 : index
    %c0_7 = arith.constant 0 : index
    %7 = vector.load %arg9[%c0_6, %c0_7] : memref<2x16xf32, #tpu.memory_space<vmem>>, vector<2x16xf32>
    %c0_8 = arith.constant 0 : index
    %c0_9 = arith.constant 0 : index
    %8 = vector.load %arg10[%c0_8, %c0_9] : memref<2x16xf32, #tpu.memory_space<vmem>>, vector<2x16xf32>
    %c0_10 = arith.constant 0 : index
    %c0_11 = arith.constant 0 : index
    %9 = vector.load %arg11[%c0_10, %c0_11] : memref<2x16xf32, #tpu.memory_space<vmem>>, vector<2x16xf32>
    %c0_12 = arith.constant 0 : index
    %c0_13 = arith.constant 0 : index
    %10 = vector.load %arg12[%c0_12, %c0_13] : memref<2x16xf32, #tpu.memory_space<vmem>>, vector<2x16xf32>
    %c0_i32_14 = arith.constant 0 : i32
    %11 = arith.addi %6, %c0_i32_14 : i32
    %12 = arith.index_cast %c0_i32_14 : i32 to index
    %c0_15 = arith.constant 0 : index
    %c0_16 = arith.constant 0 : index
    %13 = vector.load %arg3[%12, %c0_15, %c0_16] : memref<3x2x64xf32, #tpu.memory_space<vmem>>, vector<1x2x64xf32>
    %14 = vector.shape_cast %13 : vector<1x2x64xf32> to vector<2x64xf32>
    %cst = arith.constant dense<0.000000e+00> : vector<2x64xf32>
    %15 = tpu.matmul %7, %4, %cst {dimension_numbers = #tpu.dot_dimension_numbers<[1], [0], [0], [1], [0, 0, 1, 1], [], []>} : vector<2x16xf32>, vector<16x64xf32>, vector<2x64xf32> -> vector<2x64xf32>
    %16 = arith.addf %14, %15 : vector<2x64xf32>
    %17 = vector.extract_strided_slice %16 {offsets = [0, 0], sizes = [2, 16], strides = [1, 1]} : vector<2x64xf32> to vector<2x16xf32>
    %18 = arith.negf %17 : vector<2x16xf32>
    %19 = math.exp %18 : vector<2x16xf32>
    %cst_17 = arith.constant 1.000000e+00 : f32
    %20 = vector.broadcast %cst_17 : f32 to vector<2x16xf32>
    %21 = arith.addf %20, %19 : vector<2x16xf32>
    %22 = arith.divf %20, %21 : vector<2x16xf32>
    %23 = vector.extract_strided_slice %16 {offsets = [0, 16], sizes = [2, 16], strides = [1, 1]} : vector<2x64xf32> to vector<2x16xf32>
    %24 = arith.negf %23 : vector<2x16xf32>
    %25 = math.exp %24 : vector<2x16xf32>
    %cst_18 = arith.constant 1.000000e+00 : f32
    %26 = vector.broadcast %cst_18 : f32 to vector<2x16xf32>
    %27 = arith.addf %26, %25 : vector<2x16xf32>
    %28 = arith.divf %26, %27 : vector<2x16xf32>
    %29 = vector.extract_strided_slice %16 {offsets = [0, 32], sizes = [2, 16], strides = [1, 1]} : vector<2x64xf32> to vector<2x16xf32>
    %30 = math.tanh %29 : vector<2x16xf32>
    %31 = vector.extract_strided_slice %16 {offsets = [0, 48], sizes = [2, 16], strides = [1, 1]} : vector<2x64xf32> to vector<2x16xf32>
    %32 = arith.negf %31 : vector<2x16xf32>
    %33 = math.exp %32 : vector<2x16xf32>
    %cst_19 = arith.constant 1.000000e+00 : f32
    %34 = vector.broadcast %cst_19 : f32 to vector<2x16xf32>
    %35 = arith.addf %34, %33 : vector<2x16xf32>
    %36 = arith.divf %34, %35 : vector<2x16xf32>
    %37 = arith.mulf %28, %8 : vector<2x16xf32>
    %38 = arith.mulf %22, %30 : vector<2x16xf32>
    %39 = arith.addf %37, %38 : vector<2x16xf32>
    %40 = math.tanh %39 : vector<2x16xf32>
    %41 = arith.mulf %36, %40 : vector<2x16xf32>
    %42 = vector.broadcast %11 : i32 to vector<2x1xi32>
    %43 = arith.cmpi sgt, %3, %42 : vector<2x1xi32>
    %44 = vector.shape_cast %43 : vector<2x1xi1> to vector<2x1xi1>
    %45 = vector.broadcast %44 : vector<2x1xi1> to vector<2x16xi1>
    %46 = arith.select %45, %41, %7 : vector<2x16xi1>, vector<2x16xf32>
    %47 = vector.shape_cast %43 : vector<2x1xi1> to vector<2x1xi1>
    %48 = vector.broadcast %47 : vector<2x1xi1> to vector<2x16xi1>
    %49 = arith.select %48, %39, %8 : vector<2x16xi1>, vector<2x16xf32>
    %cst_20 = arith.constant 0.000000e+00 : f32
    %50 = vector.shape_cast %43 : vector<2x1xi1> to vector<2x1xi1>
    %51 = vector.broadcast %50 : vector<2x1xi1> to vector<2x16xi1>
    %52 = vector.broadcast %cst_20 : f32 to vector<2x16xf32>
    %53 = arith.select %51, %41, %52 : vector<2x16xi1>, vector<2x16xf32>
    %54 = arith.index_cast %c0_i32_14 : i32 to index
    %c0_21 = arith.constant 0 : index
    %c0_22 = arith.constant 0 : index
    %55 = vector.load %arg7[%54, %c0_21, %c0_22] : memref<3x2x16xf32, #tpu.memory_space<vmem>>, vector<1x2x16xf32>
    %56 = vector.shape_cast %55 : vector<1x2x16xf32> to vector<2x16xf32>
    %57 = vector.shape_cast %53 : vector<2x16xf32> to vector<1x2x16xf32>
    tpu.vector_store %arg7[%54, %c0_21, %c0_22], %57 {strides = array<i32>} : memref<3x2x16xf32, #tpu.memory_space<vmem>>, vector<1x2x16xf32>,
    %c2_i32 = arith.constant 2 : i32
    %58 = arith.subi %c2_i32, %c0_i32_14 : i32
    %59 = arith.addi %6, %c0_i32_14 : i32
    %c2_i32_23 = arith.constant 2 : i32
    %60 = arith.subi %c2_i32_23, %59 : i32
    %61 = arith.index_cast %58 : i32 to index
    %c0_24 = arith.constant 0 : index
    %c0_25 = arith.constant 0 : index
    %62 = vector.load %arg4[%61, %c0_24, %c0_25] : memref<3x2x64xf32, #tpu.memory_space<vmem>>, vector<1x2x64xf32>
    %63 = vector.shape_cast %62 : vector<1x2x64xf32> to vector<2x64xf32>
    %cst_26 = arith.constant dense<0.000000e+00> : vector<2x64xf32>
    %64 = tpu.matmul %9, %5, %cst_26 {dimension_numbers = #tpu.dot_dimension_numbers<[1], [0], [0], [1], [0, 0, 1, 1], [], []>} : vector<2x16xf32>, vector<16x64xf32>, vector<2x64xf32> -> vector<2x64xf32>
    %65 = arith.addf %63, %64 : vector<2x64xf32>
    %66 = vector.extract_strided_slice %65 {offsets = [0, 0], sizes = [2, 16], strides = [1, 1]} : vector<2x64xf32> to vector<2x16xf32>
    %67 = arith.negf %66 : vector<2x16xf32>
    %68 = math.exp %67 : vector<2x16xf32>
    %cst_27 = arith.constant 1.000000e+00 : f32
    %69 = vector.broadcast %cst_27 : f32 to vector<2x16xf32>
    %70 = arith.addf %69, %68 : vector<2x16xf32>
    %71 = arith.divf %69, %70 : vector<2x16xf32>
    %72 = vector.extract_strided_slice %65 {offsets = [0, 16], sizes = [2, 16], strides = [1, 1]} : vector<2x64xf32> to vector<2x16xf32>
    %73 = arith.negf %72 : vector<2x16xf32>
    %74 = math.exp %73 : vector<2x16xf32>
    %cst_28 = arith.constant 1.000000e+00 : f32
    %75 = vector.broadcast %cst_28 : f32 to vector<2x16xf32>
    %76 = arith.addf %75, %74 : vector<2x16xf32>
    %77 = arith.divf %75, %76 : vector<2x16xf32>
    %78 = vector.extract_strided_slice %65 {offsets = [0, 32], sizes = [2, 16], strides = [1, 1]} : vector<2x64xf32> to vector<2x16xf32>
    %79 = math.tanh %78 : vector<2x16xf32>
    %80 = vector.extract_strided_slice %65 {offsets = [0, 48], sizes = [2, 16], strides = [1, 1]} : vector<2x64xf32> to vector<2x16xf32>
    %81 = arith.negf %80 : vector<2x16xf32>
    %82 = math.exp %81 : vector<2x16xf32>
    %cst_29 = arith.constant 1.000000e+00 : f32
    %83 = vector.broadcast %cst_29 : f32 to vector<2x16xf32>
    %84 = arith.addf %83, %82 : vector<2x16xf32>
    %85 = arith.divf %83, %84 : vector<2x16xf32>
    %86 = arith.mulf %77, %10 : vector<2x16xf32>
    %87 = arith.mulf %71, %79 : vector<2x16xf32>
    %88 = arith.addf %86, %87 : vector<2x16xf32>
    %89 = math.tanh %88 : vector<2x16xf32>
    %90 = arith.mulf %85, %89 : vector<2x16xf32>
    %91 = vector.broadcast %60 : i32 to vector<2x1xi32>
    %92 = arith.cmpi sgt, %3, %91 : vector<2x1xi32>
    %93 = vector.shape_cast %92 : vector<2x1xi1> to vector<2x1xi1>
    %94 = vector.broadcast %93 : vector<2x1xi1> to vector<2x16xi1>
    %95 = arith.select %94, %90, %9 : vector<2x16xi1>, vector<2x16xf32>
    %96 = vector.shape_cast %92 : vector<2x1xi1> to vector<2x1xi1>
    %97 = vector.broadcast %96 : vector<2x1xi1> to vector<2x16xi1>
    %98 = arith.select %97, %88, %10 : vector<2x16xi1>, vector<2x16xf32>
    %cst_30 = arith.constant 0.000000e+00 : f32
    %99 = vector.shape_cast %92 : vector<2x1xi1> to vector<2x1xi1>
    %100 = vector.broadcast %99 : vector<2x1xi1> to vector<2x16xi1>
    %101 = vector.broadcast %cst_30 : f32 to vector<2x16xf32>
    %102 = arith.select %100, %90, %101 : vector<2x16xi1>, vector<2x16xf32>
    %103 = arith.index_cast %58 : i32 to index
    %c0_31 = arith.constant 0 : index
    %c0_32 = arith.constant 0 : index
    %104 = vector.load %arg8[%103, %c0_31, %c0_32] : memref<3x2x16xf32, #tpu.memory_space<vmem>>, vector<1x2x16xf32>
    %105 = vector.shape_cast %104 : vector<1x2x16xf32> to vector<2x16xf32>
    %106 = vector.shape_cast %102 : vector<2x16xf32> to vector<1x2x16xf32>
    tpu.vector_store %arg8[%103, %c0_31, %c0_32], %106 {strides = array<i32>} : memref<3x2x16xf32, #tpu.memory_space<vmem>>, vector<1x2x16xf32>,
    %c1_i32 = arith.constant 1 : i32
    %107 = arith.addi %6, %c1_i32 : i32
    %108 = arith.index_cast %c1_i32 : i32 to index
    %c0_33 = arith.constant 0 : index
    %c0_34 = arith.constant 0 : index
    %109 = vector.load %arg3[%108, %c0_33, %c0_34] : memref<3x2x64xf32, #tpu.memory_space<vmem>>, vector<1x2x64xf32>
    %110 = vector.shape_cast %109 : vector<1x2x64xf32> to vector<2x64xf32>
    %cst_35 = arith.constant dense<0.000000e+00> : vector<2x64xf32>
    %111 = tpu.matmul %46, %4, %cst_35 {dimension_numbers = #tpu.dot_dimension_numbers<[1], [0], [0], [1], [0, 0, 1, 1], [], []>} : vector<2x16xf32>, vector<16x64xf32>, vector<2x64xf32> -> vector<2x64xf32>
    %112 = arith.addf %110, %111 : vector<2x64xf32>
    %113 = vector.extract_strided_slice %112 {offsets = [0, 0], sizes = [2, 16], strides = [1, 1]} : vector<2x64xf32> to vector<2x16xf32>
    %114 = arith.negf %113 : vector<2x16xf32>
    %115 = math.exp %114 : vector<2x16xf32>
    %cst_36 = arith.constant 1.000000e+00 : f32
    %116 = vector.broadcast %cst_36 : f32 to vector<2x16xf32>
    %117 = arith.addf %116, %115 : vector<2x16xf32>
    %118 = arith.divf %116, %117 : vector<2x16xf32>
    %119 = vector.extract_strided_slice %112 {offsets = [0, 16], sizes = [2, 16], strides = [1, 1]} : vector<2x64xf32> to vector<2x16xf32>
    %120 = arith.negf %119 : vector<2x16xf32>
    %121 = math.exp %120 : vector<2x16xf32>
    %cst_37 = arith.constant 1.000000e+00 : f32
    %122 = vector.broadcast %cst_37 : f32 to vector<2x16xf32>
    %123 = arith.addf %122, %121 : vector<2x16xf32>
    %124 = arith.divf %122, %123 : vector<2x16xf32>
    %125 = vector.extract_strided_slice %112 {offsets = [0, 32], sizes = [2, 16], strides = [1, 1]} : vector<2x64xf32> to vector<2x16xf32>
    %126 = math.tanh %125 : vector<2x16xf32>
    %127 = vector.extract_strided_slice %112 {offsets = [0, 48], sizes = [2, 16], strides = [1, 1]} : vector<2x64xf32> to vector<2x16xf32>
    %128 = arith.negf %127 : vector<2x16xf32>
    %129 = math.exp %128 : vector<2x16xf32>
    %cst_38 = arith.constant 1.000000e+00 : f32
    %130 = vector.broadcast %cst_38 : f32 to vector<2x16xf32>
    %131 = arith.addf %130, %129 : vector<2x16xf32>
    %132 = arith.divf %130, %131 : vector<2x16xf32>
    %133 = arith.mulf %124, %49 : vector<2x16xf32>
    %134 = arith.mulf %118, %126 : vector<2x16xf32>
    %135 = arith.addf %133, %134 : vector<2x16xf32>
    %136 = math.tanh %135 : vector<2x16xf32>
    %137 = arith.mulf %132, %136 : vector<2x16xf32>
    %138 = vector.broadcast %107 : i32 to vector<2x1xi32>
    %139 = arith.cmpi sgt, %3, %138 : vector<2x1xi32>
    %140 = vector.shape_cast %139 : vector<2x1xi1> to vector<2x1xi1>
    %141 = vector.broadcast %140 : vector<2x1xi1> to vector<2x16xi1>
    %142 = arith.select %141, %137, %46 : vector<2x16xi1>, vector<2x16xf32>
    %143 = vector.shape_cast %139 : vector<2x1xi1> to vector<2x1xi1>
    %144 = vector.broadcast %143 : vector<2x1xi1> to vector<2x16xi1>
    %145 = arith.select %144, %135, %49 : vector<2x16xi1>, vector<2x16xf32>
    %cst_39 = arith.constant 0.000000e+00 : f32
    %146 = vector.shape_cast %139 : vector<2x1xi1> to vector<2x1xi1>
    %147 = vector.broadcast %146 : vector<2x1xi1> to vector<2x16xi1>
    %148 = vector.broadcast %cst_39 : f32 to vector<2x16xf32>
    %149 = arith.select %147, %137, %148 : vector<2x16xi1>, vector<2x16xf32>
    %150 = arith.index_cast %c1_i32 : i32 to index
    %c0_40 = arith.constant 0 : index
    %c0_41 = arith.constant 0 : index
    %151 = vector.load %arg7[%150, %c0_40, %c0_41] : memref<3x2x16xf32, #tpu.memory_space<vmem>>, vector<1x2x16xf32>
    %152 = vector.shape_cast %151 : vector<1x2x16xf32> to vector<2x16xf32>
    %153 = vector.shape_cast %149 : vector<2x16xf32> to vector<1x2x16xf32>
    tpu.vector_store %arg7[%150, %c0_40, %c0_41], %153 {strides = array<i32>} : memref<3x2x16xf32, #tpu.memory_space<vmem>>, vector<1x2x16xf32>,
    %c2_i32_42 = arith.constant 2 : i32
    %154 = arith.subi %c2_i32_42, %c1_i32 : i32
    %155 = arith.addi %6, %c1_i32 : i32
    %c2_i32_43 = arith.constant 2 : i32
    %156 = arith.subi %c2_i32_43, %155 : i32
    %157 = arith.index_cast %154 : i32 to index
    %c0_44 = arith.constant 0 : index
    %c0_45 = arith.constant 0 : index
    %158 = vector.load %arg4[%157, %c0_44, %c0_45] : memref<3x2x64xf32, #tpu.memory_space<vmem>>, vector<1x2x64xf32>
    %159 = vector.shape_cast %158 : vector<1x2x64xf32> to vector<2x64xf32>
    %cst_46 = arith.constant dense<0.000000e+00> : vector<2x64xf32>
    %160 = tpu.matmul %95, %5, %cst_46 {dimension_numbers = #tpu.dot_dimension_numbers<[1], [0], [0], [1], [0, 0, 1, 1], [], []>} : vector<2x16xf32>, vector<16x64xf32>, vector<2x64xf32> -> vector<2x64xf32>
    %161 = arith.addf %159, %160 : vector<2x64xf32>
    %162 = vector.extract_strided_slice %161 {offsets = [0, 0], sizes = [2, 16], strides = [1, 1]} : vector<2x64xf32> to vector<2x16xf32>
    %163 = arith.negf %162 : vector<2x16xf32>
    %164 = math.exp %163 : vector<2x16xf32>
    %cst_47 = arith.constant 1.000000e+00 : f32
    %165 = vector.broadcast %cst_47 : f32 to vector<2x16xf32>
    %166 = arith.addf %165, %164 : vector<2x16xf32>
    %167 = arith.divf %165, %166 : vector<2x16xf32>
    %168 = vector.extract_strided_slice %161 {offsets = [0, 16], sizes = [2, 16], strides = [1, 1]} : vector<2x64xf32> to vector<2x16xf32>
    %169 = arith.negf %168 : vector<2x16xf32>
    %170 = math.exp %169 : vector<2x16xf32>
    %cst_48 = arith.constant 1.000000e+00 : f32
    %171 = vector.broadcast %cst_48 : f32 to vector<2x16xf32>
    %172 = arith.addf %171, %170 : vector<2x16xf32>
    %173 = arith.divf %171, %172 : vector<2x16xf32>
    %174 = vector.extract_strided_slice %161 {offsets = [0, 32], sizes = [2, 16], strides = [1, 1]} : vector<2x64xf32> to vector<2x16xf32>
    %175 = math.tanh %174 : vector<2x16xf32>
    %176 = vector.extract_strided_slice %161 {offsets = [0, 48], sizes = [2, 16], strides = [1, 1]} : vector<2x64xf32> to vector<2x16xf32>
    %177 = arith.negf %176 : vector<2x16xf32>
    %178 = math.exp %177 : vector<2x16xf32>
    %cst_49 = arith.constant 1.000000e+00 : f32
    %179 = vector.broadcast %cst_49 : f32 to vector<2x16xf32>
    %180 = arith.addf %179, %178 : vector<2x16xf32>
    %181 = arith.divf %179, %180 : vector<2x16xf32>
    %182 = arith.mulf %173, %98 : vector<2x16xf32>
    %183 = arith.mulf %167, %175 : vector<2x16xf32>
    %184 = arith.addf %182, %183 : vector<2x16xf32>
    %185 = math.tanh %184 : vector<2x16xf32>
    %186 = arith.mulf %181, %185 : vector<2x16xf32>
    %187 = vector.broadcast %156 : i32 to vector<2x1xi32>
    %188 = arith.cmpi sgt, %3, %187 : vector<2x1xi32>
    %189 = vector.shape_cast %188 : vector<2x1xi1> to vector<2x1xi1>
    %190 = vector.broadcast %189 : vector<2x1xi1> to vector<2x16xi1>
    %191 = arith.select %190, %186, %95 : vector<2x16xi1>, vector<2x16xf32>
    %192 = vector.shape_cast %188 : vector<2x1xi1> to vector<2x1xi1>
    %193 = vector.broadcast %192 : vector<2x1xi1> to vector<2x16xi1>
    %194 = arith.select %193, %184, %98 : vector<2x16xi1>, vector<2x16xf32>
    %cst_50 = arith.constant 0.000000e+00 : f32
    %195 = vector.shape_cast %188 : vector<2x1xi1> to vector<2x1xi1>
    %196 = vector.broadcast %195 : vector<2x1xi1> to vector<2x16xi1>
    %197 = vector.broadcast %cst_50 : f32 to vector<2x16xf32>
    %198 = arith.select %196, %186, %197 : vector<2x16xi1>, vector<2x16xf32>
    %199 = arith.index_cast %154 : i32 to index
    %c0_51 = arith.constant 0 : index
    %c0_52 = arith.constant 0 : index
    %200 = vector.load %arg8[%199, %c0_51, %c0_52] : memref<3x2x16xf32, #tpu.memory_space<vmem>>, vector<1x2x16xf32>
    %201 = vector.shape_cast %200 : vector<1x2x16xf32> to vector<2x16xf32>
    %202 = vector.shape_cast %198 : vector<2x16xf32> to vector<1x2x16xf32>
    tpu.vector_store %arg8[%199, %c0_51, %c0_52], %202 {strides = array<i32>} : memref<3x2x16xf32, #tpu.memory_space<vmem>>, vector<1x2x16xf32>,
    %c2_i32_53 = arith.constant 2 : i32
    %203 = arith.addi %6, %c2_i32_53 : i32
    %204 = arith.index_cast %c2_i32_53 : i32 to index
    %c0_54 = arith.constant 0 : index
    %c0_55 = arith.constant 0 : index
    %205 = vector.load %arg3[%204, %c0_54, %c0_55] : memref<3x2x64xf32, #tpu.memory_space<vmem>>, vector<1x2x64xf32>
    %206 = vector.shape_cast %205 : vector<1x2x64xf32> to vector<2x64xf32>
    %cst_56 = arith.constant dense<0.000000e+00> : vector<2x64xf32>
    %207 = tpu.matmul %142, %4, %cst_56 {dimension_numbers = #tpu.dot_dimension_numbers<[1], [0], [0], [1], [0, 0, 1, 1], [], []>} : vector<2x16xf32>, vector<16x64xf32>, vector<2x64xf32> -> vector<2x64xf32>
    %208 = arith.addf %206, %207 : vector<2x64xf32>
    %209 = vector.extract_strided_slice %208 {offsets = [0, 0], sizes = [2, 16], strides = [1, 1]} : vector<2x64xf32> to vector<2x16xf32>
    %210 = arith.negf %209 : vector<2x16xf32>
    %211 = math.exp %210 : vector<2x16xf32>
    %cst_57 = arith.constant 1.000000e+00 : f32
    %212 = vector.broadcast %cst_57 : f32 to vector<2x16xf32>
    %213 = arith.addf %212, %211 : vector<2x16xf32>
    %214 = arith.divf %212, %213 : vector<2x16xf32>
    %215 = vector.extract_strided_slice %208 {offsets = [0, 16], sizes = [2, 16], strides = [1, 1]} : vector<2x64xf32> to vector<2x16xf32>
    %216 = arith.negf %215 : vector<2x16xf32>
    %217 = math.exp %216 : vector<2x16xf32>
    %cst_58 = arith.constant 1.000000e+00 : f32
    %218 = vector.broadcast %cst_58 : f32 to vector<2x16xf32>
    %219 = arith.addf %218, %217 : vector<2x16xf32>
    %220 = arith.divf %218, %219 : vector<2x16xf32>
    %221 = vector.extract_strided_slice %208 {offsets = [0, 32], sizes = [2, 16], strides = [1, 1]} : vector<2x64xf32> to vector<2x16xf32>
    %222 = math.tanh %221 : vector<2x16xf32>
    %223 = vector.extract_strided_slice %208 {offsets = [0, 48], sizes = [2, 16], strides = [1, 1]} : vector<2x64xf32> to vector<2x16xf32>
    %224 = arith.negf %223 : vector<2x16xf32>
    %225 = math.exp %224 : vector<2x16xf32>
    %cst_59 = arith.constant 1.000000e+00 : f32
    %226 = vector.broadcast %cst_59 : f32 to vector<2x16xf32>
    %227 = arith.addf %226, %225 : vector<2x16xf32>
    %228 = arith.divf %226, %227 : vector<2x16xf32>
    %229 = arith.mulf %220, %145 : vector<2x16xf32>
    %230 = arith.mulf %214, %222 : vector<2x16xf32>
    %231 = arith.addf %229, %230 : vector<2x16xf32>
    %232 = math.tanh %231 : vector<2x16xf32>
    %233 = arith.mulf %228, %232 : vector<2x16xf32>
    %234 = vector.broadcast %203 : i32 to vector<2x1xi32>
    %235 = arith.cmpi sgt, %3, %234 : vector<2x1xi32>
    %236 = vector.shape_cast %235 : vector<2x1xi1> to vector<2x1xi1>
    %237 = vector.broadcast %236 : vector<2x1xi1> to vector<2x16xi1>
    %238 = arith.select %237, %233, %142 : vector<2x16xi1>, vector<2x16xf32>
    %239 = vector.shape_cast %235 : vector<2x1xi1> to vector<2x1xi1>
    %240 = vector.broadcast %239 : vector<2x1xi1> to vector<2x16xi1>
    %241 = arith.select %240, %231, %145 : vector<2x16xi1>, vector<2x16xf32>
    %cst_60 = arith.constant 0.000000e+00 : f32
    %242 = vector.shape_cast %235 : vector<2x1xi1> to vector<2x1xi1>
    %243 = vector.broadcast %242 : vector<2x1xi1> to vector<2x16xi1>
    %244 = vector.broadcast %cst_60 : f32 to vector<2x16xf32>
    %245 = arith.select %243, %233, %244 : vector<2x16xi1>, vector<2x16xf32>
    %246 = arith.index_cast %c2_i32_53 : i32 to index
    %c0_61 = arith.constant 0 : index
    %c0_62 = arith.constant 0 : index
    %247 = vector.load %arg7[%246, %c0_61, %c0_62] : memref<3x2x16xf32, #tpu.memory_space<vmem>>, vector<1x2x16xf32>
    %248 = vector.shape_cast %247 : vector<1x2x16xf32> to vector<2x16xf32>
    %249 = vector.shape_cast %245 : vector<2x16xf32> to vector<1x2x16xf32>
    tpu.vector_store %arg7[%246, %c0_61, %c0_62], %249 {strides = array<i32>} : memref<3x2x16xf32, #tpu.memory_space<vmem>>, vector<1x2x16xf32>,
    %c2_i32_63 = arith.constant 2 : i32
    %250 = arith.subi %c2_i32_63, %c2_i32_53 : i32
    %251 = arith.addi %6, %c2_i32_53 : i32
    %c2_i32_64 = arith.constant 2 : i32
    %252 = arith.subi %c2_i32_64, %251 : i32
    %253 = arith.index_cast %250 : i32 to index
    %c0_65 = arith.constant 0 : index
    %c0_66 = arith.constant 0 : index
    %254 = vector.load %arg4[%253, %c0_65, %c0_66] : memref<3x2x64xf32, #tpu.memory_space<vmem>>, vector<1x2x64xf32>
    %255 = vector.shape_cast %254 : vector<1x2x64xf32> to vector<2x64xf32>
    %cst_67 = arith.constant dense<0.000000e+00> : vector<2x64xf32>
    %256 = tpu.matmul %191, %5, %cst_67 {dimension_numbers = #tpu.dot_dimension_numbers<[1], [0], [0], [1], [0, 0, 1, 1], [], []>} : vector<2x16xf32>, vector<16x64xf32>, vector<2x64xf32> -> vector<2x64xf32>
    %257 = arith.addf %255, %256 : vector<2x64xf32>
    %258 = vector.extract_strided_slice %257 {offsets = [0, 0], sizes = [2, 16], strides = [1, 1]} : vector<2x64xf32> to vector<2x16xf32>
    %259 = arith.negf %258 : vector<2x16xf32>
    %260 = math.exp %259 : vector<2x16xf32>
    %cst_68 = arith.constant 1.000000e+00 : f32
    %261 = vector.broadcast %cst_68 : f32 to vector<2x16xf32>
    %262 = arith.addf %261, %260 : vector<2x16xf32>
    %263 = arith.divf %261, %262 : vector<2x16xf32>
    %264 = vector.extract_strided_slice %257 {offsets = [0, 16], sizes = [2, 16], strides = [1, 1]} : vector<2x64xf32> to vector<2x16xf32>
    %265 = arith.negf %264 : vector<2x16xf32>
    %266 = math.exp %265 : vector<2x16xf32>
    %cst_69 = arith.constant 1.000000e+00 : f32
    %267 = vector.broadcast %cst_69 : f32 to vector<2x16xf32>
    %268 = arith.addf %267, %266 : vector<2x16xf32>
    %269 = arith.divf %267, %268 : vector<2x16xf32>
    %270 = vector.extract_strided_slice %257 {offsets = [0, 32], sizes = [2, 16], strides = [1, 1]} : vector<2x64xf32> to vector<2x16xf32>
    %271 = math.tanh %270 : vector<2x16xf32>
    %272 = vector.extract_strided_slice %257 {offsets = [0, 48], sizes = [2, 16], strides = [1, 1]} : vector<2x64xf32> to vector<2x16xf32>
    %273 = arith.negf %272 : vector<2x16xf32>
    %274 = math.exp %273 : vector<2x16xf32>
    %cst_70 = arith.constant 1.000000e+00 : f32
    %275 = vector.broadcast %cst_70 : f32 to vector<2x16xf32>
    %276 = arith.addf %275, %274 : vector<2x16xf32>
    %277 = arith.divf %275, %276 : vector<2x16xf32>
    %278 = arith.mulf %269, %194 : vector<2x16xf32>
    %279 = arith.mulf %263, %271 : vector<2x16xf32>
    %280 = arith.addf %278, %279 : vector<2x16xf32>
    %281 = math.tanh %280 : vector<2x16xf32>
    %282 = arith.mulf %277, %281 : vector<2x16xf32>
    %283 = vector.broadcast %252 : i32 to vector<2x1xi32>
    %284 = arith.cmpi sgt, %3, %283 : vector<2x1xi32>
    %285 = vector.shape_cast %284 : vector<2x1xi1> to vector<2x1xi1>
    %286 = vector.broadcast %285 : vector<2x1xi1> to vector<2x16xi1>
    %287 = arith.select %286, %282, %191 : vector<2x16xi1>, vector<2x16xf32>
    %288 = vector.shape_cast %284 : vector<2x1xi1> to vector<2x1xi1>
    %289 = vector.broadcast %288 : vector<2x1xi1> to vector<2x16xi1>
    %290 = arith.select %289, %280, %194 : vector<2x16xi1>, vector<2x16xf32>
    %cst_71 = arith.constant 0.000000e+00 : f32
    %291 = vector.shape_cast %284 : vector<2x1xi1> to vector<2x1xi1>
    %292 = vector.broadcast %291 : vector<2x1xi1> to vector<2x16xi1>
    %293 = vector.broadcast %cst_71 : f32 to vector<2x16xf32>
    %294 = arith.select %292, %282, %293 : vector<2x16xi1>, vector<2x16xf32>
    %295 = arith.index_cast %250 : i32 to index
    %c0_72 = arith.constant 0 : index
    %c0_73 = arith.constant 0 : index
    %296 = vector.load %arg8[%295, %c0_72, %c0_73] : memref<3x2x16xf32, #tpu.memory_space<vmem>>, vector<1x2x16xf32>
    %297 = vector.shape_cast %296 : vector<1x2x16xf32> to vector<2x16xf32>
    %298 = vector.shape_cast %294 : vector<2x16xf32> to vector<1x2x16xf32>
    tpu.vector_store %arg8[%295, %c0_72, %c0_73], %298 {strides = array<i32>} : memref<3x2x16xf32, #tpu.memory_space<vmem>>, vector<1x2x16xf32>,
    %c3_i32_74 = arith.constant 3 : i32
    %c0_75 = arith.constant 0 : index
    %c0_76 = arith.constant 0 : index
    %299 = vector.load %arg9[%c0_75, %c0_76] : memref<2x16xf32, #tpu.memory_space<vmem>>, vector<2x16xf32>
    tpu.vector_store %arg9[%c0_75, %c0_76], %238 {strides = array<i32>} : memref<2x16xf32, #tpu.memory_space<vmem>>, vector<2x16xf32>,
    %c0_77 = arith.constant 0 : index
    %c0_78 = arith.constant 0 : index
    %300 = vector.load %arg10[%c0_77, %c0_78] : memref<2x16xf32, #tpu.memory_space<vmem>>, vector<2x16xf32>
    tpu.vector_store %arg10[%c0_77, %c0_78], %241 {strides = array<i32>} : memref<2x16xf32, #tpu.memory_space<vmem>>, vector<2x16xf32>,
    %c0_79 = arith.constant 0 : index
    %c0_80 = arith.constant 0 : index
    %301 = vector.load %arg11[%c0_79, %c0_80] : memref<2x16xf32, #tpu.memory_space<vmem>>, vector<2x16xf32>
    tpu.vector_store %arg11[%c0_79, %c0_80], %287 {strides = array<i32>} : memref<2x16xf32, #tpu.memory_space<vmem>>, vector<2x16xf32>,
    %c0_81 = arith.constant 0 : index
    %c0_82 = arith.constant 0 : index
    %302 = vector.load %arg12[%c0_81, %c0_82] : memref<2x16xf32, #tpu.memory_space<vmem>>, vector<2x16xf32>
    tpu.vector_store %arg12[%c0_81, %c0_82], %290 {strides = array<i32>} : memref<2x16xf32, #tpu.memory_space<vmem>>, vector<2x16xf32>,
    return
  }
  func.func @transform_0(%arg0: i32, %arg1: i32) -> (i32, i32) {
    %c0_i32 = arith.constant 0 : i32
    %c0_i32_0 = arith.constant 0 : i32
    return %arg0, %c0_i32 : i32, i32
  }
  func.func @transform_1(%arg0: i32, %arg1: i32) -> (i32, i32, i32) {
    %c0_i32 = arith.constant 0 : i32
    %c0_i32_0 = arith.constant 0 : i32
    return %arg1, %arg0, %c0_i32 : i32, i32, i32
  }
  func.func @transform_2(%arg0: i32, %arg1: i32) -> (i32, i32, i32) {
    %c0_i32 = arith.constant 0 : i32
    %0 = arith.subi %c0_i32, %arg1 : i32
    %c0_i32_0 = arith.constant 0 : i32
    %c0_i32_1 = arith.constant 0 : i32
    return %0, %arg0, %c0_i32_0 : i32, i32, i32
  }
  func.func @transform_3(%arg0: i32, %arg1: i32) -> (i32, i32) {
    %c0_i32 = arith.constant 0 : i32
    %c0_i32_0 = arith.constant 0 : i32
    %c0_i32_1 = arith.constant 0 : i32
    return %c0_i32, %c0_i32_0 : i32, i32
  }
  func.func @transform_4(%arg0: i32, %arg1: i32) -> (i32, i32) {
    %c0_i32 = arith.constant 0 : i32
    %c0_i32_0 = arith.constant 0 : i32
    %c0_i32_1 = arith.constant 0 : i32
    return %c0_i32, %c0_i32_0 : i32, i32
  }
  func.func @transform_5(%arg0: i32, %arg1: i32) -> (i32, i32, i32) {
    %c0_i32 = arith.constant 0 : i32
    %c0_i32_0 = arith.constant 0 : i32
    return %arg1, %arg0, %c0_i32 : i32, i32, i32
  }
  func.func @transform_6(%arg0: i32, %arg1: i32) -> (i32, i32, i32) {
    %c0_i32 = arith.constant 0 : i32
    %0 = arith.subi %c0_i32, %arg1 : i32
    %c0_i32_0 = arith.constant 0 : i32
    %c0_i32_1 = arith.constant 0 : i32
    return %0, %arg0, %c0_i32_0 : i32, i32, i32
  }
}

module attributes {stable_mosaic.version = 11 : i64} {
  func.func @_multi_att_kernel(%arg0: i32, %arg1: memref<2x1xi32, #tpu.memory_space<vmem>>, %arg2: memref<3x2x16xf32, #tpu.memory_space<vmem>>, %arg3: memref<3x2x16xf32, #tpu.memory_space<vmem>>, %arg4: memref<16x16xf32, #tpu.memory_space<vmem>>, %arg5: memref<16x16xf32, #tpu.memory_space<vmem>>, %arg6: memref<16x3xf32, #tpu.memory_space<vmem>>, %arg7: memref<16x32xf32, #tpu.memory_space<vmem>>, %arg8: memref<16x32xf32, #tpu.memory_space<vmem>>, %arg9: memref<1x32xf32, #tpu.memory_space<vmem>>, %arg10: memref<32x4xf32, #tpu.memory_space<vmem>>, %arg11: memref<1x4xf32, #tpu.memory_space<vmem>>, %arg12: memref<2x4xf32, #tpu.memory_space<vmem>>, %arg13: memref<3x2x3xf32, #tpu.memory_space<vmem>>) attributes {dimension_semantics = [#tpu.dimension_semantics<parallel>], iteration_bounds = array<i64: 1>, scalar_prefetch = 0 : i64, scratch_operands = 1 : i64, tpu.core_type = #tpu.core_type<tc>, window_params = [{transform_indices = @transform_0, window_bounds = array<i64: 2, 1>}, {transform_indices = @transform_1, window_bounds = array<i64: 3, 2, 16>}, {transform_indices = @transform_2, window_bounds = array<i64: 3, 2, 16>}, {pipeline_mode = #tpu.pipeline_mode<synchronous>, transform_indices = @transform_3, window_bounds = array<i64: 16, 16>}, {pipeline_mode = #tpu.pipeline_mode<synchronous>, transform_indices = @transform_4, window_bounds = array<i64: 16, 16>}, {pipeline_mode = #tpu.pipeline_mode<synchronous>, transform_indices = @transform_5, window_bounds = array<i64: 16, 3>}, {pipeline_mode = #tpu.pipeline_mode<synchronous>, transform_indices = @transform_6, window_bounds = array<i64: 16, 32>}, {pipeline_mode = #tpu.pipeline_mode<synchronous>, transform_indices = @transform_7, window_bounds = array<i64: 16, 32>}, {pipeline_mode = #tpu.pipeline_mode<synchronous>, transform_indices = @transform_8, window_bounds = array<i64: 1, 32>}, {pipeline_mode = #tpu.pipeline_mode<synchronous>, transform_indices = @transform_9, window_bounds = array<i64: 32, 4>}, {pipeline_mode = #tpu.pipeline_mode<synchronous>, transform_indices = @transform_10, window_bounds = array<i64: 1, 4>}, {transform_indices = @transform_11, window_bounds = array<i64: 2, 4>}]} {
    %c0 = arith.constant 0 : index
    %c0_0 = arith.constant 0 : index
    %0 = vector.load %arg4[%c0, %c0_0] : memref<16x16xf32, #tpu.memory_space<vmem>>, vector<16x16xf32>
    %c0_1 = arith.constant 0 : index
    %c0_2 = arith.constant 0 : index
    %1 = vector.load %arg5[%c0_1, %c0_2] : memref<16x16xf32, #tpu.memory_space<vmem>>, vector<16x16xf32>
    %c0_3 = arith.constant 0 : index
    %c0_4 = arith.constant 0 : index
    %2 = vector.load %arg6[%c0_3, %c0_4] : memref<16x3xf32, #tpu.memory_space<vmem>>, vector<16x3xf32>
    %c0_i32 = arith.constant 0 : i32
    %3 = arith.index_cast %c0_i32 : i32 to index
    %c0_5 = arith.constant 0 : index
    %c0_6 = arith.constant 0 : index
    %4 = vector.load %arg2[%3, %c0_5, %c0_6] : memref<3x2x16xf32, #tpu.memory_space<vmem>>, vector<1x2x16xf32>
    %5 = vector.shape_cast %4 : vector<1x2x16xf32> to vector<2x16xf32>
    %cst = arith.constant dense<0.000000e+00> : vector<2x16xf32>
    %6 = tpu.matmul %5, %0, %cst {dimension_numbers = #tpu.dot_dimension_numbers<[1], [0], [0], [1], [0, 0, 1, 1], [], []>} : vector<2x16xf32>, vector<16x16xf32>, vector<2x16xf32> -> vector<2x16xf32>
    %7 = arith.index_cast %c0_i32 : i32 to index
    %c0_7 = arith.constant 0 : index
    %c0_8 = arith.constant 0 : index
    %8 = vector.load %arg3[%7, %c0_7, %c0_8] : memref<3x2x16xf32, #tpu.memory_space<vmem>>, vector<1x2x16xf32>
    %9 = vector.shape_cast %8 : vector<1x2x16xf32> to vector<2x16xf32>
    %cst_9 = arith.constant dense<0.000000e+00> : vector<2x16xf32>
    %10 = tpu.matmul %9, %1, %cst_9 {dimension_numbers = #tpu.dot_dimension_numbers<[1], [0], [0], [1], [0, 0, 1, 1], [], []>} : vector<2x16xf32>, vector<16x16xf32>, vector<2x16xf32> -> vector<2x16xf32>
    %11 = arith.addf %6, %10 : vector<2x16xf32>
    %12 = math.tanh %11 : vector<2x16xf32>
    %cst_10 = arith.constant dense<0.000000e+00> : vector<2x3xf32>
    %13 = tpu.matmul %12, %2, %cst_10 {dimension_numbers = #tpu.dot_dimension_numbers<[1], [0], [0], [1], [0, 0, 1, 1], [], []>} : vector<2x16xf32>, vector<16x3xf32>, vector<2x3xf32> -> vector<2x3xf32>
    %14 = arith.index_cast %c0_i32 : i32 to index
    %c0_11 = arith.constant 0 : index
    %c0_12 = arith.constant 0 : index
    %15 = vector.load %arg13[%14, %c0_11, %c0_12] : memref<3x2x3xf32, #tpu.memory_space<vmem>>, vector<1x2x3xf32>
    %16 = vector.shape_cast %15 : vector<1x2x3xf32> to vector<2x3xf32>
    %17 = vector.shape_cast %13 : vector<2x3xf32> to vector<1x2x3xf32>
    tpu.vector_store %arg13[%14, %c0_11, %c0_12], %17 {strides = array<i32>} : memref<3x2x3xf32, #tpu.memory_space<vmem>>, vector<1x2x3xf32>,
    %c1_i32 = arith.constant 1 : i32
    %18 = arith.index_cast %c1_i32 : i32 to index
    %c0_13 = arith.constant 0 : index
    %c0_14 = arith.constant 0 : index
    %19 = vector.load %arg2[%18, %c0_13, %c0_14] : memref<3x2x16xf32, #tpu.memory_space<vmem>>, vector<1x2x16xf32>
    %20 = vector.shape_cast %19 : vector<1x2x16xf32> to vector<2x16xf32>
    %cst_15 = arith.constant dense<0.000000e+00> : vector<2x16xf32>
    %21 = tpu.matmul %20, %0, %cst_15 {dimension_numbers = #tpu.dot_dimension_numbers<[1], [0], [0], [1], [0, 0, 1, 1], [], []>} : vector<2x16xf32>, vector<16x16xf32>, vector<2x16xf32> -> vector<2x16xf32>
    %22 = arith.index_cast %c1_i32 : i32 to index
    %c0_16 = arith.constant 0 : index
    %c0_17 = arith.constant 0 : index
    %23 = vector.load %arg3[%22, %c0_16, %c0_17] : memref<3x2x16xf32, #tpu.memory_space<vmem>>, vector<1x2x16xf32>
    %24 = vector.shape_cast %23 : vector<1x2x16xf32> to vector<2x16xf32>
    %cst_18 = arith.constant dense<0.000000e+00> : vector<2x16xf32>
    %25 = tpu.matmul %24, %1, %cst_18 {dimension_numbers = #tpu.dot_dimension_numbers<[1], [0], [0], [1], [0, 0, 1, 1], [], []>} : vector<2x16xf32>, vector<16x16xf32>, vector<2x16xf32> -> vector<2x16xf32>
    %26 = arith.addf %21, %25 : vector<2x16xf32>
    %27 = math.tanh %26 : vector<2x16xf32>
    %cst_19 = arith.constant dense<0.000000e+00> : vector<2x3xf32>
    %28 = tpu.matmul %27, %2, %cst_19 {dimension_numbers = #tpu.dot_dimension_numbers<[1], [0], [0], [1], [0, 0, 1, 1], [], []>} : vector<2x16xf32>, vector<16x3xf32>, vector<2x3xf32> -> vector<2x3xf32>
    %29 = arith.index_cast %c1_i32 : i32 to index
    %c0_20 = arith.constant 0 : index
    %c0_21 = arith.constant 0 : index
    %30 = vector.load %arg13[%29, %c0_20, %c0_21] : memref<3x2x3xf32, #tpu.memory_space<vmem>>, vector<1x2x3xf32>
    %31 = vector.shape_cast %30 : vector<1x2x3xf32> to vector<2x3xf32>
    %32 = vector.shape_cast %28 : vector<2x3xf32> to vector<1x2x3xf32>
    tpu.vector_store %arg13[%29, %c0_20, %c0_21], %32 {strides = array<i32>} : memref<3x2x3xf32, #tpu.memory_space<vmem>>, vector<1x2x3xf32>,
    %c2_i32 = arith.constant 2 : i32
    %33 = arith.index_cast %c2_i32 : i32 to index
    %c0_22 = arith.constant 0 : index
    %c0_23 = arith.constant 0 : index
    %34 = vector.load %arg2[%33, %c0_22, %c0_23] : memref<3x2x16xf32, #tpu.memory_space<vmem>>, vector<1x2x16xf32>
    %35 = vector.shape_cast %34 : vector<1x2x16xf32> to vector<2x16xf32>
    %cst_24 = arith.constant dense<0.000000e+00> : vector<2x16xf32>
    %36 = tpu.matmul %35, %0, %cst_24 {dimension_numbers = #tpu.dot_dimension_numbers<[1], [0], [0], [1], [0, 0, 1, 1], [], []>} : vector<2x16xf32>, vector<16x16xf32>, vector<2x16xf32> -> vector<2x16xf32>
    %37 = arith.index_cast %c2_i32 : i32 to index
    %c0_25 = arith.constant 0 : index
    %c0_26 = arith.constant 0 : index
    %38 = vector.load %arg3[%37, %c0_25, %c0_26] : memref<3x2x16xf32, #tpu.memory_space<vmem>>, vector<1x2x16xf32>
    %39 = vector.shape_cast %38 : vector<1x2x16xf32> to vector<2x16xf32>
    %cst_27 = arith.constant dense<0.000000e+00> : vector<2x16xf32>
    %40 = tpu.matmul %39, %1, %cst_27 {dimension_numbers = #tpu.dot_dimension_numbers<[1], [0], [0], [1], [0, 0, 1, 1], [], []>} : vector<2x16xf32>, vector<16x16xf32>, vector<2x16xf32> -> vector<2x16xf32>
    %41 = arith.addf %36, %40 : vector<2x16xf32>
    %42 = math.tanh %41 : vector<2x16xf32>
    %cst_28 = arith.constant dense<0.000000e+00> : vector<2x3xf32>
    %43 = tpu.matmul %42, %2, %cst_28 {dimension_numbers = #tpu.dot_dimension_numbers<[1], [0], [0], [1], [0, 0, 1, 1], [], []>} : vector<2x16xf32>, vector<16x3xf32>, vector<2x3xf32> -> vector<2x3xf32>
    %44 = arith.index_cast %c2_i32 : i32 to index
    %c0_29 = arith.constant 0 : index
    %c0_30 = arith.constant 0 : index
    %45 = vector.load %arg13[%44, %c0_29, %c0_30] : memref<3x2x3xf32, #tpu.memory_space<vmem>>, vector<1x2x3xf32>
    %46 = vector.shape_cast %45 : vector<1x2x3xf32> to vector<2x3xf32>
    %47 = vector.shape_cast %43 : vector<2x3xf32> to vector<1x2x3xf32>
    tpu.vector_store %arg13[%44, %c0_29, %c0_30], %47 {strides = array<i32>} : memref<3x2x3xf32, #tpu.memory_space<vmem>>, vector<1x2x3xf32>,
    %c3_i32 = arith.constant 3 : i32
    %c0_31 = arith.constant 0 : index
    %c0_32 = arith.constant 0 : index
    %48 = vector.load %arg1[%c0_31, %c0_32] : memref<2x1xi32, #tpu.memory_space<vmem>>, vector<2x1xi32>
    %c0_33 = arith.constant 0 : index
    %c0_34 = arith.constant 0 : index
    %c0_35 = arith.constant 0 : index
    %49 = vector.load %arg13[%c0_33, %c0_34, %c0_35] : memref<3x2x3xf32, #tpu.memory_space<vmem>>, vector<3x2x3xf32>
    %50 = tpu.iota {dimensions = array<i32: 0>} : vector<3x2x3xi32>
    %51 = vector.shape_cast %48 : vector<2x1xi32> to vector<1x2x1xi32>
    %52 = vector.broadcast %51 : vector<1x2x1xi32> to vector<3x2x3xi32>
    %53 = arith.cmpi slt, %50, %52 : vector<3x2x3xi32>
    %cst_36 = arith.constant -1.000000e+30 : f32
    %54 = vector.broadcast %cst_36 : f32 to vector<3x2x3xf32>
    %55 = arith.select %53, %49, %54 : vector<3x2x3xi1>, vector<3x2x3xf32>
    %cst_37 = arith.constant dense<0xFF800000> : vector<2x3xf32>
    %56 = vector.multi_reduction <maximumf>, %55, %cst_37 [0] : vector<3x2x3xf32> to vector<2x3xf32>
    %57 = vector.shape_cast %56 : vector<2x3xf32> to vector<1x2x3xf32>
    %58 = vector.broadcast %57 : vector<1x2x3xf32> to vector<3x2x3xf32>
    %59 = arith.subf %55, %58 : vector<3x2x3xf32>
    %60 = math.exp %59 : vector<3x2x3xf32>
    %cst_38 = arith.constant dense<0.000000e+00> : vector<2x3xf32>
    %61 = vector.multi_reduction <add>, %60, %cst_38 [0] : vector<3x2x3xf32> to vector<2x3xf32>
    %62 = vector.shape_cast %61 : vector<2x3xf32> to vector<1x2x3xf32>
    %63 = tpu.reciprocal %62 {approx = true} : vector<1x2x3xf32> -> vector<1x2x3xf32>
    %64 = vector.broadcast %63 : vector<1x2x3xf32> to vector<3x2x3xf32>
    %65 = arith.mulf %60, %64 : vector<3x2x3xf32>
    %cst_39 = arith.constant dense<0.000000e+00> : vector<3x2xf32>
    %66 = vector.multi_reduction <add>, %65, %cst_39 [2] : vector<3x2x3xf32> to vector<3x2xf32>
    %67 = vector.shape_cast %66 : vector<3x2xf32> to vector<3x2x1xf32>
    %cst_40 = arith.constant 3.000000e+00 : f32
    %68 = vector.broadcast %cst_40 : f32 to vector<3x2x1xf32>
    %69 = arith.divf %67, %68 : vector<3x2x1xf32>
    %c0_41 = arith.constant 0 : index
    %c0_42 = arith.constant 0 : index
    %c0_43 = arith.constant 0 : index
    %70 = vector.load %arg2[%c0_41, %c0_42, %c0_43] : memref<3x2x16xf32, #tpu.memory_space<vmem>>, vector<3x2x16xf32>
    %71 = vector.broadcast %69 : vector<3x2x1xf32> to vector<3x2x16xf32>
    %72 = arith.mulf %71, %70 : vector<3x2x16xf32>
    %cst_44 = arith.constant dense<0.000000e+00> : vector<2x16xf32>
    %73 = vector.multi_reduction <add>, %72, %cst_44 [0] : vector<3x2x16xf32> to vector<2x16xf32>
    %c0_45 = arith.constant 0 : index
    %c0_46 = arith.constant 0 : index
    %c0_47 = arith.constant 0 : index
    %74 = vector.load %arg3[%c0_45, %c0_46, %c0_47] : memref<3x2x16xf32, #tpu.memory_space<vmem>>, vector<3x2x16xf32>
    %75 = vector.broadcast %69 : vector<3x2x1xf32> to vector<3x2x16xf32>
    %76 = arith.mulf %75, %74 : vector<3x2x16xf32>
    %cst_48 = arith.constant dense<0.000000e+00> : vector<2x16xf32>
    %77 = vector.multi_reduction <add>, %76, %cst_48 [0] : vector<3x2x16xf32> to vector<2x16xf32>
    %c0_49 = arith.constant 0 : index
    %c0_50 = arith.constant 0 : index
    %78 = vector.load %arg7[%c0_49, %c0_50] : memref<16x32xf32, #tpu.memory_space<vmem>>, vector<16x32xf32>
    %cst_51 = arith.constant dense<0.000000e+00> : vector<2x32xf32>
    %79 = tpu.matmul %73, %78, %cst_51 {dimension_numbers = #tpu.dot_dimension_numbers<[1], [0], [0], [1], [0, 0, 1, 1], [], []>} : vector<2x16xf32>, vector<16x32xf32>, vector<2x32xf32> -> vector<2x32xf32>
    %c0_52 = arith.constant 0 : index
    %c0_53 = arith.constant 0 : index
    %80 = vector.load %arg8[%c0_52, %c0_53] : memref<16x32xf32, #tpu.memory_space<vmem>>, vector<16x32xf32>
    %cst_54 = arith.constant dense<0.000000e+00> : vector<2x32xf32>
    %81 = tpu.matmul %77, %80, %cst_54 {dimension_numbers = #tpu.dot_dimension_numbers<[1], [0], [0], [1], [0, 0, 1, 1], [], []>} : vector<2x16xf32>, vector<16x32xf32>, vector<2x32xf32> -> vector<2x32xf32>
    %82 = arith.addf %79, %81 : vector<2x32xf32>
    %c0_55 = arith.constant 0 : index
    %c0_56 = arith.constant 0 : index
    %83 = vector.load %arg9[%c0_55, %c0_56] : memref<1x32xf32, #tpu.memory_space<vmem>>, vector<1x32xf32>
    %84 = vector.broadcast %83 : vector<1x32xf32> to vector<2x32xf32>
    %85 = arith.addf %82, %84 : vector<2x32xf32>
    %c0_57 = arith.constant 0 : index
    %c0_58 = arith.constant 0 : index
    %86 = vector.load %arg10[%c0_57, %c0_58] : memref<32x4xf32, #tpu.memory_space<vmem>>, vector<32x4xf32>
    %cst_59 = arith.constant dense<0.000000e+00> : vector<2x4xf32>
    %87 = tpu.matmul %85, %86, %cst_59 {dimension_numbers = #tpu.dot_dimension_numbers<[1], [0], [0], [1], [0, 0, 1, 1], [], []>} : vector<2x32xf32>, vector<32x4xf32>, vector<2x4xf32> -> vector<2x4xf32>
    %c0_60 = arith.constant 0 : index
    %c0_61 = arith.constant 0 : index
    %88 = vector.load %arg11[%c0_60, %c0_61] : memref<1x4xf32, #tpu.memory_space<vmem>>, vector<1x4xf32>
    %89 = vector.broadcast %88 : vector<1x4xf32> to vector<2x4xf32>
    %90 = arith.addf %87, %89 : vector<2x4xf32>
    %c0_62 = arith.constant 0 : index
    %c0_63 = arith.constant 0 : index
    %91 = vector.load %arg12[%c0_62, %c0_63] : memref<2x4xf32, #tpu.memory_space<vmem>>, vector<2x4xf32>
    tpu.vector_store %arg12[%c0_62, %c0_63], %90 {strides = array<i32>} : memref<2x4xf32, #tpu.memory_space<vmem>>, vector<2x4xf32>,
    return
  }
  func.func @transform_0(%arg0: i32) -> (i32, i32) {
    %c0_i32 = arith.constant 0 : i32
    %c0_i32_0 = arith.constant 0 : i32
    return %arg0, %c0_i32 : i32, i32
  }
  func.func @transform_1(%arg0: i32) -> (i32, i32, i32) {
    %c0_i32 = arith.constant 0 : i32
    %c0_i32_0 = arith.constant 0 : i32
    %c0_i32_1 = arith.constant 0 : i32
    return %c0_i32, %arg0, %c0_i32_0 : i32, i32, i32
  }
  func.func @transform_2(%arg0: i32) -> (i32, i32, i32) {
    %c0_i32 = arith.constant 0 : i32
    %c0_i32_0 = arith.constant 0 : i32
    %c0_i32_1 = arith.constant 0 : i32
    return %c0_i32, %arg0, %c0_i32_0 : i32, i32, i32
  }
  func.func @transform_3(%arg0: i32) -> (i32, i32) {
    %c0_i32 = arith.constant 0 : i32
    %c0_i32_0 = arith.constant 0 : i32
    %c0_i32_1 = arith.constant 0 : i32
    return %c0_i32, %c0_i32_0 : i32, i32
  }
  func.func @transform_4(%arg0: i32) -> (i32, i32) {
    %c0_i32 = arith.constant 0 : i32
    %c0_i32_0 = arith.constant 0 : i32
    %c0_i32_1 = arith.constant 0 : i32
    return %c0_i32, %c0_i32_0 : i32, i32
  }
  func.func @transform_5(%arg0: i32) -> (i32, i32) {
    %c0_i32 = arith.constant 0 : i32
    %c0_i32_0 = arith.constant 0 : i32
    %c0_i32_1 = arith.constant 0 : i32
    return %c0_i32, %c0_i32_0 : i32, i32
  }
  func.func @transform_6(%arg0: i32) -> (i32, i32) {
    %c0_i32 = arith.constant 0 : i32
    %c0_i32_0 = arith.constant 0 : i32
    %c0_i32_1 = arith.constant 0 : i32
    return %c0_i32, %c0_i32_0 : i32, i32
  }
  func.func @transform_7(%arg0: i32) -> (i32, i32) {
    %c0_i32 = arith.constant 0 : i32
    %c0_i32_0 = arith.constant 0 : i32
    %c0_i32_1 = arith.constant 0 : i32
    return %c0_i32, %c0_i32_0 : i32, i32
  }
  func.func @transform_8(%arg0: i32) -> (i32, i32) {
    %c0_i32 = arith.constant 0 : i32
    %c0_i32_0 = arith.constant 0 : i32
    %c0_i32_1 = arith.constant 0 : i32
    return %c0_i32, %c0_i32_0 : i32, i32
  }
  func.func @transform_9(%arg0: i32) -> (i32, i32) {
    %c0_i32 = arith.constant 0 : i32
    %c0_i32_0 = arith.constant 0 : i32
    %c0_i32_1 = arith.constant 0 : i32
    return %c0_i32, %c0_i32_0 : i32, i32
  }
  func.func @transform_10(%arg0: i32) -> (i32, i32) {
    %c0_i32 = arith.constant 0 : i32
    %c0_i32_0 = arith.constant 0 : i32
    %c0_i32_1 = arith.constant 0 : i32
    return %c0_i32, %c0_i32_0 : i32, i32
  }
  func.func @transform_11(%arg0: i32) -> (i32, i32) {
    %c0_i32 = arith.constant 0 : i32
    %c0_i32_0 = arith.constant 0 : i32
    return %arg0, %c0_i32 : i32, i32
  }
}

</mosaic_0001>

<llo_original>
// kernel: lt.19
$region0: #{lt.19}
  #allocation0 [shape = 's32[1]{0}', space=sflag, size = 0x4, scoped, tag = 'scoped memory for lt.19']
  %s0 = inlined_call_operand.vmem [shape: s32[6], index: 0, kind: input, shape index: {}]
  %s1 = inlined_call_operand.vmem [shape: s32[6], index: 1, kind: input, shape index: {}]
  %s2 = inlined_call_operand.vmem [shape: pred[6], index: 2, kind: output, shape index: {}]
  %v3 = vld [vmem:[%s0] sm:$0x1]
  %v4 = vld [vmem:[%s1] sm:$0x1]
  %5 = xla_tuple %v3, %v4
  %6 = xla_tuple %5
  %vm7 = vcmp.lt.s32.totalorder %v3, %v4
  %v8 = vsel %vm7, 1, 0
  %9 = xla_tuple %v8
  %v10 = vpack.c.b16 0, %v8
  %v11 = vpack.c.b8 0, %v10
  %13 = vst [vmem:[%s2] sm:$0x1] %v11

// kernel: hierarchical_multi_attention_forward.6
$region0: #{hierarchical_multi_attention_forward.6}
  #allocation0 [shape = 'u32[]', space=smem, size = 0x4, offset = 0x4, fixed_abs, tag = 'smem constant byte address 0x4 - core index']
  #allocation1 [shape = 'u32[144,128]{1,0:T(1,128)}', space=vmem, size = 0x12000, scoped, tag = 'internal scratch']
  %s0 = inlined_call_operand.hbm [shape: f32[48,32], index: 0, kind: input, shape index: {}]
  %s1 = inlined_call_operand.hbm [shape: f32[32,64], index: 1, kind: input, shape index: {}]
  %s2 = inlined_call_operand.hbm [shape: f32[1,64], index: 2, kind: input, shape index: {}]
  %s3 = inlined_call_operand.hbm [shape: f32[32,64], index: 3, kind: input, shape index: {}]
  %s4 = inlined_call_operand.hbm [shape: f32[1,64], index: 4, kind: input, shape index: {}]
  %s5 = inlined_call_operand.hbm [shape: f32[48,64], index: 5, kind: output, shape index: {0}]
  %s6 = inlined_call_operand.hbm [shape: f32[48,64], index: 6, kind: output, shape index: {1}]
  %7 = xla_tuple %s5, %s6
  %s8 = sld [smem:[#allocation0]]
  $region58: #{hierarchical_multi_attention_forward.6} parent=0
    _
  %s10 = ssub.s32 1, %s8
  %s11 = scalar_select 0, %s10, %s8
  $region1: #{hierarchical_multi_attention_forward.6} parent=0
    #allocation2 [shape = 'u8[24576]{0}', space=vmem, size = 0x6000, scoped, tag = 'input window, operand 0, single buffered']
    #allocation3 [shape = 's32[1]{0}', space=sflag, size = 0x4, scoped, tag = 'scoped memory for hierarchical_multi_attention_forward.6']
    #allocation4 [shape = 's32[1]{0}', space=sflag, size = 0x4, scoped, tag = 'scoped memory for hierarchical_multi_attention_forward.6']
    #allocation5 [shape = 'u8[16384]{0}', space=vmem, size = 0x4000, scoped, tag = 'input window, operand 1, single buffered']
    #allocation6 [shape = 's32[1]{0}', space=sflag, size = 0x4, scoped, tag = 'scoped memory for hierarchical_multi_attention_forward.6']
    #allocation7 [shape = 'u8[512]{0}', space=vmem, size = 0x400, scoped, tag = 'input window, operand 2, single buffered']
    #allocation8 [shape = 'u8[16384]{0}', space=vmem, size = 0x4000, scoped, tag = 'input window, operand 3, single buffered']
    #allocation9 [shape = 's32[1]{0}', space=sflag, size = 0x4, scoped, tag = 'scoped memory for hierarchical_multi_attention_forward.6']
    #allocation10 [shape = 'u8[512]{0}', space=vmem, size = 0x400, scoped, tag = 'input window, operand 4, single buffered']
    #allocation11 [shape = 'u8[24576]{0}', space=vmem, size = 0x6000, scoped, tag = 'output window, operand 0, single buffered']
    #allocation12 [shape = 'u8[24576]{0}', space=vmem, size = 0x6000, scoped, tag = 'output window, operand 1, single buffered']
    #allocation13 [shape = 's32[1]{0}', space=sflag, size = 0x4, scoped, tag = 'scoped memory for hierarchical_multi_attention_forward.6']
    %12 = vsyncpa [#allocation3], 0
    %13 = vsyncpa [#allocation6], 0
    %14 = vsyncpa [#allocation9], 0
    %15 = vsyncpa [#allocation4], 0
    %16 = vsyncpa [#allocation13], 0
    // Predicated region
    $region2: #{hierarchical_multi_attention_forward.6} parent=1 // pred_check
      _
    $region3: #{hierarchical_multi_attention_forward.6} parent=1 // pred_check_branch
      %18 = sbr.rel (0) target = $region5
    $region4: #{hierarchical_multi_attention_forward.6} parent=1 // pred_region
      %s20 = ssub.s32 768, 768
      %21 = vsyncadd [#allocation3], %s20
      %s22 = sshll.u32 [#allocation2], 4
      %s23 = int_to_ptr.vmem [resolvable:$true] %s22
      %28 = dma.hbm_to_vmem [thread:$0]  %s0, 768, %s23, [#allocation3], 128, 128, 8
    $region5: #{hierarchical_multi_attention_forward.6} parent=1 // pred_fallthru
      _
    // Predicated region
    $region6: #{hierarchical_multi_attention_forward.6} parent=1 // pred_check
      _
    $region7: #{hierarchical_multi_attention_forward.6} parent=1 // pred_check_branch
      %30 = sbr.rel (0) target = $region9
    $region8: #{hierarchical_multi_attention_forward.6} parent=1 // pred_region
      %s32 = ssub.s32 512, 512
      %33 = vsyncadd [#allocation6], %s32
      %s34 = sshll.u32 [#allocation5], 4
      %s35 = int_to_ptr.vmem [resolvable:$true] %s34
      %40 = dma.hbm_to_vmem [thread:$0]  %s1, 512, %s35, [#allocation6], 128, 128, 8
    $region9: #{hierarchical_multi_attention_forward.6} parent=1 // pred_fallthru
      _
    // Predicated region
    $region10: #{hierarchical_multi_attention_forward.6} parent=1 // pred_check
      _
    $region11: #{hierarchical_multi_attention_forward.6} parent=1 // pred_check_branch
      %42 = sbr.rel (0) target = $region13
    $region12: #{hierarchical_multi_attention_forward.6} parent=1 // pred_region
      %s44 = ssub.s32 16, 16
      %45 = vsyncadd [#allocation6], %s44
      %s47 = sshll.u32 [#allocation7], 4
      %s48 = int_to_ptr.vmem [resolvable:$true] %s47
      %50 = dma.hbm_to_vmem [thread:$0]  %s2, 16, %s48, [#allocation6]
    $region13: #{hierarchical_multi_attention_forward.6} parent=1 // pred_fallthru
      _
    // Predicated region
    $region14: #{hierarchical_multi_attention_forward.6} parent=1 // pred_check
      _
    $region15: #{hierarchical_multi_attention_forward.6} parent=1 // pred_check_branch
      %52 = sbr.rel (0) target = $region17
    $region16: #{hierarchical_multi_attention_forward.6} parent=1 // pred_region
      %s54 = ssub.s32 512, 512
      %55 = vsyncadd [#allocation9], %s54
      %s56 = sshll.u32 [#allocation8], 4
      %s57 = int_to_ptr.vmem [resolvable:$true] %s56
      %62 = dma.hbm_to_vmem [thread:$0]  %s3, 512, %s57, [#allocation9], 128, 128, 8
    $region17: #{hierarchical_multi_attention_forward.6} parent=1 // pred_fallthru
      _
    // Predicated region
    $region18: #{hierarchical_multi_attention_forward.6} parent=1 // pred_check
      _
    $region19: #{hierarchical_multi_attention_forward.6} parent=1 // pred_check_branch
      %64 = sbr.rel (0) target = $region21
    $region20: #{hierarchical_multi_attention_forward.6} parent=1 // pred_region
      %s66 = ssub.s32 16, 16
      %67 = vsyncadd [#allocation9], %s66
      %s69 = sshll.u32 [#allocation10], 4
      %s70 = int_to_ptr.vmem [resolvable:$true] %s69
      %72 = dma.hbm_to_vmem [thread:$0]  %s4, 16, %s70, [#allocation9]
    $region21: #{hierarchical_multi_attention_forward.6} parent=1 // pred_fallthru
      _
    // Predicated region
    $region22: #{hierarchical_multi_attention_forward.6} parent=1 // pred_check
      _
    $region23: #{hierarchical_multi_attention_forward.6} parent=1 // pred_check_branch
      %74 = sbr.rel (0) target = $region25
    $region24: #{hierarchical_multi_attention_forward.6} parent=1 // pred_region
      %75 = dma.done [#allocation3], 768
    $region25: #{hierarchical_multi_attention_forward.6} parent=1 // pred_fallthru
      _
    // Predicated region
    $region26: #{hierarchical_multi_attention_forward.6} parent=1 // pred_check
      _
    $region27: #{hierarchical_multi_attention_forward.6} parent=1 // pred_check_branch
      %77 = sbr.rel (0) target = $region29
    $region28: #{hierarchical_multi_attention_forward.6} parent=1 // pred_region
      %78 = dma.done [#allocation6], 512
    $region29: #{hierarchical_multi_attention_forward.6} parent=1 // pred_fallthru
      _
    // Predicated region
    $region30: #{hierarchical_multi_attention_forward.6} parent=1 // pred_check
      _
    $region31: #{hierarchical_multi_attention_forward.6} parent=1 // pred_check_branch
      %80 = sbr.rel (0) target = $region33
    $region32: #{hierarchical_multi_attention_forward.6} parent=1 // pred_region
      %81 = dma.done [#allocation6], 16
    $region33: #{hierarchical_multi_attention_forward.6} parent=1 // pred_fallthru
      _
    // Predicated region
    $region34: #{hierarchical_multi_attention_forward.6} parent=1 // pred_check
      _
    $region35: #{hierarchical_multi_attention_forward.6} parent=1 // pred_check_branch
      %83 = sbr.rel (0) target = $region37
    $region36: #{hierarchical_multi_attention_forward.6} parent=1 // pred_region
      %84 = dma.done [#allocation9], 512
    $region37: #{hierarchical_multi_attention_forward.6} parent=1 // pred_fallthru
      _
    // Predicated region
    $region38: #{hierarchical_multi_attention_forward.6} parent=1 // pred_check
      _
    $region39: #{hierarchical_multi_attention_forward.6} parent=1 // pred_check_branch
      %86 = sbr.rel (0) target = $region41
    $region40: #{hierarchical_multi_attention_forward.6} parent=1 // pred_region
      %87 = dma.done [#allocation9], 16
    $region41: #{hierarchical_multi_attention_forward.6} parent=1 // pred_fallthru
      _
    %v88 = vld [vmem:[#allocation2] sm:$0xff]
    %v89 = vld [vmem:[#allocation2 + $0x8] sm:$0xff]
    %v90 = vld [vmem:[#allocation2 + $0x10] sm:$0xff]
    %v91 = vld [vmem:[#allocation2 + $0x18] sm:$0xff]
    %v92 = vld [vmem:[#allocation2 + $0x20] sm:$0xff]
    %v93 = vld [vmem:[#allocation2 + $0x28] sm:$0xff]
    %v94 = vld [vmem:[#allocation5] sm:$0xff]
    %v95 = vld [vmem:[#allocation5 + $0x8] sm:$0xff]
    %v96 = vld [vmem:[#allocation5 + $0x10] sm:$0xff]
    %v97 = vld [vmem:[#allocation5 + $0x18] sm:$0xff]
    %v98 = vld [vmem:[#allocation7] sm:$0x1]
    %v100 = vlaneseq
    %v101 = vshrl.u32 %v100, 7
    %v102 = vsub.s32 0, %v101
    %v103 = vrot.slane %v98, %v102
    %vm105 = vcmask 261120
    %v107 = vsel %vm105, %v88, 0
    %v110 = vsel %vm105, %v89, 0
    %v113 = vsel %vm105, %v90, 0
    %v116 = vsel %vm105, %v91, 0
    %v119 = vsel %vm105, %v92, 0
    %v122 = vsel %vm105, %v93, 0
    %124 = vmatprep.subr.mxu0 0.0
    %125 = vmatpush1.msra.mxu0 %v94
    %126 = vmatprep.subr.mxu0 0.0
    %127 = vmatpush1.msra.mxu0 %v95
    %128 = vmatprep.subr.mxu0 0.0
    %129 = vmatpush1.msra.mxu0 %v96
    %130 = vmatprep.subr.mxu0 0.0
    %131 = vmatpush1.msra.mxu0 %v97
    %132 = vmatprep.subr.mxu0 0.0
    %133 = vmatpush1.msra.mxu0 0.0
    %134 = vmatprep.subr.mxu0 0.0
    %135 = vmatpush1.msra.mxu0 0.0
    %136 = vmatprep.subr.mxu0 0.0
    %137 = vmatpush1.msra.mxu0 0.0
    %138 = vmatprep.subr.mxu0 0.0
    %139 = vmatpush1.msra.mxu0 0.0
    %140 = vmatprep.subr.mxu0 0.0
    %141 = vmatpush1.msra.mxu0 0.0
    %142 = vmatprep.subr.mxu0 0.0
    %143 = vmatpush1.msra.mxu0 0.0
    %144 = vmatprep.subr.mxu0 0.0
    %145 = vmatpush1.msra.mxu0 0.0
    %146 = vmatprep.subr.mxu0 0.0
    %147 = vmatpush1.msra.mxu0 0.0
    %148 = vmatprep.subr.mxu0 0.0
    %149 = vmatpush1.msra.mxu0 0.0
    %150 = vmatprep.subr.mxu0 0.0
    %151 = vmatpush1.msra.mxu0 0.0
    %152 = vmatprep.subr.mxu0 0.0
    %153 = vmatpush1.msra.mxu0 0.0
    %154 = vmatprep.subr.mxu0 0.0
    %155 = vmatpush1.msra.mxu0 0.0
    %156 = vmatprep.subr.mxu0 0.0
    %157 = vmatpush1.msra.mxu0 0.0
    %158 = vmatprep.subr.mxu0 0.0
    %159 = vmatpush1.msra.mxu0 0.0
    %160 = vmatprep.subr.mxu0 0.0
    %161 = vmatpush1.msra.mxu0 0.0
    %162 = vmatprep.subr.mxu0 0.0
    %163 = vmatpush1.msra.mxu0 0.0
    %164 = vmatprep.subr.mxu0 0.0
    %165 = vmatpush1.msra.mxu0 0.0
    %166 = vmatprep.subr.mxu0 0.0
    %167 = vmatpush1.msra.mxu0 0.0
    %168 = vmatprep.subr.mxu0 0.0
    %169 = vmatpush1.msra.mxu0 0.0
    %170 = vmatprep.subr.mxu0 0.0
    %171 = vmatpush1.msra.mxu0 0.0
    %172 = vmatprep.subr.mxu0 0.0
    %173 = vmatpush1.msra.mxu0 0.0
    %174 = vmatprep.subr.mxu0 0.0
    %175 = vmatpush1.msra.mxu0 0.0
    %176 = vmatprep.subr.mxu0 0.0
    %177 = vmatpush1.msra.mxu0 0.0
    %178 = vmatprep.subr.mxu0 0.0
    %179 = vmatpush1.msra.mxu0 0.0
    %180 = vmatprep.subr.mxu0 0.0
    %181 = vmatpush1.msra.mxu0 0.0
    %182 = vmatprep.subr.mxu0 0.0
    %183 = vmatpush1.msra.mxu0 0.0
    %184 = vmatprep.subr.mxu0 0.0
    %185 = vmatpush1.msra.mxu0 0.0
    %186 = vmatprep.subr.mxu0 0.0
    %187 = vmatpush1.msra.mxu0 0.0
    %188 = vmatprep.mubr.f32.mxu0 0.0
    %189 = vmatmul.mubr.f32.gmra.mrb[0].mxu0 %v107
    %v190 = vpop.f32.mrb[0].mxu0
    %v191 = vadd.f32 %v103, %v190
    %v192 = vpop.f32.mrb[0].mxu0
    %193 = vmatprep.mubr.f32.mxu0 0.0
    %194 = vmatmul.mubr.f32.gmra.mrb[0].mxu0 %v110
    %v195 = vpop.f32.mrb[0].mxu0
    %v196 = vadd.f32 %v103, %v195
    %v197 = vpop.f32.mrb[0].mxu0
    %198 = vmatprep.mubr.f32.mxu0 0.0
    %199 = vmatmul.mubr.f32.gmra.mrb[0].mxu0 %v113
    %v200 = vpop.f32.mrb[0].mxu0
    %v201 = vadd.f32 %v103, %v200
    %v202 = vpop.f32.mrb[0].mxu0
    %203 = vmatprep.mubr.f32.mxu0 0.0
    %204 = vmatmul.mubr.f32.gmra.mrb[0].mxu0 %v116
    %v205 = vpop.f32.mrb[0].mxu0
    %v206 = vadd.f32 %v103, %v205
    %v207 = vpop.f32.mrb[0].mxu0
    %208 = vmatprep.mubr.f32.mxu0 0.0
    %209 = vmatmul.mubr.f32.gmra.mrb[0].mxu0 %v119
    %v210 = vpop.f32.mrb[0].mxu0
    %v211 = vadd.f32 %v103, %v210
    %v212 = vpop.f32.mrb[0].mxu0
    %213 = vmatprep.mubr.f32.mxu0 0.0
    %214 = vmatmul.mubr.f32.gmra.mrb[0].mxu0 %v122
    %v215 = vpop.f32.mrb[0].mxu0
    %v216 = vadd.f32 %v103, %v215
    %v217 = vpop.f32.mrb[0].mxu0
    %218 = vdwg.mxu0
    %vm219 = vcmask 523264
    %220 = vst.msk [vmem:[#allocation11] sm:$0xff] %vm219, %v191
    %221 = vst.msk [vmem:[#allocation11 + $0x8] sm:$0xff] %vm219, %v196
    %222 = vst.msk [vmem:[#allocation11 + $0x10] sm:$0xff] %vm219, %v201
    %223 = vst.msk [vmem:[#allocation11 + $0x18] sm:$0xff] %vm219, %v206
    %224 = vst.msk [vmem:[#allocation11 + $0x20] sm:$0xff] %vm219, %v211
    %225 = vst.msk [vmem:[#allocation11 + $0x28] sm:$0xff] %vm219, %v216
    %v226 = vld [vmem:[#allocation8] sm:$0xff]
    %v227 = vld [vmem:[#allocation8 + $0x8] sm:$0xff]
    %v228 = vld [vmem:[#allocation8 + $0x10] sm:$0xff]
    %v229 = vld [vmem:[#allocation8 + $0x18] sm:$0xff]
    %v230 = vld [vmem:[#allocation10] sm:$0x1]
    %v232 = vlaneseq
    %v233 = vshrl.u32 %v232, 7
    %v234 = vsub.s32 0, %v233
    %v235 = vrot.slane %v230, %v234
    %237 = vmatprep.subr.mxu0 0.0
    %238 = vmatpush1.msra.mxu0 %v226
    %239 = vmatprep.subr.mxu0 0.0
    %240 = vmatpush1.msra.mxu0 %v227
    %241 = vmatprep.subr.mxu0 0.0
    %242 = vmatpush1.msra.mxu0 %v228
    %243 = vmatprep.subr.mxu0 0.0
    %244 = vmatpush1.msra.mxu0 %v229
    %245 = vmatprep.subr.mxu0 0.0
    %246 = vmatpush1.msra.mxu0 0.0
    %247 = vmatprep.subr.mxu0 0.0
    %248 = vmatpush1.msra.mxu0 0.0
    %249 = vmatprep.subr.mxu0 0.0
    %250 = vmatpush1.msra.mxu0 0.0
    %251 = vmatprep.subr.mxu0 0.0
    %252 = vmatpush1.msra.mxu0 0.0
    %253 = vmatprep.subr.mxu0 0.0
    %254 = vmatpush1.msra.mxu0 0.0
    %255 = vmatprep.subr.mxu0 0.0
    %256 = vmatpush1.msra.mxu0 0.0
    %257 = vmatprep.subr.mxu0 0.0
    %258 = vmatpush1.msra.mxu0 0.0
    %259 = vmatprep.subr.mxu0 0.0
    %260 = vmatpush1.msra.mxu0 0.0
    %261 = vmatprep.subr.mxu0 0.0
    %262 = vmatpush1.msra.mxu0 0.0
    %263 = vmatprep.subr.mxu0 0.0
    %264 = vmatpush1.msra.mxu0 0.0
    %265 = vmatprep.subr.mxu0 0.0
    %266 = vmatpush1.msra.mxu0 0.0
    %267 = vmatprep.subr.mxu0 0.0
    %268 = vmatpush1.msra.mxu0 0.0
    %269 = vmatprep.subr.mxu0 0.0
    %270 = vmatpush1.msra.mxu0 0.0
    %271 = vmatprep.subr.mxu0 0.0
    %272 = vmatpush1.msra.mxu0 0.0
    %273 = vmatprep.subr.mxu0 0.0
    %274 = vmatpush1.msra.mxu0 0.0
    %275 = vmatprep.subr.mxu0 0.0
    %276 = vmatpush1.msra.mxu0 0.0
    %277 = vmatprep.subr.mxu0 0.0
    %278 = vmatpush1.msra.mxu0 0.0
    %279 = vmatprep.subr.mxu0 0.0
    %280 = vmatpush1.msra.mxu0 0.0
    %281 = vmatprep.subr.mxu0 0.0
    %282 = vmatpush1.msra.mxu0 0.0
    %283 = vmatprep.subr.mxu0 0.0
    %284 = vmatpush1.msra.mxu0 0.0
    %285 = vmatprep.subr.mxu0 0.0
    %286 = vmatpush1.msra.mxu0 0.0
    %287 = vmatprep.subr.mxu0 0.0
    %288 = vmatpush1.msra.mxu0 0.0
    %289 = vmatprep.subr.mxu0 0.0
    %290 = vmatpush1.msra.mxu0 0.0
    %291 = vmatprep.subr.mxu0 0.0
    %292 = vmatpush1.msra.mxu0 0.0
    %293 = vmatprep.subr.mxu0 0.0
    %294 = vmatpush1.msra.mxu0 0.0
    %295 = vmatprep.subr.mxu0 0.0
    %296 = vmatpush1.msra.mxu0 0.0
    %297 = vmatprep.subr.mxu0 0.0
    %298 = vmatpush1.msra.mxu0 0.0
    %299 = vmatprep.subr.mxu0 0.0
    %300 = vmatpush1.msra.mxu0 0.0
    %301 = vmatprep.mubr.f32.mxu0 0.0
    %302 = vmatmul.mubr.f32.gmra.mrb[0].mxu0 %v107
    %v303 = vpop.f32.mrb[0].mxu0
    %v304 = vadd.f32 %v235, %v303
    %v305 = vpop.f32.mrb[0].mxu0
    %306 = vmatprep.mubr.f32.mxu0 0.0
    %307 = vmatmul.mubr.f32.gmra.mrb[0].mxu0 %v110
    %v308 = vpop.f32.mrb[0].mxu0
    %v309 = vadd.f32 %v235, %v308
    %v310 = vpop.f32.mrb[0].mxu0
    %311 = vmatprep.mubr.f32.mxu0 0.0
    %312 = vmatmul.mubr.f32.gmra.mrb[0].mxu0 %v113
    %v313 = vpop.f32.mrb[0].mxu0
    %v314 = vadd.f32 %v235, %v313
    %v315 = vpop.f32.mrb[0].mxu0
    %316 = vmatprep.mubr.f32.mxu0 0.0
    %317 = vmatmul.mubr.f32.gmra.mrb[0].mxu0 %v116
    %v318 = vpop.f32.mrb[0].mxu0
    %v319 = vadd.f32 %v235, %v318
    %v320 = vpop.f32.mrb[0].mxu0
    %321 = vmatprep.mubr.f32.mxu0 0.0
    %322 = vmatmul.mubr.f32.gmra.mrb[0].mxu0 %v119
    %v323 = vpop.f32.mrb[0].mxu0
    %v324 = vadd.f32 %v235, %v323
    %v325 = vpop.f32.mrb[0].mxu0
    %326 = vmatprep.mubr.f32.mxu0 0.0
    %327 = vmatmul.mubr.f32.gmra.mrb[0].mxu0 %v122
    %v328 = vpop.f32.mrb[0].mxu0
    %v329 = vadd.f32 %v235, %v328
    %v330 = vpop.f32.mrb[0].mxu0
    %331 = vdwg.mxu0
    %332 = vst.msk [vmem:[#allocation12] sm:$0xff] %vm219, %v304
    %333 = vst.msk [vmem:[#allocation12 + $0x8] sm:$0xff] %vm219, %v309
    %334 = vst.msk [vmem:[#allocation12 + $0x10] sm:$0xff] %vm219, %v314
    %335 = vst.msk [vmem:[#allocation12 + $0x18] sm:$0xff] %vm219, %v319
    %336 = vst.msk [vmem:[#allocation12 + $0x20] sm:$0xff] %vm219, %v324
    %337 = vst.msk [vmem:[#allocation12 + $0x28] sm:$0xff] %vm219, %v329
    // Predicated region
    $region42: #{hierarchical_multi_attention_forward.6} parent=1 // pred_check
      _
    $region43: #{hierarchical_multi_attention_forward.6} parent=1 // pred_check_branch
      %339 = sbr.rel (0) target = $region45
    $region44: #{hierarchical_multi_attention_forward.6} parent=1 // pred_region
      %s341 = ssub.s32 768, 768
      %342 = vsyncadd [#allocation4], %s341
      %s343 = sshll.u32 [#allocation11], 4
      %s344 = int_to_ptr.vmem [resolvable:$true] %s343
      %349 = dma.vmem_to_hbm [thread:$0]  %s344, 768, %s5, [#allocation4], 128, 128, 8
    $region45: #{hierarchical_multi_attention_forward.6} parent=1 // pred_fallthru
      _
    // Predicated region
    $region46: #{hierarchical_multi_attention_forward.6} parent=1 // pred_check
      _
    $region47: #{hierarchical_multi_attention_forward.6} parent=1 // pred_check_branch
      %351 = sbr.rel (0) target = $region49
    $region48: #{hierarchical_multi_attention_forward.6} parent=1 // pred_region
      %s353 = ssub.s32 768, 768
      %354 = vsyncadd [#allocation13], %s353
      %s355 = sshll.u32 [#allocation12], 4
      %s356 = int_to_ptr.vmem [resolvable:$true] %s355
      %361 = dma.vmem_to_hbm [thread:$0]  %s356, 768, %s6, [#allocation13], 128, 128, 8
    $region49: #{hierarchical_multi_attention_forward.6} parent=1 // pred_fallthru
      _
    // Predicated region
    $region50: #{hierarchical_multi_attention_forward.6} parent=1 // pred_check
      _
    $region51: #{hierarchical_multi_attention_forward.6} parent=1 // pred_check_branch
      %363 = sbr.rel (0) target = $region53
    $region52: #{hierarchical_multi_attention_forward.6} parent=1 // pred_region
      %364 = dma.done [#allocation4], 768
    $region53: #{hierarchical_multi_attention_forward.6} parent=1 // pred_fallthru
      _
    // Predicated region
    $region54: #{hierarchical_multi_attention_forward.6} parent=1 // pred_check
      _
    $region55: #{hierarchical_multi_attention_forward.6} parent=1 // pred_check_branch
      %366 = sbr.rel (0) target = $region57
    $region56: #{hierarchical_multi_attention_forward.6} parent=1 // pred_region
      %367 = dma.done [#allocation13], 768
    $region57: #{hierarchical_multi_attention_forward.6} parent=1 // pred_fallthru
      _
    %368 = vsyncpa [#allocation3], 1
    %369 = vsyncpa [#allocation6], 1
    %370 = vsyncpa [#allocation9], 1
    %371 = vsyncpa [#allocation4], 1
    %372 = vsyncpa [#allocation13], 1

// kernel: hierarchical_multi_attention_forward.9
$region0: #{hierarchical_multi_attention_forward.9}
  #allocation0 [shape = 'u32[]', space=smem, size = 0x4, offset = 0x4, fixed_abs, tag = 'smem constant byte address 0x4 - core index']
  #allocation1 [shape = 'u32[144,128]{1,0:T(1,128)}', space=vmem, size = 0x12000, scoped, tag = 'internal scratch']
  %s0 = inlined_call_operand.hbm [shape: f32[6,32], index: 0, kind: input, shape index: {}]
  %s1 = inlined_call_operand.hbm [shape: f32[32,64], index: 1, kind: input, shape index: {}]
  %s2 = inlined_call_operand.hbm [shape: f32[1,64], index: 2, kind: input, shape index: {}]
  %s3 = inlined_call_operand.hbm [shape: f32[32,64], index: 3, kind: input, shape index: {}]
  %s4 = inlined_call_operand.hbm [shape: f32[1,64], index: 4, kind: input, shape index: {}]
  %s5 = inlined_call_operand.hbm [shape: f32[6,64], index: 5, kind: output, shape index: {0}]
  %s6 = inlined_call_operand.hbm [shape: f32[6,64], index: 6, kind: output, shape index: {1}]
  %7 = xla_tuple %s5, %s6
  %s8 = sld [smem:[#allocation0]]
  $region58: #{hierarchical_multi_attention_forward.9} parent=0
    _
  %s10 = ssub.s32 1, %s8
  %s11 = scalar_select 0, %s10, %s8
  $region1: #{hierarchical_multi_attention_forward.9} parent=0
    #allocation2 [shape = 'u8[4096]{0}', space=vmem, size = 0x1000, scoped, tag = 'input window, operand 0, single buffered']
    #allocation3 [shape = 's32[1]{0}', space=sflag, size = 0x4, scoped, tag = 'scoped memory for hierarchical_multi_attention_forward.9']
    #allocation4 [shape = 's32[1]{0}', space=sflag, size = 0x4, scoped, tag = 'scoped memory for hierarchical_multi_attention_forward.9']
    #allocation5 [shape = 'u8[16384]{0}', space=vmem, size = 0x4000, scoped, tag = 'input window, operand 1, single buffered']
    #allocation6 [shape = 's32[1]{0}', space=sflag, size = 0x4, scoped, tag = 'scoped memory for hierarchical_multi_attention_forward.9']
    #allocation7 [shape = 'u8[512]{0}', space=vmem, size = 0x400, scoped, tag = 'input window, operand 2, single buffered']
    #allocation8 [shape = 'u8[16384]{0}', space=vmem, size = 0x4000, scoped, tag = 'input window, operand 3, single buffered']
    #allocation9 [shape = 's32[1]{0}', space=sflag, size = 0x4, scoped, tag = 'scoped memory for hierarchical_multi_attention_forward.9']
    #allocation10 [shape = 'u8[512]{0}', space=vmem, size = 0x400, scoped, tag = 'input window, operand 4, single buffered']
    #allocation11 [shape = 'u8[4096]{0}', space=vmem, size = 0x1000, scoped, tag = 'output window, operand 0, single buffered']
    #allocation12 [shape = 'u8[4096]{0}', space=vmem, size = 0x1000, scoped, tag = 'output window, operand 1, single buffered']
    #allocation13 [shape = 's32[1]{0}', space=sflag, size = 0x4, scoped, tag = 'scoped memory for hierarchical_multi_attention_forward.9']
    %12 = vsyncpa [#allocation3], 0
    %13 = vsyncpa [#allocation6], 0
    %14 = vsyncpa [#allocation9], 0
    %15 = vsyncpa [#allocation4], 0
    %16 = vsyncpa [#allocation13], 0
    // Predicated region
    $region2: #{hierarchical_multi_attention_forward.9} parent=1 // pred_check
      _
    $region3: #{hierarchical_multi_attention_forward.9} parent=1 // pred_check_branch
      %18 = sbr.rel (0) target = $region5
    $region4: #{hierarchical_multi_attention_forward.9} parent=1 // pred_region
      %s20 = ssub.s32 128, 128
      %21 = vsyncadd [#allocation3], %s20
      %s23 = sshll.u32 [#allocation2], 4
      %s24 = int_to_ptr.vmem [resolvable:$true] %s23
      %26 = dma.hbm_to_vmem [thread:$0]  %s0, 128, %s24, [#allocation3]
    $region5: #{hierarchical_multi_attention_forward.9} parent=1 // pred_fallthru
      _
    // Predicated region
    $region6: #{hierarchical_multi_attention_forward.9} parent=1 // pred_check
      _
    $region7: #{hierarchical_multi_attention_forward.9} parent=1 // pred_check_branch
      %28 = sbr.rel (0) target = $region9
    $region8: #{hierarchical_multi_attention_forward.9} parent=1 // pred_region
      %s30 = ssub.s32 512, 512
      %31 = vsyncadd [#allocation6], %s30
      %s32 = sshll.u32 [#allocation5], 4
      %s33 = int_to_ptr.vmem [resolvable:$true] %s32
      %38 = dma.hbm_to_vmem [thread:$0]  %s1, 512, %s33, [#allocation6], 128, 128, 8
    $region9: #{hierarchical_multi_attention_forward.9} parent=1 // pred_fallthru
      _
    // Predicated region
    $region10: #{hierarchical_multi_attention_forward.9} parent=1 // pred_check
      _
    $region11: #{hierarchical_multi_attention_forward.9} parent=1 // pred_check_branch
      %40 = sbr.rel (0) target = $region13
    $region12: #{hierarchical_multi_attention_forward.9} parent=1 // pred_region
      %s42 = ssub.s32 16, 16
      %43 = vsyncadd [#allocation6], %s42
      %s45 = sshll.u32 [#allocation7], 4
      %s46 = int_to_ptr.vmem [resolvable:$true] %s45
      %48 = dma.hbm_to_vmem [thread:$0]  %s2, 16, %s46, [#allocation6]
    $region13: #{hierarchical_multi_attention_forward.9} parent=1 // pred_fallthru
      _
    // Predicated region
    $region14: #{hierarchical_multi_attention_forward.9} parent=1 // pred_check
      _
    $region15: #{hierarchical_multi_attention_forward.9} parent=1 // pred_check_branch
      %50 = sbr.rel (0) target = $region17
    $region16: #{hierarchical_multi_attention_forward.9} parent=1 // pred_region
      %s52 = ssub.s32 512, 512
      %53 = vsyncadd [#allocation9], %s52
      %s54 = sshll.u32 [#allocation8], 4
      %s55 = int_to_ptr.vmem [resolvable:$true] %s54
      %60 = dma.hbm_to_vmem [thread:$0]  %s3, 512, %s55, [#allocation9], 128, 128, 8
    $region17: #{hierarchical_multi_attention_forward.9} parent=1 // pred_fallthru
      _
    // Predicated region
    $region18: #{hierarchical_multi_attention_forward.9} parent=1 // pred_check
      _
    $region19: #{hierarchical_multi_attention_forward.9} parent=1 // pred_check_branch
      %62 = sbr.rel (0) target = $region21
    $region20: #{hierarchical_multi_attention_forward.9} parent=1 // pred_region
      %s64 = ssub.s32 16, 16
      %65 = vsyncadd [#allocation9], %s64
      %s67 = sshll.u32 [#allocation10], 4
      %s68 = int_to_ptr.vmem [resolvable:$true] %s67
      %70 = dma.hbm_to_vmem [thread:$0]  %s4, 16, %s68, [#allocation9]
    $region21: #{hierarchical_multi_attention_forward.9} parent=1 // pred_fallthru
      _
    // Predicated region
    $region22: #{hierarchical_multi_attention_forward.9} parent=1 // pred_check
      _
    $region23: #{hierarchical_multi_attention_forward.9} parent=1 // pred_check_branch
      %72 = sbr.rel (0) target = $region25
    $region24: #{hierarchical_multi_attention_forward.9} parent=1 // pred_region
      %73 = dma.done [#allocation3], 128
    $region25: #{hierarchical_multi_attention_forward.9} parent=1 // pred_fallthru
      _
    // Predicated region
    $region26: #{hierarchical_multi_attention_forward.9} parent=1 // pred_check
      _
    $region27: #{hierarchical_multi_attention_forward.9} parent=1 // pred_check_branch
      %75 = sbr.rel (0) target = $region29
    $region28: #{hierarchical_multi_attention_forward.9} parent=1 // pred_region
      %76 = dma.done [#allocation6], 512
    $region29: #{hierarchical_multi_attention_forward.9} parent=1 // pred_fallthru
      _
    // Predicated region
    $region30: #{hierarchical_multi_attention_forward.9} parent=1 // pred_check
      _
    $region31: #{hierarchical_multi_attention_forward.9} parent=1 // pred_check_branch
      %78 = sbr.rel (0) target = $region33
    $region32: #{hierarchical_multi_attention_forward.9} parent=1 // pred_region
      %79 = dma.done [#allocation6], 16
    $region33: #{hierarchical_multi_attention_forward.9} parent=1 // pred_fallthru
      _
    // Predicated region
    $region34: #{hierarchical_multi_attention_forward.9} parent=1 // pred_check
      _
    $region35: #{hierarchical_multi_attention_forward.9} parent=1 // pred_check_branch
      %81 = sbr.rel (0) target = $region37
    $region36: #{hierarchical_multi_attention_forward.9} parent=1 // pred_region
      %82 = dma.done [#allocation9], 512
    $region37: #{hierarchical_multi_attention_forward.9} parent=1 // pred_fallthru
      _
    // Predicated region
    $region38: #{hierarchical_multi_attention_forward.9} parent=1 // pred_check
      _
    $region39: #{hierarchical_multi_attention_forward.9} parent=1 // pred_check_branch
      %84 = sbr.rel (0) target = $region41
    $region40: #{hierarchical_multi_attention_forward.9} parent=1 // pred_region
      %85 = dma.done [#allocation9], 16
    $region41: #{hierarchical_multi_attention_forward.9} parent=1 // pred_fallthru
      _
    %v86 = vld [vmem:[#allocation2] sm:$0x3f]
    %v87 = vld [vmem:[#allocation5] sm:$0xff]
    %v88 = vld [vmem:[#allocation5 + $0x8] sm:$0xff]
    %v89 = vld [vmem:[#allocation5 + $0x10] sm:$0xff]
    %v90 = vld [vmem:[#allocation5 + $0x18] sm:$0xff]
    %v91 = vld [vmem:[#allocation7] sm:$0x1]
    %v93 = vlaneseq
    %v94 = vshrl.u32 %v93, 7
    %v95 = vsub.s32 0, %v94
    %v96 = vrot.slane %v91, %v95
    %vm98 = vcmask 261120
    %v100 = vsel %vm98, %v86, 0
    %102 = vmatprep.subr.mxu0 0.0
    %103 = vmatpush1.msra.mxu0 %v87
    %104 = vmatprep.subr.mxu0 0.0
    %105 = vmatpush1.msra.mxu0 %v88
    %106 = vmatprep.subr.mxu0 0.0
    %107 = vmatpush1.msra.mxu0 %v89
    %108 = vmatprep.subr.mxu0 0.0
    %109 = vmatpush1.msra.mxu0 %v90
    %110 = vmatprep.subr.mxu0 0.0
    %111 = vmatpush1.msra.mxu0 0.0
    %112 = vmatprep.subr.mxu0 0.0
    %113 = vmatpush1.msra.mxu0 0.0
    %114 = vmatprep.subr.mxu0 0.0
    %115 = vmatpush1.msra.mxu0 0.0
    %116 = vmatprep.subr.mxu0 0.0
    %117 = vmatpush1.msra.mxu0 0.0
    %118 = vmatprep.subr.mxu0 0.0
    %119 = vmatpush1.msra.mxu0 0.0
    %120 = vmatprep.subr.mxu0 0.0
    %121 = vmatpush1.msra.mxu0 0.0
    %122 = vmatprep.subr.mxu0 0.0
    %123 = vmatpush1.msra.mxu0 0.0
    %124 = vmatprep.subr.mxu0 0.0
    %125 = vmatpush1.msra.mxu0 0.0
    %126 = vmatprep.subr.mxu0 0.0
    %127 = vmatpush1.msra.mxu0 0.0
    %128 = vmatprep.subr.mxu0 0.0
    %129 = vmatpush1.msra.mxu0 0.0
    %130 = vmatprep.subr.mxu0 0.0
    %131 = vmatpush1.msra.mxu0 0.0
    %132 = vmatprep.subr.mxu0 0.0
    %133 = vmatpush1.msra.mxu0 0.0
    %134 = vmatprep.subr.mxu0 0.0
    %135 = vmatpush1.msra.mxu0 0.0
    %136 = vmatprep.subr.mxu0 0.0
    %137 = vmatpush1.msra.mxu0 0.0
    %138 = vmatprep.subr.mxu0 0.0
    %139 = vmatpush1.msra.mxu0 0.0
    %140 = vmatprep.subr.mxu0 0.0
    %141 = vmatpush1.msra.mxu0 0.0
    %142 = vmatprep.subr.mxu0 0.0
    %143 = vmatpush1.msra.mxu0 0.0
    %144 = vmatprep.subr.mxu0 0.0
    %145 = vmatpush1.msra.mxu0 0.0
    %146 = vmatprep.subr.mxu0 0.0
    %147 = vmatpush1.msra.mxu0 0.0
    %148 = vmatprep.subr.mxu0 0.0
    %149 = vmatpush1.msra.mxu0 0.0
    %150 = vmatprep.subr.mxu0 0.0
    %151 = vmatpush1.msra.mxu0 0.0
    %152 = vmatprep.subr.mxu0 0.0
    %153 = vmatpush1.msra.mxu0 0.0
    %154 = vmatprep.subr.mxu0 0.0
    %155 = vmatpush1.msra.mxu0 0.0
    %156 = vmatprep.subr.mxu0 0.0
    %157 = vmatpush1.msra.mxu0 0.0
    %158 = vmatprep.subr.mxu0 0.0
    %159 = vmatpush1.msra.mxu0 0.0
    %160 = vmatprep.subr.mxu0 0.0
    %161 = vmatpush1.msra.mxu0 0.0
    %162 = vmatprep.subr.mxu0 0.0
    %163 = vmatpush1.msra.mxu0 0.0
    %164 = vmatprep.subr.mxu0 0.0
    %165 = vmatpush1.msra.mxu0 0.0
    %166 = vmatprep.mubr.f32.mxu0 0.0
    %167 = vmatmul.mubr.f32.gmra.mrb[0].mxu0 %v100
    %v168 = vpop.f32.mrb[0].mxu0
    %v169 = vadd.f32 %v96, %v168
    %v170 = vpop.f32.mrb[0].mxu0
    %171 = vdwg.mxu0
    %vm172 = vcmask 521216
    %173 = vst.msk [vmem:[#allocation11] sm:$0x3f] %vm172, %v169
    %v174 = vld [vmem:[#allocation8] sm:$0xff]
    %v175 = vld [vmem:[#allocation8 + $0x8] sm:$0xff]
    %v176 = vld [vmem:[#allocation8 + $0x10] sm:$0xff]
    %v177 = vld [vmem:[#allocation8 + $0x18] sm:$0xff]
    %v178 = vld [vmem:[#allocation10] sm:$0x1]
    %v180 = vlaneseq
    %v181 = vshrl.u32 %v180, 7
    %v182 = vsub.s32 0, %v181
    %v183 = vrot.slane %v178, %v182
    %185 = vmatprep.subr.mxu0 0.0
    %186 = vmatpush1.msra.mxu0 %v174
    %187 = vmatprep.subr.mxu0 0.0
    %188 = vmatpush1.msra.mxu0 %v175
    %189 = vmatprep.subr.mxu0 0.0
    %190 = vmatpush1.msra.mxu0 %v176
    %191 = vmatprep.subr.mxu0 0.0
    %192 = vmatpush1.msra.mxu0 %v177
    %193 = vmatprep.subr.mxu0 0.0
    %194 = vmatpush1.msra.mxu0 0.0
    %195 = vmatprep.subr.mxu0 0.0
    %196 = vmatpush1.msra.mxu0 0.0
    %197 = vmatprep.subr.mxu0 0.0
    %198 = vmatpush1.msra.mxu0 0.0
    %199 = vmatprep.subr.mxu0 0.0
    %200 = vmatpush1.msra.mxu0 0.0
    %201 = vmatprep.subr.mxu0 0.0
    %202 = vmatpush1.msra.mxu0 0.0
    %203 = vmatprep.subr.mxu0 0.0
    %204 = vmatpush1.msra.mxu0 0.0
    %205 = vmatprep.subr.mxu0 0.0
    %206 = vmatpush1.msra.mxu0 0.0
    %207 = vmatprep.subr.mxu0 0.0
    %208 = vmatpush1.msra.mxu0 0.0
    %209 = vmatprep.subr.mxu0 0.0
    %210 = vmatpush1.msra.mxu0 0.0
    %211 = vmatprep.subr.mxu0 0.0
    %212 = vmatpush1.msra.mxu0 0.0
    %213 = vmatprep.subr.mxu0 0.0
    %214 = vmatpush1.msra.mxu0 0.0
    %215 = vmatprep.subr.mxu0 0.0
    %216 = vmatpush1.msra.mxu0 0.0
    %217 = vmatprep.subr.mxu0 0.0
    %218 = vmatpush1.msra.mxu0 0.0
    %219 = vmatprep.subr.mxu0 0.0
    %220 = vmatpush1.msra.mxu0 0.0
    %221 = vmatprep.subr.mxu0 0.0
    %222 = vmatpush1.msra.mxu0 0.0
    %223 = vmatprep.subr.mxu0 0.0
    %224 = vmatpush1.msra.mxu0 0.0
    %225 = vmatprep.subr.mxu0 0.0
    %226 = vmatpush1.msra.mxu0 0.0
    %227 = vmatprep.subr.mxu0 0.0
    %228 = vmatpush1.msra.mxu0 0.0
    %229 = vmatprep.subr.mxu0 0.0
    %230 = vmatpush1.msra.mxu0 0.0
    %231 = vmatprep.subr.mxu0 0.0
    %232 = vmatpush1.msra.mxu0 0.0
    %233 = vmatprep.subr.mxu0 0.0
    %234 = vmatpush1.msra.mxu0 0.0
    %235 = vmatprep.subr.mxu0 0.0
    %236 = vmatpush1.msra.mxu0 0.0
    %237 = vmatprep.subr.mxu0 0.0
    %238 = vmatpush1.msra.mxu0 0.0
    %239 = vmatprep.subr.mxu0 0.0
    %240 = vmatpush1.msra.mxu0 0.0
    %241 = vmatprep.subr.mxu0 0.0
    %242 = vmatpush1.msra.mxu0 0.0
    %243 = vmatprep.subr.mxu0 0.0
    %244 = vmatpush1.msra.mxu0 0.0
    %245 = vmatprep.subr.mxu0 0.0
    %246 = vmatpush1.msra.mxu0 0.0
    %247 = vmatprep.subr.mxu0 0.0
    %248 = vmatpush1.msra.mxu0 0.0
    %249 = vmatprep.mubr.f32.mxu0 0.0
    %250 = vmatmul.mubr.f32.gmra.mrb[0].mxu0 %v100
    %v251 = vpop.f32.mrb[0].mxu0
    %v252 = vadd.f32 %v183, %v251
    %v253 = vpop.f32.mrb[0].mxu0
    %254 = vdwg.mxu0
    %255 = vst.msk [vmem:[#allocation12] sm:$0x3f] %vm172, %v252
    // Predicated region
    $region42: #{hierarchical_multi_attention_forward.9} parent=1 // pred_check
      _
    $region43: #{hierarchical_multi_attention_forward.9} parent=1 // pred_check_branch
      %257 = sbr.rel (0) target = $region45
    $region44: #{hierarchical_multi_attention_forward.9} parent=1 // pred_region
      %s259 = ssub.s32 128, 128
      %260 = vsyncadd [#allocation4], %s259
      %s262 = sshll.u32 [#allocation11], 4
      %s263 = int_to_ptr.vmem [resolvable:$true] %s262
      %265 = dma.vmem_to_hbm [thread:$0]  %s263, 128, %s5, [#allocation4]
    $region45: #{hierarchical_multi_attention_forward.9} parent=1 // pred_fallthru
      _
    // Predicated region
    $region46: #{hierarchical_multi_attention_forward.9} parent=1 // pred_check
      _
    $region47: #{hierarchical_multi_attention_forward.9} parent=1 // pred_check_branch
      %267 = sbr.rel (0) target = $region49
    $region48: #{hierarchical_multi_attention_forward.9} parent=1 // pred_region
      %s269 = ssub.s32 128, 128
      %270 = vsyncadd [#allocation13], %s269
      %s272 = sshll.u32 [#allocation12], 4
      %s273 = int_to_ptr.vmem [resolvable:$true] %s272
      %275 = dma.vmem_to_hbm [thread:$0]  %s273, 128, %s6, [#allocation13]
    $region49: #{hierarchical_multi_attention_forward.9} parent=1 // pred_fallthru
      _
    // Predicated region
    $region50: #{hierarchical_multi_attention_forward.9} parent=1 // pred_check
      _
    $region51: #{hierarchical_multi_attention_forward.9} parent=1 // pred_check_branch
      %277 = sbr.rel (0) target = $region53
    $region52: #{hierarchical_multi_attention_forward.9} parent=1 // pred_region
      %278 = dma.done [#allocation4], 128
    $region53: #{hierarchical_multi_attention_forward.9} parent=1 // pred_fallthru
      _
    // Predicated region
    $region54: #{hierarchical_multi_attention_forward.9} parent=1 // pred_check
      _
    $region55: #{hierarchical_multi_attention_forward.9} parent=1 // pred_check_branch
      %280 = sbr.rel (0) target = $region57
    $region56: #{hierarchical_multi_attention_forward.9} parent=1 // pred_region
      %281 = dma.done [#allocation13], 128
    $region57: #{hierarchical_multi_attention_forward.9} parent=1 // pred_fallthru
      _
    %282 = vsyncpa [#allocation3], 1
    %283 = vsyncpa [#allocation6], 1
    %284 = vsyncpa [#allocation9], 1
    %285 = vsyncpa [#allocation4], 1
    %286 = vsyncpa [#allocation13], 1

// kernel: hierarchical_multi_attention_forward.8
$region0: #{hierarchical_multi_attention_forward.8}
  #allocation0 [shape = 'u32[]', space=smem, size = 0x4, offset = 0x4, fixed_abs, tag = 'smem constant byte address 0x4 - core index']
  #allocation1 [shape = 'u32[144,128]{1,0:T(1,128)}', space=vmem, size = 0x12000, scoped, tag = 'internal scratch']
  #allocation2 [shape = 'f32[8,6,2]{2,1,0:T(8,128)}', space=vmem, size = 0x8000, scoped, tag = 'scratch operand']
  %s0 = inlined_call_operand.hbm [shape: s32[6,1], index: 0, kind: input, shape index: {}]
  %s1 = inlined_call_operand.hbm [shape: f32[8,6,16], index: 1, kind: input, shape index: {}]
  %s2 = inlined_call_operand.hbm [shape: f32[8,6,16], index: 2, kind: input, shape index: {}]
  %s3 = inlined_call_operand.hbm [shape: f32[16,16], index: 3, kind: input, shape index: {}]
  %s4 = inlined_call_operand.hbm [shape: f32[16,16], index: 4, kind: input, shape index: {}]
  %s5 = inlined_call_operand.hbm [shape: f32[16,2], index: 5, kind: input, shape index: {}]
  %s6 = inlined_call_operand.hbm [shape: f32[6,32], index: 6, kind: output, shape index: {}]
  %s7 = sld [smem:[#allocation0]]
  $region58: #{hierarchical_multi_attention_forward.8} parent=0
    _
  %s9 = ssub.s32 1, %s7
  %s10 = scalar_select 0, %s9, %s7
  $region1: #{hierarchical_multi_attention_forward.8} parent=0
    #allocation3 [shape = 'u8[4096]{0}', space=vmem, size = 0x1000, scoped, tag = 'input window, operand 0, single buffered']
    #allocation4 [shape = 's32[1]{0}', space=sflag, size = 0x4, scoped, tag = 'scoped memory for hierarchical_multi_attention_forward.8']
    #allocation5 [shape = 's32[1]{0}', space=sflag, size = 0x4, scoped, tag = 'scoped memory for hierarchical_multi_attention_forward.8']
    #allocation6 [shape = 'u8[32768]{0}', space=vmem, size = 0x8000, scoped, tag = 'input window, operand 1, single buffered']
    #allocation7 [shape = 's32[1]{0}', space=sflag, size = 0x4, scoped, tag = 'scoped memory for hierarchical_multi_attention_forward.8']
    #allocation8 [shape = 'u8[32768]{0}', space=vmem, size = 0x8000, scoped, tag = 'input window, operand 2, single buffered']
    #allocation9 [shape = 'u8[8192]{0}', space=vmem, size = 0x2000, scoped, tag = 'input window, operand 3, single buffered']
    #allocation10 [shape = 's32[1]{0}', space=sflag, size = 0x4, scoped, tag = 'scoped memory for hierarchical_multi_attention_forward.8']
    #allocation11 [shape = 'u8[8192]{0}', space=vmem, size = 0x2000, scoped, tag = 'input window, operand 4, single buffered']
    #allocation12 [shape = 'u8[8192]{0}', space=vmem, size = 0x2000, scoped, tag = 'input window, operand 5, single buffered']
    #allocation13 [shape = 's32[1]{0}', space=sflag, size = 0x4, scoped, tag = 'scoped memory for hierarchical_multi_attention_forward.8']
    #allocation14 [shape = 'u8[4096]{0}', space=vmem, size = 0x1000, scoped, tag = 'output window, operand 0, single buffered']
    %11 = vsyncpa [#allocation4], 0
    %12 = vsyncpa [#allocation7], 0
    %13 = vsyncpa [#allocation10], 0
    %14 = vsyncpa [#allocation13], 0
    %15 = vsyncpa [#allocation5], 0
    // Predicated region
    $region2: #{hierarchical_multi_attention_forward.8} parent=1 // pred_check
      _
    $region3: #{hierarchical_multi_attention_forward.8} parent=1 // pred_check_branch
      %17 = sbr.rel (0) target = $region5
    $region4: #{hierarchical_multi_attention_forward.8} parent=1 // pred_region
      %s19 = ssub.s32 128, 128
      %20 = vsyncadd [#allocation4], %s19
      %s22 = sshll.u32 [#allocation3], 4
      %s23 = int_to_ptr.vmem [resolvable:$true] %s22
      %25 = dma.hbm_to_vmem [thread:$0]  %s0, 128, %s23, [#allocation4]
    $region5: #{hierarchical_multi_attention_forward.8} parent=1 // pred_fallthru
      _
    // Predicated region
    $region6: #{hierarchical_multi_attention_forward.8} parent=1 // pred_check
      _
    $region7: #{hierarchical_multi_attention_forward.8} parent=1 // pred_check_branch
      %27 = sbr.rel (0) target = $region9
    $region8: #{hierarchical_multi_attention_forward.8} parent=1 // pred_region
      %s29 = ssub.s32 1024, 1024
      %30 = vsyncadd [#allocation7], %s29
      %s31 = sshll.u32 [#allocation6], 4
      %s32 = int_to_ptr.vmem [resolvable:$true] %s31
      %37 = dma.hbm_to_vmem [thread:$0]  %s1, 1024, %s32, [#allocation7], 128, 128, 8
    $region9: #{hierarchical_multi_attention_forward.8} parent=1 // pred_fallthru
      _
    // Predicated region
    $region10: #{hierarchical_multi_attention_forward.8} parent=1 // pred_check
      _
    $region11: #{hierarchical_multi_attention_forward.8} parent=1 // pred_check_branch
      %39 = sbr.rel (0) target = $region13
    $region12: #{hierarchical_multi_attention_forward.8} parent=1 // pred_region
      %s41 = ssub.s32 1024, 1024
      %42 = vsyncadd [#allocation7], %s41
      %s43 = sshll.u32 [#allocation8], 4
      %s44 = int_to_ptr.vmem [resolvable:$true] %s43
      %49 = dma.hbm_to_vmem [thread:$0]  %s2, 1024, %s44, [#allocation7], 128, 128, 8
    $region13: #{hierarchical_multi_attention_forward.8} parent=1 // pred_fallthru
      _
    // Predicated region
    $region14: #{hierarchical_multi_attention_forward.8} parent=1 // pred_check
      _
    $region15: #{hierarchical_multi_attention_forward.8} parent=1 // pred_check_branch
      %51 = sbr.rel (0) target = $region17
    $region16: #{hierarchical_multi_attention_forward.8} parent=1 // pred_region
      %s53 = ssub.s32 256, 256
      %54 = vsyncadd [#allocation10], %s53
      %s55 = sshll.u32 [#allocation9], 4
      %s56 = int_to_ptr.vmem [resolvable:$true] %s55
      %61 = dma.hbm_to_vmem [thread:$0]  %s3, 256, %s56, [#allocation10], 128, 128, 8
    $region17: #{hierarchical_multi_attention_forward.8} parent=1 // pred_fallthru
      _
    // Predicated region
    $region18: #{hierarchical_multi_attention_forward.8} parent=1 // pred_check
      _
    $region19: #{hierarchical_multi_attention_forward.8} parent=1 // pred_check_branch
      %63 = sbr.rel (0) target = $region21
    $region20: #{hierarchical_multi_attention_forward.8} parent=1 // pred_region
      %s65 = ssub.s32 256, 256
      %66 = vsyncadd [#allocation10], %s65
      %s67 = sshll.u32 [#allocation11], 4
      %s68 = int_to_ptr.vmem [resolvable:$true] %s67
      %73 = dma.hbm_to_vmem [thread:$0]  %s4, 256, %s68, [#allocation10], 128, 128, 8
    $region21: #{hierarchical_multi_attention_forward.8} parent=1 // pred_fallthru
      _
    // Predicated region
    $region22: #{hierarchical_multi_attention_forward.8} parent=1 // pred_check
      _
    $region23: #{hierarchical_multi_attention_forward.8} parent=1 // pred_check_branch
      %75 = sbr.rel (0) target = $region25
    $region24: #{hierarchical_multi_attention_forward.8} parent=1 // pred_region
      %s77 = ssub.s32 256, 256
      %78 = vsyncadd [#allocation13], %s77
      %s79 = sshll.u32 [#allocation12], 4
      %s80 = int_to_ptr.vmem [resolvable:$true] %s79
      %85 = dma.hbm_to_vmem [thread:$0]  %s5, 256, %s80, [#allocation13], 128, 128, 8
    $region25: #{hierarchical_multi_attention_forward.8} parent=1 // pred_fallthru
      _
    // Predicated region
    $region26: #{hierarchical_multi_attention_forward.8} parent=1 // pred_check
      _
    $region27: #{hierarchical_multi_attention_forward.8} parent=1 // pred_check_branch
      %87 = sbr.rel (0) target = $region29
    $region28: #{hierarchical_multi_attention_forward.8} parent=1 // pred_region
      %88 = dma.done [#allocation4], 128
    $region29: #{hierarchical_multi_attention_forward.8} parent=1 // pred_fallthru
      _
    // Predicated region
    $region30: #{hierarchical_multi_attention_forward.8} parent=1 // pred_check
      _
    $region31: #{hierarchical_multi_attention_forward.8} parent=1 // pred_check_branch
      %90 = sbr.rel (0) target = $region33
    $region32: #{hierarchical_multi_attention_forward.8} parent=1 // pred_region
      %91 = dma.done [#allocation7], 1024
    $region33: #{hierarchical_multi_attention_forward.8} parent=1 // pred_fallthru
      _
    // Predicated region
    $region34: #{hierarchical_multi_attention_forward.8} parent=1 // pred_check
      _
    $region35: #{hierarchical_multi_attention_forward.8} parent=1 // pred_check_branch
      %93 = sbr.rel (0) target = $region37
    $region36: #{hierarchical_multi_attention_forward.8} parent=1 // pred_region
      %94 = dma.done [#allocation7], 1024
    $region37: #{hierarchical_multi_attention_forward.8} parent=1 // pred_fallthru
      _
    // Predicated region
    $region38: #{hierarchical_multi_attention_forward.8} parent=1 // pred_check
      _
    $region39: #{hierarchical_multi_attention_forward.8} parent=1 // pred_check_branch
      %96 = sbr.rel (0) target = $region41
    $region40: #{hierarchical_multi_attention_forward.8} parent=1 // pred_region
      %97 = dma.done [#allocation10], 256
    $region41: #{hierarchical_multi_attention_forward.8} parent=1 // pred_fallthru
      _
    // Predicated region
    $region42: #{hierarchical_multi_attention_forward.8} parent=1 // pred_check
      _
    $region43: #{hierarchical_multi_attention_forward.8} parent=1 // pred_check_branch
      %99 = sbr.rel (0) target = $region45
    $region44: #{hierarchical_multi_attention_forward.8} parent=1 // pred_region
      %100 = dma.done [#allocation10], 256
    $region45: #{hierarchical_multi_attention_forward.8} parent=1 // pred_fallthru
      _
    // Predicated region
    $region46: #{hierarchical_multi_attention_forward.8} parent=1 // pred_check
      _
    $region47: #{hierarchical_multi_attention_forward.8} parent=1 // pred_check_branch
      %102 = sbr.rel (0) target = $region49
    $region48: #{hierarchical_multi_attention_forward.8} parent=1 // pred_region
      %103 = dma.done [#allocation13], 256
    $region49: #{hierarchical_multi_attention_forward.8} parent=1 // pred_fallthru
      _
    %v104 = vld [vmem:[#allocation9] sm:$0xff]
    %v105 = vld [vmem:[#allocation9 + $0x8] sm:$0xff]
    %v106 = vld [vmem:[#allocation11] sm:$0xff]
    %v107 = vld [vmem:[#allocation11 + $0x8] sm:$0xff]
    %v108 = vld [vmem:[#allocation12] sm:$0xff]
    %v109 = vld [vmem:[#allocation12 + $0x8] sm:$0xff]
    %v110 = vld [vmem:[#allocation6] sm:$0x3f]
    %v111 = vld [vmem:[#allocation8] sm:$0x3f]
    %vm112 = vcmask 130048
    %v114 = vsel %vm112, %v111, 0
    %116 = vmatprep.subr.mxu0 0.0
    %117 = vmatpush1.msra.mxu0 %v106
    %118 = vmatprep.subr.mxu0 0.0
    %119 = vmatpush1.msra.mxu0 %v107
    %120 = vmatprep.subr.mxu0 0.0
    %121 = vmatpush1.msra.mxu0 0.0
    %122 = vmatprep.subr.mxu0 0.0
    %123 = vmatpush1.msra.mxu0 0.0
    %124 = vmatprep.subr.mxu0 0.0
    %125 = vmatpush1.msra.mxu0 0.0
    %126 = vmatprep.subr.mxu0 0.0
    %127 = vmatpush1.msra.mxu0 0.0
    %128 = vmatprep.subr.mxu0 0.0
    %129 = vmatpush1.msra.mxu0 0.0
    %130 = vmatprep.subr.mxu0 0.0
    %131 = vmatpush1.msra.mxu0 0.0
    %132 = vmatprep.subr.mxu0 0.0
    %133 = vmatpush1.msra.mxu0 0.0
    %134 = vmatprep.subr.mxu0 0.0
    %135 = vmatpush1.msra.mxu0 0.0
    %136 = vmatprep.subr.mxu0 0.0
    %137 = vmatpush1.msra.mxu0 0.0
    %138 = vmatprep.subr.mxu0 0.0
    %139 = vmatpush1.msra.mxu0 0.0
    %140 = vmatprep.subr.mxu0 0.0
    %141 = vmatpush1.msra.mxu0 0.0
    %142 = vmatprep.subr.mxu0 0.0
    %143 = vmatpush1.msra.mxu0 0.0
    %144 = vmatprep.subr.mxu0 0.0
    %145 = vmatpush1.msra.mxu0 0.0
    %146 = vmatprep.subr.mxu0 0.0
    %147 = vmatpush1.msra.mxu0 0.0
    %148 = vmatprep.subr.mxu0 0.0
    %149 = vmatpush1.msra.mxu0 0.0
    %150 = vmatprep.subr.mxu0 0.0
    %151 = vmatpush1.msra.mxu0 0.0
    %152 = vmatprep.subr.mxu0 0.0
    %153 = vmatpush1.msra.mxu0 0.0
    %154 = vmatprep.subr.mxu0 0.0
    %155 = vmatpush1.msra.mxu0 0.0
    %156 = vmatprep.subr.mxu0 0.0
    %157 = vmatpush1.msra.mxu0 0.0
    %158 = vmatprep.subr.mxu0 0.0
    %159 = vmatpush1.msra.mxu0 0.0
    %160 = vmatprep.subr.mxu0 0.0
    %161 = vmatpush1.msra.mxu0 0.0
    %162 = vmatprep.subr.mxu0 0.0
    %163 = vmatpush1.msra.mxu0 0.0
    %164 = vmatprep.subr.mxu0 0.0
    %165 = vmatpush1.msra.mxu0 0.0
    %166 = vmatprep.subr.mxu0 0.0
    %167 = vmatpush1.msra.mxu0 0.0
    %168 = vmatprep.subr.mxu0 0.0
    %169 = vmatpush1.msra.mxu0 0.0
    %170 = vmatprep.subr.mxu0 0.0
    %171 = vmatpush1.msra.mxu0 0.0
    %172 = vmatprep.subr.mxu0 0.0
    %173 = vmatpush1.msra.mxu0 0.0
    %174 = vmatprep.subr.mxu0 0.0
    %175 = vmatpush1.msra.mxu0 0.0
    %176 = vmatprep.subr.mxu0 0.0
    %177 = vmatpush1.msra.mxu0 0.0
    %178 = vmatprep.subr.mxu0 0.0
    %179 = vmatpush1.msra.mxu0 0.0
    %180 = vmatprep.mubr.f32.mxu0 0.0
    %181 = vmatmul.mubr.f32.gmra.mrb[0].mxu0 %v114
    %v182 = vpop.f32.mrb[0].mxu0
    %v183 = vadd.f32 0.0, %v182
    %v184 = vpop.f32.mrb[0].mxu0
    %185 = vdwg.mxu0
    %v187 = vsel %vm112, %v110, 0
    %189 = vmatprep.subr.mxu0 0.0
    %190 = vmatpush1.msra.mxu0 %v104
    %191 = vmatprep.subr.mxu0 0.0
    %192 = vmatpush1.msra.mxu0 %v105
    %193 = vmatprep.subr.mxu0 0.0
    %194 = vmatpush1.msra.mxu0 0.0
    %195 = vmatprep.subr.mxu0 0.0
    %196 = vmatpush1.msra.mxu0 0.0
    %197 = vmatprep.subr.mxu0 0.0
    %198 = vmatpush1.msra.mxu0 0.0
    %199 = vmatprep.subr.mxu0 0.0
    %200 = vmatpush1.msra.mxu0 0.0
    %201 = vmatprep.subr.mxu0 0.0
    %202 = vmatpush1.msra.mxu0 0.0
    %203 = vmatprep.subr.mxu0 0.0
    %204 = vmatpush1.msra.mxu0 0.0
    %205 = vmatprep.subr.mxu0 0.0
    %206 = vmatpush1.msra.mxu0 0.0
    %207 = vmatprep.subr.mxu0 0.0
    %208 = vmatpush1.msra.mxu0 0.0
    %209 = vmatprep.subr.mxu0 0.0
    %210 = vmatpush1.msra.mxu0 0.0
    %211 = vmatprep.subr.mxu0 0.0
    %212 = vmatpush1.msra.mxu0 0.0
    %213 = vmatprep.subr.mxu0 0.0
    %214 = vmatpush1.msra.mxu0 0.0
    %215 = vmatprep.subr.mxu0 0.0
    %216 = vmatpush1.msra.mxu0 0.0
    %217 = vmatprep.subr.mxu0 0.0
    %218 = vmatpush1.msra.mxu0 0.0
    %219 = vmatprep.subr.mxu0 0.0
    %220 = vmatpush1.msra.mxu0 0.0
    %221 = vmatprep.subr.mxu0 0.0
    %222 = vmatpush1.msra.mxu0 0.0
    %223 = vmatprep.subr.mxu0 0.0
    %224 = vmatpush1.msra.mxu0 0.0
    %225 = vmatprep.subr.mxu0 0.0
    %226 = vmatpush1.msra.mxu0 0.0
    %227 = vmatprep.subr.mxu0 0.0
    %228 = vmatpush1.msra.mxu0 0.0
    %229 = vmatprep.subr.mxu0 0.0
    %230 = vmatpush1.msra.mxu0 0.0
    %231 = vmatprep.subr.mxu0 0.0
    %232 = vmatpush1.msra.mxu0 0.0
    %233 = vmatprep.subr.mxu0 0.0
    %234 = vmatpush1.msra.mxu0 0.0
    %235 = vmatprep.subr.mxu0 0.0
    %236 = vmatpush1.msra.mxu0 0.0
    %237 = vmatprep.subr.mxu0 0.0
    %238 = vmatpush1.msra.mxu0 0.0
    %239 = vmatprep.subr.mxu0 0.0
    %240 = vmatpush1.msra.mxu0 0.0
    %241 = vmatprep.subr.mxu0 0.0
    %242 = vmatpush1.msra.mxu0 0.0
    %243 = vmatprep.subr.mxu0 0.0
    %244 = vmatpush1.msra.mxu0 0.0
    %245 = vmatprep.subr.mxu0 0.0
    %246 = vmatpush1.msra.mxu0 0.0
    %247 = vmatprep.subr.mxu0 0.0
    %248 = vmatpush1.msra.mxu0 0.0
    %249 = vmatprep.subr.mxu0 0.0
    %250 = vmatpush1.msra.mxu0 0.0
    %251 = vmatprep.subr.mxu0 0.0
    %252 = vmatpush1.msra.mxu0 0.0
    %253 = vmatprep.mubr.f32.mxu0 0.0
    %254 = vmatmul.mubr.f32.gmra.mrb[0].mxu0 %v187
    %v255 = vpop.f32.mrb[0].mxu0
    %v256 = vadd.f32 %v183, %v255
    %v257 = vpop.f32.mrb[0].mxu0
    %258 = vdwg.mxu0
    %v259 = vtanh.pop %v256
    %v261 = vsel %vm112, %v259, 0
    %263 = vmatprep.subr.mxu0 0.0
    %264 = vmatpush1.msra.mxu0 %v108
    %265 = vmatprep.subr.mxu0 0.0
    %266 = vmatpush1.msra.mxu0 %v109
    %267 = vmatprep.subr.mxu0 0.0
    %268 = vmatpush1.msra.mxu0 0.0
    %269 = vmatprep.subr.mxu0 0.0
    %270 = vmatpush1.msra.mxu0 0.0
    %271 = vmatprep.subr.mxu0 0.0
    %272 = vmatpush1.msra.mxu0 0.0
    %273 = vmatprep.subr.mxu0 0.0
    %274 = vmatpush1.msra.mxu0 0.0
    %275 = vmatprep.subr.mxu0 0.0
    %276 = vmatpush1.msra.mxu0 0.0
    %277 = vmatprep.subr.mxu0 0.0
    %278 = vmatpush1.msra.mxu0 0.0
    %279 = vmatprep.subr.mxu0 0.0
    %280 = vmatpush1.msra.mxu0 0.0
    %281 = vmatprep.subr.mxu0 0.0
    %282 = vmatpush1.msra.mxu0 0.0
    %283 = vmatprep.subr.mxu0 0.0
    %284 = vmatpush1.msra.mxu0 0.0
    %285 = vmatprep.subr.mxu0 0.0
    %286 = vmatpush1.msra.mxu0 0.0
    %287 = vmatprep.subr.mxu0 0.0
    %288 = vmatpush1.msra.mxu0 0.0
    %289 = vmatprep.subr.mxu0 0.0
    %290 = vmatpush1.msra.mxu0 0.0
    %291 = vmatprep.subr.mxu0 0.0
    %292 = vmatpush1.msra.mxu0 0.0
    %293 = vmatprep.subr.mxu0 0.0
    %294 = vmatpush1.msra.mxu0 0.0
    %295 = vmatprep.subr.mxu0 0.0
    %296 = vmatpush1.msra.mxu0 0.0
    %297 = vmatprep.subr.mxu0 0.0
    %298 = vmatpush1.msra.mxu0 0.0
    %299 = vmatprep.subr.mxu0 0.0
    %300 = vmatpush1.msra.mxu0 0.0
    %301 = vmatprep.subr.mxu0 0.0
    %302 = vmatpush1.msra.mxu0 0.0
    %303 = vmatprep.subr.mxu0 0.0
    %304 = vmatpush1.msra.mxu0 0.0
    %305 = vmatprep.subr.mxu0 0.0
    %306 = vmatpush1.msra.mxu0 0.0
    %307 = vmatprep.subr.mxu0 0.0
    %308 = vmatpush1.msra.mxu0 0.0
    %309 = vmatprep.subr.mxu0 0.0
    %310 = vmatpush1.msra.mxu0 0.0
    %311 = vmatprep.subr.mxu0 0.0
    %312 = vmatpush1.msra.mxu0 0.0
    %313 = vmatprep.subr.mxu0 0.0
    %314 = vmatpush1.msra.mxu0 0.0
    %315 = vmatprep.subr.mxu0 0.0
    %316 = vmatpush1.msra.mxu0 0.0
    %317 = vmatprep.subr.mxu0 0.0
    %318 = vmatpush1.msra.mxu0 0.0
    %319 = vmatprep.subr.mxu0 0.0
    %320 = vmatpush1.msra.mxu0 0.0
    %321 = vmatprep.subr.mxu0 0.0
    %322 = vmatpush1.msra.mxu0 0.0
    %323 = vmatprep.subr.mxu0 0.0
    %324 = vmatpush1.msra.mxu0 0.0
    %325 = vmatprep.subr.mxu0 0.0
    %326 = vmatpush1.msra.mxu0 0.0
    %327 = vmatprep.mubr.f32.mxu0 0.0
    %328 = vmatmul.mubr.f32.gmra.mrb[0].mxu0 %v261
    %v329 = vpop.f32.mrb[0].mxu0
    %v330 = vadd.f32 0.0, %v329
    %v331 = vpop.f32.mrb[0].mxu0
    %332 = vdwg.mxu0
    %vm333 = vcmask 13312
    %334 = vst.msk [vmem:[#allocation2] sm:$0x3f] %vm333, %v330
    %s335 = scalar_lea.vmem [#allocation6], 8
    %v336 = vld [vmem:[%s335] sm:$0x3f]
    %s337 = scalar_lea.vmem [#allocation8], 8
    %v338 = vld [vmem:[%s337] sm:$0x3f]
    %v340 = vsel %vm112, %v338, 0
    %342 = vmatprep.subr.mxu0 0.0
    %343 = vmatpush1.msra.mxu0 %v106
    %344 = vmatprep.subr.mxu0 0.0
    %345 = vmatpush1.msra.mxu0 %v107
    %346 = vmatprep.subr.mxu0 0.0
    %347 = vmatpush1.msra.mxu0 0.0
    %348 = vmatprep.subr.mxu0 0.0
    %349 = vmatpush1.msra.mxu0 0.0
    %350 = vmatprep.subr.mxu0 0.0
    %351 = vmatpush1.msra.mxu0 0.0
    %352 = vmatprep.subr.mxu0 0.0
    %353 = vmatpush1.msra.mxu0 0.0
    %354 = vmatprep.subr.mxu0 0.0
    %355 = vmatpush1.msra.mxu0 0.0
    %356 = vmatprep.subr.mxu0 0.0
    %357 = vmatpush1.msra.mxu0 0.0
    %358 = vmatprep.subr.mxu0 0.0
    %359 = vmatpush1.msra.mxu0 0.0
    %360 = vmatprep.subr.mxu0 0.0
    %361 = vmatpush1.msra.mxu0 0.0
    %362 = vmatprep.subr.mxu0 0.0
    %363 = vmatpush1.msra.mxu0 0.0
    %364 = vmatprep.subr.mxu0 0.0
    %365 = vmatpush1.msra.mxu0 0.0
    %366 = vmatprep.subr.mxu0 0.0
    %367 = vmatpush1.msra.mxu0 0.0
    %368 = vmatprep.subr.mxu0 0.0
    %369 = vmatpush1.msra.mxu0 0.0
    %370 = vmatprep.subr.mxu0 0.0
    %371 = vmatpush1.msra.mxu0 0.0
    %372 = vmatprep.subr.mxu0 0.0
    %373 = vmatpush1.msra.mxu0 0.0
    %374 = vmatprep.subr.mxu0 0.0
    %375 = vmatpush1.msra.mxu0 0.0
    %376 = vmatprep.subr.mxu0 0.0
    %377 = vmatpush1.msra.mxu0 0.0
    %378 = vmatprep.subr.mxu0 0.0
    %379 = vmatpush1.msra.mxu0 0.0
    %380 = vmatprep.subr.mxu0 0.0
    %381 = vmatpush1.msra.mxu0 0.0
    %382 = vmatprep.subr.mxu0 0.0
    %383 = vmatpush1.msra.mxu0 0.0
    %384 = vmatprep.subr.mxu0 0.0
    %385 = vmatpush1.msra.mxu0 0.0
    %386 = vmatprep.subr.mxu0 0.0
    %387 = vmatpush1.msra.mxu0 0.0
    %388 = vmatprep.subr.mxu0 0.0
    %389 = vmatpush1.msra.mxu0 0.0
    %390 = vmatprep.subr.mxu0 0.0
    %391 = vmatpush1.msra.mxu0 0.0
    %392 = vmatprep.subr.mxu0 0.0
    %393 = vmatpush1.msra.mxu0 0.0
    %394 = vmatprep.subr.mxu0 0.0
    %395 = vmatpush1.msra.mxu0 0.0
    %396 = vmatprep.subr.mxu0 0.0
    %397 = vmatpush1.msra.mxu0 0.0
    %398 = vmatprep.subr.mxu0 0.0
    %399 = vmatpush1.msra.mxu0 0.0
    %400 = vmatprep.subr.mxu0 0.0
    %401 = vmatpush1.msra.mxu0 0.0
    %402 = vmatprep.subr.mxu0 0.0
    %403 = vmatpush1.msra.mxu0 0.0
    %404 = vmatprep.subr.mxu0 0.0
    %405 = vmatpush1.msra.mxu0 0.0
    %406 = vmatprep.mubr.f32.mxu0 0.0
    %407 = vmatmul.mubr.f32.gmra.mrb[0].mxu0 %v340
    %v408 = vpop.f32.mrb[0].mxu0
    %v409 = vadd.f32 0.0, %v408
    %v410 = vpop.f32.mrb[0].mxu0
    %411 = vdwg.mxu0
    %v413 = vsel %vm112, %v336, 0
    %415 = vmatprep.subr.mxu0 0.0
    %416 = vmatpush1.msra.mxu0 %v104
    %417 = vmatprep.subr.mxu0 0.0
    %418 = vmatpush1.msra.mxu0 %v105
    %419 = vmatprep.subr.mxu0 0.0
    %420 = vmatpush1.msra.mxu0 0.0
    %421 = vmatprep.subr.mxu0 0.0
    %422 = vmatpush1.msra.mxu0 0.0
    %423 = vmatprep.subr.mxu0 0.0
    %424 = vmatpush1.msra.mxu0 0.0
    %425 = vmatprep.subr.mxu0 0.0
    %426 = vmatpush1.msra.mxu0 0.0
    %427 = vmatprep.subr.mxu0 0.0
    %428 = vmatpush1.msra.mxu0 0.0
    %429 = vmatprep.subr.mxu0 0.0
    %430 = vmatpush1.msra.mxu0 0.0
    %431 = vmatprep.subr.mxu0 0.0
    %432 = vmatpush1.msra.mxu0 0.0
    %433 = vmatprep.subr.mxu0 0.0
    %434 = vmatpush1.msra.mxu0 0.0
    %435 = vmatprep.subr.mxu0 0.0
    %436 = vmatpush1.msra.mxu0 0.0
    %437 = vmatprep.subr.mxu0 0.0
    %438 = vmatpush1.msra.mxu0 0.0
    %439 = vmatprep.subr.mxu0 0.0
    %440 = vmatpush1.msra.mxu0 0.0
    %441 = vmatprep.subr.mxu0 0.0
    %442 = vmatpush1.msra.mxu0 0.0
    %443 = vmatprep.subr.mxu0 0.0
    %444 = vmatpush1.msra.mxu0 0.0
    %445 = vmatprep.subr.mxu0 0.0
    %446 = vmatpush1.msra.mxu0 0.0
    %447 = vmatprep.subr.mxu0 0.0
    %448 = vmatpush1.msra.mxu0 0.0
    %449 = vmatprep.subr.mxu0 0.0
    %450 = vmatpush1.msra.mxu0 0.0
    %451 = vmatprep.subr.mxu0 0.0
    %452 = vmatpush1.msra.mxu0 0.0
    %453 = vmatprep.subr.mxu0 0.0
    %454 = vmatpush1.msra.mxu0 0.0
    %455 = vmatprep.subr.mxu0 0.0
    %456 = vmatpush1.msra.mxu0 0.0
    %457 = vmatprep.subr.mxu0 0.0
    %458 = vmatpush1.msra.mxu0 0.0
    %459 = vmatprep.subr.mxu0 0.0
    %460 = vmatpush1.msra.mxu0 0.0
    %461 = vmatprep.subr.mxu0 0.0
    %462 = vmatpush1.msra.mxu0 0.0
    %463 = vmatprep.subr.mxu0 0.0
    %464 = vmatpush1.msra.mxu0 0.0
    %465 = vmatprep.subr.mxu0 0.0
    %466 = vmatpush1.msra.mxu0 0.0
    %467 = vmatprep.subr.mxu0 0.0
    %468 = vmatpush1.msra.mxu0 0.0
    %469 = vmatprep.subr.mxu0 0.0
    %470 = vmatpush1.msra.mxu0 0.0
    %471 = vmatprep.subr.mxu0 0.0
    %472 = vmatpush1.msra.mxu0 0.0
    %473 = vmatprep.subr.mxu0 0.0
    %474 = vmatpush1.msra.mxu0 0.0
    %475 = vmatprep.subr.mxu0 0.0
    %476 = vmatpush1.msra.mxu0 0.0
    %477 = vmatprep.subr.mxu0 0.0
    %478 = vmatpush1.msra.mxu0 0.0
    %479 = vmatprep.mubr.f32.mxu0 0.0
    %480 = vmatmul.mubr.f32.gmra.mrb[0].mxu0 %v413
    %v481 = vpop.f32.mrb[0].mxu0
    %v482 = vadd.f32 %v409, %v481
    %v483 = vpop.f32.mrb[0].mxu0
    %484 = vdwg.mxu0
    %v485 = vtanh.pop %v482
    %v487 = vsel %vm112, %v485, 0
    %489 = vmatprep.subr.mxu0 0.0
    %490 = vmatpush1.msra.mxu0 %v108
    %491 = vmatprep.subr.mxu0 0.0
    %492 = vmatpush1.msra.mxu0 %v109
    %493 = vmatprep.subr.mxu0 0.0
    %494 = vmatpush1.msra.mxu0 0.0
    %495 = vmatprep.subr.mxu0 0.0
    %496 = vmatpush1.msra.mxu0 0.0
    %497 = vmatprep.subr.mxu0 0.0
    %498 = vmatpush1.msra.mxu0 0.0
    %499 = vmatprep.subr.mxu0 0.0
    %500 = vmatpush1.msra.mxu0 0.0
    %501 = vmatprep.subr.mxu0 0.0
    %502 = vmatpush1.msra.mxu0 0.0
    %503 = vmatprep.subr.mxu0 0.0
    %504 = vmatpush1.msra.mxu0 0.0
    %505 = vmatprep.subr.mxu0 0.0
    %506 = vmatpush1.msra.mxu0 0.0
    %507 = vmatprep.subr.mxu0 0.0
    %508 = vmatpush1.msra.mxu0 0.0
    %509 = vmatprep.subr.mxu0 0.0
    %510 = vmatpush1.msra.mxu0 0.0
    %511 = vmatprep.subr.mxu0 0.0
    %512 = vmatpush1.msra.mxu0 0.0
    %513 = vmatprep.subr.mxu0 0.0
    %514 = vmatpush1.msra.mxu0 0.0
    %515 = vmatprep.subr.mxu0 0.0
    %516 = vmatpush1.msra.mxu0 0.0
    %517 = vmatprep.subr.mxu0 0.0
    %518 = vmatpush1.msra.mxu0 0.0
    %519 = vmatprep.subr.mxu0 0.0
    %520 = vmatpush1.msra.mxu0 0.0
    %521 = vmatprep.subr.mxu0 0.0
    %522 = vmatpush1.msra.mxu0 0.0
    %523 = vmatprep.subr.mxu0 0.0
    %524 = vmatpush1.msra.mxu0 0.0
    %525 = vmatprep.subr.mxu0 0.0
    %526 = vmatpush1.msra.mxu0 0.0
    %527 = vmatprep.subr.mxu0 0.0
    %528 = vmatpush1.msra.mxu0 0.0
    %529 = vmatprep.subr.mxu0 0.0
    %530 = vmatpush1.msra.mxu0 0.0
    %531 = vmatprep.subr.mxu0 0.0
    %532 = vmatpush1.msra.mxu0 0.0
    %533 = vmatprep.subr.mxu0 0.0
    %534 = vmatpush1.msra.mxu0 0.0
    %535 = vmatprep.subr.mxu0 0.0
    %536 = vmatpush1.msra.mxu0 0.0
    %537 = vmatprep.subr.mxu0 0.0
    %538 = vmatpush1.msra.mxu0 0.0
    %539 = vmatprep.subr.mxu0 0.0
    %540 = vmatpush1.msra.mxu0 0.0
    %541 = vmatprep.subr.mxu0 0.0
    %542 = vmatpush1.msra.mxu0 0.0
    %543 = vmatprep.subr.mxu0 0.0
    %544 = vmatpush1.msra.mxu0 0.0
    %545 = vmatprep.subr.mxu0 0.0
    %546 = vmatpush1.msra.mxu0 0.0
    %547 = vmatprep.subr.mxu0 0.0
    %548 = vmatpush1.msra.mxu0 0.0
    %549 = vmatprep.subr.mxu0 0.0
    %550 = vmatpush1.msra.mxu0 0.0
    %551 = vmatprep.subr.mxu0 0.0
    %552 = vmatpush1.msra.mxu0 0.0
    %553 = vmatprep.mubr.f32.mxu0 0.0
    %554 = vmatmul.mubr.f32.gmra.mrb[0].mxu0 %v487
    %v555 = vpop.f32.mrb[0].mxu0
    %v556 = vadd.f32 0.0, %v555
    %v557 = vpop.f32.mrb[0].mxu0
    %558 = vdwg.mxu0
    %s559 = scalar_lea.vmem [#allocation2], 8
    %560 = vst.msk [vmem:[%s559] sm:$0x3f] %vm333, %v556
    %s561 = scalar_lea.vmem [#allocation6], 16
    %v562 = vld [vmem:[%s561] sm:$0x3f]
    %s563 = scalar_lea.vmem [#allocation8], 16
    %v564 = vld [vmem:[%s563] sm:$0x3f]
    %v566 = vsel %vm112, %v564, 0
    %568 = vmatprep.subr.mxu0 0.0
    %569 = vmatpush1.msra.mxu0 %v106
    %570 = vmatprep.subr.mxu0 0.0
    %571 = vmatpush1.msra.mxu0 %v107
    %572 = vmatprep.subr.mxu0 0.0
    %573 = vmatpush1.msra.mxu0 0.0
    %574 = vmatprep.subr.mxu0 0.0
    %575 = vmatpush1.msra.mxu0 0.0
    %576 = vmatprep.subr.mxu0 0.0
    %577 = vmatpush1.msra.mxu0 0.0
    %578 = vmatprep.subr.mxu0 0.0
    %579 = vmatpush1.msra.mxu0 0.0
    %580 = vmatprep.subr.mxu0 0.0
    %581 = vmatpush1.msra.mxu0 0.0
    %582 = vmatprep.subr.mxu0 0.0
    %583 = vmatpush1.msra.mxu0 0.0
    %584 = vmatprep.subr.mxu0 0.0
    %585 = vmatpush1.msra.mxu0 0.0
    %586 = vmatprep.subr.mxu0 0.0
    %587 = vmatpush1.msra.mxu0 0.0
    %588 = vmatprep.subr.mxu0 0.0
    %589 = vmatpush1.msra.mxu0 0.0
    %590 = vmatprep.subr.mxu0 0.0
    %591 = vmatpush1.msra.mxu0 0.0
    %592 = vmatprep.subr.mxu0 0.0
    %593 = vmatpush1.msra.mxu0 0.0
    %594 = vmatprep.subr.mxu0 0.0
    %595 = vmatpush1.msra.mxu0 0.0
    %596 = vmatprep.subr.mxu0 0.0
    %597 = vmatpush1.msra.mxu0 0.0
    %598 = vmatprep.subr.mxu0 0.0
    %599 = vmatpush1.msra.mxu0 0.0
    %600 = vmatprep.subr.mxu0 0.0
    %601 = vmatpush1.msra.mxu0 0.0
    %602 = vmatprep.subr.mxu0 0.0
    %603 = vmatpush1.msra.mxu0 0.0
    %604 = vmatprep.subr.mxu0 0.0
    %605 = vmatpush1.msra.mxu0 0.0
    %606 = vmatprep.subr.mxu0 0.0
    %607 = vmatpush1.msra.mxu0 0.0
    %608 = vmatprep.subr.mxu0 0.0
    %609 = vmatpush1.msra.mxu0 0.0
    %610 = vmatprep.subr.mxu0 0.0
    %611 = vmatpush1.msra.mxu0 0.0
    %612 = vmatprep.subr.mxu0 0.0
    %613 = vmatpush1.msra.mxu0 0.0
    %614 = vmatprep.subr.mxu0 0.0
    %615 = vmatpush1.msra.mxu0 0.0
    %616 = vmatprep.subr.mxu0 0.0
    %617 = vmatpush1.msra.mxu0 0.0
    %618 = vmatprep.subr.mxu0 0.0
    %619 = vmatpush1.msra.mxu0 0.0
    %620 = vmatprep.subr.mxu0 0.0
    %621 = vmatpush1.msra.mxu0 0.0
    %622 = vmatprep.subr.mxu0 0.0
    %623 = vmatpush1.msra.mxu0 0.0
    %624 = vmatprep.subr.mxu0 0.0
    %625 = vmatpush1.msra.mxu0 0.0
    %626 = vmatprep.subr.mxu0 0.0
    %627 = vmatpush1.msra.mxu0 0.0
    %628 = vmatprep.subr.mxu0 0.0
    %629 = vmatpush1.msra.mxu0 0.0
    %630 = vmatprep.subr.mxu0 0.0
    %631 = vmatpush1.msra.mxu0 0.0
    %632 = vmatprep.mubr.f32.mxu0 0.0
    %633 = vmatmul.mubr.f32.gmra.mrb[0].mxu0 %v566
    %v634 = vpop.f32.mrb[0].mxu0
    %v635 = vadd.f32 0.0, %v634
    %v636 = vpop.f32.mrb[0].mxu0
    %637 = vdwg.mxu0
    %v639 = vsel %vm112, %v562, 0
    %641 = vmatprep.subr.mxu0 0.0
    %642 = vmatpush1.msra.mxu0 %v104
    %643 = vmatprep.subr.mxu0 0.0
    %644 = vmatpush1.msra.mxu0 %v105
    %645 = vmatprep.subr.mxu0 0.0
    %646 = vmatpush1.msra.mxu0 0.0
    %647 = vmatprep.subr.mxu0 0.0
    %648 = vmatpush1.msra.mxu0 0.0
    %649 = vmatprep.subr.mxu0 0.0
    %650 = vmatpush1.msra.mxu0 0.0
    %651 = vmatprep.subr.mxu0 0.0
    %652 = vmatpush1.msra.mxu0 0.0
    %653 = vmatprep.subr.mxu0 0.0
    %654 = vmatpush1.msra.mxu0 0.0
    %655 = vmatprep.subr.mxu0 0.0
    %656 = vmatpush1.msra.mxu0 0.0
    %657 = vmatprep.subr.mxu0 0.0
    %658 = vmatpush1.msra.mxu0 0.0
    %659 = vmatprep.subr.mxu0 0.0
    %660 = vmatpush1.msra.mxu0 0.0
    %661 = vmatprep.subr.mxu0 0.0
    %662 = vmatpush1.msra.mxu0 0.0
    %663 = vmatprep.subr.mxu0 0.0
    %664 = vmatpush1.msra.mxu0 0.0
    %665 = vmatprep.subr.mxu0 0.0
    %666 = vmatpush1.msra.mxu0 0.0
    %667 = vmatprep.subr.mxu0 0.0
    %668 = vmatpush1.msra.mxu0 0.0
    %669 = vmatprep.subr.mxu0 0.0
    %670 = vmatpush1.msra.mxu0 0.0
    %671 = vmatprep.subr.mxu0 0.0
    %672 = vmatpush1.msra.mxu0 0.0
    %673 = vmatprep.subr.mxu0 0.0
    %674 = vmatpush1.msra.mxu0 0.0
    %675 = vmatprep.subr.mxu0 0.0
    %676 = vmatpush1.msra.mxu0 0.0
    %677 = vmatprep.subr.mxu0 0.0
    %678 = vmatpush1.msra.mxu0 0.0
    %679 = vmatprep.subr.mxu0 0.0
    %680 = vmatpush1.msra.mxu0 0.0
    %681 = vmatprep.subr.mxu0 0.0
    %682 = vmatpush1.msra.mxu0 0.0
    %683 = vmatprep.subr.mxu0 0.0
    %684 = vmatpush1.msra.mxu0 0.0
    %685 = vmatprep.subr.mxu0 0.0
    %686 = vmatpush1.msra.mxu0 0.0
    %687 = vmatprep.subr.mxu0 0.0
    %688 = vmatpush1.msra.mxu0 0.0
    %689 = vmatprep.subr.mxu0 0.0
    %690 = vmatpush1.msra.mxu0 0.0
    %691 = vmatprep.subr.mxu0 0.0
    %692 = vmatpush1.msra.mxu0 0.0
    %693 = vmatprep.subr.mxu0 0.0
    %694 = vmatpush1.msra.mxu0 0.0
    %695 = vmatprep.subr.mxu0 0.0
    %696 = vmatpush1.msra.mxu0 0.0
    %697 = vmatprep.subr.mxu0 0.0
    %698 = vmatpush1.msra.mxu0 0.0
    %699 = vmatprep.subr.mxu0 0.0
    %700 = vmatpush1.msra.mxu0 0.0
    %701 = vmatprep.subr.mxu0 0.0
    %702 = vmatpush1.msra.mxu0 0.0
    %703 = vmatprep.subr.mxu0 0.0
    %704 = vmatpush1.msra.mxu0 0.0
    %705 = vmatprep.mubr.f32.mxu0 0.0
    %706 = vmatmul.mubr.f32.gmra.mrb[0].mxu0 %v639
    %v707 = vpop.f32.mrb[0].mxu0
    %v708 = vadd.f32 %v635, %v707
    %v709 = vpop.f32.mrb[0].mxu0
    %710 = vdwg.mxu0
    %v711 = vtanh.pop %v708
    %v713 = vsel %vm112, %v711, 0
    %715 = vmatprep.subr.mxu0 0.0
    %716 = vmatpush1.msra.mxu0 %v108
    %717 = vmatprep.subr.mxu0 0.0
    %718 = vmatpush1.msra.mxu0 %v109
    %719 = vmatprep.subr.mxu0 0.0
    %720 = vmatpush1.msra.mxu0 0.0
    %721 = vmatprep.subr.mxu0 0.0
    %722 = vmatpush1.msra.mxu0 0.0
    %723 = vmatprep.subr.mxu0 0.0
    %724 = vmatpush1.msra.mxu0 0.0
    %725 = vmatprep.subr.mxu0 0.0
    %726 = vmatpush1.msra.mxu0 0.0
    %727 = vmatprep.subr.mxu0 0.0
    %728 = vmatpush1.msra.mxu0 0.0
    %729 = vmatprep.subr.mxu0 0.0
    %730 = vmatpush1.msra.mxu0 0.0
    %731 = vmatprep.subr.mxu0 0.0
    %732 = vmatpush1.msra.mxu0 0.0
    %733 = vmatprep.subr.mxu0 0.0
    %734 = vmatpush1.msra.mxu0 0.0
    %735 = vmatprep.subr.mxu0 0.0
    %736 = vmatpush1.msra.mxu0 0.0
    %737 = vmatprep.subr.mxu0 0.0
    %738 = vmatpush1.msra.mxu0 0.0
    %739 = vmatprep.subr.mxu0 0.0
    %740 = vmatpush1.msra.mxu0 0.0
    %741 = vmatprep.subr.mxu0 0.0
    %742 = vmatpush1.msra.mxu0 0.0
    %743 = vmatprep.subr.mxu0 0.0
    %744 = vmatpush1.msra.mxu0 0.0
    %745 = vmatprep.subr.mxu0 0.0
    %746 = vmatpush1.msra.mxu0 0.0
    %747 = vmatprep.subr.mxu0 0.0
    %748 = vmatpush1.msra.mxu0 0.0
    %749 = vmatprep.subr.mxu0 0.0
    %750 = vmatpush1.msra.mxu0 0.0
    %751 = vmatprep.subr.mxu0 0.0
    %752 = vmatpush1.msra.mxu0 0.0
    %753 = vmatprep.subr.mxu0 0.0
    %754 = vmatpush1.msra.mxu0 0.0
    %755 = vmatprep.subr.mxu0 0.0
    %756 = vmatpush1.msra.mxu0 0.0
    %757 = vmatprep.subr.mxu0 0.0
    %758 = vmatpush1.msra.mxu0 0.0
    %759 = vmatprep.subr.mxu0 0.0
    %760 = vmatpush1.msra.mxu0 0.0
    %761 = vmatprep.subr.mxu0 0.0
    %762 = vmatpush1.msra.mxu0 0.0
    %763 = vmatprep.subr.mxu0 0.0
    %764 = vmatpush1.msra.mxu0 0.0
    %765 = vmatprep.subr.mxu0 0.0
    %766 = vmatpush1.msra.mxu0 0.0
    %767 = vmatprep.subr.mxu0 0.0
    %768 = vmatpush1.msra.mxu0 0.0
    %769 = vmatprep.subr.mxu0 0.0
    %770 = vmatpush1.msra.mxu0 0.0
    %771 = vmatprep.subr.mxu0 0.0
    %772 = vmatpush1.msra.mxu0 0.0
    %773 = vmatprep.subr.mxu0 0.0
    %774 = vmatpush1.msra.mxu0 0.0
    %775 = vmatprep.subr.mxu0 0.0
    %776 = vmatpush1.msra.mxu0 0.0
    %777 = vmatprep.subr.mxu0 0.0
    %778 = vmatpush1.msra.mxu0 0.0
    %779 = vmatprep.mubr.f32.mxu0 0.0
    %780 = vmatmul.mubr.f32.gmra.mrb[0].mxu0 %v713
    %v781 = vpop.f32.mrb[0].mxu0
    %v782 = vadd.f32 0.0, %v781
    %v783 = vpop.f32.mrb[0].mxu0
    %784 = vdwg.mxu0
    %s785 = scalar_lea.vmem [#allocation2], 16
    %786 = vst.msk [vmem:[%s785] sm:$0x3f] %vm333, %v782
    %s787 = scalar_lea.vmem [#allocation6], 24
    %v788 = vld [vmem:[%s787] sm:$0x3f]
    %s789 = scalar_lea.vmem [#allocation8], 24
    %v790 = vld [vmem:[%s789] sm:$0x3f]
    %v792 = vsel %vm112, %v790, 0
    %794 = vmatprep.subr.mxu0 0.0
    %795 = vmatpush1.msra.mxu0 %v106
    %796 = vmatprep.subr.mxu0 0.0
    %797 = vmatpush1.msra.mxu0 %v107
    %798 = vmatprep.subr.mxu0 0.0
    %799 = vmatpush1.msra.mxu0 0.0
    %800 = vmatprep.subr.mxu0 0.0
    %801 = vmatpush1.msra.mxu0 0.0
    %802 = vmatprep.subr.mxu0 0.0
    %803 = vmatpush1.msra.mxu0 0.0
    %804 = vmatprep.subr.mxu0 0.0
    %805 = vmatpush1.msra.mxu0 0.0
    %806 = vmatprep.subr.mxu0 0.0
    %807 = vmatpush1.msra.mxu0 0.0
    %808 = vmatprep.subr.mxu0 0.0
    %809 = vmatpush1.msra.mxu0 0.0
    %810 = vmatprep.subr.mxu0 0.0
    %811 = vmatpush1.msra.mxu0 0.0
    %812 = vmatprep.subr.mxu0 0.0
    %813 = vmatpush1.msra.mxu0 0.0
    %814 = vmatprep.subr.mxu0 0.0
    %815 = vmatpush1.msra.mxu0 0.0
    %816 = vmatprep.subr.mxu0 0.0
    %817 = vmatpush1.msra.mxu0 0.0
    %818 = vmatprep.subr.mxu0 0.0
    %819 = vmatpush1.msra.mxu0 0.0
    %820 = vmatprep.subr.mxu0 0.0
    %821 = vmatpush1.msra.mxu0 0.0
    %822 = vmatprep.subr.mxu0 0.0
    %823 = vmatpush1.msra.mxu0 0.0
    %824 = vmatprep.subr.mxu0 0.0
    %825 = vmatpush1.msra.mxu0 0.0
    %826 = vmatprep.subr.mxu0 0.0
    %827 = vmatpush1.msra.mxu0 0.0
    %828 = vmatprep.subr.mxu0 0.0
    %829 = vmatpush1.msra.mxu0 0.0
    %830 = vmatprep.subr.mxu0 0.0
    %831 = vmatpush1.msra.mxu0 0.0
    %832 = vmatprep.subr.mxu0 0.0
    %833 = vmatpush1.msra.mxu0 0.0
    %834 = vmatprep.subr.mxu0 0.0
    %835 = vmatpush1.msra.mxu0 0.0
    %836 = vmatprep.subr.mxu0 0.0
    %837 = vmatpush1.msra.mxu0 0.0
    %838 = vmatprep.subr.mxu0 0.0
    %839 = vmatpush1.msra.mxu0 0.0
    %840 = vmatprep.subr.mxu0 0.0
    %841 = vmatpush1.msra.mxu0 0.0
    %842 = vmatprep.subr.mxu0 0.0
    %843 = vmatpush1.msra.mxu0 0.0
    %844 = vmatprep.subr.mxu0 0.0
    %845 = vmatpush1.msra.mxu0 0.0
    %846 = vmatprep.subr.mxu0 0.0
    %847 = vmatpush1.msra.mxu0 0.0
    %848 = vmatprep.subr.mxu0 0.0
    %849 = vmatpush1.msra.mxu0 0.0
    %850 = vmatprep.subr.mxu0 0.0
    %851 = vmatpush1.msra.mxu0 0.0
    %852 = vmatprep.subr.mxu0 0.0
    %853 = vmatpush1.msra.mxu0 0.0
    %854 = vmatprep.subr.mxu0 0.0
    %855 = vmatpush1.msra.mxu0 0.0
    %856 = vmatprep.subr.mxu0 0.0
    %857 = vmatpush1.msra.mxu0 0.0
    %858 = vmatprep.mubr.f32.mxu0 0.0
    %859 = vmatmul.mubr.f32.gmra.mrb[0].mxu0 %v792
    %v860 = vpop.f32.mrb[0].mxu0
    %v861 = vadd.f32 0.0, %v860
    %v862 = vpop.f32.mrb[0].mxu0
    %863 = vdwg.mxu0
    %v865 = vsel %vm112, %v788, 0
    %867 = vmatprep.subr.mxu0 0.0
    %868 = vmatpush1.msra.mxu0 %v104
    %869 = vmatprep.subr.mxu0 0.0
    %870 = vmatpush1.msra.mxu0 %v105
    %871 = vmatprep.subr.mxu0 0.0
    %872 = vmatpush1.msra.mxu0 0.0
    %873 = vmatprep.subr.mxu0 0.0
    %874 = vmatpush1.msra.mxu0 0.0
    %875 = vmatprep.subr.mxu0 0.0
    %876 = vmatpush1.msra.mxu0 0.0
    %877 = vmatprep.subr.mxu0 0.0
    %878 = vmatpush1.msra.mxu0 0.0
    %879 = vmatprep.subr.mxu0 0.0
    %880 = vmatpush1.msra.mxu0 0.0
    %881 = vmatprep.subr.mxu0 0.0
    %882 = vmatpush1.msra.mxu0 0.0
    %883 = vmatprep.subr.mxu0 0.0
    %884 = vmatpush1.msra.mxu0 0.0
    %885 = vmatprep.subr.mxu0 0.0
    %886 = vmatpush1.msra.mxu0 0.0
    %887 = vmatprep.subr.mxu0 0.0
    %888 = vmatpush1.msra.mxu0 0.0
    %889 = vmatprep.subr.mxu0 0.0
    %890 = vmatpush1.msra.mxu0 0.0
    %891 = vmatprep.subr.mxu0 0.0
    %892 = vmatpush1.msra.mxu0 0.0
    %893 = vmatprep.subr.mxu0 0.0
    %894 = vmatpush1.msra.mxu0 0.0
    %895 = vmatprep.subr.mxu0 0.0
    %896 = vmatpush1.msra.mxu0 0.0
    %897 = vmatprep.subr.mxu0 0.0
    %898 = vmatpush1.msra.mxu0 0.0
    %899 = vmatprep.subr.mxu0 0.0
    %900 = vmatpush1.msra.mxu0 0.0
    %901 = vmatprep.subr.mxu0 0.0
    %902 = vmatpush1.msra.mxu0 0.0
    %903 = vmatprep.subr.mxu0 0.0
    %904 = vmatpush1.msra.mxu0 0.0
    %905 = vmatprep.subr.mxu0 0.0
    %906 = vmatpush1.msra.mxu0 0.0
    %907 = vmatprep.subr.mxu0 0.0
    %908 = vmatpush1.msra.mxu0 0.0
    %909 = vmatprep.subr.mxu0 0.0
    %910 = vmatpush1.msra.mxu0 0.0
    %911 = vmatprep.subr.mxu0 0.0
    %912 = vmatpush1.msra.mxu0 0.0
    %913 = vmatprep.subr.mxu0 0.0
    %914 = vmatpush1.msra.mxu0 0.0
    %915 = vmatprep.subr.mxu0 0.0
    %916 = vmatpush1.msra.mxu0 0.0
    %917 = vmatprep.subr.mxu0 0.0
    %918 = vmatpush1.msra.mxu0 0.0
    %919 = vmatprep.subr.mxu0 0.0
    %920 = vmatpush1.msra.mxu0 0.0
    %921 = vmatprep.subr.mxu0 0.0
    %922 = vmatpush1.msra.mxu0 0.0
    %923 = vmatprep.subr.mxu0 0.0
    %924 = vmatpush1.msra.mxu0 0.0
    %925 = vmatprep.subr.mxu0 0.0
    %926 = vmatpush1.msra.mxu0 0.0
    %927 = vmatprep.subr.mxu0 0.0
    %928 = vmatpush1.msra.mxu0 0.0
    %929 = vmatprep.subr.mxu0 0.0
    %930 = vmatpush1.msra.mxu0 0.0
    %931 = vmatprep.mubr.f32.mxu0 0.0
    %932 = vmatmul.mubr.f32.gmra.mrb[0].mxu0 %v865
    %v933 = vpop.f32.mrb[0].mxu0
    %v934 = vadd.f32 %v861, %v933
    %v935 = vpop.f32.mrb[0].mxu0
    %936 = vdwg.mxu0
    %v937 = vtanh.pop %v934
    %v939 = vsel %vm112, %v937, 0
    %941 = vmatprep.subr.mxu0 0.0
    %942 = vmatpush1.msra.mxu0 %v108
    %943 = vmatprep.subr.mxu0 0.0
    %944 = vmatpush1.msra.mxu0 %v109
    %945 = vmatprep.subr.mxu0 0.0
    %946 = vmatpush1.msra.mxu0 0.0
    %947 = vmatprep.subr.mxu0 0.0
    %948 = vmatpush1.msra.mxu0 0.0
    %949 = vmatprep.subr.mxu0 0.0
    %950 = vmatpush1.msra.mxu0 0.0
    %951 = vmatprep.subr.mxu0 0.0
    %952 = vmatpush1.msra.mxu0 0.0
    %953 = vmatprep.subr.mxu0 0.0
    %954 = vmatpush1.msra.mxu0 0.0
    %955 = vmatprep.subr.mxu0 0.0
    %956 = vmatpush1.msra.mxu0 0.0
    %957 = vmatprep.subr.mxu0 0.0
    %958 = vmatpush1.msra.mxu0 0.0
    %959 = vmatprep.subr.mxu0 0.0
    %960 = vmatpush1.msra.mxu0 0.0
    %961 = vmatprep.subr.mxu0 0.0
    %962 = vmatpush1.msra.mxu0 0.0
    %963 = vmatprep.subr.mxu0 0.0
    %964 = vmatpush1.msra.mxu0 0.0
    %965 = vmatprep.subr.mxu0 0.0
    %966 = vmatpush1.msra.mxu0 0.0
    %967 = vmatprep.subr.mxu0 0.0
    %968 = vmatpush1.msra.mxu0 0.0
    %969 = vmatprep.subr.mxu0 0.0
    %970 = vmatpush1.msra.mxu0 0.0
    %971 = vmatprep.subr.mxu0 0.0
    %972 = vmatpush1.msra.mxu0 0.0
    %973 = vmatprep.subr.mxu0 0.0
    %974 = vmatpush1.msra.mxu0 0.0
    %975 = vmatprep.subr.mxu0 0.0
    %976 = vmatpush1.msra.mxu0 0.0
    %977 = vmatprep.subr.mxu0 0.0
    %978 = vmatpush1.msra.mxu0 0.0
    %979 = vmatprep.subr.mxu0 0.0
    %980 = vmatpush1.msra.mxu0 0.0
    %981 = vmatprep.subr.mxu0 0.0
    %982 = vmatpush1.msra.mxu0 0.0
    %983 = vmatprep.subr.mxu0 0.0
    %984 = vmatpush1.msra.mxu0 0.0
    %985 = vmatprep.subr.mxu0 0.0
    %986 = vmatpush1.msra.mxu0 0.0
    %987 = vmatprep.subr.mxu0 0.0
    %988 = vmatpush1.msra.mxu0 0.0
    %989 = vmatprep.subr.mxu0 0.0
    %990 = vmatpush1.msra.mxu0 0.0
    %991 = vmatprep.subr.mxu0 0.0
    %992 = vmatpush1.msra.mxu0 0.0
    %993 = vmatprep.subr.mxu0 0.0
    %994 = vmatpush1.msra.mxu0 0.0
    %995 = vmatprep.subr.mxu0 0.0
    %996 = vmatpush1.msra.mxu0 0.0
    %997 = vmatprep.subr.mxu0 0.0
    %998 = vmatpush1.msra.mxu0 0.0
    %999 = vmatprep.subr.mxu0 0.0
    %1000 = vmatpush1.msra.mxu0 0.0
    %1001 = vmatprep.subr.mxu0 0.0
    %1002 = vmatpush1.msra.mxu0 0.0
    %1003 = vmatprep.subr.mxu0 0.0
    %1004 = vmatpush1.msra.mxu0 0.0
    %1005 = vmatprep.mubr.f32.mxu0 0.0
    %1006 = vmatmul.mubr.f32.gmra.mrb[0].mxu0 %v939
    %v1007 = vpop.f32.mrb[0].mxu0
    %v1008 = vadd.f32 0.0, %v1007
    %v1009 = vpop.f32.mrb[0].mxu0
    %1010 = vdwg.mxu0
    %s1011 = scalar_lea.vmem [#allocation2], 24
    %1012 = vst.msk [vmem:[%s1011] sm:$0x3f] %vm333, %v1008
    %s1013 = scalar_lea.vmem [#allocation6], 32
    %v1014 = vld [vmem:[%s1013] sm:$0x3f]
    %s1015 = scalar_lea.vmem [#allocation8], 32
    %v1016 = vld [vmem:[%s1015] sm:$0x3f]
    %v1018 = vsel %vm112, %v1016, 0
    %1020 = vmatprep.subr.mxu0 0.0
    %1021 = vmatpush1.msra.mxu0 %v106
    %1022 = vmatprep.subr.mxu0 0.0
    %1023 = vmatpush1.msra.mxu0 %v107
    %1024 = vmatprep.subr.mxu0 0.0
    %1025 = vmatpush1.msra.mxu0 0.0
    %1026 = vmatprep.subr.mxu0 0.0
    %1027 = vmatpush1.msra.mxu0 0.0
    %1028 = vmatprep.subr.mxu0 0.0
    %1029 = vmatpush1.msra.mxu0 0.0
    %1030 = vmatprep.subr.mxu0 0.0
    %1031 = vmatpush1.msra.mxu0 0.0
    %1032 = vmatprep.subr.mxu0 0.0
    %1033 = vmatpush1.msra.mxu0 0.0
    %1034 = vmatprep.subr.mxu0 0.0
    %1035 = vmatpush1.msra.mxu0 0.0
    %1036 = vmatprep.subr.mxu0 0.0
    %1037 = vmatpush1.msra.mxu0 0.0
    %1038 = vmatprep.subr.mxu0 0.0
    %1039 = vmatpush1.msra.mxu0 0.0
    %1040 = vmatprep.subr.mxu0 0.0
    %1041 = vmatpush1.msra.mxu0 0.0
    %1042 = vmatprep.subr.mxu0 0.0
    %1043 = vmatpush1.msra.mxu0 0.0
    %1044 = vmatprep.subr.mxu0 0.0
    %1045 = vmatpush1.msra.mxu0 0.0
    %1046 = vmatprep.subr.mxu0 0.0
    %1047 = vmatpush1.msra.mxu0 0.0
    %1048 = vmatprep.subr.mxu0 0.0
    %1049 = vmatpush1.msra.mxu0 0.0
    %1050 = vmatprep.subr.mxu0 0.0
    %1051 = vmatpush1.msra.mxu0 0.0
    %1052 = vmatprep.subr.mxu0 0.0
    %1053 = vmatpush1.msra.mxu0 0.0
    %1054 = vmatprep.subr.mxu0 0.0
    %1055 = vmatpush1.msra.mxu0 0.0
    %1056 = vmatprep.subr.mxu0 0.0
    %1057 = vmatpush1.msra.mxu0 0.0
    %1058 = vmatprep.subr.mxu0 0.0
    %1059 = vmatpush1.msra.mxu0 0.0
    %1060 = vmatprep.subr.mxu0 0.0
    %1061 = vmatpush1.msra.mxu0 0.0
    %1062 = vmatprep.subr.mxu0 0.0
    %1063 = vmatpush1.msra.mxu0 0.0
    %1064 = vmatprep.subr.mxu0 0.0
    %1065 = vmatpush1.msra.mxu0 0.0
    %1066 = vmatprep.subr.mxu0 0.0
    %1067 = vmatpush1.msra.mxu0 0.0
    %1068 = vmatprep.subr.mxu0 0.0
    %1069 = vmatpush1.msra.mxu0 0.0
    %1070 = vmatprep.subr.mxu0 0.0
    %1071 = vmatpush1.msra.mxu0 0.0
    %1072 = vmatprep.subr.mxu0 0.0
    %1073 = vmatpush1.msra.mxu0 0.0
    %1074 = vmatprep.subr.mxu0 0.0
    %1075 = vmatpush1.msra.mxu0 0.0
    %1076 = vmatprep.subr.mxu0 0.0
    %1077 = vmatpush1.msra.mxu0 0.0
    %1078 = vmatprep.subr.mxu0 0.0
    %1079 = vmatpush1.msra.mxu0 0.0
    %1080 = vmatprep.subr.mxu0 0.0
    %1081 = vmatpush1.msra.mxu0 0.0
    %1082 = vmatprep.subr.mxu0 0.0
    %1083 = vmatpush1.msra.mxu0 0.0
    %1084 = vmatprep.mubr.f32.mxu0 0.0
    %1085 = vmatmul.mubr.f32.gmra.mrb[0].mxu0 %v1018
    %v1086 = vpop.f32.mrb[0].mxu0
    %v1087 = vadd.f32 0.0, %v1086
    %v1088 = vpop.f32.mrb[0].mxu0
    %1089 = vdwg.mxu0
    %v1091 = vsel %vm112, %v1014, 0
    %1093 = vmatprep.subr.mxu0 0.0
    %1094 = vmatpush1.msra.mxu0 %v104
    %1095 = vmatprep.subr.mxu0 0.0
    %1096 = vmatpush1.msra.mxu0 %v105
    %1097 = vmatprep.subr.mxu0 0.0
    %1098 = vmatpush1.msra.mxu0 0.0
    %1099 = vmatprep.subr.mxu0 0.0
    %1100 = vmatpush1.msra.mxu0 0.0
    %1101 = vmatprep.subr.mxu0 0.0
    %1102 = vmatpush1.msra.mxu0 0.0
    %1103 = vmatprep.subr.mxu0 0.0
    %1104 = vmatpush1.msra.mxu0 0.0
    %1105 = vmatprep.subr.mxu0 0.0
    %1106 = vmatpush1.msra.mxu0 0.0
    %1107 = vmatprep.subr.mxu0 0.0
    %1108 = vmatpush1.msra.mxu0 0.0
    %1109 = vmatprep.subr.mxu0 0.0
    %1110 = vmatpush1.msra.mxu0 0.0
    %1111 = vmatprep.subr.mxu0 0.0
    %1112 = vmatpush1.msra.mxu0 0.0
    %1113 = vmatprep.subr.mxu0 0.0
    %1114 = vmatpush1.msra.mxu0 0.0
    %1115 = vmatprep.subr.mxu0 0.0
    %1116 = vmatpush1.msra.mxu0 0.0
    %1117 = vmatprep.subr.mxu0 0.0
    %1118 = vmatpush1.msra.mxu0 0.0
    %1119 = vmatprep.subr.mxu0 0.0
    %1120 = vmatpush1.msra.mxu0 0.0
    %1121 = vmatprep.subr.mxu0 0.0
    %1122 = vmatpush1.msra.mxu0 0.0
    %1123 = vmatprep.subr.mxu0 0.0
    %1124 = vmatpush1.msra.mxu0 0.0
    %1125 = vmatprep.subr.mxu0 0.0
    %1126 = vmatpush1.msra.mxu0 0.0
    %1127 = vmatprep.subr.mxu0 0.0
    %1128 = vmatpush1.msra.mxu0 0.0
    %1129 = vmatprep.subr.mxu0 0.0
    %1130 = vmatpush1.msra.mxu0 0.0
    %1131 = vmatprep.subr.mxu0 0.0
    %1132 = vmatpush1.msra.mxu0 0.0
    %1133 = vmatprep.subr.mxu0 0.0
    %1134 = vmatpush1.msra.mxu0 0.0
    %1135 = vmatprep.subr.mxu0 0.0
    %1136 = vmatpush1.msra.mxu0 0.0
    %1137 = vmatprep.subr.mxu0 0.0
    %1138 = vmatpush1.msra.mxu0 0.0
    %1139 = vmatprep.subr.mxu0 0.0
    %1140 = vmatpush1.msra.mxu0 0.0
    %1141 = vmatprep.subr.mxu0 0.0
    %1142 = vmatpush1.msra.mxu0 0.0
    %1143 = vmatprep.subr.mxu0 0.0
    %1144 = vmatpush1.msra.mxu0 0.0
    %1145 = vmatprep.subr.mxu0 0.0
    %1146 = vmatpush1.msra.mxu0 0.0
    %1147 = vmatprep.subr.mxu0 0.0
    %1148 = vmatpush1.msra.mxu0 0.0
    %1149 = vmatprep.subr.mxu0 0.0
    %1150 = vmatpush1.msra.mxu0 0.0
    %1151 = vmatprep.subr.mxu0 0.0
    %1152 = vmatpush1.msra.mxu0 0.0
    %1153 = vmatprep.subr.mxu0 0.0
    %1154 = vmatpush1.msra.mxu0 0.0
    %1155 = vmatprep.subr.mxu0 0.0
    %1156 = vmatpush1.msra.mxu0 0.0
    %1157 = vmatprep.mubr.f32.mxu0 0.0
    %1158 = vmatmul.mubr.f32.gmra.mrb[0].mxu0 %v1091
    %v1159 = vpop.f32.mrb[0].mxu0
    %v1160 = vadd.f32 %v1087, %v1159
    %v1161 = vpop.f32.mrb[0].mxu0
    %1162 = vdwg.mxu0
    %v1163 = vtanh.pop %v1160
    %v1165 = vsel %vm112, %v1163, 0
    %1167 = vmatprep.subr.mxu0 0.0
    %1168 = vmatpush1.msra.mxu0 %v108
    %1169 = vmatprep.subr.mxu0 0.0
    %1170 = vmatpush1.msra.mxu0 %v109
    %1171 = vmatprep.subr.mxu0 0.0
    %1172 = vmatpush1.msra.mxu0 0.0
    %1173 = vmatprep.subr.mxu0 0.0
    %1174 = vmatpush1.msra.mxu0 0.0
    %1175 = vmatprep.subr.mxu0 0.0
    %1176 = vmatpush1.msra.mxu0 0.0
    %1177 = vmatprep.subr.mxu0 0.0
    %1178 = vmatpush1.msra.mxu0 0.0
    %1179 = vmatprep.subr.mxu0 0.0
    %1180 = vmatpush1.msra.mxu0 0.0
    %1181 = vmatprep.subr.mxu0 0.0
    %1182 = vmatpush1.msra.mxu0 0.0
    %1183 = vmatprep.subr.mxu0 0.0
    %1184 = vmatpush1.msra.mxu0 0.0
    %1185 = vmatprep.subr.mxu0 0.0
    %1186 = vmatpush1.msra.mxu0 0.0
    %1187 = vmatprep.subr.mxu0 0.0
    %1188 = vmatpush1.msra.mxu0 0.0
    %1189 = vmatprep.subr.mxu0 0.0
    %1190 = vmatpush1.msra.mxu0 0.0
    %1191 = vmatprep.subr.mxu0 0.0
    %1192 = vmatpush1.msra.mxu0 0.0
    %1193 = vmatprep.subr.mxu0 0.0
    %1194 = vmatpush1.msra.mxu0 0.0
    %1195 = vmatprep.subr.mxu0 0.0
    %1196 = vmatpush1.msra.mxu0 0.0
    %1197 = vmatprep.subr.mxu0 0.0
    %1198 = vmatpush1.msra.mxu0 0.0
    %1199 = vmatprep.subr.mxu0 0.0
    %1200 = vmatpush1.msra.mxu0 0.0
    %1201 = vmatprep.subr.mxu0 0.0
    %1202 = vmatpush1.msra.mxu0 0.0
    %1203 = vmatprep.subr.mxu0 0.0
    %1204 = vmatpush1.msra.mxu0 0.0
    %1205 = vmatprep.subr.mxu0 0.0
    %1206 = vmatpush1.msra.mxu0 0.0
    %1207 = vmatprep.subr.mxu0 0.0
    %1208 = vmatpush1.msra.mxu0 0.0
    %1209 = vmatprep.subr.mxu0 0.0
    %1210 = vmatpush1.msra.mxu0 0.0
    %1211 = vmatprep.subr.mxu0 0.0
    %1212 = vmatpush1.msra.mxu0 0.0
    %1213 = vmatprep.subr.mxu0 0.0
    %1214 = vmatpush1.msra.mxu0 0.0
    %1215 = vmatprep.subr.mxu0 0.0
    %1216 = vmatpush1.msra.mxu0 0.0
    %1217 = vmatprep.subr.mxu0 0.0
    %1218 = vmatpush1.msra.mxu0 0.0
    %1219 = vmatprep.subr.mxu0 0.0
    %1220 = vmatpush1.msra.mxu0 0.0
    %1221 = vmatprep.subr.mxu0 0.0
    %1222 = vmatpush1.msra.mxu0 0.0
    %1223 = vmatprep.subr.mxu0 0.0
    %1224 = vmatpush1.msra.mxu0 0.0
    %1225 = vmatprep.subr.mxu0 0.0
    %1226 = vmatpush1.msra.mxu0 0.0
    %1227 = vmatprep.subr.mxu0 0.0
    %1228 = vmatpush1.msra.mxu0 0.0
    %1229 = vmatprep.subr.mxu0 0.0
    %1230 = vmatpush1.msra.mxu0 0.0
    %1231 = vmatprep.mubr.f32.mxu0 0.0
    %1232 = vmatmul.mubr.f32.gmra.mrb[0].mxu0 %v1165
    %v1233 = vpop.f32.mrb[0].mxu0
    %v1234 = vadd.f32 0.0, %v1233
    %v1235 = vpop.f32.mrb[0].mxu0
    %1236 = vdwg.mxu0
    %s1237 = scalar_lea.vmem [#allocation2], 32
    %1238 = vst.msk [vmem:[%s1237] sm:$0x3f] %vm333, %v1234
    %s1239 = scalar_lea.vmem [#allocation6], 40
    %v1240 = vld [vmem:[%s1239] sm:$0x3f]
    %s1241 = scalar_lea.vmem [#allocation8], 40
    %v1242 = vld [vmem:[%s1241] sm:$0x3f]
    %v1244 = vsel %vm112, %v1242, 0
    %1246 = vmatprep.subr.mxu0 0.0
    %1247 = vmatpush1.msra.mxu0 %v106
    %1248 = vmatprep.subr.mxu0 0.0
    %1249 = vmatpush1.msra.mxu0 %v107
    %1250 = vmatprep.subr.mxu0 0.0
    %1251 = vmatpush1.msra.mxu0 0.0
    %1252 = vmatprep.subr.mxu0 0.0
    %1253 = vmatpush1.msra.mxu0 0.0
    %1254 = vmatprep.subr.mxu0 0.0
    %1255 = vmatpush1.msra.mxu0 0.0
    %1256 = vmatprep.subr.mxu0 0.0
    %1257 = vmatpush1.msra.mxu0 0.0
    %1258 = vmatprep.subr.mxu0 0.0
    %1259 = vmatpush1.msra.mxu0 0.0
    %1260 = vmatprep.subr.mxu0 0.0
    %1261 = vmatpush1.msra.mxu0 0.0
    %1262 = vmatprep.subr.mxu0 0.0
    %1263 = vmatpush1.msra.mxu0 0.0
    %1264 = vmatprep.subr.mxu0 0.0
    %1265 = vmatpush1.msra.mxu0 0.0
    %1266 = vmatprep.subr.mxu0 0.0
    %1267 = vmatpush1.msra.mxu0 0.0
    %1268 = vmatprep.subr.mxu0 0.0
    %1269 = vmatpush1.msra.mxu0 0.0
    %1270 = vmatprep.subr.mxu0 0.0
    %1271 = vmatpush1.msra.mxu0 0.0
    %1272 = vmatprep.subr.mxu0 0.0
    %1273 = vmatpush1.msra.mxu0 0.0
    %1274 = vmatprep.subr.mxu0 0.0
    %1275 = vmatpush1.msra.mxu0 0.0
    %1276 = vmatprep.subr.mxu0 0.0
    %1277 = vmatpush1.msra.mxu0 0.0
    %1278 = vmatprep.subr.mxu0 0.0
    %1279 = vmatpush1.msra.mxu0 0.0
    %1280 = vmatprep.subr.mxu0 0.0
    %1281 = vmatpush1.msra.mxu0 0.0
    %1282 = vmatprep.subr.mxu0 0.0
    %1283 = vmatpush1.msra.mxu0 0.0
    %1284 = vmatprep.subr.mxu0 0.0
    %1285 = vmatpush1.msra.mxu0 0.0
    %1286 = vmatprep.subr.mxu0 0.0
    %1287 = vmatpush1.msra.mxu0 0.0
    %1288 = vmatprep.subr.mxu0 0.0
    %1289 = vmatpush1.msra.mxu0 0.0
    %1290 = vmatprep.subr.mxu0 0.0
    %1291 = vmatpush1.msra.mxu0 0.0
    %1292 = vmatprep.subr.mxu0 0.0
    %1293 = vmatpush1.msra.mxu0 0.0
    %1294 = vmatprep.subr.mxu0 0.0
    %1295 = vmatpush1.msra.mxu0 0.0
    %1296 = vmatprep.subr.mxu0 0.0
    %1297 = vmatpush1.msra.mxu0 0.0
    %1298 = vmatprep.subr.mxu0 0.0
    %1299 = vmatpush1.msra.mxu0 0.0
    %1300 = vmatprep.subr.mxu0 0.0
    %1301 = vmatpush1.msra.mxu0 0.0
    %1302 = vmatprep.subr.mxu0 0.0
    %1303 = vmatpush1.msra.mxu0 0.0
    %1304 = vmatprep.subr.mxu0 0.0
    %1305 = vmatpush1.msra.mxu0 0.0
    %1306 = vmatprep.subr.mxu0 0.0
    %1307 = vmatpush1.msra.mxu0 0.0
    %1308 = vmatprep.subr.mxu0 0.0
    %1309 = vmatpush1.msra.mxu0 0.0
    %1310 = vmatprep.mubr.f32.mxu0 0.0
    %1311 = vmatmul.mubr.f32.gmra.mrb[0].mxu0 %v1244
    %v1312 = vpop.f32.mrb[0].mxu0
    %v1313 = vadd.f32 0.0, %v1312
    %v1314 = vpop.f32.mrb[0].mxu0
    %1315 = vdwg.mxu0
    %v1317 = vsel %vm112, %v1240, 0
    %1319 = vmatprep.subr.mxu0 0.0
    %1320 = vmatpush1.msra.mxu0 %v104
    %1321 = vmatprep.subr.mxu0 0.0
    %1322 = vmatpush1.msra.mxu0 %v105
    %1323 = vmatprep.subr.mxu0 0.0
    %1324 = vmatpush1.msra.mxu0 0.0
    %1325 = vmatprep.subr.mxu0 0.0
    %1326 = vmatpush1.msra.mxu0 0.0
    %1327 = vmatprep.subr.mxu0 0.0
    %1328 = vmatpush1.msra.mxu0 0.0
    %1329 = vmatprep.subr.mxu0 0.0
    %1330 = vmatpush1.msra.mxu0 0.0
    %1331 = vmatprep.subr.mxu0 0.0
    %1332 = vmatpush1.msra.mxu0 0.0
    %1333 = vmatprep.subr.mxu0 0.0
    %1334 = vmatpush1.msra.mxu0 0.0
    %1335 = vmatprep.subr.mxu0 0.0
    %1336 = vmatpush1.msra.mxu0 0.0
    %1337 = vmatprep.subr.mxu0 0.0
    %1338 = vmatpush1.msra.mxu0 0.0
    %1339 = vmatprep.subr.mxu0 0.0
    %1340 = vmatpush1.msra.mxu0 0.0
    %1341 = vmatprep.subr.mxu0 0.0
    %1342 = vmatpush1.msra.mxu0 0.0
    %1343 = vmatprep.subr.mxu0 0.0
    %1344 = vmatpush1.msra.mxu0 0.0
    %1345 = vmatprep.subr.mxu0 0.0
    %1346 = vmatpush1.msra.mxu0 0.0
    %1347 = vmatprep.subr.mxu0 0.0
    %1348 = vmatpush1.msra.mxu0 0.0
    %1349 = vmatprep.subr.mxu0 0.0
    %1350 = vmatpush1.msra.mxu0 0.0
    %1351 = vmatprep.subr.mxu0 0.0
    %1352 = vmatpush1.msra.mxu0 0.0
    %1353 = vmatprep.subr.mxu0 0.0
    %1354 = vmatpush1.msra.mxu0 0.0
    %1355 = vmatprep.subr.mxu0 0.0
    %1356 = vmatpush1.msra.mxu0 0.0
    %1357 = vmatprep.subr.mxu0 0.0
    %1358 = vmatpush1.msra.mxu0 0.0
    %1359 = vmatprep.subr.mxu0 0.0
    %1360 = vmatpush1.msra.mxu0 0.0
    %1361 = vmatprep.subr.mxu0 0.0
    %1362 = vmatpush1.msra.mxu0 0.0
    %1363 = vmatprep.subr.mxu0 0.0
    %1364 = vmatpush1.msra.mxu0 0.0
    %1365 = vmatprep.subr.mxu0 0.0
    %1366 = vmatpush1.msra.mxu0 0.0
    %1367 = vmatprep.subr.mxu0 0.0
    %1368 = vmatpush1.msra.mxu0 0.0
    %1369 = vmatprep.subr.mxu0 0.0
    %1370 = vmatpush1.msra.mxu0 0.0
    %1371 = vmatprep.subr.mxu0 0.0
    %1372 = vmatpush1.msra.mxu0 0.0
    %1373 = vmatprep.subr.mxu0 0.0
    %1374 = vmatpush1.msra.mxu0 0.0
    %1375 = vmatprep.subr.mxu0 0.0
    %1376 = vmatpush1.msra.mxu0 0.0
    %1377 = vmatprep.subr.mxu0 0.0
    %1378 = vmatpush1.msra.mxu0 0.0
    %1379 = vmatprep.subr.mxu0 0.0
    %1380 = vmatpush1.msra.mxu0 0.0
    %1381 = vmatprep.subr.mxu0 0.0
    %1382 = vmatpush1.msra.mxu0 0.0
    %1383 = vmatprep.mubr.f32.mxu0 0.0
    %1384 = vmatmul.mubr.f32.gmra.mrb[0].mxu0 %v1317
    %v1385 = vpop.f32.mrb[0].mxu0
    %v1386 = vadd.f32 %v1313, %v1385
    %v1387 = vpop.f32.mrb[0].mxu0
    %1388 = vdwg.mxu0
    %v1389 = vtanh.pop %v1386
    %v1391 = vsel %vm112, %v1389, 0
    %1393 = vmatprep.subr.mxu0 0.0
    %1394 = vmatpush1.msra.mxu0 %v108
    %1395 = vmatprep.subr.mxu0 0.0
    %1396 = vmatpush1.msra.mxu0 %v109
    %1397 = vmatprep.subr.mxu0 0.0
    %1398 = vmatpush1.msra.mxu0 0.0
    %1399 = vmatprep.subr.mxu0 0.0
    %1400 = vmatpush1.msra.mxu0 0.0
    %1401 = vmatprep.subr.mxu0 0.0
    %1402 = vmatpush1.msra.mxu0 0.0
    %1403 = vmatprep.subr.mxu0 0.0
    %1404 = vmatpush1.msra.mxu0 0.0
    %1405 = vmatprep.subr.mxu0 0.0
    %1406 = vmatpush1.msra.mxu0 0.0
    %1407 = vmatprep.subr.mxu0 0.0
    %1408 = vmatpush1.msra.mxu0 0.0
    %1409 = vmatprep.subr.mxu0 0.0
    %1410 = vmatpush1.msra.mxu0 0.0
    %1411 = vmatprep.subr.mxu0 0.0
    %1412 = vmatpush1.msra.mxu0 0.0
    %1413 = vmatprep.subr.mxu0 0.0
    %1414 = vmatpush1.msra.mxu0 0.0
    %1415 = vmatprep.subr.mxu0 0.0
    %1416 = vmatpush1.msra.mxu0 0.0
    %1417 = vmatprep.subr.mxu0 0.0
    %1418 = vmatpush1.msra.mxu0 0.0
    %1419 = vmatprep.subr.mxu0 0.0
    %1420 = vmatpush1.msra.mxu0 0.0
    %1421 = vmatprep.subr.mxu0 0.0
    %1422 = vmatpush1.msra.mxu0 0.0
    %1423 = vmatprep.subr.mxu0 0.0
    %1424 = vmatpush1.msra.mxu0 0.0
    %1425 = vmatprep.subr.mxu0 0.0
    %1426 = vmatpush1.msra.mxu0 0.0
    %1427 = vmatprep.subr.mxu0 0.0
    %1428 = vmatpush1.msra.mxu0 0.0
    %1429 = vmatprep.subr.mxu0 0.0
    %1430 = vmatpush1.msra.mxu0 0.0
    %1431 = vmatprep.subr.mxu0 0.0
    %1432 = vmatpush1.msra.mxu0 0.0
    %1433 = vmatprep.subr.mxu0 0.0
    %1434 = vmatpush1.msra.mxu0 0.0
    %1435 = vmatprep.subr.mxu0 0.0
    %1436 = vmatpush1.msra.mxu0 0.0
    %1437 = vmatprep.subr.mxu0 0.0
    %1438 = vmatpush1.msra.mxu0 0.0
    %1439 = vmatprep.subr.mxu0 0.0
    %1440 = vmatpush1.msra.mxu0 0.0
    %1441 = vmatprep.subr.mxu0 0.0
    %1442 = vmatpush1.msra.mxu0 0.0
    %1443 = vmatprep.subr.mxu0 0.0
    %1444 = vmatpush1.msra.mxu0 0.0
    %1445 = vmatprep.subr.mxu0 0.0
    %1446 = vmatpush1.msra.mxu0 0.0
    %1447 = vmatprep.subr.mxu0 0.0
    %1448 = vmatpush1.msra.mxu0 0.0
    %1449 = vmatprep.subr.mxu0 0.0
    %1450 = vmatpush1.msra.mxu0 0.0
    %1451 = vmatprep.subr.mxu0 0.0
    %1452 = vmatpush1.msra.mxu0 0.0
    %1453 = vmatprep.subr.mxu0 0.0
    %1454 = vmatpush1.msra.mxu0 0.0
    %1455 = vmatprep.subr.mxu0 0.0
    %1456 = vmatpush1.msra.mxu0 0.0
    %1457 = vmatprep.mubr.f32.mxu0 0.0
    %1458 = vmatmul.mubr.f32.gmra.mrb[0].mxu0 %v1391
    %v1459 = vpop.f32.mrb[0].mxu0
    %v1460 = vadd.f32 0.0, %v1459
    %v1461 = vpop.f32.mrb[0].mxu0
    %1462 = vdwg.mxu0
    %s1463 = scalar_lea.vmem [#allocation2], 40
    %1464 = vst.msk [vmem:[%s1463] sm:$0x3f] %vm333, %v1460
    %s1465 = scalar_lea.vmem [#allocation6], 48
    %v1466 = vld [vmem:[%s1465] sm:$0x3f]
    %s1467 = scalar_lea.vmem [#allocation8], 48
    %v1468 = vld [vmem:[%s1467] sm:$0x3f]
    %v1470 = vsel %vm112, %v1468, 0
    %1472 = vmatprep.subr.mxu0 0.0
    %1473 = vmatpush1.msra.mxu0 %v106
    %1474 = vmatprep.subr.mxu0 0.0
    %1475 = vmatpush1.msra.mxu0 %v107
    %1476 = vmatprep.subr.mxu0 0.0
    %1477 = vmatpush1.msra.mxu0 0.0
    %1478 = vmatprep.subr.mxu0 0.0
    %1479 = vmatpush1.msra.mxu0 0.0
    %1480 = vmatprep.subr.mxu0 0.0
    %1481 = vmatpush1.msra.mxu0 0.0
    %1482 = vmatprep.subr.mxu0 0.0
    %1483 = vmatpush1.msra.mxu0 0.0
    %1484 = vmatprep.subr.mxu0 0.0
    %1485 = vmatpush1.msra.mxu0 0.0
    %1486 = vmatprep.subr.mxu0 0.0
    %1487 = vmatpush1.msra.mxu0 0.0
    %1488 = vmatprep.subr.mxu0 0.0
    %1489 = vmatpush1.msra.mxu0 0.0
    %1490 = vmatprep.subr.mxu0 0.0
    %1491 = vmatpush1.msra.mxu0 0.0
    %1492 = vmatprep.subr.mxu0 0.0
    %1493 = vmatpush1.msra.mxu0 0.0
    %1494 = vmatprep.subr.mxu0 0.0
    %1495 = vmatpush1.msra.mxu0 0.0
    %1496 = vmatprep.subr.mxu0 0.0
    %1497 = vmatpush1.msra.mxu0 0.0
    %1498 = vmatprep.subr.mxu0 0.0
    %1499 = vmatpush1.msra.mxu0 0.0
    %1500 = vmatprep.subr.mxu0 0.0
    %1501 = vmatpush1.msra.mxu0 0.0
    %1502 = vmatprep.subr.mxu0 0.0
    %1503 = vmatpush1.msra.mxu0 0.0
    %1504 = vmatprep.subr.mxu0 0.0
    %1505 = vmatpush1.msra.mxu0 0.0
    %1506 = vmatprep.subr.mxu0 0.0
    %1507 = vmatpush1.msra.mxu0 0.0
    %1508 = vmatprep.subr.mxu0 0.0
    %1509 = vmatpush1.msra.mxu0 0.0
    %1510 = vmatprep.subr.mxu0 0.0
    %1511 = vmatpush1.msra.mxu0 0.0
    %1512 = vmatprep.subr.mxu0 0.0
    %1513 = vmatpush1.msra.mxu0 0.0
    %1514 = vmatprep.subr.mxu0 0.0
    %1515 = vmatpush1.msra.mxu0 0.0
    %1516 = vmatprep.subr.mxu0 0.0
    %1517 = vmatpush1.msra.mxu0 0.0
    %1518 = vmatprep.subr.mxu0 0.0
    %1519 = vmatpush1.msra.mxu0 0.0
    %1520 = vmatprep.subr.mxu0 0.0
    %1521 = vmatpush1.msra.mxu0 0.0
    %1522 = vmatprep.subr.mxu0 0.0
    %1523 = vmatpush1.msra.mxu0 0.0
    %1524 = vmatprep.subr.mxu0 0.0
    %1525 = vmatpush1.msra.mxu0 0.0
    %1526 = vmatprep.subr.mxu0 0.0
    %1527 = vmatpush1.msra.mxu0 0.0
    %1528 = vmatprep.subr.mxu0 0.0
    %1529 = vmatpush1.msra.mxu0 0.0
    %1530 = vmatprep.subr.mxu0 0.0
    %1531 = vmatpush1.msra.mxu0 0.0
    %1532 = vmatprep.subr.mxu0 0.0
    %1533 = vmatpush1.msra.mxu0 0.0
    %1534 = vmatprep.subr.mxu0 0.0
    %1535 = vmatpush1.msra.mxu0 0.0
    %1536 = vmatprep.mubr.f32.mxu0 0.0
    %1537 = vmatmul.mubr.f32.gmra.mrb[0].mxu0 %v1470
    %v1538 = vpop.f32.mrb[0].mxu0
    %v1539 = vadd.f32 0.0, %v1538
    %v1540 = vpop.f32.mrb[0].mxu0
    %1541 = vdwg.mxu0
    %v1543 = vsel %vm112, %v1466, 0
    %1545 = vmatprep.subr.mxu0 0.0
    %1546 = vmatpush1.msra.mxu0 %v104
    %1547 = vmatprep.subr.mxu0 0.0
    %1548 = vmatpush1.msra.mxu0 %v105
    %1549 = vmatprep.subr.mxu0 0.0
    %1550 = vmatpush1.msra.mxu0 0.0
    %1551 = vmatprep.subr.mxu0 0.0
    %1552 = vmatpush1.msra.mxu0 0.0
    %1553 = vmatprep.subr.mxu0 0.0
    %1554 = vmatpush1.msra.mxu0 0.0
    %1555 = vmatprep.subr.mxu0 0.0
    %1556 = vmatpush1.msra.mxu0 0.0
    %1557 = vmatprep.subr.mxu0 0.0
    %1558 = vmatpush1.msra.mxu0 0.0
    %1559 = vmatprep.subr.mxu0 0.0
    %1560 = vmatpush1.msra.mxu0 0.0
    %1561 = vmatprep.subr.mxu0 0.0
    %1562 = vmatpush1.msra.mxu0 0.0
    %1563 = vmatprep.subr.mxu0 0.0
    %1564 = vmatpush1.msra.mxu0 0.0
    %1565 = vmatprep.subr.mxu0 0.0
    %1566 = vmatpush1.msra.mxu0 0.0
    %1567 = vmatprep.subr.mxu0 0.0
    %1568 = vmatpush1.msra.mxu0 0.0
    %1569 = vmatprep.subr.mxu0 0.0
    %1570 = vmatpush1.msra.mxu0 0.0
    %1571 = vmatprep.subr.mxu0 0.0
    %1572 = vmatpush1.msra.mxu0 0.0
    %1573 = vmatprep.subr.mxu0 0.0
    %1574 = vmatpush1.msra.mxu0 0.0
    %1575 = vmatprep.subr.mxu0 0.0
    %1576 = vmatpush1.msra.mxu0 0.0
    %1577 = vmatprep.subr.mxu0 0.0
    %1578 = vmatpush1.msra.mxu0 0.0
    %1579 = vmatprep.subr.mxu0 0.0
    %1580 = vmatpush1.msra.mxu0 0.0
    %1581 = vmatprep.subr.mxu0 0.0
    %1582 = vmatpush1.msra.mxu0 0.0
    %1583 = vmatprep.subr.mxu0 0.0
    %1584 = vmatpush1.msra.mxu0 0.0
    %1585 = vmatprep.subr.mxu0 0.0
    %1586 = vmatpush1.msra.mxu0 0.0
    %1587 = vmatprep.subr.mxu0 0.0
    %1588 = vmatpush1.msra.mxu0 0.0
    %1589 = vmatprep.subr.mxu0 0.0
    %1590 = vmatpush1.msra.mxu0 0.0
    %1591 = vmatprep.subr.mxu0 0.0
    %1592 = vmatpush1.msra.mxu0 0.0
    %1593 = vmatprep.subr.mxu0 0.0
    %1594 = vmatpush1.msra.mxu0 0.0
    %1595 = vmatprep.subr.mxu0 0.0
    %1596 = vmatpush1.msra.mxu0 0.0
    %1597 = vmatprep.subr.mxu0 0.0
    %1598 = vmatpush1.msra.mxu0 0.0
    %1599 = vmatprep.subr.mxu0 0.0
    %1600 = vmatpush1.msra.mxu0 0.0
    %1601 = vmatprep.subr.mxu0 0.0
    %1602 = vmatpush1.msra.mxu0 0.0
    %1603 = vmatprep.subr.mxu0 0.0
    %1604 = vmatpush1.msra.mxu0 0.0
    %1605 = vmatprep.subr.mxu0 0.0
    %1606 = vmatpush1.msra.mxu0 0.0
    %1607 = vmatprep.subr.mxu0 0.0
    %1608 = vmatpush1.msra.mxu0 0.0
    %1609 = vmatprep.mubr.f32.mxu0 0.0
    %1610 = vmatmul.mubr.f32.gmra.mrb[0].mxu0 %v1543
    %v1611 = vpop.f32.mrb[0].mxu0
    %v1612 = vadd.f32 %v1539, %v1611
    %v1613 = vpop.f32.mrb[0].mxu0
    %1614 = vdwg.mxu0
    %v1615 = vtanh.pop %v1612
    %v1617 = vsel %vm112, %v1615, 0
    %1619 = vmatprep.subr.mxu0 0.0
    %1620 = vmatpush1.msra.mxu0 %v108
    %1621 = vmatprep.subr.mxu0 0.0
    %1622 = vmatpush1.msra.mxu0 %v109
    %1623 = vmatprep.subr.mxu0 0.0
    %1624 = vmatpush1.msra.mxu0 0.0
    %1625 = vmatprep.subr.mxu0 0.0
    %1626 = vmatpush1.msra.mxu0 0.0
    %1627 = vmatprep.subr.mxu0 0.0
    %1628 = vmatpush1.msra.mxu0 0.0
    %1629 = vmatprep.subr.mxu0 0.0
    %1630 = vmatpush1.msra.mxu0 0.0
    %1631 = vmatprep.subr.mxu0 0.0
    %1632 = vmatpush1.msra.mxu0 0.0
    %1633 = vmatprep.subr.mxu0 0.0
    %1634 = vmatpush1.msra.mxu0 0.0
    %1635 = vmatprep.subr.mxu0 0.0
    %1636 = vmatpush1.msra.mxu0 0.0
    %1637 = vmatprep.subr.mxu0 0.0
    %1638 = vmatpush1.msra.mxu0 0.0
    %1639 = vmatprep.subr.mxu0 0.0
    %1640 = vmatpush1.msra.mxu0 0.0
    %1641 = vmatprep.subr.mxu0 0.0
    %1642 = vmatpush1.msra.mxu0 0.0
    %1643 = vmatprep.subr.mxu0 0.0
    %1644 = vmatpush1.msra.mxu0 0.0
    %1645 = vmatprep.subr.mxu0 0.0
    %1646 = vmatpush1.msra.mxu0 0.0
    %1647 = vmatprep.subr.mxu0 0.0
    %1648 = vmatpush1.msra.mxu0 0.0
    %1649 = vmatprep.subr.mxu0 0.0
    %1650 = vmatpush1.msra.mxu0 0.0
    %1651 = vmatprep.subr.mxu0 0.0
    %1652 = vmatpush1.msra.mxu0 0.0
    %1653 = vmatprep.subr.mxu0 0.0
    %1654 = vmatpush1.msra.mxu0 0.0
    %1655 = vmatprep.subr.mxu0 0.0
    %1656 = vmatpush1.msra.mxu0 0.0
    %1657 = vmatprep.subr.mxu0 0.0
    %1658 = vmatpush1.msra.mxu0 0.0
    %1659 = vmatprep.subr.mxu0 0.0
    %1660 = vmatpush1.msra.mxu0 0.0
    %1661 = vmatprep.subr.mxu0 0.0
    %1662 = vmatpush1.msra.mxu0 0.0
    %1663 = vmatprep.subr.mxu0 0.0
    %1664 = vmatpush1.msra.mxu0 0.0
    %1665 = vmatprep.subr.mxu0 0.0
    %1666 = vmatpush1.msra.mxu0 0.0
    %1667 = vmatprep.subr.mxu0 0.0
    %1668 = vmatpush1.msra.mxu0 0.0
    %1669 = vmatprep.subr.mxu0 0.0
    %1670 = vmatpush1.msra.mxu0 0.0
    %1671 = vmatprep.subr.mxu0 0.0
    %1672 = vmatpush1.msra.mxu0 0.0
    %1673 = vmatprep.subr.mxu0 0.0
    %1674 = vmatpush1.msra.mxu0 0.0
    %1675 = vmatprep.subr.mxu0 0.0
    %1676 = vmatpush1.msra.mxu0 0.0
    %1677 = vmatprep.subr.mxu0 0.0
    %1678 = vmatpush1.msra.mxu0 0.0
    %1679 = vmatprep.subr.mxu0 0.0
    %1680 = vmatpush1.msra.mxu0 0.0
    %1681 = vmatprep.subr.mxu0 0.0
    %1682 = vmatpush1.msra.mxu0 0.0
    %1683 = vmatprep.mubr.f32.mxu0 0.0
    %1684 = vmatmul.mubr.f32.gmra.mrb[0].mxu0 %v1617
    %v1685 = vpop.f32.mrb[0].mxu0
    %v1686 = vadd.f32 0.0, %v1685
    %v1687 = vpop.f32.mrb[0].mxu0
    %1688 = vdwg.mxu0
    %s1689 = scalar_lea.vmem [#allocation2], 48
    %1690 = vst.msk [vmem:[%s1689] sm:$0x3f] %vm333, %v1686
    %s1691 = scalar_lea.vmem [#allocation6], 56
    %v1692 = vld [vmem:[%s1691] sm:$0x3f]
    %s1693 = scalar_lea.vmem [#allocation8], 56
    %v1694 = vld [vmem:[%s1693] sm:$0x3f]
    %v1696 = vsel %vm112, %v1694, 0
    %1698 = vmatprep.subr.mxu0 0.0
    %1699 = vmatpush1.msra.mxu0 %v106
    %1700 = vmatprep.subr.mxu0 0.0
    %1701 = vmatpush1.msra.mxu0 %v107
    %1702 = vmatprep.subr.mxu0 0.0
    %1703 = vmatpush1.msra.mxu0 0.0
    %1704 = vmatprep.subr.mxu0 0.0
    %1705 = vmatpush1.msra.mxu0 0.0
    %1706 = vmatprep.subr.mxu0 0.0
    %1707 = vmatpush1.msra.mxu0 0.0
    %1708 = vmatprep.subr.mxu0 0.0
    %1709 = vmatpush1.msra.mxu0 0.0
    %1710 = vmatprep.subr.mxu0 0.0
    %1711 = vmatpush1.msra.mxu0 0.0
    %1712 = vmatprep.subr.mxu0 0.0
    %1713 = vmatpush1.msra.mxu0 0.0
    %1714 = vmatprep.subr.mxu0 0.0
    %1715 = vmatpush1.msra.mxu0 0.0
    %1716 = vmatprep.subr.mxu0 0.0
    %1717 = vmatpush1.msra.mxu0 0.0
    %1718 = vmatprep.subr.mxu0 0.0
    %1719 = vmatpush1.msra.mxu0 0.0
    %1720 = vmatprep.subr.mxu0 0.0
    %1721 = vmatpush1.msra.mxu0 0.0
    %1722 = vmatprep.subr.mxu0 0.0
    %1723 = vmatpush1.msra.mxu0 0.0
    %1724 = vmatprep.subr.mxu0 0.0
    %1725 = vmatpush1.msra.mxu0 0.0
    %1726 = vmatprep.subr.mxu0 0.0
    %1727 = vmatpush1.msra.mxu0 0.0
    %1728 = vmatprep.subr.mxu0 0.0
    %1729 = vmatpush1.msra.mxu0 0.0
    %1730 = vmatprep.subr.mxu0 0.0
    %1731 = vmatpush1.msra.mxu0 0.0
    %1732 = vmatprep.subr.mxu0 0.0
    %1733 = vmatpush1.msra.mxu0 0.0
    %1734 = vmatprep.subr.mxu0 0.0
    %1735 = vmatpush1.msra.mxu0 0.0
    %1736 = vmatprep.subr.mxu0 0.0
    %1737 = vmatpush1.msra.mxu0 0.0
    %1738 = vmatprep.subr.mxu0 0.0
    %1739 = vmatpush1.msra.mxu0 0.0
    %1740 = vmatprep.subr.mxu0 0.0
    %1741 = vmatpush1.msra.mxu0 0.0
    %1742 = vmatprep.subr.mxu0 0.0
    %1743 = vmatpush1.msra.mxu0 0.0
    %1744 = vmatprep.subr.mxu0 0.0
    %1745 = vmatpush1.msra.mxu0 0.0
    %1746 = vmatprep.subr.mxu0 0.0
    %1747 = vmatpush1.msra.mxu0 0.0
    %1748 = vmatprep.subr.mxu0 0.0
    %1749 = vmatpush1.msra.mxu0 0.0
    %1750 = vmatprep.subr.mxu0 0.0
    %1751 = vmatpush1.msra.mxu0 0.0
    %1752 = vmatprep.subr.mxu0 0.0
    %1753 = vmatpush1.msra.mxu0 0.0
    %1754 = vmatprep.subr.mxu0 0.0
    %1755 = vmatpush1.msra.mxu0 0.0
    %1756 = vmatprep.subr.mxu0 0.0
    %1757 = vmatpush1.msra.mxu0 0.0
    %1758 = vmatprep.subr.mxu0 0.0
    %1759 = vmatpush1.msra.mxu0 0.0
    %1760 = vmatprep.subr.mxu0 0.0
    %1761 = vmatpush1.msra.mxu0 0.0
    %1762 = vmatprep.mubr.f32.mxu0 0.0
    %1763 = vmatmul.mubr.f32.gmra.mrb[0].mxu0 %v1696
    %v1764 = vpop.f32.mrb[0].mxu0
    %v1765 = vadd.f32 0.0, %v1764
    %v1766 = vpop.f32.mrb[0].mxu0
    %1767 = vdwg.mxu0
    %v1769 = vsel %vm112, %v1692, 0
    %1771 = vmatprep.subr.mxu0 0.0
    %1772 = vmatpush1.msra.mxu0 %v104
    %1773 = vmatprep.subr.mxu0 0.0
    %1774 = vmatpush1.msra.mxu0 %v105
    %1775 = vmatprep.subr.mxu0 0.0
    %1776 = vmatpush1.msra.mxu0 0.0
    %1777 = vmatprep.subr.mxu0 0.0
    %1778 = vmatpush1.msra.mxu0 0.0
    %1779 = vmatprep.subr.mxu0 0.0
    %1780 = vmatpush1.msra.mxu0 0.0
    %1781 = vmatprep.subr.mxu0 0.0
    %1782 = vmatpush1.msra.mxu0 0.0
    %1783 = vmatprep.subr.mxu0 0.0
    %1784 = vmatpush1.msra.mxu0 0.0
    %1785 = vmatprep.subr.mxu0 0.0
    %1786 = vmatpush1.msra.mxu0 0.0
    %1787 = vmatprep.subr.mxu0 0.0
    %1788 = vmatpush1.msra.mxu0 0.0
    %1789 = vmatprep.subr.mxu0 0.0
    %1790 = vmatpush1.msra.mxu0 0.0
    %1791 = vmatprep.subr.mxu0 0.0
    %1792 = vmatpush1.msra.mxu0 0.0
    %1793 = vmatprep.subr.mxu0 0.0
    %1794 = vmatpush1.msra.mxu0 0.0
    %1795 = vmatprep.subr.mxu0 0.0
    %1796 = vmatpush1.msra.mxu0 0.0
    %1797 = vmatprep.subr.mxu0 0.0
    %1798 = vmatpush1.msra.mxu0 0.0
    %1799 = vmatprep.subr.mxu0 0.0
    %1800 = vmatpush1.msra.mxu0 0.0
    %1801 = vmatprep.subr.mxu0 0.0
    %1802 = vmatpush1.msra.mxu0 0.0
    %1803 = vmatprep.subr.mxu0 0.0
    %1804 = vmatpush1.msra.mxu0 0.0
    %1805 = vmatprep.subr.mxu0 0.0
    %1806 = vmatpush1.msra.mxu0 0.0
    %1807 = vmatprep.subr.mxu0 0.0
    %1808 = vmatpush1.msra.mxu0 0.0
    %1809 = vmatprep.subr.mxu0 0.0
    %1810 = vmatpush1.msra.mxu0 0.0
    %1811 = vmatprep.subr.mxu0 0.0
    %1812 = vmatpush1.msra.mxu0 0.0
    %1813 = vmatprep.subr.mxu0 0.0
    %1814 = vmatpush1.msra.mxu0 0.0
    %1815 = vmatprep.subr.mxu0 0.0
    %1816 = vmatpush1.msra.mxu0 0.0
    %1817 = vmatprep.subr.mxu0 0.0
    %1818 = vmatpush1.msra.mxu0 0.0
    %1819 = vmatprep.subr.mxu0 0.0
    %1820 = vmatpush1.msra.mxu0 0.0
    %1821 = vmatprep.subr.mxu0 0.0
    %1822 = vmatpush1.msra.mxu0 0.0
    %1823 = vmatprep.subr.mxu0 0.0
    %1824 = vmatpush1.msra.mxu0 0.0
    %1825 = vmatprep.subr.mxu0 0.0
    %1826 = vmatpush1.msra.mxu0 0.0
    %1827 = vmatprep.subr.mxu0 0.0
    %1828 = vmatpush1.msra.mxu0 0.0
    %1829 = vmatprep.subr.mxu0 0.0
    %1830 = vmatpush1.msra.mxu0 0.0
    %1831 = vmatprep.subr.mxu0 0.0
    %1832 = vmatpush1.msra.mxu0 0.0
    %1833 = vmatprep.subr.mxu0 0.0
    %1834 = vmatpush1.msra.mxu0 0.0
    %1835 = vmatprep.mubr.f32.mxu0 0.0
    %1836 = vmatmul.mubr.f32.gmra.mrb[0].mxu0 %v1769
    %v1837 = vpop.f32.mrb[0].mxu0
    %v1838 = vadd.f32 %v1765, %v1837
    %v1839 = vpop.f32.mrb[0].mxu0
    %1840 = vdwg.mxu0
    %v1841 = vtanh.pop %v1838
    %v1843 = vsel %vm112, %v1841, 0
    %1845 = vmatprep.subr.mxu0 0.0
    %1846 = vmatpush1.msra.mxu0 %v108
    %1847 = vmatprep.subr.mxu0 0.0
    %1848 = vmatpush1.msra.mxu0 %v109
    %1849 = vmatprep.subr.mxu0 0.0
    %1850 = vmatpush1.msra.mxu0 0.0
    %1851 = vmatprep.subr.mxu0 0.0
    %1852 = vmatpush1.msra.mxu0 0.0
    %1853 = vmatprep.subr.mxu0 0.0
    %1854 = vmatpush1.msra.mxu0 0.0
    %1855 = vmatprep.subr.mxu0 0.0
    %1856 = vmatpush1.msra.mxu0 0.0
    %1857 = vmatprep.subr.mxu0 0.0
    %1858 = vmatpush1.msra.mxu0 0.0
    %1859 = vmatprep.subr.mxu0 0.0
    %1860 = vmatpush1.msra.mxu0 0.0
    %1861 = vmatprep.subr.mxu0 0.0
    %1862 = vmatpush1.msra.mxu0 0.0
    %1863 = vmatprep.subr.mxu0 0.0
    %1864 = vmatpush1.msra.mxu0 0.0
    %1865 = vmatprep.subr.mxu0 0.0
    %1866 = vmatpush1.msra.mxu0 0.0
    %1867 = vmatprep.subr.mxu0 0.0
    %1868 = vmatpush1.msra.mxu0 0.0
    %1869 = vmatprep.subr.mxu0 0.0
    %1870 = vmatpush1.msra.mxu0 0.0
    %1871 = vmatprep.subr.mxu0 0.0
    %1872 = vmatpush1.msra.mxu0 0.0
    %1873 = vmatprep.subr.mxu0 0.0
    %1874 = vmatpush1.msra.mxu0 0.0
    %1875 = vmatprep.subr.mxu0 0.0
    %1876 = vmatpush1.msra.mxu0 0.0
    %1877 = vmatprep.subr.mxu0 0.0
    %1878 = vmatpush1.msra.mxu0 0.0
    %1879 = vmatprep.subr.mxu0 0.0
    %1880 = vmatpush1.msra.mxu0 0.0
    %1881 = vmatprep.subr.mxu0 0.0
    %1882 = vmatpush1.msra.mxu0 0.0
    %1883 = vmatprep.subr.mxu0 0.0
    %1884 = vmatpush1.msra.mxu0 0.0
    %1885 = vmatprep.subr.mxu0 0.0
    %1886 = vmatpush1.msra.mxu0 0.0
    %1887 = vmatprep.subr.mxu0 0.0
    %1888 = vmatpush1.msra.mxu0 0.0
    %1889 = vmatprep.subr.mxu0 0.0
    %1890 = vmatpush1.msra.mxu0 0.0
    %1891 = vmatprep.subr.mxu0 0.0
    %1892 = vmatpush1.msra.mxu0 0.0
    %1893 = vmatprep.subr.mxu0 0.0
    %1894 = vmatpush1.msra.mxu0 0.0
    %1895 = vmatprep.subr.mxu0 0.0
    %1896 = vmatpush1.msra.mxu0 0.0
    %1897 = vmatprep.subr.mxu0 0.0
    %1898 = vmatpush1.msra.mxu0 0.0
    %1899 = vmatprep.subr.mxu0 0.0
    %1900 = vmatpush1.msra.mxu0 0.0
    %1901 = vmatprep.subr.mxu0 0.0
    %1902 = vmatpush1.msra.mxu0 0.0
    %1903 = vmatprep.subr.mxu0 0.0
    %1904 = vmatpush1.msra.mxu0 0.0
    %1905 = vmatprep.subr.mxu0 0.0
    %1906 = vmatpush1.msra.mxu0 0.0
    %1907 = vmatprep.subr.mxu0 0.0
    %1908 = vmatpush1.msra.mxu0 0.0
    %1909 = vmatprep.mubr.f32.mxu0 0.0
    %1910 = vmatmul.mubr.f32.gmra.mrb[0].mxu0 %v1843
    %v1911 = vpop.f32.mrb[0].mxu0
    %v1912 = vadd.f32 0.0, %v1911
    %v1913 = vpop.f32.mrb[0].mxu0
    %1914 = vdwg.mxu0
    %s1915 = scalar_lea.vmem [#allocation2], 56
    %1916 = vst.msk [vmem:[%s1915] sm:$0x3f] %vm333, %v1912
    %v1917 = vld [vmem:[#allocation3] sm:$0x3f]
    %v1918 = vld [vmem:[#allocation2] sm:$0x3f]
    %v1919 = vld [vmem:[#allocation2 + $0x8] sm:$0x3f]
    %v1920 = vld [vmem:[#allocation2 + $0x10] sm:$0x3f]
    %v1921 = vld [vmem:[#allocation2 + $0x18] sm:$0x3f]
    %v1922 = vld [vmem:[#allocation2 + $0x20] sm:$0x3f]
    %v1923 = vld [vmem:[#allocation2 + $0x28] sm:$0x3f]
    %v1924 = vld [vmem:[#allocation2 + $0x30] sm:$0x3f]
    %v1925 = vld [vmem:[#allocation2 + $0x38] sm:$0x3f]
    %1926 = vset.pattern.permute.xlu0 0
    %1927 = vperm.xlu0 %1926, %v1917
    %v1928 = vpop.permute.xlu0 %1927
    %vm1929 = vcmp.gt.s32.totalorder %v1928, 0
    %vm1930 = vcmp.gt.s32.totalorder %v1928, 1
    %vm1931 = vcmp.gt.s32.totalorder %v1928, 2
    %vm1932 = vcmp.gt.s32.totalorder %v1928, 3
    %vm1933 = vcmp.gt.s32.totalorder %v1928, 4
    %vm1934 = vcmp.gt.s32.totalorder %v1928, 5
    %vm1935 = vcmp.gt.s32.totalorder %v1928, 6
    %vm1936 = vcmp.gt.s32.totalorder %v1928, 7
    %v1937 = vsel %vm1929, %v1918, -1e+30
    %v1938 = vsel %vm1930, %v1919, -1e+30
    %v1939 = vsel %vm1931, %v1920, -1e+30
    %v1940 = vsel %vm1932, %v1921, -1e+30
    %v1941 = vsel %vm1933, %v1922, -1e+30
    %v1942 = vsel %vm1934, %v1923, -1e+30
    %v1943 = vsel %vm1935, %v1924, -1e+30
    %v1944 = vsel %vm1936, %v1925, -1e+30
    %v1945 = vsel %vm333, %v1937, -inf
    %v1946 = vsel %vm333, %v1938, -inf
    %v1947 = vsel %vm333, %v1939, -inf
    %v1948 = vsel %vm333, %v1940, -inf
    %v1949 = vsel %vm333, %v1941, -inf
    %v1950 = vmax.f32 %v1945, %v1949
    %v1951 = vsel %vm333, %v1942, -inf
    %v1952 = vmax.f32 %v1946, %v1951
    %v1953 = vsel %vm333, %v1943, -inf
    %v1954 = vmax.f32 %v1947, %v1953
    %v1955 = vsel %vm333, %v1944, -inf
    %v1956 = vmax.f32 %v1948, %v1955
    %v1957 = vmax.f32 %v1950, %v1952
    %v1958 = vmax.f32 %v1954, %v1956
    %v1959 = vmax.f32 %v1957, %v1958
    %v1960 = vsub.f32 %v1937, %v1959
    %v1961 = vsub.f32 %v1938, %v1959
    %v1962 = vsub.f32 %v1939, %v1959
    %v1963 = vsub.f32 %v1940, %v1959
    %v1964 = vsub.f32 %v1941, %v1959
    %v1965 = vsub.f32 %v1942, %v1959
    %v1966 = vsub.f32 %v1943, %v1959
    %v1967 = vsub.f32 %v1944, %v1959
    %v1968 = vmul.f32 %v1960, 1.442695
    %v1969 = vpow.pop %v1968
    %v1970 = vmul.f32 %v1961, 1.442695
    %v1971 = vpow.pop %v1970
    %v1972 = vmul.f32 %v1962, 1.442695
    %v1973 = vpow.pop %v1972
    %v1974 = vmul.f32 %v1963, 1.442695
    %v1975 = vpow.pop %v1974
    %v1976 = vmul.f32 %v1964, 1.442695
    %v1977 = vpow.pop %v1976
    %v1978 = vmul.f32 %v1965, 1.442695
    %v1979 = vpow.pop %v1978
    %v1980 = vmul.f32 %v1966, 1.442695
    %v1981 = vpow.pop %v1980
    %v1982 = vmul.f32 %v1967, 1.442695
    %v1983 = vpow.pop %v1982
    %v1984 = vsel %vm333, %v1969, 0.0
    %v1985 = vsel %vm333, %v1971, 0.0
    %v1986 = vadd.f32 %v1984, %v1985
    %v1987 = vsel %vm333, %v1973, 0.0
    %v1988 = vadd.f32 %v1986, %v1987
    %v1989 = vsel %vm333, %v1975, 0.0
    %v1990 = vadd.f32 %v1988, %v1989
    %v1991 = vsel %vm333, %v1977, 0.0
    %v1992 = vadd.f32 %v1990, %v1991
    %v1993 = vsel %vm333, %v1979, 0.0
    %v1994 = vadd.f32 %v1992, %v1993
    %v1995 = vsel %vm333, %v1981, 0.0
    %v1996 = vadd.f32 %v1994, %v1995
    %v1997 = vsel %vm333, %v1983, 0.0
    %v1998 = vadd.f32 %v1996, %v1997
    %v1999 = vrcp.pop %v1998
    %v2000 = vmul.f32 %v1969, %v1999
    %v2001 = vmul.f32 %v1971, %v1999
    %v2002 = vmul.f32 %v1973, %v1999
    %v2003 = vmul.f32 %v1975, %v1999
    %v2004 = vmul.f32 %v1977, %v1999
    %v2005 = vmul.f32 %v1979, %v1999
    %v2006 = vmul.f32 %v1981, %v1999
    %v2007 = vmul.f32 %v1983, %v1999
    %v2008 = vsel %vm333, %v2000, 0.0
    %2009 = vadd.xlane.f32.xlu0 %v2008
    %v2010 = vpop.xlane.xlu0 %2009
    %v2011 = vsel %vm333, %v2001, 0.0
    %2012 = vadd.xlane.f32.xlu0 %v2011
    %v2013 = vpop.xlane.xlu0 %2012
    %v2014 = vsel %vm333, %v2002, 0.0
    %2015 = vadd.xlane.f32.xlu0 %v2014
    %v2016 = vpop.xlane.xlu0 %2015
    %v2017 = vsel %vm333, %v2003, 0.0
    %2018 = vadd.xlane.f32.xlu0 %v2017
    %v2019 = vpop.xlane.xlu0 %2018
    %v2020 = vsel %vm333, %v2004, 0.0
    %2021 = vadd.xlane.f32.xlu0 %v2020
    %v2022 = vpop.xlane.xlu0 %2021
    %v2023 = vsel %vm333, %v2005, 0.0
    %2024 = vadd.xlane.f32.xlu0 %v2023
    %v2025 = vpop.xlane.xlu0 %2024
    %v2026 = vsel %vm333, %v2006, 0.0
    %2027 = vadd.xlane.f32.xlu0 %v2026
    %v2028 = vpop.xlane.xlu0 %2027
    %v2029 = vsel %vm333, %v2007, 0.0
    %2030 = vadd.xlane.f32.xlu0 %v2029
    %v2031 = vpop.xlane.xlu0 %2030
    %v2032 = vrcp.pop 2.0
    %v2033 = vmul.f32 %v2010, %v2032
    %v2034 = vmul.f32 %v2013, %v2032
    %v2035 = vmul.f32 %v2016, %v2032
    %v2036 = vmul.f32 %v2019, %v2032
    %v2037 = vmul.f32 %v2022, %v2032
    %v2038 = vmul.f32 %v2025, %v2032
    %v2039 = vmul.f32 %v2028, %v2032
    %v2040 = vmul.f32 %v2031, %v2032
    %v2041 = vld [vmem:[#allocation6] sm:$0x3f]
    %v2042 = vld [vmem:[#allocation6 + $0x8] sm:$0x3f]
    %v2043 = vld [vmem:[#allocation6 + $0x10] sm:$0x3f]
    %v2044 = vld [vmem:[#allocation6 + $0x18] sm:$0x3f]
    %v2045 = vld [vmem:[#allocation6 + $0x20] sm:$0x3f]
    %v2046 = vld [vmem:[#allocation6 + $0x28] sm:$0x3f]
    %v2047 = vld [vmem:[#allocation6 + $0x30] sm:$0x3f]
    %v2048 = vld [vmem:[#allocation6 + $0x38] sm:$0x3f]
    %v2049 = vmul.f32 %v2033, %v2041
    %v2050 = vmul.f32 %v2034, %v2042
    %v2051 = vmul.f32 %v2035, %v2043
    %v2052 = vmul.f32 %v2036, %v2044
    %v2053 = vmul.f32 %v2037, %v2045
    %v2054 = vmul.f32 %v2038, %v2046
    %v2055 = vmul.f32 %v2039, %v2047
    %v2056 = vmul.f32 %v2040, %v2048
    %vm2057 = vcmask 128000
    %v2058 = vsel %vm2057, %v2049, 0.0
    %v2059 = vsel %vm2057, %v2050, 0.0
    %v2060 = vadd.f32 %v2058, %v2059
    %v2061 = vsel %vm2057, %v2051, 0.0
    %v2062 = vadd.f32 %v2060, %v2061
    %v2063 = vsel %vm2057, %v2052, 0.0
    %v2064 = vadd.f32 %v2062, %v2063
    %v2065 = vsel %vm2057, %v2053, 0.0
    %v2066 = vadd.f32 %v2064, %v2065
    %v2067 = vsel %vm2057, %v2054, 0.0
    %v2068 = vadd.f32 %v2066, %v2067
    %v2069 = vsel %vm2057, %v2055, 0.0
    %v2070 = vadd.f32 %v2068, %v2069
    %v2071 = vsel %vm2057, %v2056, 0.0
    %v2072 = vadd.f32 %v2070, %v2071
    %v2073 = vld [vmem:[#allocation8] sm:$0x3f]
    %v2074 = vld [vmem:[#allocation8 + $0x8] sm:$0x3f]
    %v2075 = vld [vmem:[#allocation8 + $0x10] sm:$0x3f]
    %v2076 = vld [vmem:[#allocation8 + $0x18] sm:$0x3f]
    %v2077 = vld [vmem:[#allocation8 + $0x20] sm:$0x3f]
    %v2078 = vld [vmem:[#allocation8 + $0x28] sm:$0x3f]
    %v2079 = vld [vmem:[#allocation8 + $0x30] sm:$0x3f]
    %v2080 = vld [vmem:[#allocation8 + $0x38] sm:$0x3f]
    %v2081 = vmul.f32 %v2033, %v2073
    %v2082 = vmul.f32 %v2034, %v2074
    %v2083 = vmul.f32 %v2035, %v2075
    %v2084 = vmul.f32 %v2036, %v2076
    %v2085 = vmul.f32 %v2037, %v2077
    %v2086 = vmul.f32 %v2038, %v2078
    %v2087 = vmul.f32 %v2039, %v2079
    %v2088 = vmul.f32 %v2040, %v2080
    %v2089 = vsel %vm2057, %v2081, 0.0
    %v2090 = vsel %vm2057, %v2082, 0.0
    %v2091 = vadd.f32 %v2089, %v2090
    %v2092 = vsel %vm2057, %v2083, 0.0
    %v2093 = vadd.f32 %v2091, %v2092
    %v2094 = vsel %vm2057, %v2084, 0.0
    %v2095 = vadd.f32 %v2093, %v2094
    %v2096 = vsel %vm2057, %v2085, 0.0
    %v2097 = vadd.f32 %v2095, %v2096
    %v2098 = vsel %vm2057, %v2086, 0.0
    %v2099 = vadd.f32 %v2097, %v2098
    %v2100 = vsel %vm2057, %v2087, 0.0
    %v2101 = vadd.f32 %v2099, %v2100
    %v2102 = vsel %vm2057, %v2088, 0.0
    %v2103 = vadd.f32 %v2101, %v2102
    %2105 = vrot.lane.b32.xlu0 %v2103, 16
    %v2106 = vpop.permute.xlu0 %2105
    %v2108 = vsel %vm112, %v2072, %v2106
    %vm2109 = vcmask 259072
    %2110 = vst.msk [vmem:[#allocation14] sm:$0x3f] %vm2109, %v2108
    // Predicated region
    $region50: #{hierarchical_multi_attention_forward.8} parent=1 // pred_check
      _
    $region51: #{hierarchical_multi_attention_forward.8} parent=1 // pred_check_branch
      %2112 = sbr.rel (0) target = $region53
    $region52: #{hierarchical_multi_attention_forward.8} parent=1 // pred_region
      %s2114 = ssub.s32 128, 128
      %2115 = vsyncadd [#allocation5], %s2114
      %s2117 = sshll.u32 [#allocation14], 4
      %s2118 = int_to_ptr.vmem [resolvable:$true] %s2117
      %2120 = dma.vmem_to_hbm [thread:$0]  %s2118, 128, %s6, [#allocation5]
    $region53: #{hierarchical_multi_attention_forward.8} parent=1 // pred_fallthru
      _
    // Predicated region
    $region54: #{hierarchical_multi_attention_forward.8} parent=1 // pred_check
      _
    $region55: #{hierarchical_multi_attention_forward.8} parent=1 // pred_check_branch
      %2122 = sbr.rel (0) target = $region57
    $region56: #{hierarchical_multi_attention_forward.8} parent=1 // pred_region
      %2123 = dma.done [#allocation5], 128
    $region57: #{hierarchical_multi_attention_forward.8} parent=1 // pred_fallthru
      _
    %2124 = vsyncpa [#allocation4], 1
    %2125 = vsyncpa [#allocation7], 1
    %2126 = vsyncpa [#allocation10], 1
    %2127 = vsyncpa [#allocation13], 1
    %2128 = vsyncpa [#allocation5], 1

// kernel: hierarchical_multi_attention_forward.7
$region0: #{hierarchical_multi_attention_forward.7}
  #allocation0 [shape = 'u32[]', space=smem, size = 0x4, offset = 0x4, fixed_abs, tag = 'smem constant byte address 0x4 - core index']
  #allocation1 [shape = 'u32[144,128]{1,0:T(1,128)}', space=vmem, size = 0x12000, scoped, tag = 'internal scratch']
  #allocation2 [shape = 'f32[6,16]{1,0:T(8,128)}', space=vmem, size = 0x1000, scoped, tag = 'scratch operand']
  #allocation3 [shape = 'f32[6,16]{1,0:T(8,128)}', space=vmem, size = 0x1000, scoped, tag = 'scratch operand']
  #allocation4 [shape = 'f32[6,16]{1,0:T(8,128)}', space=vmem, size = 0x1000, scoped, tag = 'scratch operand']
  #allocation5 [shape = 'f32[6,16]{1,0:T(8,128)}', space=vmem, size = 0x1000, scoped, tag = 'scratch operand']
  %s0 = inlined_call_operand.hbm [shape: s32[6,1], index: 0, kind: input, shape index: {}]
  %s1 = inlined_call_operand.hbm [shape: f32[8,6,64], index: 1, kind: input, shape index: {}]
  %s2 = inlined_call_operand.hbm [shape: f32[8,6,64], index: 2, kind: input, shape index: {}]
  %s3 = inlined_call_operand.hbm [shape: f32[16,64], index: 3, kind: input, shape index: {}]
  %s4 = inlined_call_operand.hbm [shape: f32[16,64], index: 4, kind: input, shape index: {}]
  %s5 = inlined_call_operand.hbm [shape: f32[8,6,16], index: 5, kind: output, shape index: {0}]
  %s6 = inlined_call_operand.hbm [shape: f32[8,6,16], index: 6, kind: output, shape index: {1}]
  %7 = xla_tuple %s5, %s6
  %s8 = sld [smem:[#allocation0]]
  $region62: #{hierarchical_multi_attention_forward.7} parent=0
    _
  %s10 = ssub.s32 1, %s8
  %s11 = scalar_select 0, %s10, %s8
  $region1: #{hierarchical_multi_attention_forward.7} parent=0
    #allocation6 [shape = 'u8[4096]{0}', space=vmem, size = 0x1000, scoped, tag = 'input window, operand 0, single buffered']
    #allocation7 [shape = 's32[1]{0}', space=sflag, size = 0x4, scoped, tag = 'scoped memory for hierarchical_multi_attention_forward.7']
    #allocation8 [shape = 's32[1]{0}', space=sflag, size = 0x4, scoped, tag = 'scoped memory for hierarchical_multi_attention_forward.7']
    #allocation9 [shape = 'u8[32768]{0}', space=vmem, size = 0x8000, scoped, tag = 'input window, operand 1, single buffered']
    #allocation10 [shape = 's32[1]{0}', space=sflag, size = 0x4, scoped, tag = 'scoped memory for hierarchical_multi_attention_forward.7']
    #allocation11 [shape = 'u8[32768]{0}', space=vmem, size = 0x8000, scoped, tag = 'input window, operand 2, single buffered']
    #allocation12 [shape = 'u8[8192]{0}', space=vmem, size = 0x2000, scoped, tag = 'input window, operand 3, single buffered']
    #allocation13 [shape = 's32[1]{0}', space=sflag, size = 0x4, scoped, tag = 'scoped memory for hierarchical_multi_attention_forward.7']
    #allocation14 [shape = 'u8[8192]{0}', space=vmem, size = 0x2000, scoped, tag = 'input window, operand 4, single buffered']
    #allocation15 [shape = 'u8[32768]{0}', space=vmem, size = 0x8000, scoped, tag = 'output window, operand 0, single buffered']
    #allocation16 [shape = 'u8[32768]{0}', space=vmem, size = 0x8000, scoped, tag = 'output window, operand 1, single buffered']
    #allocation17 [shape = 's32[1]{0}', space=sflag, size = 0x4, scoped, tag = 'scoped memory for hierarchical_multi_attention_forward.7']
    %12 = vsyncpa [#allocation7], 0
    %13 = vsyncpa [#allocation10], 0
    %14 = vsyncpa [#allocation13], 0
    %15 = vsyncpa [#allocation8], 0
    %16 = vsyncpa [#allocation17], 0
    // Predicated region
    $region2: #{hierarchical_multi_attention_forward.7} parent=1 // pred_check
      _
    $region3: #{hierarchical_multi_attention_forward.7} parent=1 // pred_check_branch
      %18 = sbr.rel (0) target = $region5
    $region4: #{hierarchical_multi_attention_forward.7} parent=1 // pred_region
      %s20 = ssub.s32 128, 128
      %21 = vsyncadd [#allocation7], %s20
      %s23 = sshll.u32 [#allocation6], 4
      %s24 = int_to_ptr.vmem [resolvable:$true] %s23
      %26 = dma.hbm_to_vmem [thread:$0]  %s0, 128, %s24, [#allocation7]
    $region5: #{hierarchical_multi_attention_forward.7} parent=1 // pred_fallthru
      _
    // Predicated region
    $region6: #{hierarchical_multi_attention_forward.7} parent=1 // pred_check
      _
    $region7: #{hierarchical_multi_attention_forward.7} parent=1 // pred_check_branch
      %28 = sbr.rel (0) target = $region9
    $region8: #{hierarchical_multi_attention_forward.7} parent=1 // pred_region
      %s30 = ssub.s32 1024, 1024
      %31 = vsyncadd [#allocation10], %s30
      %s32 = sshll.u32 [#allocation9], 4
      %s33 = int_to_ptr.vmem [resolvable:$true] %s32
      %38 = dma.hbm_to_vmem [thread:$0]  %s1, 1024, %s33, [#allocation10], 128, 128, 8
    $region9: #{hierarchical_multi_attention_forward.7} parent=1 // pred_fallthru
      _
    // Predicated region
    $region10: #{hierarchical_multi_attention_forward.7} parent=1 // pred_check
      _
    $region11: #{hierarchical_multi_attention_forward.7} parent=1 // pred_check_branch
      %40 = sbr.rel (0) target = $region13
    $region12: #{hierarchical_multi_attention_forward.7} parent=1 // pred_region
      %s41 = ssub.s32 0, 0
      %s42 = smul.u32 8, %s41
      %s44 = ssub.s32 1024, 1024
      %45 = vsyncadd [#allocation10], %s44
      %s46 = smul.addr %s42, 128
      %s47 = scalar_lea.hbm %s2, %s46
      %s48 = sshll.u32 [#allocation11], 4
      %s49 = int_to_ptr.vmem [resolvable:$true] %s48
      %54 = dma.hbm_to_vmem [thread:$0]  %s47, 1024, %s49, [#allocation10], 128, 128, 8
    $region13: #{hierarchical_multi_attention_forward.7} parent=1 // pred_fallthru
      _
    // Predicated region
    $region14: #{hierarchical_multi_attention_forward.7} parent=1 // pred_check
      _
    $region15: #{hierarchical_multi_attention_forward.7} parent=1 // pred_check_branch
      %56 = sbr.rel (0) target = $region17
    $region16: #{hierarchical_multi_attention_forward.7} parent=1 // pred_region
      %s58 = ssub.s32 256, 256
      %59 = vsyncadd [#allocation13], %s58
      %s60 = sshll.u32 [#allocation12], 4
      %s61 = int_to_ptr.vmem [resolvable:$true] %s60
      %66 = dma.hbm_to_vmem [thread:$0]  %s3, 256, %s61, [#allocation13], 128, 128, 8
    $region17: #{hierarchical_multi_attention_forward.7} parent=1 // pred_fallthru
      _
    // Predicated region
    $region18: #{hierarchical_multi_attention_forward.7} parent=1 // pred_check
      _
    $region19: #{hierarchical_multi_attention_forward.7} parent=1 // pred_check_branch
      %68 = sbr.rel (0) target = $region21
    $region20: #{hierarchical_multi_attention_forward.7} parent=1 // pred_region
      %s70 = ssub.s32 256, 256
      %71 = vsyncadd [#allocation13], %s70
      %s72 = sshll.u32 [#allocation14], 4
      %s73 = int_to_ptr.vmem [resolvable:$true] %s72
      %78 = dma.hbm_to_vmem [thread:$0]  %s4, 256, %s73, [#allocation13], 128, 128, 8
    $region21: #{hierarchical_multi_attention_forward.7} parent=1 // pred_fallthru
      _
    // Predicated region
    $region22: #{hierarchical_multi_attention_forward.7} parent=1 // pred_check
      _
    $region23: #{hierarchical_multi_attention_forward.7} parent=1 // pred_check_branch
      %80 = sbr.rel (0) target = $region25
    $region24: #{hierarchical_multi_attention_forward.7} parent=1 // pred_region
      %81 = dma.done [#allocation7], 128
    $region25: #{hierarchical_multi_attention_forward.7} parent=1 // pred_fallthru
      _
    // Predicated region
    $region26: #{hierarchical_multi_attention_forward.7} parent=1 // pred_check
      _
    $region27: #{hierarchical_multi_attention_forward.7} parent=1 // pred_check_branch
      %83 = sbr.rel (0) target = $region29
    $region28: #{hierarchical_multi_attention_forward.7} parent=1 // pred_region
      %84 = dma.done [#allocation10], 1024
    $region29: #{hierarchical_multi_attention_forward.7} parent=1 // pred_fallthru
      _
    // Predicated region
    $region30: #{hierarchical_multi_attention_forward.7} parent=1 // pred_check
      _
    $region31: #{hierarchical_multi_attention_forward.7} parent=1 // pred_check_branch
      %86 = sbr.rel (0) target = $region33
    $region32: #{hierarchical_multi_attention_forward.7} parent=1 // pred_region
      %87 = dma.done [#allocation10], 1024
    $region33: #{hierarchical_multi_attention_forward.7} parent=1 // pred_fallthru
      _
    // Predicated region
    $region34: #{hierarchical_multi_attention_forward.7} parent=1 // pred_check
      _
    $region35: #{hierarchical_multi_attention_forward.7} parent=1 // pred_check_branch
      %89 = sbr.rel (0) target = $region37
    $region36: #{hierarchical_multi_attention_forward.7} parent=1 // pred_region
      %90 = dma.done [#allocation13], 256
    $region37: #{hierarchical_multi_attention_forward.7} parent=1 // pred_fallthru
      _
    // Predicated region
    $region38: #{hierarchical_multi_attention_forward.7} parent=1 // pred_check
      _
    $region39: #{hierarchical_multi_attention_forward.7} parent=1 // pred_check_branch
      %92 = sbr.rel (0) target = $region41
    $region40: #{hierarchical_multi_attention_forward.7} parent=1 // pred_region
      %93 = dma.done [#allocation13], 256
    $region41: #{hierarchical_multi_attention_forward.7} parent=1 // pred_fallthru
      _
    %s94 = ssub.s32 0, 0
    %s95 = smul.u32 8, %s94
    %s96 = ssub.s32 0, 0
    %s97 = smul.u32 8, %s96
    %p98 = scmp.eq.s32.totalorder 0, 0
    // Predicated region
    $region42: #{hierarchical_multi_attention_forward.7} parent=1 // pred_check
      %p99 = pneg %p98
    $region43: #{hierarchical_multi_attention_forward.7} parent=1 // pred_check_branch
      %101 = sbr.rel (%p99) target = $region45
    $region44: #{hierarchical_multi_attention_forward.7} parent=1 // pred_region
      %vm102 = vcmask 128000
      %103 = vst.msk [vmem:[#allocation2] sm:$0x3f] %vm102, 0.0
      %104 = vst.msk [vmem:[#allocation3] sm:$0x3f] %vm102, 0.0
      %105 = vst.msk [vmem:[#allocation4] sm:$0x3f] %vm102, 0.0
      %106 = vst.msk [vmem:[#allocation5] sm:$0x3f] %vm102, 0.0
    $region45: #{hierarchical_multi_attention_forward.7} parent=1 // pred_fallthru
      _
    %v107 = vld [vmem:[#allocation6] sm:$0x3f]
    %v108 = vld [vmem:[#allocation12] sm:$0xff]
    %v109 = vld [vmem:[#allocation12 + $0x8] sm:$0xff]
    %v110 = vld [vmem:[#allocation14] sm:$0xff]
    %v111 = vld [vmem:[#allocation14 + $0x8] sm:$0xff]
    %s112 = smul.u32 0, 8
    %v113 = vld [vmem:[#allocation2] sm:$0x3f]
    %v114 = vld [vmem:[#allocation3] sm:$0x3f]
    %v115 = vld [vmem:[#allocation4] sm:$0x3f]
    %v116 = vld [vmem:[#allocation5] sm:$0x3f]
    %v117 = vld [vmem:[#allocation9] sm:$0x3f]
    %vm118 = vcmask 130048
    %v120 = vsel %vm118, %v113, 0
    %122 = vmatprep.subr.mxu0 0.0
    %123 = vmatpush1.msra.mxu0 %v108
    %124 = vmatprep.subr.mxu0 0.0
    %125 = vmatpush1.msra.mxu0 %v109
    %126 = vmatprep.subr.mxu0 0.0
    %127 = vmatpush1.msra.mxu0 0.0
    %128 = vmatprep.subr.mxu0 0.0
    %129 = vmatpush1.msra.mxu0 0.0
    %130 = vmatprep.subr.mxu0 0.0
    %131 = vmatpush1.msra.mxu0 0.0
    %132 = vmatprep.subr.mxu0 0.0
    %133 = vmatpush1.msra.mxu0 0.0
    %134 = vmatprep.subr.mxu0 0.0
    %135 = vmatpush1.msra.mxu0 0.0
    %136 = vmatprep.subr.mxu0 0.0
    %137 = vmatpush1.msra.mxu0 0.0
    %138 = vmatprep.subr.mxu0 0.0
    %139 = vmatpush1.msra.mxu0 0.0
    %140 = vmatprep.subr.mxu0 0.0
    %141 = vmatpush1.msra.mxu0 0.0
    %142 = vmatprep.subr.mxu0 0.0
    %143 = vmatpush1.msra.mxu0 0.0
    %144 = vmatprep.subr.mxu0 0.0
    %145 = vmatpush1.msra.mxu0 0.0
    %146 = vmatprep.subr.mxu0 0.0
    %147 = vmatpush1.msra.mxu0 0.0
    %148 = vmatprep.subr.mxu0 0.0
    %149 = vmatpush1.msra.mxu0 0.0
    %150 = vmatprep.subr.mxu0 0.0
    %151 = vmatpush1.msra.mxu0 0.0
    %152 = vmatprep.subr.mxu0 0.0
    %153 = vmatpush1.msra.mxu0 0.0
    %154 = vmatprep.subr.mxu0 0.0
    %155 = vmatpush1.msra.mxu0 0.0
    %156 = vmatprep.subr.mxu0 0.0
    %157 = vmatpush1.msra.mxu0 0.0
    %158 = vmatprep.subr.mxu0 0.0
    %159 = vmatpush1.msra.mxu0 0.0
    %160 = vmatprep.subr.mxu0 0.0
    %161 = vmatpush1.msra.mxu0 0.0
    %162 = vmatprep.subr.mxu0 0.0
    %163 = vmatpush1.msra.mxu0 0.0
    %164 = vmatprep.subr.mxu0 0.0
    %165 = vmatpush1.msra.mxu0 0.0
    %166 = vmatprep.subr.mxu0 0.0
    %167 = vmatpush1.msra.mxu0 0.0
    %168 = vmatprep.subr.mxu0 0.0
    %169 = vmatpush1.msra.mxu0 0.0
    %170 = vmatprep.subr.mxu0 0.0
    %171 = vmatpush1.msra.mxu0 0.0
    %172 = vmatprep.subr.mxu0 0.0
    %173 = vmatpush1.msra.mxu0 0.0
    %174 = vmatprep.subr.mxu0 0.0
    %175 = vmatpush1.msra.mxu0 0.0
    %176 = vmatprep.subr.mxu0 0.0
    %177 = vmatpush1.msra.mxu0 0.0
    %178 = vmatprep.subr.mxu0 0.0
    %179 = vmatpush1.msra.mxu0 0.0
    %180 = vmatprep.subr.mxu0 0.0
    %181 = vmatpush1.msra.mxu0 0.0
    %182 = vmatprep.subr.mxu0 0.0
    %183 = vmatpush1.msra.mxu0 0.0
    %184 = vmatprep.subr.mxu0 0.0
    %185 = vmatpush1.msra.mxu0 0.0
    %186 = vmatprep.mubr.f32.mxu0 0.0
    %187 = vmatmul.mubr.f32.gmra.mrb[0].mxu0 %v120
    %v188 = vpop.f32.mrb[0].mxu0
    %v189 = vadd.f32 0.0, %v188
    %v190 = vpop.f32.mrb[0].mxu0
    %191 = vdwg.mxu0
    %v192 = vadd.f32 %v117, %v189
    %v193 = vxor.u32 %v192, 2147483648
    %v194 = vmul.f32 %v193, 1.442695
    %v195 = vpow.pop %v194
    %v196 = vadd.f32 %v195, 1.0
    %v197 = vrcp.pop %v196
    %v198 = vmul.f32 1.0, %v197
    %v199 = vtanh.pop %v192
    %201 = vrot.lane.b32.xlu0 %v114, 16
    %v202 = vpop.permute.xlu0 %201
    %v204 = vmul.f32 %v198, %v202
    %206 = vrot.lane.b32.xlu0 %v199, 96
    %v207 = vpop.permute.xlu0 %206
    %v209 = vmul.f32 %v198, %v207
    %211 = vrot.lane.b32.xlu0 %v209, 16
    %v212 = vpop.permute.xlu0 %211
    %v214 = vadd.f32 %v204, %v212
    %v215 = vtanh.pop %v214
    %217 = vrot.lane.b32.xlu0 %v215, 32
    %v218 = vpop.permute.xlu0 %217
    %v220 = vmul.f32 %v198, %v218
    %v221 = vstv %s112
    %vm222 = vcmp.gt.s32.totalorder %v107, %v221
    %v223 = vsel %vm222, 1, 0
    %224 = vset.pattern.permute.xlu0 0
    %225 = vperm.xlu0 %224, %v223
    %v226 = vpop.permute.xlu0 %225
    %vm227 = vcmp.eq.s32.totalorder %v226, 1
    %228 = vrot.lane.b32.xlu0 %v113, 48
    %v229 = vpop.permute.xlu0 %228
    %v231 = vsel %vm227, %v220, %v229
    %v232 = vsel %vm227, %v214, %v202
    %v233 = vsel %vm227, %v220, 0.0
    %235 = vrot.lane.b32.xlu0 %v233, 80
    %v236 = vpop.permute.xlu0 %235
    %vm238 = vcmask 128000
    %239 = vst.msk [vmem:[#allocation15] sm:$0x3f] %vm238, %v236
    %s240 = ssub.s32 7, %s112
    %s241 = scalar_lea.vmem [#allocation11], 56
    %v242 = vld [vmem:[%s241] sm:$0x3f]
    %v244 = vsel %vm118, %v115, 0
    %246 = vmatprep.subr.mxu0 0.0
    %247 = vmatpush1.msra.mxu0 %v110
    %248 = vmatprep.subr.mxu0 0.0
    %249 = vmatpush1.msra.mxu0 %v111
    %250 = vmatprep.subr.mxu0 0.0
    %251 = vmatpush1.msra.mxu0 0.0
    %252 = vmatprep.subr.mxu0 0.0
    %253 = vmatpush1.msra.mxu0 0.0
    %254 = vmatprep.subr.mxu0 0.0
    %255 = vmatpush1.msra.mxu0 0.0
    %256 = vmatprep.subr.mxu0 0.0
    %257 = vmatpush1.msra.mxu0 0.0
    %258 = vmatprep.subr.mxu0 0.0
    %259 = vmatpush1.msra.mxu0 0.0
    %260 = vmatprep.subr.mxu0 0.0
    %261 = vmatpush1.msra.mxu0 0.0
    %262 = vmatprep.subr.mxu0 0.0
    %263 = vmatpush1.msra.mxu0 0.0
    %264 = vmatprep.subr.mxu0 0.0
    %265 = vmatpush1.msra.mxu0 0.0
    %266 = vmatprep.subr.mxu0 0.0
    %267 = vmatpush1.msra.mxu0 0.0
    %268 = vmatprep.subr.mxu0 0.0
    %269 = vmatpush1.msra.mxu0 0.0
    %270 = vmatprep.subr.mxu0 0.0
    %271 = vmatpush1.msra.mxu0 0.0
    %272 = vmatprep.subr.mxu0 0.0
    %273 = vmatpush1.msra.mxu0 0.0
    %274 = vmatprep.subr.mxu0 0.0
    %275 = vmatpush1.msra.mxu0 0.0
    %276 = vmatprep.subr.mxu0 0.0
    %277 = vmatpush1.msra.mxu0 0.0
    %278 = vmatprep.subr.mxu0 0.0
    %279 = vmatpush1.msra.mxu0 0.0
    %280 = vmatprep.subr.mxu0 0.0
    %281 = vmatpush1.msra.mxu0 0.0
    %282 = vmatprep.subr.mxu0 0.0
    %283 = vmatpush1.msra.mxu0 0.0
    %284 = vmatprep.subr.mxu0 0.0
    %285 = vmatpush1.msra.mxu0 0.0
    %286 = vmatprep.subr.mxu0 0.0
    %287 = vmatpush1.msra.mxu0 0.0
    %288 = vmatprep.subr.mxu0 0.0
    %289 = vmatpush1.msra.mxu0 0.0
    %290 = vmatprep.subr.mxu0 0.0
    %291 = vmatpush1.msra.mxu0 0.0
    %292 = vmatprep.subr.mxu0 0.0
    %293 = vmatpush1.msra.mxu0 0.0
    %294 = vmatprep.subr.mxu0 0.0
    %295 = vmatpush1.msra.mxu0 0.0
    %296 = vmatprep.subr.mxu0 0.0
    %297 = vmatpush1.msra.mxu0 0.0
    %298 = vmatprep.subr.mxu0 0.0
    %299 = vmatpush1.msra.mxu0 0.0
    %300 = vmatprep.subr.mxu0 0.0
    %301 = vmatpush1.msra.mxu0 0.0
    %302 = vmatprep.subr.mxu0 0.0
    %303 = vmatpush1.msra.mxu0 0.0
    %304 = vmatprep.subr.mxu0 0.0
    %305 = vmatpush1.msra.mxu0 0.0
    %306 = vmatprep.subr.mxu0 0.0
    %307 = vmatpush1.msra.mxu0 0.0
    %308 = vmatprep.subr.mxu0 0.0
    %309 = vmatpush1.msra.mxu0 0.0
    %310 = vmatprep.mubr.f32.mxu0 0.0
    %311 = vmatmul.mubr.f32.gmra.mrb[0].mxu0 %v244
    %v312 = vpop.f32.mrb[0].mxu0
    %v313 = vadd.f32 0.0, %v312
    %v314 = vpop.f32.mrb[0].mxu0
    %315 = vdwg.mxu0
    %v316 = vadd.f32 %v242, %v313
    %v317 = vxor.u32 %v316, 2147483648
    %v318 = vmul.f32 %v317, 1.442695
    %v319 = vpow.pop %v318
    %v320 = vadd.f32 %v319, 1.0
    %v321 = vrcp.pop %v320
    %v322 = vmul.f32 1.0, %v321
    %v323 = vtanh.pop %v316
    %325 = vrot.lane.b32.xlu0 %v116, 16
    %v326 = vpop.permute.xlu0 %325
    %v328 = vmul.f32 %v322, %v326
    %330 = vrot.lane.b32.xlu0 %v323, 96
    %v331 = vpop.permute.xlu0 %330
    %v333 = vmul.f32 %v322, %v331
    %335 = vrot.lane.b32.xlu0 %v333, 16
    %v336 = vpop.permute.xlu0 %335
    %v338 = vadd.f32 %v328, %v336
    %v339 = vtanh.pop %v338
    %341 = vrot.lane.b32.xlu0 %v339, 32
    %v342 = vpop.permute.xlu0 %341
    %v344 = vmul.f32 %v322, %v342
    %v345 = vstv %s240
    %vm346 = vcmp.gt.s32.totalorder %v107, %v345
    %v347 = vsel %vm346, 1, 0
    %348 = vset.pattern.permute.xlu0 0
    %349 = vperm.xlu0 %348, %v347
    %v350 = vpop.permute.xlu0 %349
    %vm351 = vcmp.eq.s32.totalorder %v350, 1
    %352 = vrot.lane.b32.xlu0 %v115, 48
    %v353 = vpop.permute.xlu0 %352
    %v355 = vsel %vm351, %v344, %v353
    %v356 = vsel %vm351, %v338, %v326
    %v357 = vsel %vm351, %v344, 0.0
    %359 = vrot.lane.b32.xlu0 %v357, 80
    %v360 = vpop.permute.xlu0 %359
    %s362 = scalar_lea.vmem [#allocation16], 56
    %363 = vst.msk [vmem:[%s362] sm:$0x3f] %vm238, %v360
    %s364 = sadd.s32 %s112, 1
    %s365 = scalar_lea.vmem [#allocation9], 8
    %v366 = vld [vmem:[%s365] sm:$0x3f]
    %368 = vrot.lane.b32.xlu0 %v231, 80
    %v369 = vpop.permute.xlu0 %368
    %v370 = vsel %vm118, %v369, 0
    %372 = vmatprep.subr.mxu0 0.0
    %373 = vmatpush1.msra.mxu0 %v108
    %374 = vmatprep.subr.mxu0 0.0
    %375 = vmatpush1.msra.mxu0 %v109
    %376 = vmatprep.subr.mxu0 0.0
    %377 = vmatpush1.msra.mxu0 0.0
    %378 = vmatprep.subr.mxu0 0.0
    %379 = vmatpush1.msra.mxu0 0.0
    %380 = vmatprep.subr.mxu0 0.0
    %381 = vmatpush1.msra.mxu0 0.0
    %382 = vmatprep.subr.mxu0 0.0
    %383 = vmatpush1.msra.mxu0 0.0
    %384 = vmatprep.subr.mxu0 0.0
    %385 = vmatpush1.msra.mxu0 0.0
    %386 = vmatprep.subr.mxu0 0.0
    %387 = vmatpush1.msra.mxu0 0.0
    %388 = vmatprep.subr.mxu0 0.0
    %389 = vmatpush1.msra.mxu0 0.0
    %390 = vmatprep.subr.mxu0 0.0
    %391 = vmatpush1.msra.mxu0 0.0
    %392 = vmatprep.subr.mxu0 0.0
    %393 = vmatpush1.msra.mxu0 0.0
    %394 = vmatprep.subr.mxu0 0.0
    %395 = vmatpush1.msra.mxu0 0.0
    %396 = vmatprep.subr.mxu0 0.0
    %397 = vmatpush1.msra.mxu0 0.0
    %398 = vmatprep.subr.mxu0 0.0
    %399 = vmatpush1.msra.mxu0 0.0
    %400 = vmatprep.subr.mxu0 0.0
    %401 = vmatpush1.msra.mxu0 0.0
    %402 = vmatprep.subr.mxu0 0.0
    %403 = vmatpush1.msra.mxu0 0.0
    %404 = vmatprep.subr.mxu0 0.0
    %405 = vmatpush1.msra.mxu0 0.0
    %406 = vmatprep.subr.mxu0 0.0
    %407 = vmatpush1.msra.mxu0 0.0
    %408 = vmatprep.subr.mxu0 0.0
    %409 = vmatpush1.msra.mxu0 0.0
    %410 = vmatprep.subr.mxu0 0.0
    %411 = vmatpush1.msra.mxu0 0.0
    %412 = vmatprep.subr.mxu0 0.0
    %413 = vmatpush1.msra.mxu0 0.0
    %414 = vmatprep.subr.mxu0 0.0
    %415 = vmatpush1.msra.mxu0 0.0
    %416 = vmatprep.subr.mxu0 0.0
    %417 = vmatpush1.msra.mxu0 0.0
    %418 = vmatprep.subr.mxu0 0.0
    %419 = vmatpush1.msra.mxu0 0.0
    %420 = vmatprep.subr.mxu0 0.0
    %421 = vmatpush1.msra.mxu0 0.0
    %422 = vmatprep.subr.mxu0 0.0
    %423 = vmatpush1.msra.mxu0 0.0
    %424 = vmatprep.subr.mxu0 0.0
    %425 = vmatpush1.msra.mxu0 0.0
    %426 = vmatprep.subr.mxu0 0.0
    %427 = vmatpush1.msra.mxu0 0.0
    %428 = vmatprep.subr.mxu0 0.0
    %429 = vmatpush1.msra.mxu0 0.0
    %430 = vmatprep.subr.mxu0 0.0
    %431 = vmatpush1.msra.mxu0 0.0
    %432 = vmatprep.subr.mxu0 0.0
    %433 = vmatpush1.msra.mxu0 0.0
    %434 = vmatprep.subr.mxu0 0.0
    %435 = vmatpush1.msra.mxu0 0.0
    %436 = vmatprep.mubr.f32.mxu0 0.0
    %437 = vmatmul.mubr.f32.gmra.mrb[0].mxu0 %v370
    %v438 = vpop.f32.mrb[0].mxu0
    %v439 = vadd.f32 0.0, %v438
    %v440 = vpop.f32.mrb[0].mxu0
    %441 = vdwg.mxu0
    %v442 = vadd.f32 %v366, %v439
    %v443 = vxor.u32 %v442, 2147483648
    %v444 = vmul.f32 %v443, 1.442695
    %v445 = vpow.pop %v444
    %v446 = vadd.f32 %v445, 1.0
    %v447 = vrcp.pop %v446
    %v448 = vmul.f32 1.0, %v447
    %v449 = vtanh.pop %v442
    %v450 = vmul.f32 %v448, %v232
    %452 = vrot.lane.b32.xlu0 %v449, 96
    %v453 = vpop.permute.xlu0 %452
    %v455 = vmul.f32 %v448, %v453
    %457 = vrot.lane.b32.xlu0 %v455, 16
    %v458 = vpop.permute.xlu0 %457
    %v460 = vadd.f32 %v450, %v458
    %v461 = vtanh.pop %v460
    %463 = vrot.lane.b32.xlu0 %v461, 32
    %v464 = vpop.permute.xlu0 %463
    %v466 = vmul.f32 %v448, %v464
    %v467 = vstv %s364
    %vm468 = vcmp.gt.s32.totalorder %v107, %v467
    %v469 = vsel %vm468, 1, 0
    %470 = vset.pattern.permute.xlu0 0
    %471 = vperm.xlu0 %470, %v469
    %v472 = vpop.permute.xlu0 %471
    %vm473 = vcmp.eq.s32.totalorder %v472, 1
    %v474 = vsel %vm473, %v466, %v231
    %v475 = vsel %vm473, %v460, %v232
    %v476 = vsel %vm473, %v466, 0.0
    %478 = vrot.lane.b32.xlu0 %v476, 80
    %v479 = vpop.permute.xlu0 %478
    %s481 = scalar_lea.vmem [#allocation15], 8
    %482 = vst.msk [vmem:[%s481] sm:$0x3f] %vm238, %v479
    %s483 = ssub.s32 6, %s112
    %s484 = scalar_lea.vmem [#allocation11], 48
    %v485 = vld [vmem:[%s484] sm:$0x3f]
    %487 = vrot.lane.b32.xlu0 %v355, 80
    %v488 = vpop.permute.xlu0 %487
    %v489 = vsel %vm118, %v488, 0
    %491 = vmatprep.subr.mxu0 0.0
    %492 = vmatpush1.msra.mxu0 %v110
    %493 = vmatprep.subr.mxu0 0.0
    %494 = vmatpush1.msra.mxu0 %v111
    %495 = vmatprep.subr.mxu0 0.0
    %496 = vmatpush1.msra.mxu0 0.0
    %497 = vmatprep.subr.mxu0 0.0
    %498 = vmatpush1.msra.mxu0 0.0
    %499 = vmatprep.subr.mxu0 0.0
    %500 = vmatpush1.msra.mxu0 0.0
    %501 = vmatprep.subr.mxu0 0.0
    %502 = vmatpush1.msra.mxu0 0.0
    %503 = vmatprep.subr.mxu0 0.0
    %504 = vmatpush1.msra.mxu0 0.0
    %505 = vmatprep.subr.mxu0 0.0
    %506 = vmatpush1.msra.mxu0 0.0
    %507 = vmatprep.subr.mxu0 0.0
    %508 = vmatpush1.msra.mxu0 0.0
    %509 = vmatprep.subr.mxu0 0.0
    %510 = vmatpush1.msra.mxu0 0.0
    %511 = vmatprep.subr.mxu0 0.0
    %512 = vmatpush1.msra.mxu0 0.0
    %513 = vmatprep.subr.mxu0 0.0
    %514 = vmatpush1.msra.mxu0 0.0
    %515 = vmatprep.subr.mxu0 0.0
    %516 = vmatpush1.msra.mxu0 0.0
    %517 = vmatprep.subr.mxu0 0.0
    %518 = vmatpush1.msra.mxu0 0.0
    %519 = vmatprep.subr.mxu0 0.0
    %520 = vmatpush1.msra.mxu0 0.0
    %521 = vmatprep.subr.mxu0 0.0
    %522 = vmatpush1.msra.mxu0 0.0
    %523 = vmatprep.subr.mxu0 0.0
    %524 = vmatpush1.msra.mxu0 0.0
    %525 = vmatprep.subr.mxu0 0.0
    %526 = vmatpush1.msra.mxu0 0.0
    %527 = vmatprep.subr.mxu0 0.0
    %528 = vmatpush1.msra.mxu0 0.0
    %529 = vmatprep.subr.mxu0 0.0
    %530 = vmatpush1.msra.mxu0 0.0
    %531 = vmatprep.subr.mxu0 0.0
    %532 = vmatpush1.msra.mxu0 0.0
    %533 = vmatprep.subr.mxu0 0.0
    %534 = vmatpush1.msra.mxu0 0.0
    %535 = vmatprep.subr.mxu0 0.0
    %536 = vmatpush1.msra.mxu0 0.0
    %537 = vmatprep.subr.mxu0 0.0
    %538 = vmatpush1.msra.mxu0 0.0
    %539 = vmatprep.subr.mxu0 0.0
    %540 = vmatpush1.msra.mxu0 0.0
    %541 = vmatprep.subr.mxu0 0.0
    %542 = vmatpush1.msra.mxu0 0.0
    %543 = vmatprep.subr.mxu0 0.0
    %544 = vmatpush1.msra.mxu0 0.0
    %545 = vmatprep.subr.mxu0 0.0
    %546 = vmatpush1.msra.mxu0 0.0
    %547 = vmatprep.subr.mxu0 0.0
    %548 = vmatpush1.msra.mxu0 0.0
    %549 = vmatprep.subr.mxu0 0.0
    %550 = vmatpush1.msra.mxu0 0.0
    %551 = vmatprep.subr.mxu0 0.0
    %552 = vmatpush1.msra.mxu0 0.0
    %553 = vmatprep.subr.mxu0 0.0
    %554 = vmatpush1.msra.mxu0 0.0
    %555 = vmatprep.mubr.f32.mxu0 0.0
    %556 = vmatmul.mubr.f32.gmra.mrb[0].mxu0 %v489
    %v557 = vpop.f32.mrb[0].mxu0
    %v558 = vadd.f32 0.0, %v557
    %v559 = vpop.f32.mrb[0].mxu0
    %560 = vdwg.mxu0
    %v561 = vadd.f32 %v485, %v558
    %v562 = vxor.u32 %v561, 2147483648
    %v563 = vmul.f32 %v562, 1.442695
    %v564 = vpow.pop %v563
    %v565 = vadd.f32 %v564, 1.0
    %v566 = vrcp.pop %v565
    %v567 = vmul.f32 1.0, %v566
    %v568 = vtanh.pop %v561
    %v569 = vmul.f32 %v567, %v356
    %571 = vrot.lane.b32.xlu0 %v568, 96
    %v572 = vpop.permute.xlu0 %571
    %v574 = vmul.f32 %v567, %v572
    %576 = vrot.lane.b32.xlu0 %v574, 16
    %v577 = vpop.permute.xlu0 %576
    %v579 = vadd.f32 %v569, %v577
    %v580 = vtanh.pop %v579
    %582 = vrot.lane.b32.xlu0 %v580, 32
    %v583 = vpop.permute.xlu0 %582
    %v585 = vmul.f32 %v567, %v583
    %v586 = vstv %s483
    %vm587 = vcmp.gt.s32.totalorder %v107, %v586
    %v588 = vsel %vm587, 1, 0
    %589 = vset.pattern.permute.xlu0 0
    %590 = vperm.xlu0 %589, %v588
    %v591 = vpop.permute.xlu0 %590
    %vm592 = vcmp.eq.s32.totalorder %v591, 1
    %v593 = vsel %vm592, %v585, %v355
    %v594 = vsel %vm592, %v579, %v356
    %v595 = vsel %vm592, %v585, 0.0
    %597 = vrot.lane.b32.xlu0 %v595, 80
    %v598 = vpop.permute.xlu0 %597
    %s600 = scalar_lea.vmem [#allocation16], 48
    %601 = vst.msk [vmem:[%s600] sm:$0x3f] %vm238, %v598
    %s602 = sadd.s32 %s112, 2
    %s603 = scalar_lea.vmem [#allocation9], 16
    %v604 = vld [vmem:[%s603] sm:$0x3f]
    %606 = vrot.lane.b32.xlu0 %v474, 80
    %v607 = vpop.permute.xlu0 %606
    %v608 = vsel %vm118, %v607, 0
    %610 = vmatprep.subr.mxu0 0.0
    %611 = vmatpush1.msra.mxu0 %v108
    %612 = vmatprep.subr.mxu0 0.0
    %613 = vmatpush1.msra.mxu0 %v109
    %614 = vmatprep.subr.mxu0 0.0
    %615 = vmatpush1.msra.mxu0 0.0
    %616 = vmatprep.subr.mxu0 0.0
    %617 = vmatpush1.msra.mxu0 0.0
    %618 = vmatprep.subr.mxu0 0.0
    %619 = vmatpush1.msra.mxu0 0.0
    %620 = vmatprep.subr.mxu0 0.0
    %621 = vmatpush1.msra.mxu0 0.0
    %622 = vmatprep.subr.mxu0 0.0
    %623 = vmatpush1.msra.mxu0 0.0
    %624 = vmatprep.subr.mxu0 0.0
    %625 = vmatpush1.msra.mxu0 0.0
    %626 = vmatprep.subr.mxu0 0.0
    %627 = vmatpush1.msra.mxu0 0.0
    %628 = vmatprep.subr.mxu0 0.0
    %629 = vmatpush1.msra.mxu0 0.0
    %630 = vmatprep.subr.mxu0 0.0
    %631 = vmatpush1.msra.mxu0 0.0
    %632 = vmatprep.subr.mxu0 0.0
    %633 = vmatpush1.msra.mxu0 0.0
    %634 = vmatprep.subr.mxu0 0.0
    %635 = vmatpush1.msra.mxu0 0.0
    %636 = vmatprep.subr.mxu0 0.0
    %637 = vmatpush1.msra.mxu0 0.0
    %638 = vmatprep.subr.mxu0 0.0
    %639 = vmatpush1.msra.mxu0 0.0
    %640 = vmatprep.subr.mxu0 0.0
    %641 = vmatpush1.msra.mxu0 0.0
    %642 = vmatprep.subr.mxu0 0.0
    %643 = vmatpush1.msra.mxu0 0.0
    %644 = vmatprep.subr.mxu0 0.0
    %645 = vmatpush1.msra.mxu0 0.0
    %646 = vmatprep.subr.mxu0 0.0
    %647 = vmatpush1.msra.mxu0 0.0
    %648 = vmatprep.subr.mxu0 0.0
    %649 = vmatpush1.msra.mxu0 0.0
    %650 = vmatprep.subr.mxu0 0.0
    %651 = vmatpush1.msra.mxu0 0.0
    %652 = vmatprep.subr.mxu0 0.0
    %653 = vmatpush1.msra.mxu0 0.0
    %654 = vmatprep.subr.mxu0 0.0
    %655 = vmatpush1.msra.mxu0 0.0
    %656 = vmatprep.subr.mxu0 0.0
    %657 = vmatpush1.msra.mxu0 0.0
    %658 = vmatprep.subr.mxu0 0.0
    %659 = vmatpush1.msra.mxu0 0.0
    %660 = vmatprep.subr.mxu0 0.0
    %661 = vmatpush1.msra.mxu0 0.0
    %662 = vmatprep.subr.mxu0 0.0
    %663 = vmatpush1.msra.mxu0 0.0
    %664 = vmatprep.subr.mxu0 0.0
    %665 = vmatpush1.msra.mxu0 0.0
    %666 = vmatprep.subr.mxu0 0.0
    %667 = vmatpush1.msra.mxu0 0.0
    %668 = vmatprep.subr.mxu0 0.0
    %669 = vmatpush1.msra.mxu0 0.0
    %670 = vmatprep.subr.mxu0 0.0
    %671 = vmatpush1.msra.mxu0 0.0
    %672 = vmatprep.subr.mxu0 0.0
    %673 = vmatpush1.msra.mxu0 0.0
    %674 = vmatprep.mubr.f32.mxu0 0.0
    %675 = vmatmul.mubr.f32.gmra.mrb[0].mxu0 %v608
    %v676 = vpop.f32.mrb[0].mxu0
    %v677 = vadd.f32 0.0, %v676
    %v678 = vpop.f32.mrb[0].mxu0
    %679 = vdwg.mxu0
    %v680 = vadd.f32 %v604, %v677
    %v681 = vxor.u32 %v680, 2147483648
    %v682 = vmul.f32 %v681, 1.442695
    %v683 = vpow.pop %v682
    %v684 = vadd.f32 %v683, 1.0
    %v685 = vrcp.pop %v684
    %v686 = vmul.f32 1.0, %v685
    %v687 = vtanh.pop %v680
    %v688 = vmul.f32 %v686, %v475
    %690 = vrot.lane.b32.xlu0 %v687, 96
    %v691 = vpop.permute.xlu0 %690
    %v693 = vmul.f32 %v686, %v691
    %695 = vrot.lane.b32.xlu0 %v693, 16
    %v696 = vpop.permute.xlu0 %695
    %v698 = vadd.f32 %v688, %v696
    %v699 = vtanh.pop %v698
    %701 = vrot.lane.b32.xlu0 %v699, 32
    %v702 = vpop.permute.xlu0 %701
    %v704 = vmul.f32 %v686, %v702
    %v705 = vstv %s602
    %vm706 = vcmp.gt.s32.totalorder %v107, %v705
    %v707 = vsel %vm706, 1, 0
    %708 = vset.pattern.permute.xlu0 0
    %709 = vperm.xlu0 %708, %v707
    %v710 = vpop.permute.xlu0 %709
    %vm711 = vcmp.eq.s32.totalorder %v710, 1
    %v712 = vsel %vm711, %v704, %v474
    %v713 = vsel %vm711, %v698, %v475
    %v714 = vsel %vm711, %v704, 0.0
    %716 = vrot.lane.b32.xlu0 %v714, 80
    %v717 = vpop.permute.xlu0 %716
    %s719 = scalar_lea.vmem [#allocation15], 16
    %720 = vst.msk [vmem:[%s719] sm:$0x3f] %vm238, %v717
    %s721 = ssub.s32 5, %s112
    %s722 = scalar_lea.vmem [#allocation11], 40
    %v723 = vld [vmem:[%s722] sm:$0x3f]
    %725 = vrot.lane.b32.xlu0 %v593, 80
    %v726 = vpop.permute.xlu0 %725
    %v727 = vsel %vm118, %v726, 0
    %729 = vmatprep.subr.mxu0 0.0
    %730 = vmatpush1.msra.mxu0 %v110
    %731 = vmatprep.subr.mxu0 0.0
    %732 = vmatpush1.msra.mxu0 %v111
    %733 = vmatprep.subr.mxu0 0.0
    %734 = vmatpush1.msra.mxu0 0.0
    %735 = vmatprep.subr.mxu0 0.0
    %736 = vmatpush1.msra.mxu0 0.0
    %737 = vmatprep.subr.mxu0 0.0
    %738 = vmatpush1.msra.mxu0 0.0
    %739 = vmatprep.subr.mxu0 0.0
    %740 = vmatpush1.msra.mxu0 0.0
    %741 = vmatprep.subr.mxu0 0.0
    %742 = vmatpush1.msra.mxu0 0.0
    %743 = vmatprep.subr.mxu0 0.0
    %744 = vmatpush1.msra.mxu0 0.0
    %745 = vmatprep.subr.mxu0 0.0
    %746 = vmatpush1.msra.mxu0 0.0
    %747 = vmatprep.subr.mxu0 0.0
    %748 = vmatpush1.msra.mxu0 0.0
    %749 = vmatprep.subr.mxu0 0.0
    %750 = vmatpush1.msra.mxu0 0.0
    %751 = vmatprep.subr.mxu0 0.0
    %752 = vmatpush1.msra.mxu0 0.0
    %753 = vmatprep.subr.mxu0 0.0
    %754 = vmatpush1.msra.mxu0 0.0
    %755 = vmatprep.subr.mxu0 0.0
    %756 = vmatpush1.msra.mxu0 0.0
    %757 = vmatprep.subr.mxu0 0.0
    %758 = vmatpush1.msra.mxu0 0.0
    %759 = vmatprep.subr.mxu0 0.0
    %760 = vmatpush1.msra.mxu0 0.0
    %761 = vmatprep.subr.mxu0 0.0
    %762 = vmatpush1.msra.mxu0 0.0
    %763 = vmatprep.subr.mxu0 0.0
    %764 = vmatpush1.msra.mxu0 0.0
    %765 = vmatprep.subr.mxu0 0.0
    %766 = vmatpush1.msra.mxu0 0.0
    %767 = vmatprep.subr.mxu0 0.0
    %768 = vmatpush1.msra.mxu0 0.0
    %769 = vmatprep.subr.mxu0 0.0
    %770 = vmatpush1.msra.mxu0 0.0
    %771 = vmatprep.subr.mxu0 0.0
    %772 = vmatpush1.msra.mxu0 0.0
    %773 = vmatprep.subr.mxu0 0.0
    %774 = vmatpush1.msra.mxu0 0.0
    %775 = vmatprep.subr.mxu0 0.0
    %776 = vmatpush1.msra.mxu0 0.0
    %777 = vmatprep.subr.mxu0 0.0
    %778 = vmatpush1.msra.mxu0 0.0
    %779 = vmatprep.subr.mxu0 0.0
    %780 = vmatpush1.msra.mxu0 0.0
    %781 = vmatprep.subr.mxu0 0.0
    %782 = vmatpush1.msra.mxu0 0.0
    %783 = vmatprep.subr.mxu0 0.0
    %784 = vmatpush1.msra.mxu0 0.0
    %785 = vmatprep.subr.mxu0 0.0
    %786 = vmatpush1.msra.mxu0 0.0
    %787 = vmatprep.subr.mxu0 0.0
    %788 = vmatpush1.msra.mxu0 0.0
    %789 = vmatprep.subr.mxu0 0.0
    %790 = vmatpush1.msra.mxu0 0.0
    %791 = vmatprep.subr.mxu0 0.0
    %792 = vmatpush1.msra.mxu0 0.0
    %793 = vmatprep.mubr.f32.mxu0 0.0
    %794 = vmatmul.mubr.f32.gmra.mrb[0].mxu0 %v727
    %v795 = vpop.f32.mrb[0].mxu0
    %v796 = vadd.f32 0.0, %v795
    %v797 = vpop.f32.mrb[0].mxu0
    %798 = vdwg.mxu0
    %v799 = vadd.f32 %v723, %v796
    %v800 = vxor.u32 %v799, 2147483648
    %v801 = vmul.f32 %v800, 1.442695
    %v802 = vpow.pop %v801
    %v803 = vadd.f32 %v802, 1.0
    %v804 = vrcp.pop %v803
    %v805 = vmul.f32 1.0, %v804
    %v806 = vtanh.pop %v799
    %v807 = vmul.f32 %v805, %v594
    %809 = vrot.lane.b32.xlu0 %v806, 96
    %v810 = vpop.permute.xlu0 %809
    %v812 = vmul.f32 %v805, %v810
    %814 = vrot.lane.b32.xlu0 %v812, 16
    %v815 = vpop.permute.xlu0 %814
    %v817 = vadd.f32 %v807, %v815
    %v818 = vtanh.pop %v817
    %820 = vrot.lane.b32.xlu0 %v818, 32
    %v821 = vpop.permute.xlu0 %820
    %v823 = vmul.f32 %v805, %v821
    %v824 = vstv %s721
    %vm825 = vcmp.gt.s32.totalorder %v107, %v824
    %v826 = vsel %vm825, 1, 0
    %827 = vset.pattern.permute.xlu0 0
    %828 = vperm.xlu0 %827, %v826
    %v829 = vpop.permute.xlu0 %828
    %vm830 = vcmp.eq.s32.totalorder %v829, 1
    %v831 = vsel %vm830, %v823, %v593
    %v832 = vsel %vm830, %v817, %v594
    %v833 = vsel %vm830, %v823, 0.0
    %835 = vrot.lane.b32.xlu0 %v833, 80
    %v836 = vpop.permute.xlu0 %835
    %s838 = scalar_lea.vmem [#allocation16], 40
    %839 = vst.msk [vmem:[%s838] sm:$0x3f] %vm238, %v836
    %s840 = sadd.s32 %s112, 3
    %s841 = scalar_lea.vmem [#allocation9], 24
    %v842 = vld [vmem:[%s841] sm:$0x3f]
    %844 = vrot.lane.b32.xlu0 %v712, 80
    %v845 = vpop.permute.xlu0 %844
    %v846 = vsel %vm118, %v845, 0
    %848 = vmatprep.subr.mxu0 0.0
    %849 = vmatpush1.msra.mxu0 %v108
    %850 = vmatprep.subr.mxu0 0.0
    %851 = vmatpush1.msra.mxu0 %v109
    %852 = vmatprep.subr.mxu0 0.0
    %853 = vmatpush1.msra.mxu0 0.0
    %854 = vmatprep.subr.mxu0 0.0
    %855 = vmatpush1.msra.mxu0 0.0
    %856 = vmatprep.subr.mxu0 0.0
    %857 = vmatpush1.msra.mxu0 0.0
    %858 = vmatprep.subr.mxu0 0.0
    %859 = vmatpush1.msra.mxu0 0.0
    %860 = vmatprep.subr.mxu0 0.0
    %861 = vmatpush1.msra.mxu0 0.0
    %862 = vmatprep.subr.mxu0 0.0
    %863 = vmatpush1.msra.mxu0 0.0
    %864 = vmatprep.subr.mxu0 0.0
    %865 = vmatpush1.msra.mxu0 0.0
    %866 = vmatprep.subr.mxu0 0.0
    %867 = vmatpush1.msra.mxu0 0.0
    %868 = vmatprep.subr.mxu0 0.0
    %869 = vmatpush1.msra.mxu0 0.0
    %870 = vmatprep.subr.mxu0 0.0
    %871 = vmatpush1.msra.mxu0 0.0
    %872 = vmatprep.subr.mxu0 0.0
    %873 = vmatpush1.msra.mxu0 0.0
    %874 = vmatprep.subr.mxu0 0.0
    %875 = vmatpush1.msra.mxu0 0.0
    %876 = vmatprep.subr.mxu0 0.0
    %877 = vmatpush1.msra.mxu0 0.0
    %878 = vmatprep.subr.mxu0 0.0
    %879 = vmatpush1.msra.mxu0 0.0
    %880 = vmatprep.subr.mxu0 0.0
    %881 = vmatpush1.msra.mxu0 0.0
    %882 = vmatprep.subr.mxu0 0.0
    %883 = vmatpush1.msra.mxu0 0.0
    %884 = vmatprep.subr.mxu0 0.0
    %885 = vmatpush1.msra.mxu0 0.0
    %886 = vmatprep.subr.mxu0 0.0
    %887 = vmatpush1.msra.mxu0 0.0
    %888 = vmatprep.subr.mxu0 0.0
    %889 = vmatpush1.msra.mxu0 0.0
    %890 = vmatprep.subr.mxu0 0.0
    %891 = vmatpush1.msra.mxu0 0.0
    %892 = vmatprep.subr.mxu0 0.0
    %893 = vmatpush1.msra.mxu0 0.0
    %894 = vmatprep.subr.mxu0 0.0
    %895 = vmatpush1.msra.mxu0 0.0
    %896 = vmatprep.subr.mxu0 0.0
    %897 = vmatpush1.msra.mxu0 0.0
    %898 = vmatprep.subr.mxu0 0.0
    %899 = vmatpush1.msra.mxu0 0.0
    %900 = vmatprep.subr.mxu0 0.0
    %901 = vmatpush1.msra.mxu0 0.0
    %902 = vmatprep.subr.mxu0 0.0
    %903 = vmatpush1.msra.mxu0 0.0
    %904 = vmatprep.subr.mxu0 0.0
    %905 = vmatpush1.msra.mxu0 0.0
    %906 = vmatprep.subr.mxu0 0.0
    %907 = vmatpush1.msra.mxu0 0.0
    %908 = vmatprep.subr.mxu0 0.0
    %909 = vmatpush1.msra.mxu0 0.0
    %910 = vmatprep.subr.mxu0 0.0
    %911 = vmatpush1.msra.mxu0 0.0
    %912 = vmatprep.mubr.f32.mxu0 0.0
    %913 = vmatmul.mubr.f32.gmra.mrb[0].mxu0 %v846
    %v914 = vpop.f32.mrb[0].mxu0
    %v915 = vadd.f32 0.0, %v914
    %v916 = vpop.f32.mrb[0].mxu0
    %917 = vdwg.mxu0
    %v918 = vadd.f32 %v842, %v915
    %v919 = vxor.u32 %v918, 2147483648
    %v920 = vmul.f32 %v919, 1.442695
    %v921 = vpow.pop %v920
    %v922 = vadd.f32 %v921, 1.0
    %v923 = vrcp.pop %v922
    %v924 = vmul.f32 1.0, %v923
    %v925 = vtanh.pop %v918
    %v926 = vmul.f32 %v924, %v713
    %928 = vrot.lane.b32.xlu0 %v925, 96
    %v929 = vpop.permute.xlu0 %928
    %v931 = vmul.f32 %v924, %v929
    %933 = vrot.lane.b32.xlu0 %v931, 16
    %v934 = vpop.permute.xlu0 %933
    %v936 = vadd.f32 %v926, %v934
    %v937 = vtanh.pop %v936
    %939 = vrot.lane.b32.xlu0 %v937, 32
    %v940 = vpop.permute.xlu0 %939
    %v942 = vmul.f32 %v924, %v940
    %v943 = vstv %s840
    %vm944 = vcmp.gt.s32.totalorder %v107, %v943
    %v945 = vsel %vm944, 1, 0
    %946 = vset.pattern.permute.xlu0 0
    %947 = vperm.xlu0 %946, %v945
    %v948 = vpop.permute.xlu0 %947
    %vm949 = vcmp.eq.s32.totalorder %v948, 1
    %v950 = vsel %vm949, %v942, %v712
    %v951 = vsel %vm949, %v936, %v713
    %v952 = vsel %vm949, %v942, 0.0
    %954 = vrot.lane.b32.xlu0 %v952, 80
    %v955 = vpop.permute.xlu0 %954
    %s957 = scalar_lea.vmem [#allocation15], 24
    %958 = vst.msk [vmem:[%s957] sm:$0x3f] %vm238, %v955
    %s959 = ssub.s32 4, %s112
    %s960 = scalar_lea.vmem [#allocation11], 32
    %v961 = vld [vmem:[%s960] sm:$0x3f]
    %963 = vrot.lane.b32.xlu0 %v831, 80
    %v964 = vpop.permute.xlu0 %963
    %v965 = vsel %vm118, %v964, 0
    %967 = vmatprep.subr.mxu0 0.0
    %968 = vmatpush1.msra.mxu0 %v110
    %969 = vmatprep.subr.mxu0 0.0
    %970 = vmatpush1.msra.mxu0 %v111
    %971 = vmatprep.subr.mxu0 0.0
    %972 = vmatpush1.msra.mxu0 0.0
    %973 = vmatprep.subr.mxu0 0.0
    %974 = vmatpush1.msra.mxu0 0.0
    %975 = vmatprep.subr.mxu0 0.0
    %976 = vmatpush1.msra.mxu0 0.0
    %977 = vmatprep.subr.mxu0 0.0
    %978 = vmatpush1.msra.mxu0 0.0
    %979 = vmatprep.subr.mxu0 0.0
    %980 = vmatpush1.msra.mxu0 0.0
    %981 = vmatprep.subr.mxu0 0.0
    %982 = vmatpush1.msra.mxu0 0.0
    %983 = vmatprep.subr.mxu0 0.0
    %984 = vmatpush1.msra.mxu0 0.0
    %985 = vmatprep.subr.mxu0 0.0
    %986 = vmatpush1.msra.mxu0 0.0
    %987 = vmatprep.subr.mxu0 0.0
    %988 = vmatpush1.msra.mxu0 0.0
    %989 = vmatprep.subr.mxu0 0.0
    %990 = vmatpush1.msra.mxu0 0.0
    %991 = vmatprep.subr.mxu0 0.0
    %992 = vmatpush1.msra.mxu0 0.0
    %993 = vmatprep.subr.mxu0 0.0
    %994 = vmatpush1.msra.mxu0 0.0
    %995 = vmatprep.subr.mxu0 0.0
    %996 = vmatpush1.msra.mxu0 0.0
    %997 = vmatprep.subr.mxu0 0.0
    %998 = vmatpush1.msra.mxu0 0.0
    %999 = vmatprep.subr.mxu0 0.0
    %1000 = vmatpush1.msra.mxu0 0.0
    %1001 = vmatprep.subr.mxu0 0.0
    %1002 = vmatpush1.msra.mxu0 0.0
    %1003 = vmatprep.subr.mxu0 0.0
    %1004 = vmatpush1.msra.mxu0 0.0
    %1005 = vmatprep.subr.mxu0 0.0
    %1006 = vmatpush1.msra.mxu0 0.0
    %1007 = vmatprep.subr.mxu0 0.0
    %1008 = vmatpush1.msra.mxu0 0.0
    %1009 = vmatprep.subr.mxu0 0.0
    %1010 = vmatpush1.msra.mxu0 0.0
    %1011 = vmatprep.subr.mxu0 0.0
    %1012 = vmatpush1.msra.mxu0 0.0
    %1013 = vmatprep.subr.mxu0 0.0
    %1014 = vmatpush1.msra.mxu0 0.0
    %1015 = vmatprep.subr.mxu0 0.0
    %1016 = vmatpush1.msra.mxu0 0.0
    %1017 = vmatprep.subr.mxu0 0.0
    %1018 = vmatpush1.msra.mxu0 0.0
    %1019 = vmatprep.subr.mxu0 0.0
    %1020 = vmatpush1.msra.mxu0 0.0
    %1021 = vmatprep.subr.mxu0 0.0
    %1022 = vmatpush1.msra.mxu0 0.0
    %1023 = vmatprep.subr.mxu0 0.0
    %1024 = vmatpush1.msra.mxu0 0.0
    %1025 = vmatprep.subr.mxu0 0.0
    %1026 = vmatpush1.msra.mxu0 0.0
    %1027 = vmatprep.subr.mxu0 0.0
    %1028 = vmatpush1.msra.mxu0 0.0
    %1029 = vmatprep.subr.mxu0 0.0
    %1030 = vmatpush1.msra.mxu0 0.0
    %1031 = vmatprep.mubr.f32.mxu0 0.0
    %1032 = vmatmul.mubr.f32.gmra.mrb[0].mxu0 %v965
    %v1033 = vpop.f32.mrb[0].mxu0
    %v1034 = vadd.f32 0.0, %v1033
    %v1035 = vpop.f32.mrb[0].mxu0
    %1036 = vdwg.mxu0
    %v1037 = vadd.f32 %v961, %v1034
    %v1038 = vxor.u32 %v1037, 2147483648
    %v1039 = vmul.f32 %v1038, 1.442695
    %v1040 = vpow.pop %v1039
    %v1041 = vadd.f32 %v1040, 1.0
    %v1042 = vrcp.pop %v1041
    %v1043 = vmul.f32 1.0, %v1042
    %v1044 = vtanh.pop %v1037
    %v1045 = vmul.f32 %v1043, %v832
    %1047 = vrot.lane.b32.xlu0 %v1044, 96
    %v1048 = vpop.permute.xlu0 %1047
    %v1050 = vmul.f32 %v1043, %v1048
    %1052 = vrot.lane.b32.xlu0 %v1050, 16
    %v1053 = vpop.permute.xlu0 %1052
    %v1055 = vadd.f32 %v1045, %v1053
    %v1056 = vtanh.pop %v1055
    %1058 = vrot.lane.b32.xlu0 %v1056, 32
    %v1059 = vpop.permute.xlu0 %1058
    %v1061 = vmul.f32 %v1043, %v1059
    %v1062 = vstv %s959
    %vm1063 = vcmp.gt.s32.totalorder %v107, %v1062
    %v1064 = vsel %vm1063, 1, 0
    %1065 = vset.pattern.permute.xlu0 0
    %1066 = vperm.xlu0 %1065, %v1064
    %v1067 = vpop.permute.xlu0 %1066
    %vm1068 = vcmp.eq.s32.totalorder %v1067, 1
    %v1069 = vsel %vm1068, %v1061, %v831
    %v1070 = vsel %vm1068, %v1055, %v832
    %v1071 = vsel %vm1068, %v1061, 0.0
    %1073 = vrot.lane.b32.xlu0 %v1071, 80
    %v1074 = vpop.permute.xlu0 %1073
    %s1076 = scalar_lea.vmem [#allocation16], 32
    %1077 = vst.msk [vmem:[%s1076] sm:$0x3f] %vm238, %v1074
    %s1078 = sadd.s32 %s112, 4
    %s1079 = scalar_lea.vmem [#allocation9], 32
    %v1080 = vld [vmem:[%s1079] sm:$0x3f]
    %1082 = vrot.lane.b32.xlu0 %v950, 80
    %v1083 = vpop.permute.xlu0 %1082
    %v1084 = vsel %vm118, %v1083, 0
    %1086 = vmatprep.subr.mxu0 0.0
    %1087 = vmatpush1.msra.mxu0 %v108
    %1088 = vmatprep.subr.mxu0 0.0
    %1089 = vmatpush1.msra.mxu0 %v109
    %1090 = vmatprep.subr.mxu0 0.0
    %1091 = vmatpush1.msra.mxu0 0.0
    %1092 = vmatprep.subr.mxu0 0.0
    %1093 = vmatpush1.msra.mxu0 0.0
    %1094 = vmatprep.subr.mxu0 0.0
    %1095 = vmatpush1.msra.mxu0 0.0
    %1096 = vmatprep.subr.mxu0 0.0
    %1097 = vmatpush1.msra.mxu0 0.0
    %1098 = vmatprep.subr.mxu0 0.0
    %1099 = vmatpush1.msra.mxu0 0.0
    %1100 = vmatprep.subr.mxu0 0.0
    %1101 = vmatpush1.msra.mxu0 0.0
    %1102 = vmatprep.subr.mxu0 0.0
    %1103 = vmatpush1.msra.mxu0 0.0
    %1104 = vmatprep.subr.mxu0 0.0
    %1105 = vmatpush1.msra.mxu0 0.0
    %1106 = vmatprep.subr.mxu0 0.0
    %1107 = vmatpush1.msra.mxu0 0.0
    %1108 = vmatprep.subr.mxu0 0.0
    %1109 = vmatpush1.msra.mxu0 0.0
    %1110 = vmatprep.subr.mxu0 0.0
    %1111 = vmatpush1.msra.mxu0 0.0
    %1112 = vmatprep.subr.mxu0 0.0
    %1113 = vmatpush1.msra.mxu0 0.0
    %1114 = vmatprep.subr.mxu0 0.0
    %1115 = vmatpush1.msra.mxu0 0.0
    %1116 = vmatprep.subr.mxu0 0.0
    %1117 = vmatpush1.msra.mxu0 0.0
    %1118 = vmatprep.subr.mxu0 0.0
    %1119 = vmatpush1.msra.mxu0 0.0
    %1120 = vmatprep.subr.mxu0 0.0
    %1121 = vmatpush1.msra.mxu0 0.0
    %1122 = vmatprep.subr.mxu0 0.0
    %1123 = vmatpush1.msra.mxu0 0.0
    %1124 = vmatprep.subr.mxu0 0.0
    %1125 = vmatpush1.msra.mxu0 0.0
    %1126 = vmatprep.subr.mxu0 0.0
    %1127 = vmatpush1.msra.mxu0 0.0
    %1128 = vmatprep.subr.mxu0 0.0
    %1129 = vmatpush1.msra.mxu0 0.0
    %1130 = vmatprep.subr.mxu0 0.0
    %1131 = vmatpush1.msra.mxu0 0.0
    %1132 = vmatprep.subr.mxu0 0.0
    %1133 = vmatpush1.msra.mxu0 0.0
    %1134 = vmatprep.subr.mxu0 0.0
    %1135 = vmatpush1.msra.mxu0 0.0
    %1136 = vmatprep.subr.mxu0 0.0
    %1137 = vmatpush1.msra.mxu0 0.0
    %1138 = vmatprep.subr.mxu0 0.0
    %1139 = vmatpush1.msra.mxu0 0.0
    %1140 = vmatprep.subr.mxu0 0.0
    %1141 = vmatpush1.msra.mxu0 0.0
    %1142 = vmatprep.subr.mxu0 0.0
    %1143 = vmatpush1.msra.mxu0 0.0
    %1144 = vmatprep.subr.mxu0 0.0
    %1145 = vmatpush1.msra.mxu0 0.0
    %1146 = vmatprep.subr.mxu0 0.0
    %1147 = vmatpush1.msra.mxu0 0.0
    %1148 = vmatprep.subr.mxu0 0.0
    %1149 = vmatpush1.msra.mxu0 0.0
    %1150 = vmatprep.mubr.f32.mxu0 0.0
    %1151 = vmatmul.mubr.f32.gmra.mrb[0].mxu0 %v1084
    %v1152 = vpop.f32.mrb[0].mxu0
    %v1153 = vadd.f32 0.0, %v1152
    %v1154 = vpop.f32.mrb[0].mxu0
    %1155 = vdwg.mxu0
    %v1156 = vadd.f32 %v1080, %v1153
    %v1157 = vxor.u32 %v1156, 2147483648
    %v1158 = vmul.f32 %v1157, 1.442695
    %v1159 = vpow.pop %v1158
    %v1160 = vadd.f32 %v1159, 1.0
    %v1161 = vrcp.pop %v1160
    %v1162 = vmul.f32 1.0, %v1161
    %v1163 = vtanh.pop %v1156
    %v1164 = vmul.f32 %v1162, %v951
    %1166 = vrot.lane.b32.xlu0 %v1163, 96
    %v1167 = vpop.permute.xlu0 %1166
    %v1169 = vmul.f32 %v1162, %v1167
    %1171 = vrot.lane.b32.xlu0 %v1169, 16
    %v1172 = vpop.permute.xlu0 %1171
    %v1174 = vadd.f32 %v1164, %v1172
    %v1175 = vtanh.pop %v1174
    %1177 = vrot.lane.b32.xlu0 %v1175, 32
    %v1178 = vpop.permute.xlu0 %1177
    %v1180 = vmul.f32 %v1162, %v1178
    %v1181 = vstv %s1078
    %vm1182 = vcmp.gt.s32.totalorder %v107, %v1181
    %v1183 = vsel %vm1182, 1, 0
    %1184 = vset.pattern.permute.xlu0 0
    %1185 = vperm.xlu0 %1184, %v1183
    %v1186 = vpop.permute.xlu0 %1185
    %vm1187 = vcmp.eq.s32.totalorder %v1186, 1
    %v1188 = vsel %vm1187, %v1180, %v950
    %v1189 = vsel %vm1187, %v1174, %v951
    %v1190 = vsel %vm1187, %v1180, 0.0
    %1192 = vrot.lane.b32.xlu0 %v1190, 80
    %v1193 = vpop.permute.xlu0 %1192
    %s1195 = scalar_lea.vmem [#allocation15], 32
    %1196 = vst.msk [vmem:[%s1195] sm:$0x3f] %vm238, %v1193
    %s1197 = ssub.s32 3, %s112
    %s1198 = scalar_lea.vmem [#allocation11], 24
    %v1199 = vld [vmem:[%s1198] sm:$0x3f]
    %1201 = vrot.lane.b32.xlu0 %v1069, 80
    %v1202 = vpop.permute.xlu0 %1201
    %v1203 = vsel %vm118, %v1202, 0
    %1205 = vmatprep.subr.mxu0 0.0
    %1206 = vmatpush1.msra.mxu0 %v110
    %1207 = vmatprep.subr.mxu0 0.0
    %1208 = vmatpush1.msra.mxu0 %v111
    %1209 = vmatprep.subr.mxu0 0.0
    %1210 = vmatpush1.msra.mxu0 0.0
    %1211 = vmatprep.subr.mxu0 0.0
    %1212 = vmatpush1.msra.mxu0 0.0
    %1213 = vmatprep.subr.mxu0 0.0
    %1214 = vmatpush1.msra.mxu0 0.0
    %1215 = vmatprep.subr.mxu0 0.0
    %1216 = vmatpush1.msra.mxu0 0.0
    %1217 = vmatprep.subr.mxu0 0.0
    %1218 = vmatpush1.msra.mxu0 0.0
    %1219 = vmatprep.subr.mxu0 0.0
    %1220 = vmatpush1.msra.mxu0 0.0
    %1221 = vmatprep.subr.mxu0 0.0
    %1222 = vmatpush1.msra.mxu0 0.0
    %1223 = vmatprep.subr.mxu0 0.0
    %1224 = vmatpush1.msra.mxu0 0.0
    %1225 = vmatprep.subr.mxu0 0.0
    %1226 = vmatpush1.msra.mxu0 0.0
    %1227 = vmatprep.subr.mxu0 0.0
    %1228 = vmatpush1.msra.mxu0 0.0
    %1229 = vmatprep.subr.mxu0 0.0
    %1230 = vmatpush1.msra.mxu0 0.0
    %1231 = vmatprep.subr.mxu0 0.0
    %1232 = vmatpush1.msra.mxu0 0.0
    %1233 = vmatprep.subr.mxu0 0.0
    %1234 = vmatpush1.msra.mxu0 0.0
    %1235 = vmatprep.subr.mxu0 0.0
    %1236 = vmatpush1.msra.mxu0 0.0
    %1237 = vmatprep.subr.mxu0 0.0
    %1238 = vmatpush1.msra.mxu0 0.0
    %1239 = vmatprep.subr.mxu0 0.0
    %1240 = vmatpush1.msra.mxu0 0.0
    %1241 = vmatprep.subr.mxu0 0.0
    %1242 = vmatpush1.msra.mxu0 0.0
    %1243 = vmatprep.subr.mxu0 0.0
    %1244 = vmatpush1.msra.mxu0 0.0
    %1245 = vmatprep.subr.mxu0 0.0
    %1246 = vmatpush1.msra.mxu0 0.0
    %1247 = vmatprep.subr.mxu0 0.0
    %1248 = vmatpush1.msra.mxu0 0.0
    %1249 = vmatprep.subr.mxu0 0.0
    %1250 = vmatpush1.msra.mxu0 0.0
    %1251 = vmatprep.subr.mxu0 0.0
    %1252 = vmatpush1.msra.mxu0 0.0
    %1253 = vmatprep.subr.mxu0 0.0
    %1254 = vmatpush1.msra.mxu0 0.0
    %1255 = vmatprep.subr.mxu0 0.0
    %1256 = vmatpush1.msra.mxu0 0.0
    %1257 = vmatprep.subr.mxu0 0.0
    %1258 = vmatpush1.msra.mxu0 0.0
    %1259 = vmatprep.subr.mxu0 0.0
    %1260 = vmatpush1.msra.mxu0 0.0
    %1261 = vmatprep.subr.mxu0 0.0
    %1262 = vmatpush1.msra.mxu0 0.0
    %1263 = vmatprep.subr.mxu0 0.0
    %1264 = vmatpush1.msra.mxu0 0.0
    %1265 = vmatprep.subr.mxu0 0.0
    %1266 = vmatpush1.msra.mxu0 0.0
    %1267 = vmatprep.subr.mxu0 0.0
    %1268 = vmatpush1.msra.mxu0 0.0
    %1269 = vmatprep.mubr.f32.mxu0 0.0
    %1270 = vmatmul.mubr.f32.gmra.mrb[0].mxu0 %v1203
    %v1271 = vpop.f32.mrb[0].mxu0
    %v1272 = vadd.f32 0.0, %v1271
    %v1273 = vpop.f32.mrb[0].mxu0
    %1274 = vdwg.mxu0
    %v1275 = vadd.f32 %v1199, %v1272
    %v1276 = vxor.u32 %v1275, 2147483648
    %v1277 = vmul.f32 %v1276, 1.442695
    %v1278 = vpow.pop %v1277
    %v1279 = vadd.f32 %v1278, 1.0
    %v1280 = vrcp.pop %v1279
    %v1281 = vmul.f32 1.0, %v1280
    %v1282 = vtanh.pop %v1275
    %v1283 = vmul.f32 %v1281, %v1070
    %1285 = vrot.lane.b32.xlu0 %v1282, 96
    %v1286 = vpop.permute.xlu0 %1285
    %v1288 = vmul.f32 %v1281, %v1286
    %1290 = vrot.lane.b32.xlu0 %v1288, 16
    %v1291 = vpop.permute.xlu0 %1290
    %v1293 = vadd.f32 %v1283, %v1291
    %v1294 = vtanh.pop %v1293
    %1296 = vrot.lane.b32.xlu0 %v1294, 32
    %v1297 = vpop.permute.xlu0 %1296
    %v1299 = vmul.f32 %v1281, %v1297
    %v1300 = vstv %s1197
    %vm1301 = vcmp.gt.s32.totalorder %v107, %v1300
    %v1302 = vsel %vm1301, 1, 0
    %1303 = vset.pattern.permute.xlu0 0
    %1304 = vperm.xlu0 %1303, %v1302
    %v1305 = vpop.permute.xlu0 %1304
    %vm1306 = vcmp.eq.s32.totalorder %v1305, 1
    %v1307 = vsel %vm1306, %v1299, %v1069
    %v1308 = vsel %vm1306, %v1293, %v1070
    %v1309 = vsel %vm1306, %v1299, 0.0
    %1311 = vrot.lane.b32.xlu0 %v1309, 80
    %v1312 = vpop.permute.xlu0 %1311
    %s1314 = scalar_lea.vmem [#allocation16], 24
    %1315 = vst.msk [vmem:[%s1314] sm:$0x3f] %vm238, %v1312
    %s1316 = sadd.s32 %s112, 5
    %s1317 = scalar_lea.vmem [#allocation9], 40
    %v1318 = vld [vmem:[%s1317] sm:$0x3f]
    %1320 = vrot.lane.b32.xlu0 %v1188, 80
    %v1321 = vpop.permute.xlu0 %1320
    %v1322 = vsel %vm118, %v1321, 0
    %1324 = vmatprep.subr.mxu0 0.0
    %1325 = vmatpush1.msra.mxu0 %v108
    %1326 = vmatprep.subr.mxu0 0.0
    %1327 = vmatpush1.msra.mxu0 %v109
    %1328 = vmatprep.subr.mxu0 0.0
    %1329 = vmatpush1.msra.mxu0 0.0
    %1330 = vmatprep.subr.mxu0 0.0
    %1331 = vmatpush1.msra.mxu0 0.0
    %1332 = vmatprep.subr.mxu0 0.0
    %1333 = vmatpush1.msra.mxu0 0.0
    %1334 = vmatprep.subr.mxu0 0.0
    %1335 = vmatpush1.msra.mxu0 0.0
    %1336 = vmatprep.subr.mxu0 0.0
    %1337 = vmatpush1.msra.mxu0 0.0
    %1338 = vmatprep.subr.mxu0 0.0
    %1339 = vmatpush1.msra.mxu0 0.0
    %1340 = vmatprep.subr.mxu0 0.0
    %1341 = vmatpush1.msra.mxu0 0.0
    %1342 = vmatprep.subr.mxu0 0.0
    %1343 = vmatpush1.msra.mxu0 0.0
    %1344 = vmatprep.subr.mxu0 0.0
    %1345 = vmatpush1.msra.mxu0 0.0
    %1346 = vmatprep.subr.mxu0 0.0
    %1347 = vmatpush1.msra.mxu0 0.0
    %1348 = vmatprep.subr.mxu0 0.0
    %1349 = vmatpush1.msra.mxu0 0.0
    %1350 = vmatprep.subr.mxu0 0.0
    %1351 = vmatpush1.msra.mxu0 0.0
    %1352 = vmatprep.subr.mxu0 0.0
    %1353 = vmatpush1.msra.mxu0 0.0
    %1354 = vmatprep.subr.mxu0 0.0
    %1355 = vmatpush1.msra.mxu0 0.0
    %1356 = vmatprep.subr.mxu0 0.0
    %1357 = vmatpush1.msra.mxu0 0.0
    %1358 = vmatprep.subr.mxu0 0.0
    %1359 = vmatpush1.msra.mxu0 0.0
    %1360 = vmatprep.subr.mxu0 0.0
    %1361 = vmatpush1.msra.mxu0 0.0
    %1362 = vmatprep.subr.mxu0 0.0
    %1363 = vmatpush1.msra.mxu0 0.0
    %1364 = vmatprep.subr.mxu0 0.0
    %1365 = vmatpush1.msra.mxu0 0.0
    %1366 = vmatprep.subr.mxu0 0.0
    %1367 = vmatpush1.msra.mxu0 0.0
    %1368 = vmatprep.subr.mxu0 0.0
    %1369 = vmatpush1.msra.mxu0 0.0
    %1370 = vmatprep.subr.mxu0 0.0
    %1371 = vmatpush1.msra.mxu0 0.0
    %1372 = vmatprep.subr.mxu0 0.0
    %1373 = vmatpush1.msra.mxu0 0.0
    %1374 = vmatprep.subr.mxu0 0.0
    %1375 = vmatpush1.msra.mxu0 0.0
    %1376 = vmatprep.subr.mxu0 0.0
    %1377 = vmatpush1.msra.mxu0 0.0
    %1378 = vmatprep.subr.mxu0 0.0
    %1379 = vmatpush1.msra.mxu0 0.0
    %1380 = vmatprep.subr.mxu0 0.0
    %1381 = vmatpush1.msra.mxu0 0.0
    %1382 = vmatprep.subr.mxu0 0.0
    %1383 = vmatpush1.msra.mxu0 0.0
    %1384 = vmatprep.subr.mxu0 0.0
    %1385 = vmatpush1.msra.mxu0 0.0
    %1386 = vmatprep.subr.mxu0 0.0
    %1387 = vmatpush1.msra.mxu0 0.0
    %1388 = vmatprep.mubr.f32.mxu0 0.0
    %1389 = vmatmul.mubr.f32.gmra.mrb[0].mxu0 %v1322
    %v1390 = vpop.f32.mrb[0].mxu0
    %v1391 = vadd.f32 0.0, %v1390
    %v1392 = vpop.f32.mrb[0].mxu0
    %1393 = vdwg.mxu0
    %v1394 = vadd.f32 %v1318, %v1391
    %v1395 = vxor.u32 %v1394, 2147483648
    %v1396 = vmul.f32 %v1395, 1.442695
    %v1397 = vpow.pop %v1396
    %v1398 = vadd.f32 %v1397, 1.0
    %v1399 = vrcp.pop %v1398
    %v1400 = vmul.f32 1.0, %v1399
    %v1401 = vtanh.pop %v1394
    %v1402 = vmul.f32 %v1400, %v1189
    %1404 = vrot.lane.b32.xlu0 %v1401, 96
    %v1405 = vpop.permute.xlu0 %1404
    %v1407 = vmul.f32 %v1400, %v1405
    %1409 = vrot.lane.b32.xlu0 %v1407, 16
    %v1410 = vpop.permute.xlu0 %1409
    %v1412 = vadd.f32 %v1402, %v1410
    %v1413 = vtanh.pop %v1412
    %1415 = vrot.lane.b32.xlu0 %v1413, 32
    %v1416 = vpop.permute.xlu0 %1415
    %v1418 = vmul.f32 %v1400, %v1416
    %v1419 = vstv %s1316
    %vm1420 = vcmp.gt.s32.totalorder %v107, %v1419
    %v1421 = vsel %vm1420, 1, 0
    %1422 = vset.pattern.permute.xlu0 0
    %1423 = vperm.xlu0 %1422, %v1421
    %v1424 = vpop.permute.xlu0 %1423
    %vm1425 = vcmp.eq.s32.totalorder %v1424, 1
    %v1426 = vsel %vm1425, %v1418, %v1188
    %v1427 = vsel %vm1425, %v1412, %v1189
    %v1428 = vsel %vm1425, %v1418, 0.0
    %1430 = vrot.lane.b32.xlu0 %v1428, 80
    %v1431 = vpop.permute.xlu0 %1430
    %s1433 = scalar_lea.vmem [#allocation15], 40
    %1434 = vst.msk [vmem:[%s1433] sm:$0x3f] %vm238, %v1431
    %s1435 = ssub.s32 2, %s112
    %s1436 = scalar_lea.vmem [#allocation11], 16
    %v1437 = vld [vmem:[%s1436] sm:$0x3f]
    %1439 = vrot.lane.b32.xlu0 %v1307, 80
    %v1440 = vpop.permute.xlu0 %1439
    %v1441 = vsel %vm118, %v1440, 0
    %1443 = vmatprep.subr.mxu0 0.0
    %1444 = vmatpush1.msra.mxu0 %v110
    %1445 = vmatprep.subr.mxu0 0.0
    %1446 = vmatpush1.msra.mxu0 %v111
    %1447 = vmatprep.subr.mxu0 0.0
    %1448 = vmatpush1.msra.mxu0 0.0
    %1449 = vmatprep.subr.mxu0 0.0
    %1450 = vmatpush1.msra.mxu0 0.0
    %1451 = vmatprep.subr.mxu0 0.0
    %1452 = vmatpush1.msra.mxu0 0.0
    %1453 = vmatprep.subr.mxu0 0.0
    %1454 = vmatpush1.msra.mxu0 0.0
    %1455 = vmatprep.subr.mxu0 0.0
    %1456 = vmatpush1.msra.mxu0 0.0
    %1457 = vmatprep.subr.mxu0 0.0
    %1458 = vmatpush1.msra.mxu0 0.0
    %1459 = vmatprep.subr.mxu0 0.0
    %1460 = vmatpush1.msra.mxu0 0.0
    %1461 = vmatprep.subr.mxu0 0.0
    %1462 = vmatpush1.msra.mxu0 0.0
    %1463 = vmatprep.subr.mxu0 0.0
    %1464 = vmatpush1.msra.mxu0 0.0
    %1465 = vmatprep.subr.mxu0 0.0
    %1466 = vmatpush1.msra.mxu0 0.0
    %1467 = vmatprep.subr.mxu0 0.0
    %1468 = vmatpush1.msra.mxu0 0.0
    %1469 = vmatprep.subr.mxu0 0.0
    %1470 = vmatpush1.msra.mxu0 0.0
    %1471 = vmatprep.subr.mxu0 0.0
    %1472 = vmatpush1.msra.mxu0 0.0
    %1473 = vmatprep.subr.mxu0 0.0
    %1474 = vmatpush1.msra.mxu0 0.0
    %1475 = vmatprep.subr.mxu0 0.0
    %1476 = vmatpush1.msra.mxu0 0.0
    %1477 = vmatprep.subr.mxu0 0.0
    %1478 = vmatpush1.msra.mxu0 0.0
    %1479 = vmatprep.subr.mxu0 0.0
    %1480 = vmatpush1.msra.mxu0 0.0
    %1481 = vmatprep.subr.mxu0 0.0
    %1482 = vmatpush1.msra.mxu0 0.0
    %1483 = vmatprep.subr.mxu0 0.0
    %1484 = vmatpush1.msra.mxu0 0.0
    %1485 = vmatprep.subr.mxu0 0.0
    %1486 = vmatpush1.msra.mxu0 0.0
    %1487 = vmatprep.subr.mxu0 0.0
    %1488 = vmatpush1.msra.mxu0 0.0
    %1489 = vmatprep.subr.mxu0 0.0
    %1490 = vmatpush1.msra.mxu0 0.0
    %1491 = vmatprep.subr.mxu0 0.0
    %1492 = vmatpush1.msra.mxu0 0.0
    %1493 = vmatprep.subr.mxu0 0.0
    %1494 = vmatpush1.msra.mxu0 0.0
    %1495 = vmatprep.subr.mxu0 0.0
    %1496 = vmatpush1.msra.mxu0 0.0
    %1497 = vmatprep.subr.mxu0 0.0
    %1498 = vmatpush1.msra.mxu0 0.0
    %1499 = vmatprep.subr.mxu0 0.0
    %1500 = vmatpush1.msra.mxu0 0.0
    %1501 = vmatprep.subr.mxu0 0.0
    %1502 = vmatpush1.msra.mxu0 0.0
    %1503 = vmatprep.subr.mxu0 0.0
    %1504 = vmatpush1.msra.mxu0 0.0
    %1505 = vmatprep.subr.mxu0 0.0
    %1506 = vmatpush1.msra.mxu0 0.0
    %1507 = vmatprep.mubr.f32.mxu0 0.0
    %1508 = vmatmul.mubr.f32.gmra.mrb[0].mxu0 %v1441
    %v1509 = vpop.f32.mrb[0].mxu0
    %v1510 = vadd.f32 0.0, %v1509
    %v1511 = vpop.f32.mrb[0].mxu0
    %1512 = vdwg.mxu0
    %v1513 = vadd.f32 %v1437, %v1510
    %v1514 = vxor.u32 %v1513, 2147483648
    %v1515 = vmul.f32 %v1514, 1.442695
    %v1516 = vpow.pop %v1515
    %v1517 = vadd.f32 %v1516, 1.0
    %v1518 = vrcp.pop %v1517
    %v1519 = vmul.f32 1.0, %v1518
    %v1520 = vtanh.pop %v1513
    %v1521 = vmul.f32 %v1519, %v1308
    %1523 = vrot.lane.b32.xlu0 %v1520, 96
    %v1524 = vpop.permute.xlu0 %1523
    %v1526 = vmul.f32 %v1519, %v1524
    %1528 = vrot.lane.b32.xlu0 %v1526, 16
    %v1529 = vpop.permute.xlu0 %1528
    %v1531 = vadd.f32 %v1521, %v1529
    %v1532 = vtanh.pop %v1531
    %1534 = vrot.lane.b32.xlu0 %v1532, 32
    %v1535 = vpop.permute.xlu0 %1534
    %v1537 = vmul.f32 %v1519, %v1535
    %v1538 = vstv %s1435
    %vm1539 = vcmp.gt.s32.totalorder %v107, %v1538
    %v1540 = vsel %vm1539, 1, 0
    %1541 = vset.pattern.permute.xlu0 0
    %1542 = vperm.xlu0 %1541, %v1540
    %v1543 = vpop.permute.xlu0 %1542
    %vm1544 = vcmp.eq.s32.totalorder %v1543, 1
    %v1545 = vsel %vm1544, %v1537, %v1307
    %v1546 = vsel %vm1544, %v1531, %v1308
    %v1547 = vsel %vm1544, %v1537, 0.0
    %1549 = vrot.lane.b32.xlu0 %v1547, 80
    %v1550 = vpop.permute.xlu0 %1549
    %s1552 = scalar_lea.vmem [#allocation16], 16
    %1553 = vst.msk [vmem:[%s1552] sm:$0x3f] %vm238, %v1550
    %s1554 = sadd.s32 %s112, 6
    %s1555 = scalar_lea.vmem [#allocation9], 48
    %v1556 = vld [vmem:[%s1555] sm:$0x3f]
    %1558 = vrot.lane.b32.xlu0 %v1426, 80
    %v1559 = vpop.permute.xlu0 %1558
    %v1560 = vsel %vm118, %v1559, 0
    %1562 = vmatprep.subr.mxu0 0.0
    %1563 = vmatpush1.msra.mxu0 %v108
    %1564 = vmatprep.subr.mxu0 0.0
    %1565 = vmatpush1.msra.mxu0 %v109
    %1566 = vmatprep.subr.mxu0 0.0
    %1567 = vmatpush1.msra.mxu0 0.0
    %1568 = vmatprep.subr.mxu0 0.0
    %1569 = vmatpush1.msra.mxu0 0.0
    %1570 = vmatprep.subr.mxu0 0.0
    %1571 = vmatpush1.msra.mxu0 0.0
    %1572 = vmatprep.subr.mxu0 0.0
    %1573 = vmatpush1.msra.mxu0 0.0
    %1574 = vmatprep.subr.mxu0 0.0
    %1575 = vmatpush1.msra.mxu0 0.0
    %1576 = vmatprep.subr.mxu0 0.0
    %1577 = vmatpush1.msra.mxu0 0.0
    %1578 = vmatprep.subr.mxu0 0.0
    %1579 = vmatpush1.msra.mxu0 0.0
    %1580 = vmatprep.subr.mxu0 0.0
    %1581 = vmatpush1.msra.mxu0 0.0
    %1582 = vmatprep.subr.mxu0 0.0
    %1583 = vmatpush1.msra.mxu0 0.0
    %1584 = vmatprep.subr.mxu0 0.0
    %1585 = vmatpush1.msra.mxu0 0.0
    %1586 = vmatprep.subr.mxu0 0.0
    %1587 = vmatpush1.msra.mxu0 0.0
    %1588 = vmatprep.subr.mxu0 0.0
    %1589 = vmatpush1.msra.mxu0 0.0
    %1590 = vmatprep.subr.mxu0 0.0
    %1591 = vmatpush1.msra.mxu0 0.0
    %1592 = vmatprep.subr.mxu0 0.0
    %1593 = vmatpush1.msra.mxu0 0.0
    %1594 = vmatprep.subr.mxu0 0.0
    %1595 = vmatpush1.msra.mxu0 0.0
    %1596 = vmatprep.subr.mxu0 0.0
    %1597 = vmatpush1.msra.mxu0 0.0
    %1598 = vmatprep.subr.mxu0 0.0
    %1599 = vmatpush1.msra.mxu0 0.0
    %1600 = vmatprep.subr.mxu0 0.0
    %1601 = vmatpush1.msra.mxu0 0.0
    %1602 = vmatprep.subr.mxu0 0.0
    %1603 = vmatpush1.msra.mxu0 0.0
    %1604 = vmatprep.subr.mxu0 0.0
    %1605 = vmatpush1.msra.mxu0 0.0
    %1606 = vmatprep.subr.mxu0 0.0
    %1607 = vmatpush1.msra.mxu0 0.0
    %1608 = vmatprep.subr.mxu0 0.0
    %1609 = vmatpush1.msra.mxu0 0.0
    %1610 = vmatprep.subr.mxu0 0.0
    %1611 = vmatpush1.msra.mxu0 0.0
    %1612 = vmatprep.subr.mxu0 0.0
    %1613 = vmatpush1.msra.mxu0 0.0
    %1614 = vmatprep.subr.mxu0 0.0
    %1615 = vmatpush1.msra.mxu0 0.0
    %1616 = vmatprep.subr.mxu0 0.0
    %1617 = vmatpush1.msra.mxu0 0.0
    %1618 = vmatprep.subr.mxu0 0.0
    %1619 = vmatpush1.msra.mxu0 0.0
    %1620 = vmatprep.subr.mxu0 0.0
    %1621 = vmatpush1.msra.mxu0 0.0
    %1622 = vmatprep.subr.mxu0 0.0
    %1623 = vmatpush1.msra.mxu0 0.0
    %1624 = vmatprep.subr.mxu0 0.0
    %1625 = vmatpush1.msra.mxu0 0.0
    %1626 = vmatprep.mubr.f32.mxu0 0.0
    %1627 = vmatmul.mubr.f32.gmra.mrb[0].mxu0 %v1560
    %v1628 = vpop.f32.mrb[0].mxu0
    %v1629 = vadd.f32 0.0, %v1628
    %v1630 = vpop.f32.mrb[0].mxu0
    %1631 = vdwg.mxu0
    %v1632 = vadd.f32 %v1556, %v1629
    %v1633 = vxor.u32 %v1632, 2147483648
    %v1634 = vmul.f32 %v1633, 1.442695
    %v1635 = vpow.pop %v1634
    %v1636 = vadd.f32 %v1635, 1.0
    %v1637 = vrcp.pop %v1636
    %v1638 = vmul.f32 1.0, %v1637
    %v1639 = vtanh.pop %v1632
    %v1640 = vmul.f32 %v1638, %v1427
    %1642 = vrot.lane.b32.xlu0 %v1639, 96
    %v1643 = vpop.permute.xlu0 %1642
    %v1645 = vmul.f32 %v1638, %v1643
    %1647 = vrot.lane.b32.xlu0 %v1645, 16
    %v1648 = vpop.permute.xlu0 %1647
    %v1650 = vadd.f32 %v1640, %v1648
    %v1651 = vtanh.pop %v1650
    %1653 = vrot.lane.b32.xlu0 %v1651, 32
    %v1654 = vpop.permute.xlu0 %1653
    %v1656 = vmul.f32 %v1638, %v1654
    %v1657 = vstv %s1554
    %vm1658 = vcmp.gt.s32.totalorder %v107, %v1657
    %v1659 = vsel %vm1658, 1, 0
    %1660 = vset.pattern.permute.xlu0 0
    %1661 = vperm.xlu0 %1660, %v1659
    %v1662 = vpop.permute.xlu0 %1661
    %vm1663 = vcmp.eq.s32.totalorder %v1662, 1
    %v1664 = vsel %vm1663, %v1656, %v1426
    %v1665 = vsel %vm1663, %v1650, %v1427
    %v1666 = vsel %vm1663, %v1656, 0.0
    %1668 = vrot.lane.b32.xlu0 %v1666, 80
    %v1669 = vpop.permute.xlu0 %1668
    %s1671 = scalar_lea.vmem [#allocation15], 48
    %1672 = vst.msk [vmem:[%s1671] sm:$0x3f] %vm238, %v1669
    %s1673 = ssub.s32 1, %s112
    %s1674 = scalar_lea.vmem [#allocation11], 8
    %v1675 = vld [vmem:[%s1674] sm:$0x3f]
    %1677 = vrot.lane.b32.xlu0 %v1545, 80
    %v1678 = vpop.permute.xlu0 %1677
    %v1679 = vsel %vm118, %v1678, 0
    %1681 = vmatprep.subr.mxu0 0.0
    %1682 = vmatpush1.msra.mxu0 %v110
    %1683 = vmatprep.subr.mxu0 0.0
    %1684 = vmatpush1.msra.mxu0 %v111
    %1685 = vmatprep.subr.mxu0 0.0
    %1686 = vmatpush1.msra.mxu0 0.0
    %1687 = vmatprep.subr.mxu0 0.0
    %1688 = vmatpush1.msra.mxu0 0.0
    %1689 = vmatprep.subr.mxu0 0.0
    %1690 = vmatpush1.msra.mxu0 0.0
    %1691 = vmatprep.subr.mxu0 0.0
    %1692 = vmatpush1.msra.mxu0 0.0
    %1693 = vmatprep.subr.mxu0 0.0
    %1694 = vmatpush1.msra.mxu0 0.0
    %1695 = vmatprep.subr.mxu0 0.0
    %1696 = vmatpush1.msra.mxu0 0.0
    %1697 = vmatprep.subr.mxu0 0.0
    %1698 = vmatpush1.msra.mxu0 0.0
    %1699 = vmatprep.subr.mxu0 0.0
    %1700 = vmatpush1.msra.mxu0 0.0
    %1701 = vmatprep.subr.mxu0 0.0
    %1702 = vmatpush1.msra.mxu0 0.0
    %1703 = vmatprep.subr.mxu0 0.0
    %1704 = vmatpush1.msra.mxu0 0.0
    %1705 = vmatprep.subr.mxu0 0.0
    %1706 = vmatpush1.msra.mxu0 0.0
    %1707 = vmatprep.subr.mxu0 0.0
    %1708 = vmatpush1.msra.mxu0 0.0
    %1709 = vmatprep.subr.mxu0 0.0
    %1710 = vmatpush1.msra.mxu0 0.0
    %1711 = vmatprep.subr.mxu0 0.0
    %1712 = vmatpush1.msra.mxu0 0.0
    %1713 = vmatprep.subr.mxu0 0.0
    %1714 = vmatpush1.msra.mxu0 0.0
    %1715 = vmatprep.subr.mxu0 0.0
    %1716 = vmatpush1.msra.mxu0 0.0
    %1717 = vmatprep.subr.mxu0 0.0
    %1718 = vmatpush1.msra.mxu0 0.0
    %1719 = vmatprep.subr.mxu0 0.0
    %1720 = vmatpush1.msra.mxu0 0.0
    %1721 = vmatprep.subr.mxu0 0.0
    %1722 = vmatpush1.msra.mxu0 0.0
    %1723 = vmatprep.subr.mxu0 0.0
    %1724 = vmatpush1.msra.mxu0 0.0
    %1725 = vmatprep.subr.mxu0 0.0
    %1726 = vmatpush1.msra.mxu0 0.0
    %1727 = vmatprep.subr.mxu0 0.0
    %1728 = vmatpush1.msra.mxu0 0.0
    %1729 = vmatprep.subr.mxu0 0.0
    %1730 = vmatpush1.msra.mxu0 0.0
    %1731 = vmatprep.subr.mxu0 0.0
    %1732 = vmatpush1.msra.mxu0 0.0
    %1733 = vmatprep.subr.mxu0 0.0
    %1734 = vmatpush1.msra.mxu0 0.0
    %1735 = vmatprep.subr.mxu0 0.0
    %1736 = vmatpush1.msra.mxu0 0.0
    %1737 = vmatprep.subr.mxu0 0.0
    %1738 = vmatpush1.msra.mxu0 0.0
    %1739 = vmatprep.subr.mxu0 0.0
    %1740 = vmatpush1.msra.mxu0 0.0
    %1741 = vmatprep.subr.mxu0 0.0
    %1742 = vmatpush1.msra.mxu0 0.0
    %1743 = vmatprep.subr.mxu0 0.0
    %1744 = vmatpush1.msra.mxu0 0.0
    %1745 = vmatprep.mubr.f32.mxu0 0.0
    %1746 = vmatmul.mubr.f32.gmra.mrb[0].mxu0 %v1679
    %v1747 = vpop.f32.mrb[0].mxu0
    %v1748 = vadd.f32 0.0, %v1747
    %v1749 = vpop.f32.mrb[0].mxu0
    %1750 = vdwg.mxu0
    %v1751 = vadd.f32 %v1675, %v1748
    %v1752 = vxor.u32 %v1751, 2147483648
    %v1753 = vmul.f32 %v1752, 1.442695
    %v1754 = vpow.pop %v1753
    %v1755 = vadd.f32 %v1754, 1.0
    %v1756 = vrcp.pop %v1755
    %v1757 = vmul.f32 1.0, %v1756
    %v1758 = vtanh.pop %v1751
    %v1759 = vmul.f32 %v1757, %v1546
    %1761 = vrot.lane.b32.xlu0 %v1758, 96
    %v1762 = vpop.permute.xlu0 %1761
    %v1764 = vmul.f32 %v1757, %v1762
    %1766 = vrot.lane.b32.xlu0 %v1764, 16
    %v1767 = vpop.permute.xlu0 %1766
    %v1769 = vadd.f32 %v1759, %v1767
    %v1770 = vtanh.pop %v1769
    %1772 = vrot.lane.b32.xlu0 %v1770, 32
    %v1773 = vpop.permute.xlu0 %1772
    %v1775 = vmul.f32 %v1757, %v1773
    %v1776 = vstv %s1673
    %vm1777 = vcmp.gt.s32.totalorder %v107, %v1776
    %v1778 = vsel %vm1777, 1, 0
    %1779 = vset.pattern.permute.xlu0 0
    %1780 = vperm.xlu0 %1779, %v1778
    %v1781 = vpop.permute.xlu0 %1780
    %vm1782 = vcmp.eq.s32.totalorder %v1781, 1
    %v1783 = vsel %vm1782, %v1775, %v1545
    %v1784 = vsel %vm1782, %v1769, %v1546
    %v1785 = vsel %vm1782, %v1775, 0.0
    %1787 = vrot.lane.b32.xlu0 %v1785, 80
    %v1788 = vpop.permute.xlu0 %1787
    %s1790 = scalar_lea.vmem [#allocation16], 8
    %1791 = vst.msk [vmem:[%s1790] sm:$0x3f] %vm238, %v1788
    %s1792 = sadd.s32 %s112, 7
    %s1793 = scalar_lea.vmem [#allocation9], 56
    %v1794 = vld [vmem:[%s1793] sm:$0x3f]
    %1796 = vrot.lane.b32.xlu0 %v1664, 80
    %v1797 = vpop.permute.xlu0 %1796
    %v1798 = vsel %vm118, %v1797, 0
    %1800 = vmatprep.subr.mxu0 0.0
    %1801 = vmatpush1.msra.mxu0 %v108
    %1802 = vmatprep.subr.mxu0 0.0
    %1803 = vmatpush1.msra.mxu0 %v109
    %1804 = vmatprep.subr.mxu0 0.0
    %1805 = vmatpush1.msra.mxu0 0.0
    %1806 = vmatprep.subr.mxu0 0.0
    %1807 = vmatpush1.msra.mxu0 0.0
    %1808 = vmatprep.subr.mxu0 0.0
    %1809 = vmatpush1.msra.mxu0 0.0
    %1810 = vmatprep.subr.mxu0 0.0
    %1811 = vmatpush1.msra.mxu0 0.0
    %1812 = vmatprep.subr.mxu0 0.0
    %1813 = vmatpush1.msra.mxu0 0.0
    %1814 = vmatprep.subr.mxu0 0.0
    %1815 = vmatpush1.msra.mxu0 0.0
    %1816 = vmatprep.subr.mxu0 0.0
    %1817 = vmatpush1.msra.mxu0 0.0
    %1818 = vmatprep.subr.mxu0 0.0
    %1819 = vmatpush1.msra.mxu0 0.0
    %1820 = vmatprep.subr.mxu0 0.0
    %1821 = vmatpush1.msra.mxu0 0.0
    %1822 = vmatprep.subr.mxu0 0.0
    %1823 = vmatpush1.msra.mxu0 0.0
    %1824 = vmatprep.subr.mxu0 0.0
    %1825 = vmatpush1.msra.mxu0 0.0
    %1826 = vmatprep.subr.mxu0 0.0
    %1827 = vmatpush1.msra.mxu0 0.0
    %1828 = vmatprep.subr.mxu0 0.0
    %1829 = vmatpush1.msra.mxu0 0.0
    %1830 = vmatprep.subr.mxu0 0.0
    %1831 = vmatpush1.msra.mxu0 0.0
    %1832 = vmatprep.subr.mxu0 0.0
    %1833 = vmatpush1.msra.mxu0 0.0
    %1834 = vmatprep.subr.mxu0 0.0
    %1835 = vmatpush1.msra.mxu0 0.0
    %1836 = vmatprep.subr.mxu0 0.0
    %1837 = vmatpush1.msra.mxu0 0.0
    %1838 = vmatprep.subr.mxu0 0.0
    %1839 = vmatpush1.msra.mxu0 0.0
    %1840 = vmatprep.subr.mxu0 0.0
    %1841 = vmatpush1.msra.mxu0 0.0
    %1842 = vmatprep.subr.mxu0 0.0
    %1843 = vmatpush1.msra.mxu0 0.0
    %1844 = vmatprep.subr.mxu0 0.0
    %1845 = vmatpush1.msra.mxu0 0.0
    %1846 = vmatprep.subr.mxu0 0.0
    %1847 = vmatpush1.msra.mxu0 0.0
    %1848 = vmatprep.subr.mxu0 0.0
    %1849 = vmatpush1.msra.mxu0 0.0
    %1850 = vmatprep.subr.mxu0 0.0
    %1851 = vmatpush1.msra.mxu0 0.0
    %1852 = vmatprep.subr.mxu0 0.0
    %1853 = vmatpush1.msra.mxu0 0.0
    %1854 = vmatprep.subr.mxu0 0.0
    %1855 = vmatpush1.msra.mxu0 0.0
    %1856 = vmatprep.subr.mxu0 0.0
    %1857 = vmatpush1.msra.mxu0 0.0
    %1858 = vmatprep.subr.mxu0 0.0
    %1859 = vmatpush1.msra.mxu0 0.0
    %1860 = vmatprep.subr.mxu0 0.0
    %1861 = vmatpush1.msra.mxu0 0.0
    %1862 = vmatprep.subr.mxu0 0.0
    %1863 = vmatpush1.msra.mxu0 0.0
    %1864 = vmatprep.mubr.f32.mxu0 0.0
    %1865 = vmatmul.mubr.f32.gmra.mrb[0].mxu0 %v1798
    %v1866 = vpop.f32.mrb[0].mxu0
    %v1867 = vadd.f32 0.0, %v1866
    %v1868 = vpop.f32.mrb[0].mxu0
    %1869 = vdwg.mxu0
    %v1870 = vadd.f32 %v1794, %v1867
    %v1871 = vxor.u32 %v1870, 2147483648
    %v1872 = vmul.f32 %v1871, 1.442695
    %v1873 = vpow.pop %v1872
    %v1874 = vadd.f32 %v1873, 1.0
    %v1875 = vrcp.pop %v1874
    %v1876 = vmul.f32 1.0, %v1875
    %v1877 = vtanh.pop %v1870
    %v1878 = vmul.f32 %v1876, %v1665
    %1880 = vrot.lane.b32.xlu0 %v1877, 96
    %v1881 = vpop.permute.xlu0 %1880
    %v1883 = vmul.f32 %v1876, %v1881
    %1885 = vrot.lane.b32.xlu0 %v1883, 16
    %v1886 = vpop.permute.xlu0 %1885
    %v1888 = vadd.f32 %v1878, %v1886
    %v1889 = vtanh.pop %v1888
    %1891 = vrot.lane.b32.xlu0 %v1889, 32
    %v1892 = vpop.permute.xlu0 %1891
    %v1894 = vmul.f32 %v1876, %v1892
    %v1895 = vstv %s1792
    %vm1896 = vcmp.gt.s32.totalorder %v107, %v1895
    %v1897 = vsel %vm1896, 1, 0
    %1898 = vset.pattern.permute.xlu0 0
    %1899 = vperm.xlu0 %1898, %v1897
    %v1900 = vpop.permute.xlu0 %1899
    %vm1901 = vcmp.eq.s32.totalorder %v1900, 1
    %v1902 = vsel %vm1901, %v1894, %v1664
    %v1903 = vsel %vm1901, %v1888, %v1665
    %v1904 = vsel %vm1901, %v1894, 0.0
    %1906 = vrot.lane.b32.xlu0 %v1904, 80
    %v1907 = vpop.permute.xlu0 %1906
    %s1909 = scalar_lea.vmem [#allocation15], 56
    %1910 = vst.msk [vmem:[%s1909] sm:$0x3f] %vm238, %v1907
    %s1911 = ssub.s32 0, %s112
    %v1912 = vld [vmem:[#allocation11] sm:$0x3f]
    %1914 = vrot.lane.b32.xlu0 %v1783, 80
    %v1915 = vpop.permute.xlu0 %1914
    %v1916 = vsel %vm118, %v1915, 0
    %1918 = vmatprep.subr.mxu0 0.0
    %1919 = vmatpush1.msra.mxu0 %v110
    %1920 = vmatprep.subr.mxu0 0.0
    %1921 = vmatpush1.msra.mxu0 %v111
    %1922 = vmatprep.subr.mxu0 0.0
    %1923 = vmatpush1.msra.mxu0 0.0
    %1924 = vmatprep.subr.mxu0 0.0
    %1925 = vmatpush1.msra.mxu0 0.0
    %1926 = vmatprep.subr.mxu0 0.0
    %1927 = vmatpush1.msra.mxu0 0.0
    %1928 = vmatprep.subr.mxu0 0.0
    %1929 = vmatpush1.msra.mxu0 0.0
    %1930 = vmatprep.subr.mxu0 0.0
    %1931 = vmatpush1.msra.mxu0 0.0
    %1932 = vmatprep.subr.mxu0 0.0
    %1933 = vmatpush1.msra.mxu0 0.0
    %1934 = vmatprep.subr.mxu0 0.0
    %1935 = vmatpush1.msra.mxu0 0.0
    %1936 = vmatprep.subr.mxu0 0.0
    %1937 = vmatpush1.msra.mxu0 0.0
    %1938 = vmatprep.subr.mxu0 0.0
    %1939 = vmatpush1.msra.mxu0 0.0
    %1940 = vmatprep.subr.mxu0 0.0
    %1941 = vmatpush1.msra.mxu0 0.0
    %1942 = vmatprep.subr.mxu0 0.0
    %1943 = vmatpush1.msra.mxu0 0.0
    %1944 = vmatprep.subr.mxu0 0.0
    %1945 = vmatpush1.msra.mxu0 0.0
    %1946 = vmatprep.subr.mxu0 0.0
    %1947 = vmatpush1.msra.mxu0 0.0
    %1948 = vmatprep.subr.mxu0 0.0
    %1949 = vmatpush1.msra.mxu0 0.0
    %1950 = vmatprep.subr.mxu0 0.0
    %1951 = vmatpush1.msra.mxu0 0.0
    %1952 = vmatprep.subr.mxu0 0.0
    %1953 = vmatpush1.msra.mxu0 0.0
    %1954 = vmatprep.subr.mxu0 0.0
    %1955 = vmatpush1.msra.mxu0 0.0
    %1956 = vmatprep.subr.mxu0 0.0
    %1957 = vmatpush1.msra.mxu0 0.0
    %1958 = vmatprep.subr.mxu0 0.0
    %1959 = vmatpush1.msra.mxu0 0.0
    %1960 = vmatprep.subr.mxu0 0.0
    %1961 = vmatpush1.msra.mxu0 0.0
    %1962 = vmatprep.subr.mxu0 0.0
    %1963 = vmatpush1.msra.mxu0 0.0
    %1964 = vmatprep.subr.mxu0 0.0
    %1965 = vmatpush1.msra.mxu0 0.0
    %1966 = vmatprep.subr.mxu0 0.0
    %1967 = vmatpush1.msra.mxu0 0.0
    %1968 = vmatprep.subr.mxu0 0.0
    %1969 = vmatpush1.msra.mxu0 0.0
    %1970 = vmatprep.subr.mxu0 0.0
    %1971 = vmatpush1.msra.mxu0 0.0
    %1972 = vmatprep.subr.mxu0 0.0
    %1973 = vmatpush1.msra.mxu0 0.0
    %1974 = vmatprep.subr.mxu0 0.0
    %1975 = vmatpush1.msra.mxu0 0.0
    %1976 = vmatprep.subr.mxu0 0.0
    %1977 = vmatpush1.msra.mxu0 0.0
    %1978 = vmatprep.subr.mxu0 0.0
    %1979 = vmatpush1.msra.mxu0 0.0
    %1980 = vmatprep.subr.mxu0 0.0
    %1981 = vmatpush1.msra.mxu0 0.0
    %1982 = vmatprep.mubr.f32.mxu0 0.0
    %1983 = vmatmul.mubr.f32.gmra.mrb[0].mxu0 %v1916
    %v1984 = vpop.f32.mrb[0].mxu0
    %v1985 = vadd.f32 0.0, %v1984
    %v1986 = vpop.f32.mrb[0].mxu0
    %1987 = vdwg.mxu0
    %v1988 = vadd.f32 %v1912, %v1985
    %v1989 = vxor.u32 %v1988, 2147483648
    %v1990 = vmul.f32 %v1989, 1.442695
    %v1991 = vpow.pop %v1990
    %v1992 = vadd.f32 %v1991, 1.0
    %v1993 = vrcp.pop %v1992
    %v1994 = vmul.f32 1.0, %v1993
    %v1995 = vtanh.pop %v1988
    %v1996 = vmul.f32 %v1994, %v1784
    %1998 = vrot.lane.b32.xlu0 %v1995, 96
    %v1999 = vpop.permute.xlu0 %1998
    %v2001 = vmul.f32 %v1994, %v1999
    %2003 = vrot.lane.b32.xlu0 %v2001, 16
    %v2004 = vpop.permute.xlu0 %2003
    %v2006 = vadd.f32 %v1996, %v2004
    %v2007 = vtanh.pop %v2006
    %2009 = vrot.lane.b32.xlu0 %v2007, 32
    %v2010 = vpop.permute.xlu0 %2009
    %v2012 = vmul.f32 %v1994, %v2010
    %v2013 = vstv %s1911
    %vm2014 = vcmp.gt.s32.totalorder %v107, %v2013
    %v2015 = vsel %vm2014, 1, 0
    %2016 = vset.pattern.permute.xlu0 0
    %2017 = vperm.xlu0 %2016, %v2015
    %v2018 = vpop.permute.xlu0 %2017
    %vm2019 = vcmp.eq.s32.totalorder %v2018, 1
    %v2020 = vsel %vm2019, %v2012, %v1783
    %v2021 = vsel %vm2019, %v2006, %v1784
    %v2022 = vsel %vm2019, %v2012, 0.0
    %2024 = vrot.lane.b32.xlu0 %v2022, 80
    %v2025 = vpop.permute.xlu0 %2024
    %2027 = vst.msk [vmem:[#allocation16] sm:$0x3f] %vm238, %v2025
    %2029 = vrot.lane.b32.xlu0 %v1902, 80
    %v2030 = vpop.permute.xlu0 %2029
    %2032 = vst.msk [vmem:[#allocation2] sm:$0x3f] %vm238, %v2030
    %2034 = vrot.lane.b32.xlu0 %v1903, 112
    %v2035 = vpop.permute.xlu0 %2034
    %2037 = vst.msk [vmem:[#allocation3] sm:$0x3f] %vm238, %v2035
    %2039 = vrot.lane.b32.xlu0 %v2020, 80
    %v2040 = vpop.permute.xlu0 %2039
    %2042 = vst.msk [vmem:[#allocation4] sm:$0x3f] %vm238, %v2040
    %2044 = vrot.lane.b32.xlu0 %v2021, 112
    %v2045 = vpop.permute.xlu0 %2044
    %2047 = vst.msk [vmem:[#allocation5] sm:$0x3f] %vm238, %v2045
    // Predicated region
    $region46: #{hierarchical_multi_attention_forward.7} parent=1 // pred_check
      _
    $region47: #{hierarchical_multi_attention_forward.7} parent=1 // pred_check_branch
      %2049 = sbr.rel (0) target = $region49
    $region48: #{hierarchical_multi_attention_forward.7} parent=1 // pred_region
      %s2051 = ssub.s32 1024, 1024
      %2052 = vsyncadd [#allocation8], %s2051
      %s2053 = sshll.u32 [#allocation15], 4
      %s2054 = int_to_ptr.vmem [resolvable:$true] %s2053
      %2059 = dma.vmem_to_hbm [thread:$0]  %s2054, 1024, %s5, [#allocation8], 128, 128, 8
    $region49: #{hierarchical_multi_attention_forward.7} parent=1 // pred_fallthru
      _
    // Predicated region
    $region50: #{hierarchical_multi_attention_forward.7} parent=1 // pred_check
      _
    $region51: #{hierarchical_multi_attention_forward.7} parent=1 // pred_check_branch
      %2061 = sbr.rel (0) target = $region53
    $region52: #{hierarchical_multi_attention_forward.7} parent=1 // pred_region
      %s2062 = ssub.s32 0, 0
      %s2063 = smul.u32 8, %s2062
      %s2065 = ssub.s32 1024, 1024
      %2066 = vsyncadd [#allocation17], %s2065
      %s2067 = smul.addr %s2063, 128
      %s2068 = scalar_lea.hbm %s6, %s2067
      %s2069 = sshll.u32 [#allocation16], 4
      %s2070 = int_to_ptr.vmem [resolvable:$true] %s2069
      %2075 = dma.vmem_to_hbm [thread:$0]  %s2070, 1024, %s2068, [#allocation17], 128, 128, 8
    $region53: #{hierarchical_multi_attention_forward.7} parent=1 // pred_fallthru
      _
    // Predicated region
    $region54: #{hierarchical_multi_attention_forward.7} parent=1 // pred_check
      _
    $region55: #{hierarchical_multi_attention_forward.7} parent=1 // pred_check_branch
      %2077 = sbr.rel (0) target = $region57
    $region56: #{hierarchical_multi_attention_forward.7} parent=1 // pred_region
      %2078 = dma.done [#allocation8], 1024
    $region57: #{hierarchical_multi_attention_forward.7} parent=1 // pred_fallthru
      _
    // Predicated region
    $region58: #{hierarchical_multi_attention_forward.7} parent=1 // pred_check
      _
    $region59: #{hierarchical_multi_attention_forward.7} parent=1 // pred_check_branch
      %2080 = sbr.rel (0) target = $region61
    $region60: #{hierarchical_multi_attention_forward.7} parent=1 // pred_region
      %2081 = dma.done [#allocation17], 1024
    $region61: #{hierarchical_multi_attention_forward.7} parent=1 // pred_fallthru
      _
    %2082 = vsyncpa [#allocation7], 1
    %2083 = vsyncpa [#allocation10], 1
    %2084 = vsyncpa [#allocation13], 1
    %2085 = vsyncpa [#allocation8], 1
    %2086 = vsyncpa [#allocation17], 1

// kernel: hierarchical_multi_attention_forward.10
$region0: #{hierarchical_multi_attention_forward.10}
  #allocation0 [shape = 'u32[]', space=smem, size = 0x4, offset = 0x4, fixed_abs, tag = 'smem constant byte address 0x4 - core index']
  #allocation1 [shape = 'u32[144,128]{1,0:T(1,128)}', space=vmem, size = 0x12000, scoped, tag = 'internal scratch']
  #allocation2 [shape = 'f32[2,16]{1,0:T(2,128)}', space=vmem, size = 0x400, scoped, tag = 'scratch operand']
  #allocation3 [shape = 'f32[2,16]{1,0:T(2,128)}', space=vmem, size = 0x400, scoped, tag = 'scratch operand']
  #allocation4 [shape = 'f32[2,16]{1,0:T(2,128)}', space=vmem, size = 0x400, scoped, tag = 'scratch operand']
  #allocation5 [shape = 'f32[2,16]{1,0:T(2,128)}', space=vmem, size = 0x400, scoped, tag = 'scratch operand']
  %s0 = inlined_call_operand.hbm [shape: s32[2,1], index: 0, kind: input, shape index: {}]
  %s1 = inlined_call_operand.hbm [shape: f32[3,2,64], index: 1, kind: input, shape index: {}]
  %s2 = inlined_call_operand.hbm [shape: f32[3,2,64], index: 2, kind: input, shape index: {}]
  %s3 = inlined_call_operand.hbm [shape: f32[16,64], index: 3, kind: input, shape index: {}]
  %s4 = inlined_call_operand.hbm [shape: f32[16,64], index: 4, kind: input, shape index: {}]
  %s5 = inlined_call_operand.hbm [shape: f32[3,2,16], index: 5, kind: output, shape index: {0}]
  %s6 = inlined_call_operand.hbm [shape: f32[3,2,16], index: 6, kind: output, shape index: {1}]
  %7 = xla_tuple %s5, %s6
  %s8 = sld [smem:[#allocation0]]
  $region62: #{hierarchical_multi_attention_forward.10} parent=0
    _
  %s10 = ssub.s32 1, %s8
  %s11 = scalar_select 0, %s10, %s8
  $region1: #{hierarchical_multi_attention_forward.10} parent=0
    #allocation6 [shape = 'u8[1024]{0}', space=vmem, size = 0x400, scoped, tag = 'input window, operand 0, single buffered']
    #allocation7 [shape = 's32[1]{0}', space=sflag, size = 0x4, scoped, tag = 'scoped memory for hierarchical_multi_attention_forward.10']
    #allocation8 [shape = 's32[1]{0}', space=sflag, size = 0x4, scoped, tag = 'scoped memory for hierarchical_multi_attention_forward.10']
    #allocation9 [shape = 'u8[3072]{0}', space=vmem, size = 0xc00, scoped, tag = 'input window, operand 1, single buffered']
    #allocation10 [shape = 's32[1]{0}', space=sflag, size = 0x4, scoped, tag = 'scoped memory for hierarchical_multi_attention_forward.10']
    #allocation11 [shape = 'u8[3072]{0}', space=vmem, size = 0xc00, scoped, tag = 'input window, operand 2, single buffered']
    #allocation12 [shape = 'u8[8192]{0}', space=vmem, size = 0x2000, scoped, tag = 'input window, operand 3, single buffered']
    #allocation13 [shape = 's32[1]{0}', space=sflag, size = 0x4, scoped, tag = 'scoped memory for hierarchical_multi_attention_forward.10']
    #allocation14 [shape = 'u8[8192]{0}', space=vmem, size = 0x2000, scoped, tag = 'input window, operand 4, single buffered']
    #allocation15 [shape = 'u8[3072]{0}', space=vmem, size = 0xc00, scoped, tag = 'output window, operand 0, single buffered']
    #allocation16 [shape = 'u8[3072]{0}', space=vmem, size = 0xc00, scoped, tag = 'output window, operand 1, single buffered']
    #allocation17 [shape = 's32[1]{0}', space=sflag, size = 0x4, scoped, tag = 'scoped memory for hierarchical_multi_attention_forward.10']
    %12 = vsyncpa [#allocation7], 0
    %13 = vsyncpa [#allocation10], 0
    %14 = vsyncpa [#allocation13], 0
    %15 = vsyncpa [#allocation8], 0
    %16 = vsyncpa [#allocation17], 0
    // Predicated region
    $region2: #{hierarchical_multi_attention_forward.10} parent=1 // pred_check
      _
    $region3: #{hierarchical_multi_attention_forward.10} parent=1 // pred_check_branch
      %18 = sbr.rel (0) target = $region5
    $region4: #{hierarchical_multi_attention_forward.10} parent=1 // pred_region
      %s20 = ssub.s32 32, 32
      %21 = vsyncadd [#allocation7], %s20
      %s23 = sshll.u32 [#allocation6], 4
      %s24 = int_to_ptr.vmem [resolvable:$true] %s23
      %26 = dma.hbm_to_vmem [thread:$0]  %s0, 32, %s24, [#allocation7]
    $region5: #{hierarchical_multi_attention_forward.10} parent=1 // pred_fallthru
      _
    // Predicated region
    $region6: #{hierarchical_multi_attention_forward.10} parent=1 // pred_check
      _
    $region7: #{hierarchical_multi_attention_forward.10} parent=1 // pred_check_branch
      %28 = sbr.rel (0) target = $region9
    $region8: #{hierarchical_multi_attention_forward.10} parent=1 // pred_region
      %s30 = ssub.s32 96, 96
      %31 = vsyncadd [#allocation10], %s30
      %s32 = sshll.u32 [#allocation9], 4
      %s33 = int_to_ptr.vmem [resolvable:$true] %s32
      %38 = dma.hbm_to_vmem [thread:$0]  %s1, 96, %s33, [#allocation10], 32, 32, 2
    $region9: #{hierarchical_multi_attention_forward.10} parent=1 // pred_fallthru
      _
    // Predicated region
    $region10: #{hierarchical_multi_attention_forward.10} parent=1 // pred_check
      _
    $region11: #{hierarchical_multi_attention_forward.10} parent=1 // pred_check_branch
      %40 = sbr.rel (0) target = $region13
    $region12: #{hierarchical_multi_attention_forward.10} parent=1 // pred_region
      %s41 = ssub.s32 0, 0
      %s42 = smul.u32 3, %s41
      %s44 = ssub.s32 96, 96
      %45 = vsyncadd [#allocation10], %s44
      %s46 = smul.addr %s42, 32
      %s47 = scalar_lea.hbm %s2, %s46
      %s48 = sshll.u32 [#allocation11], 4
      %s49 = int_to_ptr.vmem [resolvable:$true] %s48
      %54 = dma.hbm_to_vmem [thread:$0]  %s47, 96, %s49, [#allocation10], 32, 32, 2
    $region13: #{hierarchical_multi_attention_forward.10} parent=1 // pred_fallthru
      _
    // Predicated region
    $region14: #{hierarchical_multi_attention_forward.10} parent=1 // pred_check
      _
    $region15: #{hierarchical_multi_attention_forward.10} parent=1 // pred_check_branch
      %56 = sbr.rel (0) target = $region17
    $region16: #{hierarchical_multi_attention_forward.10} parent=1 // pred_region
      %s58 = ssub.s32 256, 256
      %59 = vsyncadd [#allocation13], %s58
      %s60 = sshll.u32 [#allocation12], 4
      %s61 = int_to_ptr.vmem [resolvable:$true] %s60
      %66 = dma.hbm_to_vmem [thread:$0]  %s3, 256, %s61, [#allocation13], 128, 128, 8
    $region17: #{hierarchical_multi_attention_forward.10} parent=1 // pred_fallthru
      _
    // Predicated region
    $region18: #{hierarchical_multi_attention_forward.10} parent=1 // pred_check
      _
    $region19: #{hierarchical_multi_attention_forward.10} parent=1 // pred_check_branch
      %68 = sbr.rel (0) target = $region21
    $region20: #{hierarchical_multi_attention_forward.10} parent=1 // pred_region
      %s70 = ssub.s32 256, 256
      %71 = vsyncadd [#allocation13], %s70
      %s72 = sshll.u32 [#allocation14], 4
      %s73 = int_to_ptr.vmem [resolvable:$true] %s72
      %78 = dma.hbm_to_vmem [thread:$0]  %s4, 256, %s73, [#allocation13], 128, 128, 8
    $region21: #{hierarchical_multi_attention_forward.10} parent=1 // pred_fallthru
      _
    // Predicated region
    $region22: #{hierarchical_multi_attention_forward.10} parent=1 // pred_check
      _
    $region23: #{hierarchical_multi_attention_forward.10} parent=1 // pred_check_branch
      %80 = sbr.rel (0) target = $region25
    $region24: #{hierarchical_multi_attention_forward.10} parent=1 // pred_region
      %81 = dma.done [#allocation7], 32
    $region25: #{hierarchical_multi_attention_forward.10} parent=1 // pred_fallthru
      _
    // Predicated region
    $region26: #{hierarchical_multi_attention_forward.10} parent=1 // pred_check
      _
    $region27: #{hierarchical_multi_attention_forward.10} parent=1 // pred_check_branch
      %83 = sbr.rel (0) target = $region29
    $region28: #{hierarchical_multi_attention_forward.10} parent=1 // pred_region
      %84 = dma.done [#allocation10], 96
    $region29: #{hierarchical_multi_attention_forward.10} parent=1 // pred_fallthru
      _
    // Predicated region
    $region30: #{hierarchical_multi_attention_forward.10} parent=1 // pred_check
      _
    $region31: #{hierarchical_multi_attention_forward.10} parent=1 // pred_check_branch
      %86 = sbr.rel (0) target = $region33
    $region32: #{hierarchical_multi_attention_forward.10} parent=1 // pred_region
      %87 = dma.done [#allocation10], 96
    $region33: #{hierarchical_multi_attention_forward.10} parent=1 // pred_fallthru
      _
    // Predicated region
    $region34: #{hierarchical_multi_attention_forward.10} parent=1 // pred_check
      _
    $region35: #{hierarchical_multi_attention_forward.10} parent=1 // pred_check_branch
      %89 = sbr.rel (0) target = $region37
    $region36: #{hierarchical_multi_attention_forward.10} parent=1 // pred_region
      %90 = dma.done [#allocation13], 256
    $region37: #{hierarchical_multi_attention_forward.10} parent=1 // pred_fallthru
      _
    // Predicated region
    $region38: #{hierarchical_multi_attention_forward.10} parent=1 // pred_check
      _
    $region39: #{hierarchical_multi_attention_forward.10} parent=1 // pred_check_branch
      %92 = sbr.rel (0) target = $region41
    $region40: #{hierarchical_multi_attention_forward.10} parent=1 // pred_region
      %93 = dma.done [#allocation13], 256
    $region41: #{hierarchical_multi_attention_forward.10} parent=1 // pred_fallthru
      _
    %s94 = ssub.s32 0, 0
    %s95 = smul.u32 3, %s94
    %s96 = ssub.s32 0, 0
    %s97 = smul.u32 3, %s96
    %p98 = scmp.eq.s32.totalorder 0, 0
    // Predicated region
    $region42: #{hierarchical_multi_attention_forward.10} parent=1 // pred_check
      %p99 = pneg %p98
    $region43: #{hierarchical_multi_attention_forward.10} parent=1 // pred_check_branch
      %101 = sbr.rel (%p99) target = $region45
    $region44: #{hierarchical_multi_attention_forward.10} parent=1 // pred_region
      %vm102 = vcmask 123904
      %103 = vst.msk [vmem:[#allocation2] sm:$0x3] %vm102, 0.0
      %104 = vst.msk [vmem:[#allocation3] sm:$0x3] %vm102, 0.0
      %105 = vst.msk [vmem:[#allocation4] sm:$0x3] %vm102, 0.0
      %106 = vst.msk [vmem:[#allocation5] sm:$0x3] %vm102, 0.0
    $region45: #{hierarchical_multi_attention_forward.10} parent=1 // pred_fallthru
      _
    %v107 = vld [vmem:[#allocation6] sm:$0x3]
    %v108 = vld [vmem:[#allocation12] sm:$0xff]
    %v109 = vld [vmem:[#allocation12 + $0x8] sm:$0xff]
    %v110 = vld [vmem:[#allocation14] sm:$0xff]
    %v111 = vld [vmem:[#allocation14 + $0x8] sm:$0xff]
    %s112 = smul.u32 0, 3
    %v113 = vld [vmem:[#allocation2] sm:$0x3]
    %v114 = vld [vmem:[#allocation3] sm:$0x3]
    %v115 = vld [vmem:[#allocation4] sm:$0x3]
    %v116 = vld [vmem:[#allocation5] sm:$0x3]
    %v117 = vld [vmem:[#allocation9] sm:$0x3]
    %vm118 = vcmask 130048
    %v120 = vsel %vm118, %v113, 0
    %122 = vmatprep.subr.mxu0 0.0
    %123 = vmatpush1.msra.mxu0 %v108
    %124 = vmatprep.subr.mxu0 0.0
    %125 = vmatpush1.msra.mxu0 %v109
    %126 = vmatprep.subr.mxu0 0.0
    %127 = vmatpush1.msra.mxu0 0.0
    %128 = vmatprep.subr.mxu0 0.0
    %129 = vmatpush1.msra.mxu0 0.0
    %130 = vmatprep.subr.mxu0 0.0
    %131 = vmatpush1.msra.mxu0 0.0
    %132 = vmatprep.subr.mxu0 0.0
    %133 = vmatpush1.msra.mxu0 0.0
    %134 = vmatprep.subr.mxu0 0.0
    %135 = vmatpush1.msra.mxu0 0.0
    %136 = vmatprep.subr.mxu0 0.0
    %137 = vmatpush1.msra.mxu0 0.0
    %138 = vmatprep.subr.mxu0 0.0
    %139 = vmatpush1.msra.mxu0 0.0
    %140 = vmatprep.subr.mxu0 0.0
    %141 = vmatpush1.msra.mxu0 0.0
    %142 = vmatprep.subr.mxu0 0.0
    %143 = vmatpush1.msra.mxu0 0.0
    %144 = vmatprep.subr.mxu0 0.0
    %145 = vmatpush1.msra.mxu0 0.0
    %146 = vmatprep.subr.mxu0 0.0
    %147 = vmatpush1.msra.mxu0 0.0
    %148 = vmatprep.subr.mxu0 0.0
    %149 = vmatpush1.msra.mxu0 0.0
    %150 = vmatprep.subr.mxu0 0.0
    %151 = vmatpush1.msra.mxu0 0.0
    %152 = vmatprep.subr.mxu0 0.0
    %153 = vmatpush1.msra.mxu0 0.0
    %154 = vmatprep.subr.mxu0 0.0
    %155 = vmatpush1.msra.mxu0 0.0
    %156 = vmatprep.subr.mxu0 0.0
    %157 = vmatpush1.msra.mxu0 0.0
    %158 = vmatprep.subr.mxu0 0.0
    %159 = vmatpush1.msra.mxu0 0.0
    %160 = vmatprep.subr.mxu0 0.0
    %161 = vmatpush1.msra.mxu0 0.0
    %162 = vmatprep.subr.mxu0 0.0
    %163 = vmatpush1.msra.mxu0 0.0
    %164 = vmatprep.subr.mxu0 0.0
    %165 = vmatpush1.msra.mxu0 0.0
    %166 = vmatprep.subr.mxu0 0.0
    %167 = vmatpush1.msra.mxu0 0.0
    %168 = vmatprep.subr.mxu0 0.0
    %169 = vmatpush1.msra.mxu0 0.0
    %170 = vmatprep.subr.mxu0 0.0
    %171 = vmatpush1.msra.mxu0 0.0
    %172 = vmatprep.subr.mxu0 0.0
    %173 = vmatpush1.msra.mxu0 0.0
    %174 = vmatprep.subr.mxu0 0.0
    %175 = vmatpush1.msra.mxu0 0.0
    %176 = vmatprep.subr.mxu0 0.0
    %177 = vmatpush1.msra.mxu0 0.0
    %178 = vmatprep.subr.mxu0 0.0
    %179 = vmatpush1.msra.mxu0 0.0
    %180 = vmatprep.subr.mxu0 0.0
    %181 = vmatpush1.msra.mxu0 0.0
    %182 = vmatprep.subr.mxu0 0.0
    %183 = vmatpush1.msra.mxu0 0.0
    %184 = vmatprep.subr.mxu0 0.0
    %185 = vmatpush1.msra.mxu0 0.0
    %186 = vmatprep.mubr.f32.mxu0 0.0
    %187 = vmatmul.mubr.f32.gmra.mrb[0].mxu0 %v120
    %v188 = vpop.f32.mrb[0].mxu0
    %v189 = vadd.f32 0.0, %v188
    %v190 = vpop.f32.mrb[0].mxu0
    %191 = vdwg.mxu0
    %v192 = vadd.f32 %v117, %v189
    %v193 = vxor.u32 %v192, 2147483648
    %v194 = vmul.f32 %v193, 1.442695
    %v195 = vpow.pop %v194
    %v196 = vadd.f32 %v195, 1.0
    %v197 = vrcp.pop %v196
    %v198 = vmul.f32 1.0, %v197
    %v199 = vtanh.pop %v192
    %201 = vrot.lane.b32.xlu0 %v114, 16
    %v202 = vpop.permute.xlu0 %201
    %v204 = vmul.f32 %v198, %v202
    %206 = vrot.lane.b32.xlu0 %v199, 96
    %v207 = vpop.permute.xlu0 %206
    %v209 = vmul.f32 %v198, %v207
    %211 = vrot.lane.b32.xlu0 %v209, 16
    %v212 = vpop.permute.xlu0 %211
    %v214 = vadd.f32 %v204, %v212
    %v215 = vtanh.pop %v214
    %217 = vrot.lane.b32.xlu0 %v215, 32
    %v218 = vpop.permute.xlu0 %217
    %v220 = vmul.f32 %v198, %v218
    %v221 = vstv %s112
    %vm222 = vcmp.gt.s32.totalorder %v107, %v221
    %v223 = vsel %vm222, 1, 0
    %224 = vset.pattern.permute.xlu0 0
    %225 = vperm.xlu0 %224, %v223
    %v226 = vpop.permute.xlu0 %225
    %vm227 = vcmp.eq.s32.totalorder %v226, 1
    %228 = vrot.lane.b32.xlu0 %v113, 48
    %v229 = vpop.permute.xlu0 %228
    %v231 = vsel %vm227, %v220, %v229
    %v232 = vsel %vm227, %v214, %v202
    %v233 = vsel %vm227, %v220, 0.0
    %235 = vrot.lane.b32.xlu0 %v233, 80
    %v236 = vpop.permute.xlu0 %235
    %vm238 = vcmask 123904
    %239 = vst.msk [vmem:[#allocation15] sm:$0x3] %vm238, %v236
    %s240 = ssub.s32 2, %s112
    %s241 = scalar_lea.vmem [#allocation11], 4
    %v242 = vld [vmem:[%s241] sm:$0x3]
    %v244 = vsel %vm118, %v115, 0
    %246 = vmatprep.subr.mxu0 0.0
    %247 = vmatpush1.msra.mxu0 %v110
    %248 = vmatprep.subr.mxu0 0.0
    %249 = vmatpush1.msra.mxu0 %v111
    %250 = vmatprep.subr.mxu0 0.0
    %251 = vmatpush1.msra.mxu0 0.0
    %252 = vmatprep.subr.mxu0 0.0
    %253 = vmatpush1.msra.mxu0 0.0
    %254 = vmatprep.subr.mxu0 0.0
    %255 = vmatpush1.msra.mxu0 0.0
    %256 = vmatprep.subr.mxu0 0.0
    %257 = vmatpush1.msra.mxu0 0.0
    %258 = vmatprep.subr.mxu0 0.0
    %259 = vmatpush1.msra.mxu0 0.0
    %260 = vmatprep.subr.mxu0 0.0
    %261 = vmatpush1.msra.mxu0 0.0
    %262 = vmatprep.subr.mxu0 0.0
    %263 = vmatpush1.msra.mxu0 0.0
    %264 = vmatprep.subr.mxu0 0.0
    %265 = vmatpush1.msra.mxu0 0.0
    %266 = vmatprep.subr.mxu0 0.0
    %267 = vmatpush1.msra.mxu0 0.0
    %268 = vmatprep.subr.mxu0 0.0
    %269 = vmatpush1.msra.mxu0 0.0
    %270 = vmatprep.subr.mxu0 0.0
    %271 = vmatpush1.msra.mxu0 0.0
    %272 = vmatprep.subr.mxu0 0.0
    %273 = vmatpush1.msra.mxu0 0.0
    %274 = vmatprep.subr.mxu0 0.0
    %275 = vmatpush1.msra.mxu0 0.0
    %276 = vmatprep.subr.mxu0 0.0
    %277 = vmatpush1.msra.mxu0 0.0
    %278 = vmatprep.subr.mxu0 0.0
    %279 = vmatpush1.msra.mxu0 0.0
    %280 = vmatprep.subr.mxu0 0.0
    %281 = vmatpush1.msra.mxu0 0.0
    %282 = vmatprep.subr.mxu0 0.0
    %283 = vmatpush1.msra.mxu0 0.0
    %284 = vmatprep.subr.mxu0 0.0
    %285 = vmatpush1.msra.mxu0 0.0
    %286 = vmatprep.subr.mxu0 0.0
    %287 = vmatpush1.msra.mxu0 0.0
    %288 = vmatprep.subr.mxu0 0.0
    %289 = vmatpush1.msra.mxu0 0.0
    %290 = vmatprep.subr.mxu0 0.0
    %291 = vmatpush1.msra.mxu0 0.0
    %292 = vmatprep.subr.mxu0 0.0
    %293 = vmatpush1.msra.mxu0 0.0
    %294 = vmatprep.subr.mxu0 0.0
    %295 = vmatpush1.msra.mxu0 0.0
    %296 = vmatprep.subr.mxu0 0.0
    %297 = vmatpush1.msra.mxu0 0.0
    %298 = vmatprep.subr.mxu0 0.0
    %299 = vmatpush1.msra.mxu0 0.0
    %300 = vmatprep.subr.mxu0 0.0
    %301 = vmatpush1.msra.mxu0 0.0
    %302 = vmatprep.subr.mxu0 0.0
    %303 = vmatpush1.msra.mxu0 0.0
    %304 = vmatprep.subr.mxu0 0.0
    %305 = vmatpush1.msra.mxu0 0.0
    %306 = vmatprep.subr.mxu0 0.0
    %307 = vmatpush1.msra.mxu0 0.0
    %308 = vmatprep.subr.mxu0 0.0
    %309 = vmatpush1.msra.mxu0 0.0
    %310 = vmatprep.mubr.f32.mxu0 0.0
    %311 = vmatmul.mubr.f32.gmra.mrb[0].mxu0 %v244
    %v312 = vpop.f32.mrb[0].mxu0
    %v313 = vadd.f32 0.0, %v312
    %v314 = vpop.f32.mrb[0].mxu0
    %315 = vdwg.mxu0
    %v316 = vadd.f32 %v242, %v313
    %v317 = vxor.u32 %v316, 2147483648
    %v318 = vmul.f32 %v317, 1.442695
    %v319 = vpow.pop %v318
    %v320 = vadd.f32 %v319, 1.0
    %v321 = vrcp.pop %v320
    %v322 = vmul.f32 1.0, %v321
    %v323 = vtanh.pop %v316
    %325 = vrot.lane.b32.xlu0 %v116, 16
    %v326 = vpop.permute.xlu0 %325
    %v328 = vmul.f32 %v322, %v326
    %330 = vrot.lane.b32.xlu0 %v323, 96
    %v331 = vpop.permute.xlu0 %330
    %v333 = vmul.f32 %v322, %v331
    %335 = vrot.lane.b32.xlu0 %v333, 16
    %v336 = vpop.permute.xlu0 %335
    %v338 = vadd.f32 %v328, %v336
    %v339 = vtanh.pop %v338
    %341 = vrot.lane.b32.xlu0 %v339, 32
    %v342 = vpop.permute.xlu0 %341
    %v344 = vmul.f32 %v322, %v342
    %v345 = vstv %s240
    %vm346 = vcmp.gt.s32.totalorder %v107, %v345
    %v347 = vsel %vm346, 1, 0
    %348 = vset.pattern.permute.xlu0 0
    %349 = vperm.xlu0 %348, %v347
    %v350 = vpop.permute.xlu0 %349
    %vm351 = vcmp.eq.s32.totalorder %v350, 1
    %352 = vrot.lane.b32.xlu0 %v115, 48
    %v353 = vpop.permute.xlu0 %352
    %v355 = vsel %vm351, %v344, %v353
    %v356 = vsel %vm351, %v338, %v326
    %v357 = vsel %vm351, %v344, 0.0
    %359 = vrot.lane.b32.xlu0 %v357, 80
    %v360 = vpop.permute.xlu0 %359
    %s362 = scalar_lea.vmem [#allocation16], 4
    %363 = vst.msk [vmem:[%s362] sm:$0x3] %vm238, %v360
    %s364 = sadd.s32 %s112, 1
    %s365 = scalar_lea.vmem [#allocation9], 2
    %v366 = vld [vmem:[%s365] sm:$0x3]
    %368 = vrot.lane.b32.xlu0 %v231, 80
    %v369 = vpop.permute.xlu0 %368
    %v370 = vsel %vm118, %v369, 0
    %372 = vmatprep.subr.mxu0 0.0
    %373 = vmatpush1.msra.mxu0 %v108
    %374 = vmatprep.subr.mxu0 0.0
    %375 = vmatpush1.msra.mxu0 %v109
    %376 = vmatprep.subr.mxu0 0.0
    %377 = vmatpush1.msra.mxu0 0.0
    %378 = vmatprep.subr.mxu0 0.0
    %379 = vmatpush1.msra.mxu0 0.0
    %380 = vmatprep.subr.mxu0 0.0
    %381 = vmatpush1.msra.mxu0 0.0
    %382 = vmatprep.subr.mxu0 0.0
    %383 = vmatpush1.msra.mxu0 0.0
    %384 = vmatprep.subr.mxu0 0.0
    %385 = vmatpush1.msra.mxu0 0.0
    %386 = vmatprep.subr.mxu0 0.0
    %387 = vmatpush1.msra.mxu0 0.0
    %388 = vmatprep.subr.mxu0 0.0
    %389 = vmatpush1.msra.mxu0 0.0
    %390 = vmatprep.subr.mxu0 0.0
    %391 = vmatpush1.msra.mxu0 0.0
    %392 = vmatprep.subr.mxu0 0.0
    %393 = vmatpush1.msra.mxu0 0.0
    %394 = vmatprep.subr.mxu0 0.0
    %395 = vmatpush1.msra.mxu0 0.0
    %396 = vmatprep.subr.mxu0 0.0
    %397 = vmatpush1.msra.mxu0 0.0
    %398 = vmatprep.subr.mxu0 0.0
    %399 = vmatpush1.msra.mxu0 0.0
    %400 = vmatprep.subr.mxu0 0.0
    %401 = vmatpush1.msra.mxu0 0.0
    %402 = vmatprep.subr.mxu0 0.0
    %403 = vmatpush1.msra.mxu0 0.0
    %404 = vmatprep.subr.mxu0 0.0
    %405 = vmatpush1.msra.mxu0 0.0
    %406 = vmatprep.subr.mxu0 0.0
    %407 = vmatpush1.msra.mxu0 0.0
    %408 = vmatprep.subr.mxu0 0.0
    %409 = vmatpush1.msra.mxu0 0.0
    %410 = vmatprep.subr.mxu0 0.0
    %411 = vmatpush1.msra.mxu0 0.0
    %412 = vmatprep.subr.mxu0 0.0
    %413 = vmatpush1.msra.mxu0 0.0
    %414 = vmatprep.subr.mxu0 0.0
    %415 = vmatpush1.msra.mxu0 0.0
    %416 = vmatprep.subr.mxu0 0.0
    %417 = vmatpush1.msra.mxu0 0.0
    %418 = vmatprep.subr.mxu0 0.0
    %419 = vmatpush1.msra.mxu0 0.0
    %420 = vmatprep.subr.mxu0 0.0
    %421 = vmatpush1.msra.mxu0 0.0
    %422 = vmatprep.subr.mxu0 0.0
    %423 = vmatpush1.msra.mxu0 0.0
    %424 = vmatprep.subr.mxu0 0.0
    %425 = vmatpush1.msra.mxu0 0.0
    %426 = vmatprep.subr.mxu0 0.0
    %427 = vmatpush1.msra.mxu0 0.0
    %428 = vmatprep.subr.mxu0 0.0
    %429 = vmatpush1.msra.mxu0 0.0
    %430 = vmatprep.subr.mxu0 0.0
    %431 = vmatpush1.msra.mxu0 0.0
    %432 = vmatprep.subr.mxu0 0.0
    %433 = vmatpush1.msra.mxu0 0.0
    %434 = vmatprep.subr.mxu0 0.0
    %435 = vmatpush1.msra.mxu0 0.0
    %436 = vmatprep.mubr.f32.mxu0 0.0
    %437 = vmatmul.mubr.f32.gmra.mrb[0].mxu0 %v370
    %v438 = vpop.f32.mrb[0].mxu0
    %v439 = vadd.f32 0.0, %v438
    %v440 = vpop.f32.mrb[0].mxu0
    %441 = vdwg.mxu0
    %v442 = vadd.f32 %v366, %v439
    %v443 = vxor.u32 %v442, 2147483648
    %v444 = vmul.f32 %v443, 1.442695
    %v445 = vpow.pop %v444
    %v446 = vadd.f32 %v445, 1.0
    %v447 = vrcp.pop %v446
    %v448 = vmul.f32 1.0, %v447
    %v449 = vtanh.pop %v442
    %v450 = vmul.f32 %v448, %v232
    %452 = vrot.lane.b32.xlu0 %v449, 96
    %v453 = vpop.permute.xlu0 %452
    %v455 = vmul.f32 %v448, %v453
    %457 = vrot.lane.b32.xlu0 %v455, 16
    %v458 = vpop.permute.xlu0 %457
    %v460 = vadd.f32 %v450, %v458
    %v461 = vtanh.pop %v460
    %463 = vrot.lane.b32.xlu0 %v461, 32
    %v464 = vpop.permute.xlu0 %463
    %v466 = vmul.f32 %v448, %v464
    %v467 = vstv %s364
    %vm468 = vcmp.gt.s32.totalorder %v107, %v467
    %v469 = vsel %vm468, 1, 0
    %470 = vset.pattern.permute.xlu0 0
    %471 = vperm.xlu0 %470, %v469
    %v472 = vpop.permute.xlu0 %471
    %vm473 = vcmp.eq.s32.totalorder %v472, 1
    %v474 = vsel %vm473, %v466, %v231
    %v475 = vsel %vm473, %v460, %v232
    %v476 = vsel %vm473, %v466, 0.0
    %478 = vrot.lane.b32.xlu0 %v476, 80
    %v479 = vpop.permute.xlu0 %478
    %s481 = scalar_lea.vmem [#allocation15], 2
    %482 = vst.msk [vmem:[%s481] sm:$0x3] %vm238, %v479
    %s483 = ssub.s32 1, %s112
    %s484 = scalar_lea.vmem [#allocation11], 2
    %v485 = vld [vmem:[%s484] sm:$0x3]
    %487 = vrot.lane.b32.xlu0 %v355, 80
    %v488 = vpop.permute.xlu0 %487
    %v489 = vsel %vm118, %v488, 0
    %491 = vmatprep.subr.mxu0 0.0
    %492 = vmatpush1.msra.mxu0 %v110
    %493 = vmatprep.subr.mxu0 0.0
    %494 = vmatpush1.msra.mxu0 %v111
    %495 = vmatprep.subr.mxu0 0.0
    %496 = vmatpush1.msra.mxu0 0.0
    %497 = vmatprep.subr.mxu0 0.0
    %498 = vmatpush1.msra.mxu0 0.0
    %499 = vmatprep.subr.mxu0 0.0
    %500 = vmatpush1.msra.mxu0 0.0
    %501 = vmatprep.subr.mxu0 0.0
    %502 = vmatpush1.msra.mxu0 0.0
    %503 = vmatprep.subr.mxu0 0.0
    %504 = vmatpush1.msra.mxu0 0.0
    %505 = vmatprep.subr.mxu0 0.0
    %506 = vmatpush1.msra.mxu0 0.0
    %507 = vmatprep.subr.mxu0 0.0
    %508 = vmatpush1.msra.mxu0 0.0
    %509 = vmatprep.subr.mxu0 0.0
    %510 = vmatpush1.msra.mxu0 0.0
    %511 = vmatprep.subr.mxu0 0.0
    %512 = vmatpush1.msra.mxu0 0.0
    %513 = vmatprep.subr.mxu0 0.0
    %514 = vmatpush1.msra.mxu0 0.0
    %515 = vmatprep.subr.mxu0 0.0
    %516 = vmatpush1.msra.mxu0 0.0
    %517 = vmatprep.subr.mxu0 0.0
    %518 = vmatpush1.msra.mxu0 0.0
    %519 = vmatprep.subr.mxu0 0.0
    %520 = vmatpush1.msra.mxu0 0.0
    %521 = vmatprep.subr.mxu0 0.0
    %522 = vmatpush1.msra.mxu0 0.0
    %523 = vmatprep.subr.mxu0 0.0
    %524 = vmatpush1.msra.mxu0 0.0
    %525 = vmatprep.subr.mxu0 0.0
    %526 = vmatpush1.msra.mxu0 0.0
    %527 = vmatprep.subr.mxu0 0.0
    %528 = vmatpush1.msra.mxu0 0.0
    %529 = vmatprep.subr.mxu0 0.0
    %530 = vmatpush1.msra.mxu0 0.0
    %531 = vmatprep.subr.mxu0 0.0
    %532 = vmatpush1.msra.mxu0 0.0
    %533 = vmatprep.subr.mxu0 0.0
    %534 = vmatpush1.msra.mxu0 0.0
    %535 = vmatprep.subr.mxu0 0.0
    %536 = vmatpush1.msra.mxu0 0.0
    %537 = vmatprep.subr.mxu0 0.0
    %538 = vmatpush1.msra.mxu0 0.0
    %539 = vmatprep.subr.mxu0 0.0
    %540 = vmatpush1.msra.mxu0 0.0
    %541 = vmatprep.subr.mxu0 0.0
    %542 = vmatpush1.msra.mxu0 0.0
    %543 = vmatprep.subr.mxu0 0.0
    %544 = vmatpush1.msra.mxu0 0.0
    %545 = vmatprep.subr.mxu0 0.0
    %546 = vmatpush1.msra.mxu0 0.0
    %547 = vmatprep.subr.mxu0 0.0
    %548 = vmatpush1.msra.mxu0 0.0
    %549 = vmatprep.subr.mxu0 0.0
    %550 = vmatpush1.msra.mxu0 0.0
    %551 = vmatprep.subr.mxu0 0.0
    %552 = vmatpush1.msra.mxu0 0.0
    %553 = vmatprep.subr.mxu0 0.0
    %554 = vmatpush1.msra.mxu0 0.0
    %555 = vmatprep.mubr.f32.mxu0 0.0
    %556 = vmatmul.mubr.f32.gmra.mrb[0].mxu0 %v489
    %v557 = vpop.f32.mrb[0].mxu0
    %v558 = vadd.f32 0.0, %v557
    %v559 = vpop.f32.mrb[0].mxu0
    %560 = vdwg.mxu0
    %v561 = vadd.f32 %v485, %v558
    %v562 = vxor.u32 %v561, 2147483648
    %v563 = vmul.f32 %v562, 1.442695
    %v564 = vpow.pop %v563
    %v565 = vadd.f32 %v564, 1.0
    %v566 = vrcp.pop %v565
    %v567 = vmul.f32 1.0, %v566
    %v568 = vtanh.pop %v561
    %v569 = vmul.f32 %v567, %v356
    %571 = vrot.lane.b32.xlu0 %v568, 96
    %v572 = vpop.permute.xlu0 %571
    %v574 = vmul.f32 %v567, %v572
    %576 = vrot.lane.b32.xlu0 %v574, 16
    %v577 = vpop.permute.xlu0 %576
    %v579 = vadd.f32 %v569, %v577
    %v580 = vtanh.pop %v579
    %582 = vrot.lane.b32.xlu0 %v580, 32
    %v583 = vpop.permute.xlu0 %582
    %v585 = vmul.f32 %v567, %v583
    %v586 = vstv %s483
    %vm587 = vcmp.gt.s32.totalorder %v107, %v586
    %v588 = vsel %vm587, 1, 0
    %589 = vset.pattern.permute.xlu0 0
    %590 = vperm.xlu0 %589, %v588
    %v591 = vpop.permute.xlu0 %590
    %vm592 = vcmp.eq.s32.totalorder %v591, 1
    %v593 = vsel %vm592, %v585, %v355
    %v594 = vsel %vm592, %v579, %v356
    %v595 = vsel %vm592, %v585, 0.0
    %597 = vrot.lane.b32.xlu0 %v595, 80
    %v598 = vpop.permute.xlu0 %597
    %s600 = scalar_lea.vmem [#allocation16], 2
    %601 = vst.msk [vmem:[%s600] sm:$0x3] %vm238, %v598
    %s602 = sadd.s32 %s112, 2
    %s603 = scalar_lea.vmem [#allocation9], 4
    %v604 = vld [vmem:[%s603] sm:$0x3]
    %606 = vrot.lane.b32.xlu0 %v474, 80
    %v607 = vpop.permute.xlu0 %606
    %v608 = vsel %vm118, %v607, 0
    %610 = vmatprep.subr.mxu0 0.0
    %611 = vmatpush1.msra.mxu0 %v108
    %612 = vmatprep.subr.mxu0 0.0
    %613 = vmatpush1.msra.mxu0 %v109
    %614 = vmatprep.subr.mxu0 0.0
    %615 = vmatpush1.msra.mxu0 0.0
    %616 = vmatprep.subr.mxu0 0.0
    %617 = vmatpush1.msra.mxu0 0.0
    %618 = vmatprep.subr.mxu0 0.0
    %619 = vmatpush1.msra.mxu0 0.0
    %620 = vmatprep.subr.mxu0 0.0
    %621 = vmatpush1.msra.mxu0 0.0
    %622 = vmatprep.subr.mxu0 0.0
    %623 = vmatpush1.msra.mxu0 0.0
    %624 = vmatprep.subr.mxu0 0.0
    %625 = vmatpush1.msra.mxu0 0.0
    %626 = vmatprep.subr.mxu0 0.0
    %627 = vmatpush1.msra.mxu0 0.0
    %628 = vmatprep.subr.mxu0 0.0
    %629 = vmatpush1.msra.mxu0 0.0
    %630 = vmatprep.subr.mxu0 0.0
    %631 = vmatpush1.msra.mxu0 0.0
    %632 = vmatprep.subr.mxu0 0.0
    %633 = vmatpush1.msra.mxu0 0.0
    %634 = vmatprep.subr.mxu0 0.0
    %635 = vmatpush1.msra.mxu0 0.0
    %636 = vmatprep.subr.mxu0 0.0
    %637 = vmatpush1.msra.mxu0 0.0
    %638 = vmatprep.subr.mxu0 0.0
    %639 = vmatpush1.msra.mxu0 0.0
    %640 = vmatprep.subr.mxu0 0.0
    %641 = vmatpush1.msra.mxu0 0.0
    %642 = vmatprep.subr.mxu0 0.0
    %643 = vmatpush1.msra.mxu0 0.0
    %644 = vmatprep.subr.mxu0 0.0
    %645 = vmatpush1.msra.mxu0 0.0
    %646 = vmatprep.subr.mxu0 0.0
    %647 = vmatpush1.msra.mxu0 0.0
    %648 = vmatprep.subr.mxu0 0.0
    %649 = vmatpush1.msra.mxu0 0.0
    %650 = vmatprep.subr.mxu0 0.0
    %651 = vmatpush1.msra.mxu0 0.0
    %652 = vmatprep.subr.mxu0 0.0
    %653 = vmatpush1.msra.mxu0 0.0
    %654 = vmatprep.subr.mxu0 0.0
    %655 = vmatpush1.msra.mxu0 0.0
    %656 = vmatprep.subr.mxu0 0.0
    %657 = vmatpush1.msra.mxu0 0.0
    %658 = vmatprep.subr.mxu0 0.0
    %659 = vmatpush1.msra.mxu0 0.0
    %660 = vmatprep.subr.mxu0 0.0
    %661 = vmatpush1.msra.mxu0 0.0
    %662 = vmatprep.subr.mxu0 0.0
    %663 = vmatpush1.msra.mxu0 0.0
    %664 = vmatprep.subr.mxu0 0.0
    %665 = vmatpush1.msra.mxu0 0.0
    %666 = vmatprep.subr.mxu0 0.0
    %667 = vmatpush1.msra.mxu0 0.0
    %668 = vmatprep.subr.mxu0 0.0
    %669 = vmatpush1.msra.mxu0 0.0
    %670 = vmatprep.subr.mxu0 0.0
    %671 = vmatpush1.msra.mxu0 0.0
    %672 = vmatprep.subr.mxu0 0.0
    %673 = vmatpush1.msra.mxu0 0.0
    %674 = vmatprep.mubr.f32.mxu0 0.0
    %675 = vmatmul.mubr.f32.gmra.mrb[0].mxu0 %v608
    %v676 = vpop.f32.mrb[0].mxu0
    %v677 = vadd.f32 0.0, %v676
    %v678 = vpop.f32.mrb[0].mxu0
    %679 = vdwg.mxu0
    %v680 = vadd.f32 %v604, %v677
    %v681 = vxor.u32 %v680, 2147483648
    %v682 = vmul.f32 %v681, 1.442695
    %v683 = vpow.pop %v682
    %v684 = vadd.f32 %v683, 1.0
    %v685 = vrcp.pop %v684
    %v686 = vmul.f32 1.0, %v685
    %v687 = vtanh.pop %v680
    %v688 = vmul.f32 %v686, %v475
    %690 = vrot.lane.b32.xlu0 %v687, 96
    %v691 = vpop.permute.xlu0 %690
    %v693 = vmul.f32 %v686, %v691
    %695 = vrot.lane.b32.xlu0 %v693, 16
    %v696 = vpop.permute.xlu0 %695
    %v698 = vadd.f32 %v688, %v696
    %v699 = vtanh.pop %v698
    %701 = vrot.lane.b32.xlu0 %v699, 32
    %v702 = vpop.permute.xlu0 %701
    %v704 = vmul.f32 %v686, %v702
    %v705 = vstv %s602
    %vm706 = vcmp.gt.s32.totalorder %v107, %v705
    %v707 = vsel %vm706, 1, 0
    %708 = vset.pattern.permute.xlu0 0
    %709 = vperm.xlu0 %708, %v707
    %v710 = vpop.permute.xlu0 %709
    %vm711 = vcmp.eq.s32.totalorder %v710, 1
    %v712 = vsel %vm711, %v704, %v474
    %v713 = vsel %vm711, %v698, %v475
    %v714 = vsel %vm711, %v704, 0.0
    %716 = vrot.lane.b32.xlu0 %v714, 80
    %v717 = vpop.permute.xlu0 %716
    %s719 = scalar_lea.vmem [#allocation15], 4
    %720 = vst.msk [vmem:[%s719] sm:$0x3] %vm238, %v717
    %s721 = ssub.s32 0, %s112
    %v722 = vld [vmem:[#allocation11] sm:$0x3]
    %724 = vrot.lane.b32.xlu0 %v593, 80
    %v725 = vpop.permute.xlu0 %724
    %v726 = vsel %vm118, %v725, 0
    %728 = vmatprep.subr.mxu0 0.0
    %729 = vmatpush1.msra.mxu0 %v110
    %730 = vmatprep.subr.mxu0 0.0
    %731 = vmatpush1.msra.mxu0 %v111
    %732 = vmatprep.subr.mxu0 0.0
    %733 = vmatpush1.msra.mxu0 0.0
    %734 = vmatprep.subr.mxu0 0.0
    %735 = vmatpush1.msra.mxu0 0.0
    %736 = vmatprep.subr.mxu0 0.0
    %737 = vmatpush1.msra.mxu0 0.0
    %738 = vmatprep.subr.mxu0 0.0
    %739 = vmatpush1.msra.mxu0 0.0
    %740 = vmatprep.subr.mxu0 0.0
    %741 = vmatpush1.msra.mxu0 0.0
    %742 = vmatprep.subr.mxu0 0.0
    %743 = vmatpush1.msra.mxu0 0.0
    %744 = vmatprep.subr.mxu0 0.0
    %745 = vmatpush1.msra.mxu0 0.0
    %746 = vmatprep.subr.mxu0 0.0
    %747 = vmatpush1.msra.mxu0 0.0
    %748 = vmatprep.subr.mxu0 0.0
    %749 = vmatpush1.msra.mxu0 0.0
    %750 = vmatprep.subr.mxu0 0.0
    %751 = vmatpush1.msra.mxu0 0.0
    %752 = vmatprep.subr.mxu0 0.0
    %753 = vmatpush1.msra.mxu0 0.0
    %754 = vmatprep.subr.mxu0 0.0
    %755 = vmatpush1.msra.mxu0 0.0
    %756 = vmatprep.subr.mxu0 0.0
    %757 = vmatpush1.msra.mxu0 0.0
    %758 = vmatprep.subr.mxu0 0.0
    %759 = vmatpush1.msra.mxu0 0.0
    %760 = vmatprep.subr.mxu0 0.0
    %761 = vmatpush1.msra.mxu0 0.0
    %762 = vmatprep.subr.mxu0 0.0
    %763 = vmatpush1.msra.mxu0 0.0
    %764 = vmatprep.subr.mxu0 0.0
    %765 = vmatpush1.msra.mxu0 0.0
    %766 = vmatprep.subr.mxu0 0.0
    %767 = vmatpush1.msra.mxu0 0.0
    %768 = vmatprep.subr.mxu0 0.0
    %769 = vmatpush1.msra.mxu0 0.0
    %770 = vmatprep.subr.mxu0 0.0
    %771 = vmatpush1.msra.mxu0 0.0
    %772 = vmatprep.subr.mxu0 0.0
    %773 = vmatpush1.msra.mxu0 0.0
    %774 = vmatprep.subr.mxu0 0.0
    %775 = vmatpush1.msra.mxu0 0.0
    %776 = vmatprep.subr.mxu0 0.0
    %777 = vmatpush1.msra.mxu0 0.0
    %778 = vmatprep.subr.mxu0 0.0
    %779 = vmatpush1.msra.mxu0 0.0
    %780 = vmatprep.subr.mxu0 0.0
    %781 = vmatpush1.msra.mxu0 0.0
    %782 = vmatprep.subr.mxu0 0.0
    %783 = vmatpush1.msra.mxu0 0.0
    %784 = vmatprep.subr.mxu0 0.0
    %785 = vmatpush1.msra.mxu0 0.0
    %786 = vmatprep.subr.mxu0 0.0
    %787 = vmatpush1.msra.mxu0 0.0
    %788 = vmatprep.subr.mxu0 0.0
    %789 = vmatpush1.msra.mxu0 0.0
    %790 = vmatprep.subr.mxu0 0.0
    %791 = vmatpush1.msra.mxu0 0.0
    %792 = vmatprep.mubr.f32.mxu0 0.0
    %793 = vmatmul.mubr.f32.gmra.mrb[0].mxu0 %v726
    %v794 = vpop.f32.mrb[0].mxu0
    %v795 = vadd.f32 0.0, %v794
    %v796 = vpop.f32.mrb[0].mxu0
    %797 = vdwg.mxu0
    %v798 = vadd.f32 %v722, %v795
    %v799 = vxor.u32 %v798, 2147483648
    %v800 = vmul.f32 %v799, 1.442695
    %v801 = vpow.pop %v800
    %v802 = vadd.f32 %v801, 1.0
    %v803 = vrcp.pop %v802
    %v804 = vmul.f32 1.0, %v803
    %v805 = vtanh.pop %v798
    %v806 = vmul.f32 %v804, %v594
    %808 = vrot.lane.b32.xlu0 %v805, 96
    %v809 = vpop.permute.xlu0 %808
    %v811 = vmul.f32 %v804, %v809
    %813 = vrot.lane.b32.xlu0 %v811, 16
    %v814 = vpop.permute.xlu0 %813
    %v816 = vadd.f32 %v806, %v814
    %v817 = vtanh.pop %v816
    %819 = vrot.lane.b32.xlu0 %v817, 32
    %v820 = vpop.permute.xlu0 %819
    %v822 = vmul.f32 %v804, %v820
    %v823 = vstv %s721
    %vm824 = vcmp.gt.s32.totalorder %v107, %v823
    %v825 = vsel %vm824, 1, 0
    %826 = vset.pattern.permute.xlu0 0
    %827 = vperm.xlu0 %826, %v825
    %v828 = vpop.permute.xlu0 %827
    %vm829 = vcmp.eq.s32.totalorder %v828, 1
    %v830 = vsel %vm829, %v822, %v593
    %v831 = vsel %vm829, %v816, %v594
    %v832 = vsel %vm829, %v822, 0.0
    %834 = vrot.lane.b32.xlu0 %v832, 80
    %v835 = vpop.permute.xlu0 %834
    %837 = vst.msk [vmem:[#allocation16] sm:$0x3] %vm238, %v835
    %839 = vrot.lane.b32.xlu0 %v712, 80
    %v840 = vpop.permute.xlu0 %839
    %842 = vst.msk [vmem:[#allocation2] sm:$0x3] %vm238, %v840
    %844 = vrot.lane.b32.xlu0 %v713, 112
    %v845 = vpop.permute.xlu0 %844
    %847 = vst.msk [vmem:[#allocation3] sm:$0x3] %vm238, %v845
    %849 = vrot.lane.b32.xlu0 %v830, 80
    %v850 = vpop.permute.xlu0 %849
    %852 = vst.msk [vmem:[#allocation4] sm:$0x3] %vm238, %v850
    %854 = vrot.lane.b32.xlu0 %v831, 112
    %v855 = vpop.permute.xlu0 %854
    %857 = vst.msk [vmem:[#allocation5] sm:$0x3] %vm238, %v855
    // Predicated region
    $region46: #{hierarchical_multi_attention_forward.10} parent=1 // pred_check
      _
    $region47: #{hierarchical_multi_attention_forward.10} parent=1 // pred_check_branch
      %859 = sbr.rel (0) target = $region49
    $region48: #{hierarchical_multi_attention_forward.10} parent=1 // pred_region
      %s861 = ssub.s32 96, 96
      %862 = vsyncadd [#allocation8], %s861
      %s863 = sshll.u32 [#allocation15], 4
      %s864 = int_to_ptr.vmem [resolvable:$true] %s863
      %869 = dma.vmem_to_hbm [thread:$0]  %s864, 96, %s5, [#allocation8], 32, 32, 2
    $region49: #{hierarchical_multi_attention_forward.10} parent=1 // pred_fallthru
      _
    // Predicated region
    $region50: #{hierarchical_multi_attention_forward.10} parent=1 // pred_check
      _
    $region51: #{hierarchical_multi_attention_forward.10} parent=1 // pred_check_branch
      %871 = sbr.rel (0) target = $region53
    $region52: #{hierarchical_multi_attention_forward.10} parent=1 // pred_region
      %s872 = ssub.s32 0, 0
      %s873 = smul.u32 3, %s872
      %s875 = ssub.s32 96, 96
      %876 = vsyncadd [#allocation17], %s875
      %s877 = smul.addr %s873, 32
      %s878 = scalar_lea.hbm %s6, %s877
      %s879 = sshll.u32 [#allocation16], 4
      %s880 = int_to_ptr.vmem [resolvable:$true] %s879
      %885 = dma.vmem_to_hbm [thread:$0]  %s880, 96, %s878, [#allocation17], 32, 32, 2
    $region53: #{hierarchical_multi_attention_forward.10} parent=1 // pred_fallthru
      _
    // Predicated region
    $region54: #{hierarchical_multi_attention_forward.10} parent=1 // pred_check
      _
    $region55: #{hierarchical_multi_attention_forward.10} parent=1 // pred_check_branch
      %887 = sbr.rel (0) target = $region57
    $region56: #{hierarchical_multi_attention_forward.10} parent=1 // pred_region
      %888 = dma.done [#allocation8], 96
    $region57: #{hierarchical_multi_attention_forward.10} parent=1 // pred_fallthru
      _
    // Predicated region
    $region58: #{hierarchical_multi_attention_forward.10} parent=1 // pred_check
      _
    $region59: #{hierarchical_multi_attention_forward.10} parent=1 // pred_check_branch
      %890 = sbr.rel (0) target = $region61
    $region60: #{hierarchical_multi_attention_forward.10} parent=1 // pred_region
      %891 = dma.done [#allocation17], 96
    $region61: #{hierarchical_multi_attention_forward.10} parent=1 // pred_fallthru
      _
    %892 = vsyncpa [#allocation7], 1
    %893 = vsyncpa [#allocation10], 1
    %894 = vsyncpa [#allocation13], 1
    %895 = vsyncpa [#allocation8], 1
    %896 = vsyncpa [#allocation17], 1

// kernel: hierarchical_multi_attention_forward.11
$region0: #{hierarchical_multi_attention_forward.11}
  #allocation0 [shape = 'u32[]', space=smem, size = 0x4, offset = 0x4, fixed_abs, tag = 'smem constant byte address 0x4 - core index']
  #allocation1 [shape = 'u32[144,128]{1,0:T(1,128)}', space=vmem, size = 0x12000, scoped, tag = 'internal scratch']
  #allocation2 [shape = 'f32[3,2,3]{2,1,0:T(2,128)}', space=vmem, size = 0xc00, scoped, tag = 'scratch operand']
  %s0 = inlined_call_operand.hbm [shape: s32[2,1], index: 0, kind: input, shape index: {}]
  %s1 = inlined_call_operand.hbm [shape: f32[3,2,16], index: 1, kind: input, shape index: {}]
  %s2 = inlined_call_operand.hbm [shape: f32[3,2,16], index: 2, kind: input, shape index: {}]
  %s3 = inlined_call_operand.hbm [shape: f32[16,16], index: 3, kind: input, shape index: {}]
  %s4 = inlined_call_operand.hbm [shape: f32[16,16], index: 4, kind: input, shape index: {}]
  %s5 = inlined_call_operand.hbm [shape: f32[16,3], index: 5, kind: input, shape index: {}]
  %s6 = inlined_call_operand.hbm [shape: f32[16,32], index: 6, kind: input, shape index: {}]
  %s7 = inlined_call_operand.hbm [shape: f32[16,32], index: 7, kind: input, shape index: {}]
  %s8 = inlined_call_operand.hbm [shape: f32[1,32], index: 8, kind: input, shape index: {}]
  %s9 = inlined_call_operand.hbm [shape: f32[32,4], index: 9, kind: input, shape index: {}]
  %s10 = inlined_call_operand.hbm [shape: f32[1,4], index: 10, kind: input, shape index: {}]
  %s11 = inlined_call_operand.hbm [shape: f32[2,4], index: 11, kind: output, shape index: {}]
  %s12 = sld [smem:[#allocation0]]
  $region98: #{hierarchical_multi_attention_forward.11} parent=0
    _
  %s14 = ssub.s32 1, %s12
  %s15 = scalar_select 0, %s14, %s12
  $region1: #{hierarchical_multi_attention_forward.11} parent=0
    #allocation3 [shape = 'u8[1024]{0}', space=vmem, size = 0x400, scoped, tag = 'input window, operand 0, single buffered']
    #allocation4 [shape = 's32[1]{0}', space=sflag, size = 0x4, scoped, tag = 'scoped memory for hierarchical_multi_attention_forward.11']
    #allocation5 [shape = 's32[1]{0}', space=sflag, size = 0x4, scoped, tag = 'scoped memory for hierarchical_multi_attention_forward.11']
    #allocation6 [shape = 'u8[3072]{0}', space=vmem, size = 0xc00, scoped, tag = 'input window, operand 1, single buffered']
    #allocation7 [shape = 's32[1]{0}', space=sflag, size = 0x4, scoped, tag = 'scoped memory for hierarchical_multi_attention_forward.11']
    #allocation8 [shape = 'u8[3072]{0}', space=vmem, size = 0xc00, scoped, tag = 'input window, operand 2, single buffered']
    #allocation9 [shape = 'u8[8192]{0}', space=vmem, size = 0x2000, scoped, tag = 'input window, operand 3, single buffered']
    #allocation10 [shape = 's32[1]{0}', space=sflag, size = 0x4, scoped, tag = 'scoped memory for hierarchical_multi_attention_forward.11']
    #allocation11 [shape = 'u8[8192]{0}', space=vmem, size = 0x2000, scoped, tag = 'input window, operand 4, single buffered']
    #allocation12 [shape = 'u8[8192]{0}', space=vmem, size = 0x2000, scoped, tag = 'input window, operand 5, single buffered']
    #allocation13 [shape = 's32[1]{0}', space=sflag, size = 0x4, scoped, tag = 'scoped memory for hierarchical_multi_attention_forward.11']
    #allocation14 [shape = 'u8[8192]{0}', space=vmem, size = 0x2000, scoped, tag = 'input window, operand 6, single buffered']
    #allocation15 [shape = 'u8[8192]{0}', space=vmem, size = 0x2000, scoped, tag = 'input window, operand 7, single buffered']
    #allocation16 [shape = 's32[1]{0}', space=sflag, size = 0x4, scoped, tag = 'scoped memory for hierarchical_multi_attention_forward.11']
    #allocation17 [shape = 'u8[512]{0}', space=vmem, size = 0x400, scoped, tag = 'input window, operand 8, single buffered']
    #allocation18 [shape = 'u8[16384]{0}', space=vmem, size = 0x4000, scoped, tag = 'input window, operand 9, single buffered']
    #allocation19 [shape = 's32[1]{0}', space=sflag, size = 0x4, scoped, tag = 'scoped memory for hierarchical_multi_attention_forward.11']
    #allocation20 [shape = 'u8[512]{0}', space=vmem, size = 0x400, scoped, tag = 'input window, operand 10, single buffered']
    #allocation21 [shape = 'u8[1024]{0}', space=vmem, size = 0x400, scoped, tag = 'output window, operand 0, single buffered']
    %16 = vsyncpa [#allocation4], 0
    %17 = vsyncpa [#allocation7], 0
    %18 = vsyncpa [#allocation10], 0
    %19 = vsyncpa [#allocation13], 0
    %20 = vsyncpa [#allocation16], 0
    %21 = vsyncpa [#allocation19], 0
    %22 = vsyncpa [#allocation5], 0
    // Predicated region
    $region2: #{hierarchical_multi_attention_forward.11} parent=1 // pred_check
      _
    $region3: #{hierarchical_multi_attention_forward.11} parent=1 // pred_check_branch
      %24 = sbr.rel (0) target = $region5
    $region4: #{hierarchical_multi_attention_forward.11} parent=1 // pred_region
      %s26 = ssub.s32 32, 32
      %27 = vsyncadd [#allocation4], %s26
      %s29 = sshll.u32 [#allocation3], 4
      %s30 = int_to_ptr.vmem [resolvable:$true] %s29
      %32 = dma.hbm_to_vmem [thread:$0]  %s0, 32, %s30, [#allocation4]
    $region5: #{hierarchical_multi_attention_forward.11} parent=1 // pred_fallthru
      _
    // Predicated region
    $region6: #{hierarchical_multi_attention_forward.11} parent=1 // pred_check
      _
    $region7: #{hierarchical_multi_attention_forward.11} parent=1 // pred_check_branch
      %34 = sbr.rel (0) target = $region9
    $region8: #{hierarchical_multi_attention_forward.11} parent=1 // pred_region
      %s36 = ssub.s32 96, 96
      %37 = vsyncadd [#allocation7], %s36
      %s38 = sshll.u32 [#allocation6], 4
      %s39 = int_to_ptr.vmem [resolvable:$true] %s38
      %44 = dma.hbm_to_vmem [thread:$0]  %s1, 96, %s39, [#allocation7], 32, 32, 2
    $region9: #{hierarchical_multi_attention_forward.11} parent=1 // pred_fallthru
      _
    // Predicated region
    $region10: #{hierarchical_multi_attention_forward.11} parent=1 // pred_check
      _
    $region11: #{hierarchical_multi_attention_forward.11} parent=1 // pred_check_branch
      %46 = sbr.rel (0) target = $region13
    $region12: #{hierarchical_multi_attention_forward.11} parent=1 // pred_region
      %s48 = ssub.s32 96, 96
      %49 = vsyncadd [#allocation7], %s48
      %s50 = sshll.u32 [#allocation8], 4
      %s51 = int_to_ptr.vmem [resolvable:$true] %s50
      %56 = dma.hbm_to_vmem [thread:$0]  %s2, 96, %s51, [#allocation7], 32, 32, 2
    $region13: #{hierarchical_multi_attention_forward.11} parent=1 // pred_fallthru
      _
    // Predicated region
    $region14: #{hierarchical_multi_attention_forward.11} parent=1 // pred_check
      _
    $region15: #{hierarchical_multi_attention_forward.11} parent=1 // pred_check_branch
      %58 = sbr.rel (0) target = $region17
    $region16: #{hierarchical_multi_attention_forward.11} parent=1 // pred_region
      %s60 = ssub.s32 256, 256
      %61 = vsyncadd [#allocation10], %s60
      %s62 = sshll.u32 [#allocation9], 4
      %s63 = int_to_ptr.vmem [resolvable:$true] %s62
      %68 = dma.hbm_to_vmem [thread:$0]  %s3, 256, %s63, [#allocation10], 128, 128, 8
    $region17: #{hierarchical_multi_attention_forward.11} parent=1 // pred_fallthru
      _
    // Predicated region
    $region18: #{hierarchical_multi_attention_forward.11} parent=1 // pred_check
      _
    $region19: #{hierarchical_multi_attention_forward.11} parent=1 // pred_check_branch
      %70 = sbr.rel (0) target = $region21
    $region20: #{hierarchical_multi_attention_forward.11} parent=1 // pred_region
      %s72 = ssub.s32 256, 256
      %73 = vsyncadd [#allocation10], %s72
      %s74 = sshll.u32 [#allocation11], 4
      %s75 = int_to_ptr.vmem [resolvable:$true] %s74
      %80 = dma.hbm_to_vmem [thread:$0]  %s4, 256, %s75, [#allocation10], 128, 128, 8
    $region21: #{hierarchical_multi_attention_forward.11} parent=1 // pred_fallthru
      _
    // Predicated region
    $region22: #{hierarchical_multi_attention_forward.11} parent=1 // pred_check
      _
    $region23: #{hierarchical_multi_attention_forward.11} parent=1 // pred_check_branch
      %82 = sbr.rel (0) target = $region25
    $region24: #{hierarchical_multi_attention_forward.11} parent=1 // pred_region
      %s84 = ssub.s32 256, 256
      %85 = vsyncadd [#allocation13], %s84
      %s86 = sshll.u32 [#allocation12], 4
      %s87 = int_to_ptr.vmem [resolvable:$true] %s86
      %92 = dma.hbm_to_vmem [thread:$0]  %s5, 256, %s87, [#allocation13], 128, 128, 8
    $region25: #{hierarchical_multi_attention_forward.11} parent=1 // pred_fallthru
      _
    // Predicated region
    $region26: #{hierarchical_multi_attention_forward.11} parent=1 // pred_check
      _
    $region27: #{hierarchical_multi_attention_forward.11} parent=1 // pred_check_branch
      %94 = sbr.rel (0) target = $region29
    $region28: #{hierarchical_multi_attention_forward.11} parent=1 // pred_region
      %s96 = ssub.s32 256, 256
      %97 = vsyncadd [#allocation13], %s96
      %s98 = sshll.u32 [#allocation14], 4
      %s99 = int_to_ptr.vmem [resolvable:$true] %s98
      %104 = dma.hbm_to_vmem [thread:$0]  %s6, 256, %s99, [#allocation13], 128, 128, 8
    $region29: #{hierarchical_multi_attention_forward.11} parent=1 // pred_fallthru
      _
    // Predicated region
    $region30: #{hierarchical_multi_attention_forward.11} parent=1 // pred_check
      _
    $region31: #{hierarchical_multi_attention_forward.11} parent=1 // pred_check_branch
      %106 = sbr.rel (0) target = $region33
    $region32: #{hierarchical_multi_attention_forward.11} parent=1 // pred_region
      %s108 = ssub.s32 256, 256
      %109 = vsyncadd [#allocation16], %s108
      %s110 = sshll.u32 [#allocation15], 4
      %s111 = int_to_ptr.vmem [resolvable:$true] %s110
      %116 = dma.hbm_to_vmem [thread:$0]  %s7, 256, %s111, [#allocation16], 128, 128, 8
    $region33: #{hierarchical_multi_attention_forward.11} parent=1 // pred_fallthru
      _
    // Predicated region
    $region34: #{hierarchical_multi_attention_forward.11} parent=1 // pred_check
      _
    $region35: #{hierarchical_multi_attention_forward.11} parent=1 // pred_check_branch
      %118 = sbr.rel (0) target = $region37
    $region36: #{hierarchical_multi_attention_forward.11} parent=1 // pred_region
      %s120 = ssub.s32 16, 16
      %121 = vsyncadd [#allocation16], %s120
      %s123 = sshll.u32 [#allocation17], 4
      %s124 = int_to_ptr.vmem [resolvable:$true] %s123
      %126 = dma.hbm_to_vmem [thread:$0]  %s8, 16, %s124, [#allocation16]
    $region37: #{hierarchical_multi_attention_forward.11} parent=1 // pred_fallthru
      _
    // Predicated region
    $region38: #{hierarchical_multi_attention_forward.11} parent=1 // pred_check
      _
    $region39: #{hierarchical_multi_attention_forward.11} parent=1 // pred_check_branch
      %128 = sbr.rel (0) target = $region41
    $region40: #{hierarchical_multi_attention_forward.11} parent=1 // pred_region
      %s130 = ssub.s32 512, 512
      %131 = vsyncadd [#allocation19], %s130
      %s132 = sshll.u32 [#allocation18], 4
      %s133 = int_to_ptr.vmem [resolvable:$true] %s132
      %138 = dma.hbm_to_vmem [thread:$0]  %s9, 512, %s133, [#allocation19], 128, 128, 8
    $region41: #{hierarchical_multi_attention_forward.11} parent=1 // pred_fallthru
      _
    // Predicated region
    $region42: #{hierarchical_multi_attention_forward.11} parent=1 // pred_check
      _
    $region43: #{hierarchical_multi_attention_forward.11} parent=1 // pred_check_branch
      %140 = sbr.rel (0) target = $region45
    $region44: #{hierarchical_multi_attention_forward.11} parent=1 // pred_region
      %s142 = ssub.s32 16, 16
      %143 = vsyncadd [#allocation19], %s142
      %s145 = sshll.u32 [#allocation20], 4
      %s146 = int_to_ptr.vmem [resolvable:$true] %s145
      %148 = dma.hbm_to_vmem [thread:$0]  %s10, 16, %s146, [#allocation19]
    $region45: #{hierarchical_multi_attention_forward.11} parent=1 // pred_fallthru
      _
    // Predicated region
    $region46: #{hierarchical_multi_attention_forward.11} parent=1 // pred_check
      _
    $region47: #{hierarchical_multi_attention_forward.11} parent=1 // pred_check_branch
      %150 = sbr.rel (0) target = $region49
    $region48: #{hierarchical_multi_attention_forward.11} parent=1 // pred_region
      %151 = dma.done [#allocation4], 32
    $region49: #{hierarchical_multi_attention_forward.11} parent=1 // pred_fallthru
      _
    // Predicated region
    $region50: #{hierarchical_multi_attention_forward.11} parent=1 // pred_check
      _
    $region51: #{hierarchical_multi_attention_forward.11} parent=1 // pred_check_branch
      %153 = sbr.rel (0) target = $region53
    $region52: #{hierarchical_multi_attention_forward.11} parent=1 // pred_region
      %154 = dma.done [#allocation7], 96
    $region53: #{hierarchical_multi_attention_forward.11} parent=1 // pred_fallthru
      _
    // Predicated region
    $region54: #{hierarchical_multi_attention_forward.11} parent=1 // pred_check
      _
    $region55: #{hierarchical_multi_attention_forward.11} parent=1 // pred_check_branch
      %156 = sbr.rel (0) target = $region57
    $region56: #{hierarchical_multi_attention_forward.11} parent=1 // pred_region
      %157 = dma.done [#allocation7], 96
    $region57: #{hierarchical_multi_attention_forward.11} parent=1 // pred_fallthru
      _
    // Predicated region
    $region58: #{hierarchical_multi_attention_forward.11} parent=1 // pred_check
      _
    $region59: #{hierarchical_multi_attention_forward.11} parent=1 // pred_check_branch
      %159 = sbr.rel (0) target = $region61
    $region60: #{hierarchical_multi_attention_forward.11} parent=1 // pred_region
      %160 = dma.done [#allocation10], 256
    $region61: #{hierarchical_multi_attention_forward.11} parent=1 // pred_fallthru
      _
    // Predicated region
    $region62: #{hierarchical_multi_attention_forward.11} parent=1 // pred_check
      _
    $region63: #{hierarchical_multi_attention_forward.11} parent=1 // pred_check_branch
      %162 = sbr.rel (0) target = $region65
    $region64: #{hierarchical_multi_attention_forward.11} parent=1 // pred_region
      %163 = dma.done [#allocation10], 256
    $region65: #{hierarchical_multi_attention_forward.11} parent=1 // pred_fallthru
      _
    // Predicated region
    $region66: #{hierarchical_multi_attention_forward.11} parent=1 // pred_check
      _
    $region67: #{hierarchical_multi_attention_forward.11} parent=1 // pred_check_branch
      %165 = sbr.rel (0) target = $region69
    $region68: #{hierarchical_multi_attention_forward.11} parent=1 // pred_region
      %166 = dma.done [#allocation13], 256
    $region69: #{hierarchical_multi_attention_forward.11} parent=1 // pred_fallthru
      _
    // Predicated region
    $region70: #{hierarchical_multi_attention_forward.11} parent=1 // pred_check
      _
    $region71: #{hierarchical_multi_attention_forward.11} parent=1 // pred_check_branch
      %168 = sbr.rel (0) target = $region73
    $region72: #{hierarchical_multi_attention_forward.11} parent=1 // pred_region
      %169 = dma.done [#allocation13], 256
    $region73: #{hierarchical_multi_attention_forward.11} parent=1 // pred_fallthru
      _
    // Predicated region
    $region74: #{hierarchical_multi_attention_forward.11} parent=1 // pred_check
      _
    $region75: #{hierarchical_multi_attention_forward.11} parent=1 // pred_check_branch
      %171 = sbr.rel (0) target = $region77
    $region76: #{hierarchical_multi_attention_forward.11} parent=1 // pred_region
      %172 = dma.done [#allocation16], 256
    $region77: #{hierarchical_multi_attention_forward.11} parent=1 // pred_fallthru
      _
    // Predicated region
    $region78: #{hierarchical_multi_attention_forward.11} parent=1 // pred_check
      _
    $region79: #{hierarchical_multi_attention_forward.11} parent=1 // pred_check_branch
      %174 = sbr.rel (0) target = $region81
    $region80: #{hierarchical_multi_attention_forward.11} parent=1 // pred_region
      %175 = dma.done [#allocation16], 16
    $region81: #{hierarchical_multi_attention_forward.11} parent=1 // pred_fallthru
      _
    // Predicated region
    $region82: #{hierarchical_multi_attention_forward.11} parent=1 // pred_check
      _
    $region83: #{hierarchical_multi_attention_forward.11} parent=1 // pred_check_branch
      %177 = sbr.rel (0) target = $region85
    $region84: #{hierarchical_multi_attention_forward.11} parent=1 // pred_region
      %178 = dma.done [#allocation19], 512
    $region85: #{hierarchical_multi_attention_forward.11} parent=1 // pred_fallthru
      _
    // Predicated region
    $region86: #{hierarchical_multi_attention_forward.11} parent=1 // pred_check
      _
    $region87: #{hierarchical_multi_attention_forward.11} parent=1 // pred_check_branch
      %180 = sbr.rel (0) target = $region89
    $region88: #{hierarchical_multi_attention_forward.11} parent=1 // pred_region
      %181 = dma.done [#allocation19], 16
    $region89: #{hierarchical_multi_attention_forward.11} parent=1 // pred_fallthru
      _
    %v182 = vld [vmem:[#allocation9] sm:$0xff]
    %v183 = vld [vmem:[#allocation9 + $0x8] sm:$0xff]
    %v184 = vld [vmem:[#allocation11] sm:$0xff]
    %v185 = vld [vmem:[#allocation11 + $0x8] sm:$0xff]
    %v186 = vld [vmem:[#allocation12] sm:$0xff]
    %v187 = vld [vmem:[#allocation12 + $0x8] sm:$0xff]
    %v188 = vld [vmem:[#allocation6] sm:$0x3]
    %v189 = vld [vmem:[#allocation8] sm:$0x3]
    %vm190 = vcmask 130048
    %v192 = vsel %vm190, %v189, 0
    %194 = vmatprep.subr.mxu0 0.0
    %195 = vmatpush1.msra.mxu0 %v184
    %196 = vmatprep.subr.mxu0 0.0
    %197 = vmatpush1.msra.mxu0 %v185
    %198 = vmatprep.subr.mxu0 0.0
    %199 = vmatpush1.msra.mxu0 0.0
    %200 = vmatprep.subr.mxu0 0.0
    %201 = vmatpush1.msra.mxu0 0.0
    %202 = vmatprep.subr.mxu0 0.0
    %203 = vmatpush1.msra.mxu0 0.0
    %204 = vmatprep.subr.mxu0 0.0
    %205 = vmatpush1.msra.mxu0 0.0
    %206 = vmatprep.subr.mxu0 0.0
    %207 = vmatpush1.msra.mxu0 0.0
    %208 = vmatprep.subr.mxu0 0.0
    %209 = vmatpush1.msra.mxu0 0.0
    %210 = vmatprep.subr.mxu0 0.0
    %211 = vmatpush1.msra.mxu0 0.0
    %212 = vmatprep.subr.mxu0 0.0
    %213 = vmatpush1.msra.mxu0 0.0
    %214 = vmatprep.subr.mxu0 0.0
    %215 = vmatpush1.msra.mxu0 0.0
    %216 = vmatprep.subr.mxu0 0.0
    %217 = vmatpush1.msra.mxu0 0.0
    %218 = vmatprep.subr.mxu0 0.0
    %219 = vmatpush1.msra.mxu0 0.0
    %220 = vmatprep.subr.mxu0 0.0
    %221 = vmatpush1.msra.mxu0 0.0
    %222 = vmatprep.subr.mxu0 0.0
    %223 = vmatpush1.msra.mxu0 0.0
    %224 = vmatprep.subr.mxu0 0.0
    %225 = vmatpush1.msra.mxu0 0.0
    %226 = vmatprep.subr.mxu0 0.0
    %227 = vmatpush1.msra.mxu0 0.0
    %228 = vmatprep.subr.mxu0 0.0
    %229 = vmatpush1.msra.mxu0 0.0
    %230 = vmatprep.subr.mxu0 0.0
    %231 = vmatpush1.msra.mxu0 0.0
    %232 = vmatprep.subr.mxu0 0.0
    %233 = vmatpush1.msra.mxu0 0.0
    %234 = vmatprep.subr.mxu0 0.0
    %235 = vmatpush1.msra.mxu0 0.0
    %236 = vmatprep.subr.mxu0 0.0
    %237 = vmatpush1.msra.mxu0 0.0
    %238 = vmatprep.subr.mxu0 0.0
    %239 = vmatpush1.msra.mxu0 0.0
    %240 = vmatprep.subr.mxu0 0.0
    %241 = vmatpush1.msra.mxu0 0.0
    %242 = vmatprep.subr.mxu0 0.0
    %243 = vmatpush1.msra.mxu0 0.0
    %244 = vmatprep.subr.mxu0 0.0
    %245 = vmatpush1.msra.mxu0 0.0
    %246 = vmatprep.subr.mxu0 0.0
    %247 = vmatpush1.msra.mxu0 0.0
    %248 = vmatprep.subr.mxu0 0.0
    %249 = vmatpush1.msra.mxu0 0.0
    %250 = vmatprep.subr.mxu0 0.0
    %251 = vmatpush1.msra.mxu0 0.0
    %252 = vmatprep.subr.mxu0 0.0
    %253 = vmatpush1.msra.mxu0 0.0
    %254 = vmatprep.subr.mxu0 0.0
    %255 = vmatpush1.msra.mxu0 0.0
    %256 = vmatprep.subr.mxu0 0.0
    %257 = vmatpush1.msra.mxu0 0.0
    %258 = vmatprep.mubr.f32.mxu0 0.0
    %259 = vmatmul.mubr.f32.gmra.mrb[0].mxu0 %v192
    %v260 = vpop.f32.mrb[0].mxu0
    %v261 = vadd.f32 0.0, %v260
    %v262 = vpop.f32.mrb[0].mxu0
    %263 = vdwg.mxu0
    %v265 = vsel %vm190, %v188, 0
    %267 = vmatprep.subr.mxu0 0.0
    %268 = vmatpush1.msra.mxu0 %v182
    %269 = vmatprep.subr.mxu0 0.0
    %270 = vmatpush1.msra.mxu0 %v183
    %271 = vmatprep.subr.mxu0 0.0
    %272 = vmatpush1.msra.mxu0 0.0
    %273 = vmatprep.subr.mxu0 0.0
    %274 = vmatpush1.msra.mxu0 0.0
    %275 = vmatprep.subr.mxu0 0.0
    %276 = vmatpush1.msra.mxu0 0.0
    %277 = vmatprep.subr.mxu0 0.0
    %278 = vmatpush1.msra.mxu0 0.0
    %279 = vmatprep.subr.mxu0 0.0
    %280 = vmatpush1.msra.mxu0 0.0
    %281 = vmatprep.subr.mxu0 0.0
    %282 = vmatpush1.msra.mxu0 0.0
    %283 = vmatprep.subr.mxu0 0.0
    %284 = vmatpush1.msra.mxu0 0.0
    %285 = vmatprep.subr.mxu0 0.0
    %286 = vmatpush1.msra.mxu0 0.0
    %287 = vmatprep.subr.mxu0 0.0
    %288 = vmatpush1.msra.mxu0 0.0
    %289 = vmatprep.subr.mxu0 0.0
    %290 = vmatpush1.msra.mxu0 0.0
    %291 = vmatprep.subr.mxu0 0.0
    %292 = vmatpush1.msra.mxu0 0.0
    %293 = vmatprep.subr.mxu0 0.0
    %294 = vmatpush1.msra.mxu0 0.0
    %295 = vmatprep.subr.mxu0 0.0
    %296 = vmatpush1.msra.mxu0 0.0
    %297 = vmatprep.subr.mxu0 0.0
    %298 = vmatpush1.msra.mxu0 0.0
    %299 = vmatprep.subr.mxu0 0.0
    %300 = vmatpush1.msra.mxu0 0.0
    %301 = vmatprep.subr.mxu0 0.0
    %302 = vmatpush1.msra.mxu0 0.0
    %303 = vmatprep.subr.mxu0 0.0
    %304 = vmatpush1.msra.mxu0 0.0
    %305 = vmatprep.subr.mxu0 0.0
    %306 = vmatpush1.msra.mxu0 0.0
    %307 = vmatprep.subr.mxu0 0.0
    %308 = vmatpush1.msra.mxu0 0.0
    %309 = vmatprep.subr.mxu0 0.0
    %310 = vmatpush1.msra.mxu0 0.0
    %311 = vmatprep.subr.mxu0 0.0
    %312 = vmatpush1.msra.mxu0 0.0
    %313 = vmatprep.subr.mxu0 0.0
    %314 = vmatpush1.msra.mxu0 0.0
    %315 = vmatprep.subr.mxu0 0.0
    %316 = vmatpush1.msra.mxu0 0.0
    %317 = vmatprep.subr.mxu0 0.0
    %318 = vmatpush1.msra.mxu0 0.0
    %319 = vmatprep.subr.mxu0 0.0
    %320 = vmatpush1.msra.mxu0 0.0
    %321 = vmatprep.subr.mxu0 0.0
    %322 = vmatpush1.msra.mxu0 0.0
    %323 = vmatprep.subr.mxu0 0.0
    %324 = vmatpush1.msra.mxu0 0.0
    %325 = vmatprep.subr.mxu0 0.0
    %326 = vmatpush1.msra.mxu0 0.0
    %327 = vmatprep.subr.mxu0 0.0
    %328 = vmatpush1.msra.mxu0 0.0
    %329 = vmatprep.subr.mxu0 0.0
    %330 = vmatpush1.msra.mxu0 0.0
    %331 = vmatprep.mubr.f32.mxu0 0.0
    %332 = vmatmul.mubr.f32.gmra.mrb[0].mxu0 %v265
    %v333 = vpop.f32.mrb[0].mxu0
    %v334 = vadd.f32 %v261, %v333
    %v335 = vpop.f32.mrb[0].mxu0
    %336 = vdwg.mxu0
    %v337 = vtanh.pop %v334
    %v339 = vsel %vm190, %v337, 0
    %341 = vmatprep.subr.mxu0 0.0
    %342 = vmatpush1.msra.mxu0 %v186
    %343 = vmatprep.subr.mxu0 0.0
    %344 = vmatpush1.msra.mxu0 %v187
    %345 = vmatprep.subr.mxu0 0.0
    %346 = vmatpush1.msra.mxu0 0.0
    %347 = vmatprep.subr.mxu0 0.0
    %348 = vmatpush1.msra.mxu0 0.0
    %349 = vmatprep.subr.mxu0 0.0
    %350 = vmatpush1.msra.mxu0 0.0
    %351 = vmatprep.subr.mxu0 0.0
    %352 = vmatpush1.msra.mxu0 0.0
    %353 = vmatprep.subr.mxu0 0.0
    %354 = vmatpush1.msra.mxu0 0.0
    %355 = vmatprep.subr.mxu0 0.0
    %356 = vmatpush1.msra.mxu0 0.0
    %357 = vmatprep.subr.mxu0 0.0
    %358 = vmatpush1.msra.mxu0 0.0
    %359 = vmatprep.subr.mxu0 0.0
    %360 = vmatpush1.msra.mxu0 0.0
    %361 = vmatprep.subr.mxu0 0.0
    %362 = vmatpush1.msra.mxu0 0.0
    %363 = vmatprep.subr.mxu0 0.0
    %364 = vmatpush1.msra.mxu0 0.0
    %365 = vmatprep.subr.mxu0 0.0
    %366 = vmatpush1.msra.mxu0 0.0
    %367 = vmatprep.subr.mxu0 0.0
    %368 = vmatpush1.msra.mxu0 0.0
    %369 = vmatprep.subr.mxu0 0.0
    %370 = vmatpush1.msra.mxu0 0.0
    %371 = vmatprep.subr.mxu0 0.0
    %372 = vmatpush1.msra.mxu0 0.0
    %373 = vmatprep.subr.mxu0 0.0
    %374 = vmatpush1.msra.mxu0 0.0
    %375 = vmatprep.subr.mxu0 0.0
    %376 = vmatpush1.msra.mxu0 0.0
    %377 = vmatprep.subr.mxu0 0.0
    %378 = vmatpush1.msra.mxu0 0.0
    %379 = vmatprep.subr.mxu0 0.0
    %380 = vmatpush1.msra.mxu0 0.0
    %381 = vmatprep.subr.mxu0 0.0
    %382 = vmatpush1.msra.mxu0 0.0
    %383 = vmatprep.subr.mxu0 0.0
    %384 = vmatpush1.msra.mxu0 0.0
    %385 = vmatprep.subr.mxu0 0.0
    %386 = vmatpush1.msra.mxu0 0.0
    %387 = vmatprep.subr.mxu0 0.0
    %388 = vmatpush1.msra.mxu0 0.0
    %389 = vmatprep.subr.mxu0 0.0
    %390 = vmatpush1.msra.mxu0 0.0
    %391 = vmatprep.subr.mxu0 0.0
    %392 = vmatpush1.msra.mxu0 0.0
    %393 = vmatprep.subr.mxu0 0.0
    %394 = vmatpush1.msra.mxu0 0.0
    %395 = vmatprep.subr.mxu0 0.0
    %396 = vmatpush1.msra.mxu0 0.0
    %397 = vmatprep.subr.mxu0 0.0
    %398 = vmatpush1.msra.mxu0 0.0
    %399 = vmatprep.subr.mxu0 0.0
    %400 = vmatpush1.msra.mxu0 0.0
    %401 = vmatprep.subr.mxu0 0.0
    %402 = vmatpush1.msra.mxu0 0.0
    %403 = vmatprep.subr.mxu0 0.0
    %404 = vmatpush1.msra.mxu0 0.0
    %405 = vmatprep.mubr.f32.mxu0 0.0
    %406 = vmatmul.mubr.f32.gmra.mrb[0].mxu0 %v339
    %v407 = vpop.f32.mrb[0].mxu0
    %v408 = vadd.f32 0.0, %v407
    %v409 = vpop.f32.mrb[0].mxu0
    %410 = vdwg.mxu0
    %vm411 = vcmask 17408
    %412 = vst.msk [vmem:[#allocation2] sm:$0x3] %vm411, %v408
    %s413 = scalar_lea.vmem [#allocation6], 2
    %v414 = vld [vmem:[%s413] sm:$0x3]
    %s415 = scalar_lea.vmem [#allocation8], 2
    %v416 = vld [vmem:[%s415] sm:$0x3]
    %v418 = vsel %vm190, %v416, 0
    %420 = vmatprep.subr.mxu0 0.0
    %421 = vmatpush1.msra.mxu0 %v184
    %422 = vmatprep.subr.mxu0 0.0
    %423 = vmatpush1.msra.mxu0 %v185
    %424 = vmatprep.subr.mxu0 0.0
    %425 = vmatpush1.msra.mxu0 0.0
    %426 = vmatprep.subr.mxu0 0.0
    %427 = vmatpush1.msra.mxu0 0.0
    %428 = vmatprep.subr.mxu0 0.0
    %429 = vmatpush1.msra.mxu0 0.0
    %430 = vmatprep.subr.mxu0 0.0
    %431 = vmatpush1.msra.mxu0 0.0
    %432 = vmatprep.subr.mxu0 0.0
    %433 = vmatpush1.msra.mxu0 0.0
    %434 = vmatprep.subr.mxu0 0.0
    %435 = vmatpush1.msra.mxu0 0.0
    %436 = vmatprep.subr.mxu0 0.0
    %437 = vmatpush1.msra.mxu0 0.0
    %438 = vmatprep.subr.mxu0 0.0
    %439 = vmatpush1.msra.mxu0 0.0
    %440 = vmatprep.subr.mxu0 0.0
    %441 = vmatpush1.msra.mxu0 0.0
    %442 = vmatprep.subr.mxu0 0.0
    %443 = vmatpush1.msra.mxu0 0.0
    %444 = vmatprep.subr.mxu0 0.0
    %445 = vmatpush1.msra.mxu0 0.0
    %446 = vmatprep.subr.mxu0 0.0
    %447 = vmatpush1.msra.mxu0 0.0
    %448 = vmatprep.subr.mxu0 0.0
    %449 = vmatpush1.msra.mxu0 0.0
    %450 = vmatprep.subr.mxu0 0.0
    %451 = vmatpush1.msra.mxu0 0.0
    %452 = vmatprep.subr.mxu0 0.0
    %453 = vmatpush1.msra.mxu0 0.0
    %454 = vmatprep.subr.mxu0 0.0
    %455 = vmatpush1.msra.mxu0 0.0
    %456 = vmatprep.subr.mxu0 0.0
    %457 = vmatpush1.msra.mxu0 0.0
    %458 = vmatprep.subr.mxu0 0.0
    %459 = vmatpush1.msra.mxu0 0.0
    %460 = vmatprep.subr.mxu0 0.0
    %461 = vmatpush1.msra.mxu0 0.0
    %462 = vmatprep.subr.mxu0 0.0
    %463 = vmatpush1.msra.mxu0 0.0
    %464 = vmatprep.subr.mxu0 0.0
    %465 = vmatpush1.msra.mxu0 0.0
    %466 = vmatprep.subr.mxu0 0.0
    %467 = vmatpush1.msra.mxu0 0.0
    %468 = vmatprep.subr.mxu0 0.0
    %469 = vmatpush1.msra.mxu0 0.0
    %470 = vmatprep.subr.mxu0 0.0
    %471 = vmatpush1.msra.mxu0 0.0
    %472 = vmatprep.subr.mxu0 0.0
    %473 = vmatpush1.msra.mxu0 0.0
    %474 = vmatprep.subr.mxu0 0.0
    %475 = vmatpush1.msra.mxu0 0.0
    %476 = vmatprep.subr.mxu0 0.0
    %477 = vmatpush1.msra.mxu0 0.0
    %478 = vmatprep.subr.mxu0 0.0
    %479 = vmatpush1.msra.mxu0 0.0
    %480 = vmatprep.subr.mxu0 0.0
    %481 = vmatpush1.msra.mxu0 0.0
    %482 = vmatprep.subr.mxu0 0.0
    %483 = vmatpush1.msra.mxu0 0.0
    %484 = vmatprep.mubr.f32.mxu0 0.0
    %485 = vmatmul.mubr.f32.gmra.mrb[0].mxu0 %v418
    %v486 = vpop.f32.mrb[0].mxu0
    %v487 = vadd.f32 0.0, %v486
    %v488 = vpop.f32.mrb[0].mxu0
    %489 = vdwg.mxu0
    %v491 = vsel %vm190, %v414, 0
    %493 = vmatprep.subr.mxu0 0.0
    %494 = vmatpush1.msra.mxu0 %v182
    %495 = vmatprep.subr.mxu0 0.0
    %496 = vmatpush1.msra.mxu0 %v183
    %497 = vmatprep.subr.mxu0 0.0
    %498 = vmatpush1.msra.mxu0 0.0
    %499 = vmatprep.subr.mxu0 0.0
    %500 = vmatpush1.msra.mxu0 0.0
    %501 = vmatprep.subr.mxu0 0.0
    %502 = vmatpush1.msra.mxu0 0.0
    %503 = vmatprep.subr.mxu0 0.0
    %504 = vmatpush1.msra.mxu0 0.0
    %505 = vmatprep.subr.mxu0 0.0
    %506 = vmatpush1.msra.mxu0 0.0
    %507 = vmatprep.subr.mxu0 0.0
    %508 = vmatpush1.msra.mxu0 0.0
    %509 = vmatprep.subr.mxu0 0.0
    %510 = vmatpush1.msra.mxu0 0.0
    %511 = vmatprep.subr.mxu0 0.0
    %512 = vmatpush1.msra.mxu0 0.0
    %513 = vmatprep.subr.mxu0 0.0
    %514 = vmatpush1.msra.mxu0 0.0
    %515 = vmatprep.subr.mxu0 0.0
    %516 = vmatpush1.msra.mxu0 0.0
    %517 = vmatprep.subr.mxu0 0.0
    %518 = vmatpush1.msra.mxu0 0.0
    %519 = vmatprep.subr.mxu0 0.0
    %520 = vmatpush1.msra.mxu0 0.0
    %521 = vmatprep.subr.mxu0 0.0
    %522 = vmatpush1.msra.mxu0 0.0
    %523 = vmatprep.subr.mxu0 0.0
    %524 = vmatpush1.msra.mxu0 0.0
    %525 = vmatprep.subr.mxu0 0.0
    %526 = vmatpush1.msra.mxu0 0.0
    %527 = vmatprep.subr.mxu0 0.0
    %528 = vmatpush1.msra.mxu0 0.0
    %529 = vmatprep.subr.mxu0 0.0
    %530 = vmatpush1.msra.mxu0 0.0
    %531 = vmatprep.subr.mxu0 0.0
    %532 = vmatpush1.msra.mxu0 0.0
    %533 = vmatprep.subr.mxu0 0.0
    %534 = vmatpush1.msra.mxu0 0.0
    %535 = vmatprep.subr.mxu0 0.0
    %536 = vmatpush1.msra.mxu0 0.0
    %537 = vmatprep.subr.mxu0 0.0
    %538 = vmatpush1.msra.mxu0 0.0
    %539 = vmatprep.subr.mxu0 0.0
    %540 = vmatpush1.msra.mxu0 0.0
    %541 = vmatprep.subr.mxu0 0.0
    %542 = vmatpush1.msra.mxu0 0.0
    %543 = vmatprep.subr.mxu0 0.0
    %544 = vmatpush1.msra.mxu0 0.0
    %545 = vmatprep.subr.mxu0 0.0
    %546 = vmatpush1.msra.mxu0 0.0
    %547 = vmatprep.subr.mxu0 0.0
    %548 = vmatpush1.msra.mxu0 0.0
    %549 = vmatprep.subr.mxu0 0.0
    %550 = vmatpush1.msra.mxu0 0.0
    %551 = vmatprep.subr.mxu0 0.0
    %552 = vmatpush1.msra.mxu0 0.0
    %553 = vmatprep.subr.mxu0 0.0
    %554 = vmatpush1.msra.mxu0 0.0
    %555 = vmatprep.subr.mxu0 0.0
    %556 = vmatpush1.msra.mxu0 0.0
    %557 = vmatprep.mubr.f32.mxu0 0.0
    %558 = vmatmul.mubr.f32.gmra.mrb[0].mxu0 %v491
    %v559 = vpop.f32.mrb[0].mxu0
    %v560 = vadd.f32 %v487, %v559
    %v561 = vpop.f32.mrb[0].mxu0
    %562 = vdwg.mxu0
    %v563 = vtanh.pop %v560
    %v565 = vsel %vm190, %v563, 0
    %567 = vmatprep.subr.mxu0 0.0
    %568 = vmatpush1.msra.mxu0 %v186
    %569 = vmatprep.subr.mxu0 0.0
    %570 = vmatpush1.msra.mxu0 %v187
    %571 = vmatprep.subr.mxu0 0.0
    %572 = vmatpush1.msra.mxu0 0.0
    %573 = vmatprep.subr.mxu0 0.0
    %574 = vmatpush1.msra.mxu0 0.0
    %575 = vmatprep.subr.mxu0 0.0
    %576 = vmatpush1.msra.mxu0 0.0
    %577 = vmatprep.subr.mxu0 0.0
    %578 = vmatpush1.msra.mxu0 0.0
    %579 = vmatprep.subr.mxu0 0.0
    %580 = vmatpush1.msra.mxu0 0.0
    %581 = vmatprep.subr.mxu0 0.0
    %582 = vmatpush1.msra.mxu0 0.0
    %583 = vmatprep.subr.mxu0 0.0
    %584 = vmatpush1.msra.mxu0 0.0
    %585 = vmatprep.subr.mxu0 0.0
    %586 = vmatpush1.msra.mxu0 0.0
    %587 = vmatprep.subr.mxu0 0.0
    %588 = vmatpush1.msra.mxu0 0.0
    %589 = vmatprep.subr.mxu0 0.0
    %590 = vmatpush1.msra.mxu0 0.0
    %591 = vmatprep.subr.mxu0 0.0
    %592 = vmatpush1.msra.mxu0 0.0
    %593 = vmatprep.subr.mxu0 0.0
    %594 = vmatpush1.msra.mxu0 0.0
    %595 = vmatprep.subr.mxu0 0.0
    %596 = vmatpush1.msra.mxu0 0.0
    %597 = vmatprep.subr.mxu0 0.0
    %598 = vmatpush1.msra.mxu0 0.0
    %599 = vmatprep.subr.mxu0 0.0
    %600 = vmatpush1.msra.mxu0 0.0
    %601 = vmatprep.subr.mxu0 0.0
    %602 = vmatpush1.msra.mxu0 0.0
    %603 = vmatprep.subr.mxu0 0.0
    %604 = vmatpush1.msra.mxu0 0.0
    %605 = vmatprep.subr.mxu0 0.0
    %606 = vmatpush1.msra.mxu0 0.0
    %607 = vmatprep.subr.mxu0 0.0
    %608 = vmatpush1.msra.mxu0 0.0
    %609 = vmatprep.subr.mxu0 0.0
    %610 = vmatpush1.msra.mxu0 0.0
    %611 = vmatprep.subr.mxu0 0.0
    %612 = vmatpush1.msra.mxu0 0.0
    %613 = vmatprep.subr.mxu0 0.0
    %614 = vmatpush1.msra.mxu0 0.0
    %615 = vmatprep.subr.mxu0 0.0
    %616 = vmatpush1.msra.mxu0 0.0
    %617 = vmatprep.subr.mxu0 0.0
    %618 = vmatpush1.msra.mxu0 0.0
    %619 = vmatprep.subr.mxu0 0.0
    %620 = vmatpush1.msra.mxu0 0.0
    %621 = vmatprep.subr.mxu0 0.0
    %622 = vmatpush1.msra.mxu0 0.0
    %623 = vmatprep.subr.mxu0 0.0
    %624 = vmatpush1.msra.mxu0 0.0
    %625 = vmatprep.subr.mxu0 0.0
    %626 = vmatpush1.msra.mxu0 0.0
    %627 = vmatprep.subr.mxu0 0.0
    %628 = vmatpush1.msra.mxu0 0.0
    %629 = vmatprep.subr.mxu0 0.0
    %630 = vmatpush1.msra.mxu0 0.0
    %631 = vmatprep.mubr.f32.mxu0 0.0
    %632 = vmatmul.mubr.f32.gmra.mrb[0].mxu0 %v565
    %v633 = vpop.f32.mrb[0].mxu0
    %v634 = vadd.f32 0.0, %v633
    %v635 = vpop.f32.mrb[0].mxu0
    %636 = vdwg.mxu0
    %s637 = scalar_lea.vmem [#allocation2], 2
    %638 = vst.msk [vmem:[%s637] sm:$0x3] %vm411, %v634
    %s639 = scalar_lea.vmem [#allocation6], 4
    %v640 = vld [vmem:[%s639] sm:$0x3]
    %s641 = scalar_lea.vmem [#allocation8], 4
    %v642 = vld [vmem:[%s641] sm:$0x3]
    %v644 = vsel %vm190, %v642, 0
    %646 = vmatprep.subr.mxu0 0.0
    %647 = vmatpush1.msra.mxu0 %v184
    %648 = vmatprep.subr.mxu0 0.0
    %649 = vmatpush1.msra.mxu0 %v185
    %650 = vmatprep.subr.mxu0 0.0
    %651 = vmatpush1.msra.mxu0 0.0
    %652 = vmatprep.subr.mxu0 0.0
    %653 = vmatpush1.msra.mxu0 0.0
    %654 = vmatprep.subr.mxu0 0.0
    %655 = vmatpush1.msra.mxu0 0.0
    %656 = vmatprep.subr.mxu0 0.0
    %657 = vmatpush1.msra.mxu0 0.0
    %658 = vmatprep.subr.mxu0 0.0
    %659 = vmatpush1.msra.mxu0 0.0
    %660 = vmatprep.subr.mxu0 0.0
    %661 = vmatpush1.msra.mxu0 0.0
    %662 = vmatprep.subr.mxu0 0.0
    %663 = vmatpush1.msra.mxu0 0.0
    %664 = vmatprep.subr.mxu0 0.0
    %665 = vmatpush1.msra.mxu0 0.0
    %666 = vmatprep.subr.mxu0 0.0
    %667 = vmatpush1.msra.mxu0 0.0
    %668 = vmatprep.subr.mxu0 0.0
    %669 = vmatpush1.msra.mxu0 0.0
    %670 = vmatprep.subr.mxu0 0.0
    %671 = vmatpush1.msra.mxu0 0.0
    %672 = vmatprep.subr.mxu0 0.0
    %673 = vmatpush1.msra.mxu0 0.0
    %674 = vmatprep.subr.mxu0 0.0
    %675 = vmatpush1.msra.mxu0 0.0
    %676 = vmatprep.subr.mxu0 0.0
    %677 = vmatpush1.msra.mxu0 0.0
    %678 = vmatprep.subr.mxu0 0.0
    %679 = vmatpush1.msra.mxu0 0.0
    %680 = vmatprep.subr.mxu0 0.0
    %681 = vmatpush1.msra.mxu0 0.0
    %682 = vmatprep.subr.mxu0 0.0
    %683 = vmatpush1.msra.mxu0 0.0
    %684 = vmatprep.subr.mxu0 0.0
    %685 = vmatpush1.msra.mxu0 0.0
    %686 = vmatprep.subr.mxu0 0.0
    %687 = vmatpush1.msra.mxu0 0.0
    %688 = vmatprep.subr.mxu0 0.0
    %689 = vmatpush1.msra.mxu0 0.0
    %690 = vmatprep.subr.mxu0 0.0
    %691 = vmatpush1.msra.mxu0 0.0
    %692 = vmatprep.subr.mxu0 0.0
    %693 = vmatpush1.msra.mxu0 0.0
    %694 = vmatprep.subr.mxu0 0.0
    %695 = vmatpush1.msra.mxu0 0.0
    %696 = vmatprep.subr.mxu0 0.0
    %697 = vmatpush1.msra.mxu0 0.0
    %698 = vmatprep.subr.mxu0 0.0
    %699 = vmatpush1.msra.mxu0 0.0
    %700 = vmatprep.subr.mxu0 0.0
    %701 = vmatpush1.msra.mxu0 0.0
    %702 = vmatprep.subr.mxu0 0.0
    %703 = vmatpush1.msra.mxu0 0.0
    %704 = vmatprep.subr.mxu0 0.0
    %705 = vmatpush1.msra.mxu0 0.0
    %706 = vmatprep.subr.mxu0 0.0
    %707 = vmatpush1.msra.mxu0 0.0
    %708 = vmatprep.subr.mxu0 0.0
    %709 = vmatpush1.msra.mxu0 0.0
    %710 = vmatprep.mubr.f32.mxu0 0.0
    %711 = vmatmul.mubr.f32.gmra.mrb[0].mxu0 %v644
    %v712 = vpop.f32.mrb[0].mxu0
    %v713 = vadd.f32 0.0, %v712
    %v714 = vpop.f32.mrb[0].mxu0
    %715 = vdwg.mxu0
    %v717 = vsel %vm190, %v640, 0
    %719 = vmatprep.subr.mxu0 0.0
    %720 = vmatpush1.msra.mxu0 %v182
    %721 = vmatprep.subr.mxu0 0.0
    %722 = vmatpush1.msra.mxu0 %v183
    %723 = vmatprep.subr.mxu0 0.0
    %724 = vmatpush1.msra.mxu0 0.0
    %725 = vmatprep.subr.mxu0 0.0
    %726 = vmatpush1.msra.mxu0 0.0
    %727 = vmatprep.subr.mxu0 0.0
    %728 = vmatpush1.msra.mxu0 0.0
    %729 = vmatprep.subr.mxu0 0.0
    %730 = vmatpush1.msra.mxu0 0.0
    %731 = vmatprep.subr.mxu0 0.0
    %732 = vmatpush1.msra.mxu0 0.0
    %733 = vmatprep.subr.mxu0 0.0
    %734 = vmatpush1.msra.mxu0 0.0
    %735 = vmatprep.subr.mxu0 0.0
    %736 = vmatpush1.msra.mxu0 0.0
    %737 = vmatprep.subr.mxu0 0.0
    %738 = vmatpush1.msra.mxu0 0.0
    %739 = vmatprep.subr.mxu0 0.0
    %740 = vmatpush1.msra.mxu0 0.0
    %741 = vmatprep.subr.mxu0 0.0
    %742 = vmatpush1.msra.mxu0 0.0
    %743 = vmatprep.subr.mxu0 0.0
    %744 = vmatpush1.msra.mxu0 0.0
    %745 = vmatprep.subr.mxu0 0.0
    %746 = vmatpush1.msra.mxu0 0.0
    %747 = vmatprep.subr.mxu0 0.0
    %748 = vmatpush1.msra.mxu0 0.0
    %749 = vmatprep.subr.mxu0 0.0
    %750 = vmatpush1.msra.mxu0 0.0
    %751 = vmatprep.subr.mxu0 0.0
    %752 = vmatpush1.msra.mxu0 0.0
    %753 = vmatprep.subr.mxu0 0.0
    %754 = vmatpush1.msra.mxu0 0.0
    %755 = vmatprep.subr.mxu0 0.0
    %756 = vmatpush1.msra.mxu0 0.0
    %757 = vmatprep.subr.mxu0 0.0
    %758 = vmatpush1.msra.mxu0 0.0
    %759 = vmatprep.subr.mxu0 0.0
    %760 = vmatpush1.msra.mxu0 0.0
    %761 = vmatprep.subr.mxu0 0.0
    %762 = vmatpush1.msra.mxu0 0.0
    %763 = vmatprep.subr.mxu0 0.0
    %764 = vmatpush1.msra.mxu0 0.0
    %765 = vmatprep.subr.mxu0 0.0
    %766 = vmatpush1.msra.mxu0 0.0
    %767 = vmatprep.subr.mxu0 0.0
    %768 = vmatpush1.msra.mxu0 0.0
    %769 = vmatprep.subr.mxu0 0.0
    %770 = vmatpush1.msra.mxu0 0.0
    %771 = vmatprep.subr.mxu0 0.0
    %772 = vmatpush1.msra.mxu0 0.0
    %773 = vmatprep.subr.mxu0 0.0
    %774 = vmatpush1.msra.mxu0 0.0
    %775 = vmatprep.subr.mxu0 0.0
    %776 = vmatpush1.msra.mxu0 0.0
    %777 = vmatprep.subr.mxu0 0.0
    %778 = vmatpush1.msra.mxu0 0.0
    %779 = vmatprep.subr.mxu0 0.0
    %780 = vmatpush1.msra.mxu0 0.0
    %781 = vmatprep.subr.mxu0 0.0
    %782 = vmatpush1.msra.mxu0 0.0
    %783 = vmatprep.mubr.f32.mxu0 0.0
    %784 = vmatmul.mubr.f32.gmra.mrb[0].mxu0 %v717
    %v785 = vpop.f32.mrb[0].mxu0
    %v786 = vadd.f32 %v713, %v785
    %v787 = vpop.f32.mrb[0].mxu0
    %788 = vdwg.mxu0
    %v789 = vtanh.pop %v786
    %v791 = vsel %vm190, %v789, 0
    %793 = vmatprep.subr.mxu0 0.0
    %794 = vmatpush1.msra.mxu0 %v186
    %795 = vmatprep.subr.mxu0 0.0
    %796 = vmatpush1.msra.mxu0 %v187
    %797 = vmatprep.subr.mxu0 0.0
    %798 = vmatpush1.msra.mxu0 0.0
    %799 = vmatprep.subr.mxu0 0.0
    %800 = vmatpush1.msra.mxu0 0.0
    %801 = vmatprep.subr.mxu0 0.0
    %802 = vmatpush1.msra.mxu0 0.0
    %803 = vmatprep.subr.mxu0 0.0
    %804 = vmatpush1.msra.mxu0 0.0
    %805 = vmatprep.subr.mxu0 0.0
    %806 = vmatpush1.msra.mxu0 0.0
    %807 = vmatprep.subr.mxu0 0.0
    %808 = vmatpush1.msra.mxu0 0.0
    %809 = vmatprep.subr.mxu0 0.0
    %810 = vmatpush1.msra.mxu0 0.0
    %811 = vmatprep.subr.mxu0 0.0
    %812 = vmatpush1.msra.mxu0 0.0
    %813 = vmatprep.subr.mxu0 0.0
    %814 = vmatpush1.msra.mxu0 0.0
    %815 = vmatprep.subr.mxu0 0.0
    %816 = vmatpush1.msra.mxu0 0.0
    %817 = vmatprep.subr.mxu0 0.0
    %818 = vmatpush1.msra.mxu0 0.0
    %819 = vmatprep.subr.mxu0 0.0
    %820 = vmatpush1.msra.mxu0 0.0
    %821 = vmatprep.subr.mxu0 0.0
    %822 = vmatpush1.msra.mxu0 0.0
    %823 = vmatprep.subr.mxu0 0.0
    %824 = vmatpush1.msra.mxu0 0.0
    %825 = vmatprep.subr.mxu0 0.0
    %826 = vmatpush1.msra.mxu0 0.0
    %827 = vmatprep.subr.mxu0 0.0
    %828 = vmatpush1.msra.mxu0 0.0
    %829 = vmatprep.subr.mxu0 0.0
    %830 = vmatpush1.msra.mxu0 0.0
    %831 = vmatprep.subr.mxu0 0.0
    %832 = vmatpush1.msra.mxu0 0.0
    %833 = vmatprep.subr.mxu0 0.0
    %834 = vmatpush1.msra.mxu0 0.0
    %835 = vmatprep.subr.mxu0 0.0
    %836 = vmatpush1.msra.mxu0 0.0
    %837 = vmatprep.subr.mxu0 0.0
    %838 = vmatpush1.msra.mxu0 0.0
    %839 = vmatprep.subr.mxu0 0.0
    %840 = vmatpush1.msra.mxu0 0.0
    %841 = vmatprep.subr.mxu0 0.0
    %842 = vmatpush1.msra.mxu0 0.0
    %843 = vmatprep.subr.mxu0 0.0
    %844 = vmatpush1.msra.mxu0 0.0
    %845 = vmatprep.subr.mxu0 0.0
    %846 = vmatpush1.msra.mxu0 0.0
    %847 = vmatprep.subr.mxu0 0.0
    %848 = vmatpush1.msra.mxu0 0.0
    %849 = vmatprep.subr.mxu0 0.0
    %850 = vmatpush1.msra.mxu0 0.0
    %851 = vmatprep.subr.mxu0 0.0
    %852 = vmatpush1.msra.mxu0 0.0
    %853 = vmatprep.subr.mxu0 0.0
    %854 = vmatpush1.msra.mxu0 0.0
    %855 = vmatprep.subr.mxu0 0.0
    %856 = vmatpush1.msra.mxu0 0.0
    %857 = vmatprep.mubr.f32.mxu0 0.0
    %858 = vmatmul.mubr.f32.gmra.mrb[0].mxu0 %v791
    %v859 = vpop.f32.mrb[0].mxu0
    %v860 = vadd.f32 0.0, %v859
    %v861 = vpop.f32.mrb[0].mxu0
    %862 = vdwg.mxu0
    %s863 = scalar_lea.vmem [#allocation2], 4
    %864 = vst.msk [vmem:[%s863] sm:$0x3] %vm411, %v860
    %v865 = vld [vmem:[#allocation3] sm:$0x3]
    %v866 = vld [vmem:[#allocation2] sm:$0x3]
    %v867 = vld [vmem:[#allocation2 + $0x2] sm:$0x3]
    %v868 = vld [vmem:[#allocation2 + $0x4] sm:$0x3]
    %869 = vset.pattern.permute.xlu0 0
    %870 = vperm.xlu0 %869, %v865
    %v871 = vpop.permute.xlu0 %870
    %vm872 = vcmp.gt.s32.totalorder %v871, 0
    %vm873 = vcmp.gt.s32.totalorder %v871, 1
    %vm874 = vcmp.gt.s32.totalorder %v871, 2
    %v875 = vsel %vm872, %v866, -1e+30
    %v876 = vsel %vm873, %v867, -1e+30
    %v877 = vsel %vm874, %v868, -1e+30
    %v878 = vsel %vm411, %v875, -inf
    %v879 = vsel %vm411, %v876, -inf
    %v880 = vsel %vm411, %v877, -inf
    %v881 = vmax.f32 %v878, %v879
    %v882 = vmax.f32 %v881, %v880
    %v883 = vsub.f32 %v875, %v882
    %v884 = vsub.f32 %v876, %v882
    %v885 = vsub.f32 %v877, %v882
    %v886 = vmul.f32 %v883, 1.442695
    %v887 = vpow.pop %v886
    %v888 = vmul.f32 %v884, 1.442695
    %v889 = vpow.pop %v888
    %v890 = vmul.f32 %v885, 1.442695
    %v891 = vpow.pop %v890
    %v892 = vsel %vm411, %v887, 0.0
    %v893 = vsel %vm411, %v889, 0.0
    %v894 = vadd.f32 %v892, %v893
    %v895 = vsel %vm411, %v891, 0.0
    %v896 = vadd.f32 %v894, %v895
    %v897 = vrcp.pop %v896
    %v898 = vmul.f32 %v887, %v897
    %v899 = vmul.f32 %v889, %v897
    %v900 = vmul.f32 %v891, %v897
    %v901 = vsel %vm411, %v898, 0.0
    %902 = vadd.xlane.f32.xlu0 %v901
    %v903 = vpop.xlane.xlu0 %902
    %v904 = vsel %vm411, %v899, 0.0
    %905 = vadd.xlane.f32.xlu0 %v904
    %v906 = vpop.xlane.xlu0 %905
    %v907 = vsel %vm411, %v900, 0.0
    %908 = vadd.xlane.f32.xlu0 %v907
    %v909 = vpop.xlane.xlu0 %908
    %v910 = vrcp.pop 3.0
    %v911 = vmul.f32 %v903, %v910
    %v912 = vmul.f32 %v906, %v910
    %v913 = vmul.f32 %v909, %v910
    %v914 = vld [vmem:[#allocation6] sm:$0x3]
    %v915 = vld [vmem:[#allocation6 + $0x2] sm:$0x3]
    %v916 = vld [vmem:[#allocation6 + $0x4] sm:$0x3]
    %v917 = vmul.f32 %v911, %v914
    %v918 = vmul.f32 %v912, %v915
    %v919 = vmul.f32 %v913, %v916
    %vm920 = vcmask 123904
    %v921 = vsel %vm920, %v917, 0.0
    %v922 = vsel %vm920, %v918, 0.0
    %v923 = vadd.f32 %v921, %v922
    %v924 = vsel %vm920, %v919, 0.0
    %v925 = vadd.f32 %v923, %v924
    %v926 = vld [vmem:[#allocation8] sm:$0x3]
    %v927 = vld [vmem:[#allocation8 + $0x2] sm:$0x3]
    %v928 = vld [vmem:[#allocation8 + $0x4] sm:$0x3]
    %v929 = vmul.f32 %v911, %v926
    %v930 = vmul.f32 %v912, %v927
    %v931 = vmul.f32 %v913, %v928
    %v932 = vsel %vm920, %v929, 0.0
    %v933 = vsel %vm920, %v930, 0.0
    %v934 = vadd.f32 %v932, %v933
    %v935 = vsel %vm920, %v931, 0.0
    %v936 = vadd.f32 %v934, %v935
    %v937 = vld [vmem:[#allocation14] sm:$0xff]
    %v938 = vld [vmem:[#allocation14 + $0x8] sm:$0xff]
    %v939 = vld [vmem:[#allocation15] sm:$0xff]
    %v940 = vld [vmem:[#allocation15 + $0x8] sm:$0xff]
    %v942 = vsel %vm190, %v936, 0
    %944 = vmatprep.subr.mxu0 0.0
    %945 = vmatpush1.msra.mxu0 %v939
    %946 = vmatprep.subr.mxu0 0.0
    %947 = vmatpush1.msra.mxu0 %v940
    %948 = vmatprep.subr.mxu0 0.0
    %949 = vmatpush1.msra.mxu0 0.0
    %950 = vmatprep.subr.mxu0 0.0
    %951 = vmatpush1.msra.mxu0 0.0
    %952 = vmatprep.subr.mxu0 0.0
    %953 = vmatpush1.msra.mxu0 0.0
    %954 = vmatprep.subr.mxu0 0.0
    %955 = vmatpush1.msra.mxu0 0.0
    %956 = vmatprep.subr.mxu0 0.0
    %957 = vmatpush1.msra.mxu0 0.0
    %958 = vmatprep.subr.mxu0 0.0
    %959 = vmatpush1.msra.mxu0 0.0
    %960 = vmatprep.subr.mxu0 0.0
    %961 = vmatpush1.msra.mxu0 0.0
    %962 = vmatprep.subr.mxu0 0.0
    %963 = vmatpush1.msra.mxu0 0.0
    %964 = vmatprep.subr.mxu0 0.0
    %965 = vmatpush1.msra.mxu0 0.0
    %966 = vmatprep.subr.mxu0 0.0
    %967 = vmatpush1.msra.mxu0 0.0
    %968 = vmatprep.subr.mxu0 0.0
    %969 = vmatpush1.msra.mxu0 0.0
    %970 = vmatprep.subr.mxu0 0.0
    %971 = vmatpush1.msra.mxu0 0.0
    %972 = vmatprep.subr.mxu0 0.0
    %973 = vmatpush1.msra.mxu0 0.0
    %974 = vmatprep.subr.mxu0 0.0
    %975 = vmatpush1.msra.mxu0 0.0
    %976 = vmatprep.subr.mxu0 0.0
    %977 = vmatpush1.msra.mxu0 0.0
    %978 = vmatprep.subr.mxu0 0.0
    %979 = vmatpush1.msra.mxu0 0.0
    %980 = vmatprep.subr.mxu0 0.0
    %981 = vmatpush1.msra.mxu0 0.0
    %982 = vmatprep.subr.mxu0 0.0
    %983 = vmatpush1.msra.mxu0 0.0
    %984 = vmatprep.subr.mxu0 0.0
    %985 = vmatpush1.msra.mxu0 0.0
    %986 = vmatprep.subr.mxu0 0.0
    %987 = vmatpush1.msra.mxu0 0.0
    %988 = vmatprep.subr.mxu0 0.0
    %989 = vmatpush1.msra.mxu0 0.0
    %990 = vmatprep.subr.mxu0 0.0
    %991 = vmatpush1.msra.mxu0 0.0
    %992 = vmatprep.subr.mxu0 0.0
    %993 = vmatpush1.msra.mxu0 0.0
    %994 = vmatprep.subr.mxu0 0.0
    %995 = vmatpush1.msra.mxu0 0.0
    %996 = vmatprep.subr.mxu0 0.0
    %997 = vmatpush1.msra.mxu0 0.0
    %998 = vmatprep.subr.mxu0 0.0
    %999 = vmatpush1.msra.mxu0 0.0
    %1000 = vmatprep.subr.mxu0 0.0
    %1001 = vmatpush1.msra.mxu0 0.0
    %1002 = vmatprep.subr.mxu0 0.0
    %1003 = vmatpush1.msra.mxu0 0.0
    %1004 = vmatprep.subr.mxu0 0.0
    %1005 = vmatpush1.msra.mxu0 0.0
    %1006 = vmatprep.subr.mxu0 0.0
    %1007 = vmatpush1.msra.mxu0 0.0
    %1008 = vmatprep.mubr.f32.mxu0 0.0
    %1009 = vmatmul.mubr.f32.gmra.mrb[0].mxu0 %v942
    %v1010 = vpop.f32.mrb[0].mxu0
    %v1011 = vadd.f32 0.0, %v1010
    %v1012 = vpop.f32.mrb[0].mxu0
    %1013 = vdwg.mxu0
    %v1015 = vsel %vm190, %v925, 0
    %1017 = vmatprep.subr.mxu0 0.0
    %1018 = vmatpush1.msra.mxu0 %v937
    %1019 = vmatprep.subr.mxu0 0.0
    %1020 = vmatpush1.msra.mxu0 %v938
    %1021 = vmatprep.subr.mxu0 0.0
    %1022 = vmatpush1.msra.mxu0 0.0
    %1023 = vmatprep.subr.mxu0 0.0
    %1024 = vmatpush1.msra.mxu0 0.0
    %1025 = vmatprep.subr.mxu0 0.0
    %1026 = vmatpush1.msra.mxu0 0.0
    %1027 = vmatprep.subr.mxu0 0.0
    %1028 = vmatpush1.msra.mxu0 0.0
    %1029 = vmatprep.subr.mxu0 0.0
    %1030 = vmatpush1.msra.mxu0 0.0
    %1031 = vmatprep.subr.mxu0 0.0
    %1032 = vmatpush1.msra.mxu0 0.0
    %1033 = vmatprep.subr.mxu0 0.0
    %1034 = vmatpush1.msra.mxu0 0.0
    %1035 = vmatprep.subr.mxu0 0.0
    %1036 = vmatpush1.msra.mxu0 0.0
    %1037 = vmatprep.subr.mxu0 0.0
    %1038 = vmatpush1.msra.mxu0 0.0
    %1039 = vmatprep.subr.mxu0 0.0
    %1040 = vmatpush1.msra.mxu0 0.0
    %1041 = vmatprep.subr.mxu0 0.0
    %1042 = vmatpush1.msra.mxu0 0.0
    %1043 = vmatprep.subr.mxu0 0.0
    %1044 = vmatpush1.msra.mxu0 0.0
    %1045 = vmatprep.subr.mxu0 0.0
    %1046 = vmatpush1.msra.mxu0 0.0
    %1047 = vmatprep.subr.mxu0 0.0
    %1048 = vmatpush1.msra.mxu0 0.0
    %1049 = vmatprep.subr.mxu0 0.0
    %1050 = vmatpush1.msra.mxu0 0.0
    %1051 = vmatprep.subr.mxu0 0.0
    %1052 = vmatpush1.msra.mxu0 0.0
    %1053 = vmatprep.subr.mxu0 0.0
    %1054 = vmatpush1.msra.mxu0 0.0
    %1055 = vmatprep.subr.mxu0 0.0
    %1056 = vmatpush1.msra.mxu0 0.0
    %1057 = vmatprep.subr.mxu0 0.0
    %1058 = vmatpush1.msra.mxu0 0.0
    %1059 = vmatprep.subr.mxu0 0.0
    %1060 = vmatpush1.msra.mxu0 0.0
    %1061 = vmatprep.subr.mxu0 0.0
    %1062 = vmatpush1.msra.mxu0 0.0
    %1063 = vmatprep.subr.mxu0 0.0
    %1064 = vmatpush1.msra.mxu0 0.0
    %1065 = vmatprep.subr.mxu0 0.0
    %1066 = vmatpush1.msra.mxu0 0.0
    %1067 = vmatprep.subr.mxu0 0.0
    %1068 = vmatpush1.msra.mxu0 0.0
    %1069 = vmatprep.subr.mxu0 0.0
    %1070 = vmatpush1.msra.mxu0 0.0
    %1071 = vmatprep.subr.mxu0 0.0
    %1072 = vmatpush1.msra.mxu0 0.0
    %1073 = vmatprep.subr.mxu0 0.0
    %1074 = vmatpush1.msra.mxu0 0.0
    %1075 = vmatprep.subr.mxu0 0.0
    %1076 = vmatpush1.msra.mxu0 0.0
    %1077 = vmatprep.subr.mxu0 0.0
    %1078 = vmatpush1.msra.mxu0 0.0
    %1079 = vmatprep.subr.mxu0 0.0
    %1080 = vmatpush1.msra.mxu0 0.0
    %1081 = vmatprep.mubr.f32.mxu0 0.0
    %1082 = vmatmul.mubr.f32.gmra.mrb[0].mxu0 %v1015
    %v1083 = vpop.f32.mrb[0].mxu0
    %v1084 = vadd.f32 %v1011, %v1083
    %v1085 = vpop.f32.mrb[0].mxu0
    %1086 = vdwg.mxu0
    %v1087 = vld [vmem:[#allocation17] sm:$0x1]
    %v1089 = vlaneseq
    %v1090 = vshrl.u32 %v1089, 7
    %v1091 = vsub.s32 0, %v1090
    %v1092 = vrot.slane %v1087, %v1091
    %v1094 = vadd.f32 %v1084, %v1092
    %v1095 = vld [vmem:[#allocation18] sm:$0xff]
    %v1096 = vld [vmem:[#allocation18 + $0x8] sm:$0xff]
    %v1097 = vld [vmem:[#allocation18 + $0x10] sm:$0xff]
    %v1098 = vld [vmem:[#allocation18 + $0x18] sm:$0xff]
    %v1099 = vld [vmem:[#allocation20] sm:$0x1]
    %v1101 = vlaneseq
    %v1102 = vshrl.u32 %v1101, 7
    %v1103 = vsub.s32 0, %v1102
    %v1104 = vrot.slane %v1099, %v1103
    %vm1106 = vcmask 261120
    %v1108 = vsel %vm1106, %v1094, 0
    %1110 = vmatprep.subr.mxu0 0.0
    %1111 = vmatpush1.msra.mxu0 %v1095
    %1112 = vmatprep.subr.mxu0 0.0
    %1113 = vmatpush1.msra.mxu0 %v1096
    %1114 = vmatprep.subr.mxu0 0.0
    %1115 = vmatpush1.msra.mxu0 %v1097
    %1116 = vmatprep.subr.mxu0 0.0
    %1117 = vmatpush1.msra.mxu0 %v1098
    %1118 = vmatprep.subr.mxu0 0.0
    %1119 = vmatpush1.msra.mxu0 0.0
    %1120 = vmatprep.subr.mxu0 0.0
    %1121 = vmatpush1.msra.mxu0 0.0
    %1122 = vmatprep.subr.mxu0 0.0
    %1123 = vmatpush1.msra.mxu0 0.0
    %1124 = vmatprep.subr.mxu0 0.0
    %1125 = vmatpush1.msra.mxu0 0.0
    %1126 = vmatprep.subr.mxu0 0.0
    %1127 = vmatpush1.msra.mxu0 0.0
    %1128 = vmatprep.subr.mxu0 0.0
    %1129 = vmatpush1.msra.mxu0 0.0
    %1130 = vmatprep.subr.mxu0 0.0
    %1131 = vmatpush1.msra.mxu0 0.0
    %1132 = vmatprep.subr.mxu0 0.0
    %1133 = vmatpush1.msra.mxu0 0.0
    %1134 = vmatprep.subr.mxu0 0.0
    %1135 = vmatpush1.msra.mxu0 0.0
    %1136 = vmatprep.subr.mxu0 0.0
    %1137 = vmatpush1.msra.mxu0 0.0
    %1138 = vmatprep.subr.mxu0 0.0
    %1139 = vmatpush1.msra.mxu0 0.0
    %1140 = vmatprep.subr.mxu0 0.0
    %1141 = vmatpush1.msra.mxu0 0.0
    %1142 = vmatprep.subr.mxu0 0.0
    %1143 = vmatpush1.msra.mxu0 0.0
    %1144 = vmatprep.subr.mxu0 0.0
    %1145 = vmatpush1.msra.mxu0 0.0
    %1146 = vmatprep.subr.mxu0 0.0
    %1147 = vmatpush1.msra.mxu0 0.0
    %1148 = vmatprep.subr.mxu0 0.0
    %1149 = vmatpush1.msra.mxu0 0.0
    %1150 = vmatprep.subr.mxu0 0.0
    %1151 = vmatpush1.msra.mxu0 0.0
    %1152 = vmatprep.subr.mxu0 0.0
    %1153 = vmatpush1.msra.mxu0 0.0
    %1154 = vmatprep.subr.mxu0 0.0
    %1155 = vmatpush1.msra.mxu0 0.0
    %1156 = vmatprep.subr.mxu0 0.0
    %1157 = vmatpush1.msra.mxu0 0.0
    %1158 = vmatprep.subr.mxu0 0.0
    %1159 = vmatpush1.msra.mxu0 0.0
    %1160 = vmatprep.subr.mxu0 0.0
    %1161 = vmatpush1.msra.mxu0 0.0
    %1162 = vmatprep.subr.mxu0 0.0
    %1163 = vmatpush1.msra.mxu0 0.0
    %1164 = vmatprep.subr.mxu0 0.0
    %1165 = vmatpush1.msra.mxu0 0.0
    %1166 = vmatprep.subr.mxu0 0.0
    %1167 = vmatpush1.msra.mxu0 0.0
    %1168 = vmatprep.subr.mxu0 0.0
    %1169 = vmatpush1.msra.mxu0 0.0
    %1170 = vmatprep.subr.mxu0 0.0
    %1171 = vmatpush1.msra.mxu0 0.0
    %1172 = vmatprep.subr.mxu0 0.0
    %1173 = vmatpush1.msra.mxu0 0.0
    %1174 = vmatprep.mubr.f32.mxu0 0.0
    %1175 = vmatmul.mubr.f32.gmra.mrb[0].mxu0 %v1108
    %v1176 = vpop.f32.mrb[0].mxu0
    %v1177 = vadd.f32 %v1104, %v1176
    %v1178 = vpop.f32.mrb[0].mxu0
    %1179 = vdwg.mxu0
    %vm1180 = vcmask 25600
    %1181 = vst.msk [vmem:[#allocation21] sm:$0x3] %vm1180, %v1177
    // Predicated region
    $region90: #{hierarchical_multi_attention_forward.11} parent=1 // pred_check
      _
    $region91: #{hierarchical_multi_attention_forward.11} parent=1 // pred_check_branch
      %1183 = sbr.rel (0) target = $region93
    $region92: #{hierarchical_multi_attention_forward.11} parent=1 // pred_region
      %s1185 = ssub.s32 32, 32
      %1186 = vsyncadd [#allocation5], %s1185
      %s1188 = sshll.u32 [#allocation21], 4
      %s1189 = int_to_ptr.vmem [resolvable:$true] %s1188
      %1191 = dma.vmem_to_hbm [thread:$0]  %s1189, 32, %s11, [#allocation5]
    $region93: #{hierarchical_multi_attention_forward.11} parent=1 // pred_fallthru
      _
    // Predicated region
    $region94: #{hierarchical_multi_attention_forward.11} parent=1 // pred_check
      _
    $region95: #{hierarchical_multi_attention_forward.11} parent=1 // pred_check_branch
      %1193 = sbr.rel (0) target = $region97
    $region96: #{hierarchical_multi_attention_forward.11} parent=1 // pred_region
      %1194 = dma.done [#allocation5], 32
    $region97: #{hierarchical_multi_attention_forward.11} parent=1 // pred_fallthru
      _
    %1195 = vsyncpa [#allocation4], 1
    %1196 = vsyncpa [#allocation7], 1
    %1197 = vsyncpa [#allocation10], 1
    %1198 = vsyncpa [#allocation13], 1
    %1199 = vsyncpa [#allocation16], 1
    %1200 = vsyncpa [#allocation19], 1
    %1201 = vsyncpa [#allocation5], 1

</llo_original>
